<compile_context>
chip_gen: v6e
topology: v6e:2x2x1
jax: 0.10.0
libtpu: 0.0.40
codegen_flags: <defaults>
</compile_context>

<pallas_src>
import numpy as np
import jax
import jax.numpy as jnp
from jax.experimental import pallas as pl
from jax.experimental.pallas import tpu as pltpu

# ----------------------- module hyper-parameters (small, fixed) ----------------------------
SEQ_LEN   = 16   # seq_len
INPUT_DIM = 4    # input_dim
CNN_CH    = 8    # cnn_channels
CNN_K     = 3    # cnn_kernel
CNN_S     = 1    # cnn_stride (im2col-by-slices below assumes stride 1)
MP_K      = 2    # mp_kernel
MP_S      = 2    # mp_stride
H         = 8    # lstm_hidden_dim
BATCH     = 2

L_CONV = (SEQ_LEN - CNN_K) // CNN_S + 1          # Conv1d output length (14)
T      = (L_CONV - MP_K) // MP_S + 1             # latent length after MaxPool1d (7)

assert CNN_S == 1, "static-slice im2col below assumes cnn_stride == 1"

HI = jax.lax.Precision.HIGHEST


def _dot(a, b):
    return jnp.dot(a, b, precision=HI, preferred_element_type=jnp.float32)


# ------------------------------------ Pallas kernel ----------------------------------------
def encoder_kernel(x_ref, wc_ref, bc_ref,
                   w1x_ref, w1h_ref, b1_ref,
                   w2fx_ref, u2f_ref, b2f_ref,
                   w2bx_ref, u2b_ref, b2b_ref,
                   out_ref):
    B = x_ref.shape[0]

    def lrelu(v):
        return jnp.where(v >= 0, v, 0.01 * v)          # F.leaky_relu default slope

    x = x_ref[...]                                      # (B, SEQ_LEN, D)

    # ---------------- Conv1d: static-slice im2col + ONE MXU dot + leaky_relu ---------------
    pats = []
    for b in range(B):
        xb = x[b]                                       # (SEQ_LEN, D)
        pats.append(jnp.concatenate([xb[k:k + L_CONV, :] for k in range(CNN_K)], axis=1))
    patches = jnp.concatenate(pats, axis=0)             # (B*L_CONV, K*D), row = b*L_CONV + l
    y = lrelu(_dot(patches, wc_ref[...]) + bc_ref[...]) # (B*L_CONV, CNN_CH)

    # ---------------- MaxPool1d: static row slices, emitted time-major (row = t*B + b) ------
    z_rows = []
    for t in range(T):
        per_b = []
        for b in range(B):
            r0 = b * L_CONV + t * MP_S
            w = y[r0:r0 + 1, :]
            for j in range(1, MP_K):
                w = jnp.maximum(w, y[r0 + j:r0 + j + 1, :])
            per_b.append(w)                              # (1, CNN_CH)
        z_rows.append(jnp.concatenate(per_b, axis=0))    # (B, CNN_CH)
    z = jnp.concatenate(z_rows, axis=0)                  # (T*B, CNN_CH), time-major

    # ---------------- LSTM layer one (forward direction), fused gates, unrolled -------------
    # hoisted input projection: one (T*B, C) x (C, 4H) dot; gate columns ordered (i, f, o, g)
    xg1 = _dot(z, w1x_ref[...]) + b1_ref[...]            # (T*B, 4H)
    w1h = w1h_ref[...]                                   # (H, 4H)

    h = jnp.zeros((B, H), jnp.float32)
    c = jnp.zeros((B, H), jnp.float32)
    h1_rows = []
    for t in range(T):                                   # fully unrolled, 1 dot per step
        g = xg1[t * B:(t + 1) * B, :] + _dot(h, w1h)     # (B, 4H)
        s = jax.nn.sigmoid(g[:, :3 * H])                 # i, f, o in one activation call
        gg = jnp.tanh(g[:, 3 * H:])                      # g (cell) gate
        c = s[:, H:2 * H] * c + s[:, :H] * gg
        h = s[:, 2 * H:3 * H] * jnp.tanh(c)
        h1_rows.append(h + h)                            # x[:, :, :H] + x[:, :, :H]
    h1 = jnp.concatenate(h1_rows, axis=0)                # (T*B, H), time-major

    # ---------------- LSTM layer two (bidirectional, hidden_size = 1) -----------------------
    xg2f = _dot(h1, w2fx_ref[...]) + b2f_ref[...]        # (T*B, 4) hoisted projections
    xg2b = _dot(h1, w2bx_ref[...]) + b2b_ref[...]        # (T*B, 4)
    u2f = u2f_ref[...]                                   # (1, 4) recurrent weights (scalars)
    u2b = u2b_ref[...]

    def cell1(xg_t, h, c, u):                            # hidden dim 1: pure VPU work
        g = xg_t + h * u                                 # (B, 4)
        s = jax.nn.sigmoid(g[:, 0:3])                    # i, f, o
        gg = jnp.tanh(g[:, 3:4])
        c = s[:, 1:2] * c + s[:, 0:1] * gg
        h = s[:, 2:3] * jnp.tanh(c)
        return h, c

    zero1 = jnp.zeros((B, 1), jnp.float32)
    hf = [None] * T
    h, c = zero1, zero1
    for t in range(T):                                   # forward direction
        h, c = cell1(xg2f[t * B:(t + 1) * B, :], h, c, u2f)
        hf[t] = h
    hb = [None] * T
    h, c = zero1, zero1
    for t in range(T - 1, -1, -1):                       # backward direction (values only)
        h, c = cell1(xg2b[t * B:(t + 1) * B, :], h, c, u2b)
        hb[t] = h

    # (x[:,:,0] + x[:,:,1]).unsqueeze(-1).permute(0,2,1) -> lane-dense (B, T) slab
    out_ref[...] = jnp.concatenate([hf[t] + hb[t] for t in range(T)], axis=1)


# --------------------------- parameter creation (deterministic) ----------------------------
def make_params(key):
    ks = jax.random.split(key, 14)

    def u(k, shape, fan):
        bound = 1.0 / np.sqrt(fan)
        return jax.random.uniform(k, shape, jnp.float32, -bound, bound)

    p = {}
    p['cnn_w']   = u(ks[0],  (CNN_CH, INPUT_DIM, CNN_K), INPUT_DIM * CNN_K)
    p['cnn_b']   = u(ks[1],  (CNN_CH,), INPUT_DIM * CNN_K)
    # LSTM layer one, forward direction only (reverse direction is dead in the forward pass)
    p['l1_wih']  = u(ks[2],  (4 * H, CNN_CH), H)
    p['l1_whh']  = u(ks[3],  (4 * H, H), H)
    p['l1_bih']  = u(ks[4],  (4 * H,), H)
    p['l1_bhh']  = u(ks[5],  (4 * H,), H)
    # LSTM layer two, both directions, hidden_size = 1
    p['l2f_wih'] = u(ks[6],  (4, H), 1)
    p['l2f_whh'] = u(ks[7],  (4, 1), 1)
    p['l2f_bih'] = u(ks[8],  (4,), 1)
    p['l2f_bhh'] = u(ks[9],  (4,), 1)
    p['l2b_wih'] = u(ks[10], (4, H), 1)
    p['l2b_whh'] = u(ks[11], (4, 1), 1)
    p['l2b_bih'] = u(ks[12], (4,), 1)
    p['l2b_bhh'] = u(ks[13], (4,), 1)
    return p


def pack_operands(p):
    """Host-side, one-time repacking of the PyTorch-layout weights for the kernel."""
    # Conv1d weight (C, D, K) -> (K*D, C) with rows ordered k-major, d-minor (matches im2col)
    wc = jnp.transpose(p['cnn_w'], (2, 1, 0)).reshape(CNN_K * INPUT_DIM, CNN_CH)
    bc = p['cnn_b'][None, :]                                        # (1, C)

    def fuse_ifog(w, hdim):
        # (4*hdim, in_dim) with PyTorch gate order i,f,g,o -> (in_dim, 4*hdim), cols (i,f,o,g)
        i_, f_, g_, o_ = (w[k * hdim:(k + 1) * hdim, :] for k in range(4))
        return jnp.concatenate([i_.T, f_.T, o_.T, g_.T], axis=1)

    def fuse_bias(bih, bhh, hdim):
        b = bih + bhh
        i_, f_, g_, o_ = (b[k * hdim:(k + 1) * hdim] for k in range(4))
        return jnp.concatenate([i_, f_, o_, g_])[None, :]           # (1, 4*hdim)

    w1x = fuse_ifog(p['l1_wih'], H)                                 # (C, 4H)
    w1h = fuse_ifog(p['l1_whh'], H)                                 # (H, 4H)
    b1  = fuse_bias(p['l1_bih'], p['l1_bhh'], H)                    # (1, 4H)

    w2fx = fuse_ifog(p['l2f_wih'], 1)                               # (H, 4)
    u2f  = fuse_ifog(p['l2f_whh'], 1)                               # (1, 4)
    b2f  = fuse_bias(p['l2f_bih'], p['l2f_bhh'], 1)                 # (1, 4)
    w2bx = fuse_ifog(p['l2b_wih'], 1)
    u2b  = fuse_ifog(p['l2b_whh'], 1)
    b2b  = fuse_bias(p['l2b_bih'], p['l2b_bhh'], 1)

    return (wc, bc, w1x, w1h, b1, w2fx, u2f, b2f, w2bx, u2b, b2b)


# ----------------------------------- Pallas wrapper ----------------------------------------
def _full_block(a):
    nd = a.ndim
    return pl.BlockSpec(a.shape, lambda i, _nd=nd: (0,) * _nd)


@jax.jit
def encoder_forward(x, ops):
    B = x.shape[0]
    operands = (x,) + tuple(ops)

    lat = pl.pallas_call(
        encoder_kernel,
        out_shape=jax.ShapeDtypeStruct((B, T), jnp.float32),
        grid_spec=pltpu.PrefetchScalarGridSpec(
            num_scalar_prefetch=0,
            grid=(1,),                                   # single invocation, batch vectorized
            in_specs=[_full_block(a) for a in operands],
            out_specs=pl.BlockSpec((B, T), lambda i: (0, 0)),
        ),
        compiler_params=pltpu.CompilerParams(dimension_semantics=("arbitrary",)),
    )(*operands)

    # module returns x.permute(0, 2, 1) -> (B, 1, T); kernel emits lane-dense (B, T)
    return lat[:, None, :]


# ------------------------------- pure numpy (fp64) reference --------------------------------
def reference_forward_np(x, params):
    x = np.asarray(x, np.float64)
    P = {k: np.asarray(v, np.float64) for k, v in params.items()}

    def lrelu(v):
        return np.where(v >= 0, v, 0.01 * v)

    def sigmoid(v):
        return 1.0 / (1.0 + np.exp(-v))

    B = x.shape[0]
    # Conv1d (on x.permute(0,2,1)) + leaky_relu, expressed in (B, L, C) layout
    y = np.zeros((B, L_CONV, CNN_CH))
    for t in range(L_CONV):
        seg = x[:, t * CNN_S:t * CNN_S + CNN_K, :]                 # (B, K, D)
        y[:, t, :] = np.einsum('bkd,cdk->bc', seg, P['cnn_w']) + P['cnn_b']
    y = lrelu(y)
    # MaxPool1d
    z = np.stack([y[:, t * MP_S:t * MP_S + MP_K, :].max(axis=1) for t in range(T)], axis=1)

    def run_lstm(seq, wih, whh, bih, bhh, hdim, reverse=False):
        idxs = range(seq.shape[1] - 1, -1, -1) if reverse else range(seq.shape[1])
        h = np.zeros((seq.shape[0], hdim))
        c = np.zeros((seq.shape[0], hdim))
        outs = [None] * seq.shape[1]
        for t in idxs:
            g = seq[:, t, :] @ wih.T + h @ whh.T + bih + bhh
            i = sigmoid(g[:, :hdim]); f = sigmoid(g[:, hdim:2 * hdim])
            gg = np.tanh(g[:, 2 * hdim:3 * hdim]); o = sigmoid(g[:, 3 * hdim:])
            c = f * c + i * gg
            h = o * np.tanh(c)
            outs[t] = h
        return np.stack(outs, axis=1)

    h1 = run_lstm(z, P['l1_wih'], P['l1_whh'], P['l1_bih'], P['l1_bhh'], H)
    zz = h1 + h1                                                    # x[:, :, :H] + x[:, :, :H]
    hf = run_lstm(zz, P['l2f_wih'], P['l2f_whh'], P['l2f_bih'], P['l2f_bhh'], 1)
    hb = run_lstm(zz, P['l2b_wih'], P['l2b_whh'], P['l2b_bih'], P['l2b_bhh'], 1, reverse=True)
    lat = hf + hb                                                   # (B, T, 1)
    return np.transpose(lat, (0, 2, 1))                             # (B, 1, T)


# ------------------------------------------ main --------------------------------------------
if __name__ == "__main__":
    key = jax.random.PRNGKey(0)
    kx, kp = jax.random.split(key)
    x = jax.random.normal(kx, (BATCH, SEQ_LEN, INPUT_DIM), jnp.float32)

    params = make_params(kp)
    ops = pack_operands(params)          # host-side packing, done once (hoisted out of calls)

    out = encoder_forward(x, ops)
    jax.block_until_ready(out)

    assert out.shape == (BATCH, 1, T)

    ref = reference_forward_np(x, params)
    np.testing.assert_allclose(np.asarray(out), ref.astype(np.float32), rtol=1e-3, atol=1e-3)

    print("KERNEL_OK")
</pallas_src>

<mosaic_0001>
module attributes {stable_mosaic.version = 11 : i64} {
  func.func @encoder_kernel(%arg0: i32, %arg1: memref<2x16x4xf32, #tpu.memory_space<vmem>>, %arg2: memref<12x8xf32, #tpu.memory_space<vmem>>, %arg3: memref<1x8xf32, #tpu.memory_space<vmem>>, %arg4: memref<8x32xf32, #tpu.memory_space<vmem>>, %arg5: memref<8x32xf32, #tpu.memory_space<vmem>>, %arg6: memref<1x32xf32, #tpu.memory_space<vmem>>, %arg7: memref<8x4xf32, #tpu.memory_space<vmem>>, %arg8: memref<1x4xf32, #tpu.memory_space<vmem>>, %arg9: memref<1x4xf32, #tpu.memory_space<vmem>>, %arg10: memref<8x4xf32, #tpu.memory_space<vmem>>, %arg11: memref<1x4xf32, #tpu.memory_space<vmem>>, %arg12: memref<1x4xf32, #tpu.memory_space<vmem>>, %arg13: memref<2x7xf32, #tpu.memory_space<vmem>>) attributes {dimension_semantics = [#tpu.dimension_semantics<arbitrary>], iteration_bounds = array<i64: 1>, scalar_prefetch = 0 : i64, scratch_operands = 0 : i64, tpu.core_type = #tpu.core_type<tc>, window_params = [{pipeline_mode = #tpu.pipeline_mode<synchronous>, transform_indices = @transform_0, window_bounds = array<i64: 2, 16, 4>}, {pipeline_mode = #tpu.pipeline_mode<synchronous>, transform_indices = @transform_1, window_bounds = array<i64: 12, 8>}, {pipeline_mode = #tpu.pipeline_mode<synchronous>, transform_indices = @transform_2, window_bounds = array<i64: 1, 8>}, {pipeline_mode = #tpu.pipeline_mode<synchronous>, transform_indices = @transform_3, window_bounds = array<i64: 8, 32>}, {pipeline_mode = #tpu.pipeline_mode<synchronous>, transform_indices = @transform_4, window_bounds = array<i64: 8, 32>}, {pipeline_mode = #tpu.pipeline_mode<synchronous>, transform_indices = @transform_5, window_bounds = array<i64: 1, 32>}, {pipeline_mode = #tpu.pipeline_mode<synchronous>, transform_indices = @transform_6, window_bounds = array<i64: 8, 4>}, {pipeline_mode = #tpu.pipeline_mode<synchronous>, transform_indices = @transform_7, window_bounds = array<i64: 1, 4>}, {pipeline_mode = #tpu.pipeline_mode<synchronous>, transform_indices = @transform_8, window_bounds = array<i64: 1, 4>}, {pipeline_mode = #tpu.pipeline_mode<synchronous>, transform_indices = @transform_9, window_bounds = array<i64: 8, 4>}, {pipeline_mode = #tpu.pipeline_mode<synchronous>, transform_indices = @transform_10, window_bounds = array<i64: 1, 4>}, {pipeline_mode = #tpu.pipeline_mode<synchronous>, transform_indices = @transform_11, window_bounds = array<i64: 1, 4>}, {pipeline_mode = #tpu.pipeline_mode<synchronous>, transform_indices = @transform_12, window_bounds = array<i64: 2, 7>}]} {
    %c0 = arith.constant 0 : index
    %c0_0 = arith.constant 0 : index
    %c0_1 = arith.constant 0 : index
    %0 = vector.load %arg1[%c0, %c0_0, %c0_1] : memref<2x16x4xf32, #tpu.memory_space<vmem>>, vector<2x16x4xf32>
    %1 = vector.extract_strided_slice %0 {offsets = [0, 0, 0], sizes = [1, 16, 4], strides = [1, 1, 1]} : vector<2x16x4xf32> to vector<1x16x4xf32>
    %2 = vector.shape_cast %1 : vector<1x16x4xf32> to vector<16x4xf32>
    %3 = vector.extract_strided_slice %2 {offsets = [0, 0], sizes = [14, 4], strides = [1, 1]} : vector<16x4xf32> to vector<14x4xf32>
    %4 = vector.extract_strided_slice %2 {offsets = [1, 0], sizes = [14, 4], strides = [1, 1]} : vector<16x4xf32> to vector<14x4xf32>
    %5 = vector.extract_strided_slice %2 {offsets = [2, 0], sizes = [14, 4], strides = [1, 1]} : vector<16x4xf32> to vector<14x4xf32>
    %6 = tpu.concatenate %3, %4, %5 in 1 : vector<14x4xf32>, vector<14x4xf32>, vector<14x4xf32> -> vector<14x12xf32>
    %7 = vector.extract_strided_slice %0 {offsets = [1, 0, 0], sizes = [1, 16, 4], strides = [1, 1, 1]} : vector<2x16x4xf32> to vector<1x16x4xf32>
    %8 = vector.shape_cast %7 : vector<1x16x4xf32> to vector<16x4xf32>
    %9 = vector.extract_strided_slice %8 {offsets = [0, 0], sizes = [14, 4], strides = [1, 1]} : vector<16x4xf32> to vector<14x4xf32>
    %10 = vector.extract_strided_slice %8 {offsets = [1, 0], sizes = [14, 4], strides = [1, 1]} : vector<16x4xf32> to vector<14x4xf32>
    %11 = vector.extract_strided_slice %8 {offsets = [2, 0], sizes = [14, 4], strides = [1, 1]} : vector<16x4xf32> to vector<14x4xf32>
    %12 = tpu.concatenate %9, %10, %11 in 1 : vector<14x4xf32>, vector<14x4xf32>, vector<14x4xf32> -> vector<14x12xf32>
    %13 = tpu.concatenate %6, %12 in 0 : vector<14x12xf32>, vector<14x12xf32> -> vector<28x12xf32>
    %c0_2 = arith.constant 0 : index
    %c0_3 = arith.constant 0 : index
    %14 = vector.load %arg2[%c0_2, %c0_3] : memref<12x8xf32, #tpu.memory_space<vmem>>, vector<12x8xf32>
    %cst = arith.constant dense<0.000000e+00> : vector<28x8xf32>
    %15 = tpu.matmul %13, %14, %cst {dimension_numbers = #tpu.dot_dimension_numbers<[1], [0], [0], [1], [0, 0, 1, 1], [], []>, precision = #tpu.contract_precision<fp32>} : vector<28x12xf32>, vector<12x8xf32>, vector<28x8xf32> -> vector<28x8xf32>
    %c0_4 = arith.constant 0 : index
    %c0_5 = arith.constant 0 : index
    %16 = vector.load %arg3[%c0_4, %c0_5] : memref<1x8xf32, #tpu.memory_space<vmem>>, vector<1x8xf32>
    %17 = vector.broadcast %16 : vector<1x8xf32> to vector<28x8xf32>
    %18 = arith.addf %15, %17 : vector<28x8xf32>
    %cst_6 = arith.constant 0.000000e+00 : f32
    %19 = vector.broadcast %cst_6 : f32 to vector<28x8xf32>
    %20 = arith.cmpf oge, %18, %19 : vector<28x8xf32>
    %cst_7 = arith.constant 0.00999999977 : f32
    %21 = vector.broadcast %cst_7 : f32 to vector<28x8xf32>
    %22 = arith.mulf %21, %18 : vector<28x8xf32>
    %23 = arith.select %20, %18, %22 : vector<28x8xi1>, vector<28x8xf32>
    %24 = vector.extract_strided_slice %23 {offsets = [0, 0], sizes = [1, 8], strides = [1, 1]} : vector<28x8xf32> to vector<1x8xf32>
    %25 = vector.extract_strided_slice %23 {offsets = [1, 0], sizes = [1, 8], strides = [1, 1]} : vector<28x8xf32> to vector<1x8xf32>
    %26 = arith.maximumf %24, %25 : vector<1x8xf32>
    %27 = vector.extract_strided_slice %23 {offsets = [14, 0], sizes = [1, 8], strides = [1, 1]} : vector<28x8xf32> to vector<1x8xf32>
    %28 = vector.extract_strided_slice %23 {offsets = [15, 0], sizes = [1, 8], strides = [1, 1]} : vector<28x8xf32> to vector<1x8xf32>
    %29 = arith.maximumf %27, %28 : vector<1x8xf32>
    %30 = tpu.concatenate %26, %29 in 0 : vector<1x8xf32>, vector<1x8xf32> -> vector<2x8xf32>
    %31 = vector.extract_strided_slice %23 {offsets = [2, 0], sizes = [1, 8], strides = [1, 1]} : vector<28x8xf32> to vector<1x8xf32>
    %32 = vector.extract_strided_slice %23 {offsets = [3, 0], sizes = [1, 8], strides = [1, 1]} : vector<28x8xf32> to vector<1x8xf32>
    %33 = arith.maximumf %31, %32 : vector<1x8xf32>
    %34 = vector.extract_strided_slice %23 {offsets = [16, 0], sizes = [1, 8], strides = [1, 1]} : vector<28x8xf32> to vector<1x8xf32>
    %35 = vector.extract_strided_slice %23 {offsets = [17, 0], sizes = [1, 8], strides = [1, 1]} : vector<28x8xf32> to vector<1x8xf32>
    %36 = arith.maximumf %34, %35 : vector<1x8xf32>
    %37 = tpu.concatenate %33, %36 in 0 : vector<1x8xf32>, vector<1x8xf32> -> vector<2x8xf32>
    %38 = vector.extract_strided_slice %23 {offsets = [4, 0], sizes = [1, 8], strides = [1, 1]} : vector<28x8xf32> to vector<1x8xf32>
    %39 = vector.extract_strided_slice %23 {offsets = [5, 0], sizes = [1, 8], strides = [1, 1]} : vector<28x8xf32> to vector<1x8xf32>
    %40 = arith.maximumf %38, %39 : vector<1x8xf32>
    %41 = vector.extract_strided_slice %23 {offsets = [18, 0], sizes = [1, 8], strides = [1, 1]} : vector<28x8xf32> to vector<1x8xf32>
    %42 = vector.extract_strided_slice %23 {offsets = [19, 0], sizes = [1, 8], strides = [1, 1]} : vector<28x8xf32> to vector<1x8xf32>
    %43 = arith.maximumf %41, %42 : vector<1x8xf32>
    %44 = tpu.concatenate %40, %43 in 0 : vector<1x8xf32>, vector<1x8xf32> -> vector<2x8xf32>
    %45 = vector.extract_strided_slice %23 {offsets = [6, 0], sizes = [1, 8], strides = [1, 1]} : vector<28x8xf32> to vector<1x8xf32>
    %46 = vector.extract_strided_slice %23 {offsets = [7, 0], sizes = [1, 8], strides = [1, 1]} : vector<28x8xf32> to vector<1x8xf32>
    %47 = arith.maximumf %45, %46 : vector<1x8xf32>
    %48 = vector.extract_strided_slice %23 {offsets = [20, 0], sizes = [1, 8], strides = [1, 1]} : vector<28x8xf32> to vector<1x8xf32>
    %49 = vector.extract_strided_slice %23 {offsets = [21, 0], sizes = [1, 8], strides = [1, 1]} : vector<28x8xf32> to vector<1x8xf32>
    %50 = arith.maximumf %48, %49 : vector<1x8xf32>
    %51 = tpu.concatenate %47, %50 in 0 : vector<1x8xf32>, vector<1x8xf32> -> vector<2x8xf32>
    %52 = vector.extract_strided_slice %23 {offsets = [8, 0], sizes = [1, 8], strides = [1, 1]} : vector<28x8xf32> to vector<1x8xf32>
    %53 = vector.extract_strided_slice %23 {offsets = [9, 0], sizes = [1, 8], strides = [1, 1]} : vector<28x8xf32> to vector<1x8xf32>
    %54 = arith.maximumf %52, %53 : vector<1x8xf32>
    %55 = vector.extract_strided_slice %23 {offsets = [22, 0], sizes = [1, 8], strides = [1, 1]} : vector<28x8xf32> to vector<1x8xf32>
    %56 = vector.extract_strided_slice %23 {offsets = [23, 0], sizes = [1, 8], strides = [1, 1]} : vector<28x8xf32> to vector<1x8xf32>
    %57 = arith.maximumf %55, %56 : vector<1x8xf32>
    %58 = tpu.concatenate %54, %57 in 0 : vector<1x8xf32>, vector<1x8xf32> -> vector<2x8xf32>
    %59 = vector.extract_strided_slice %23 {offsets = [10, 0], sizes = [1, 8], strides = [1, 1]} : vector<28x8xf32> to vector<1x8xf32>
    %60 = vector.extract_strided_slice %23 {offsets = [11, 0], sizes = [1, 8], strides = [1, 1]} : vector<28x8xf32> to vector<1x8xf32>
    %61 = arith.maximumf %59, %60 : vector<1x8xf32>
    %62 = vector.extract_strided_slice %23 {offsets = [24, 0], sizes = [1, 8], strides = [1, 1]} : vector<28x8xf32> to vector<1x8xf32>
    %63 = vector.extract_strided_slice %23 {offsets = [25, 0], sizes = [1, 8], strides = [1, 1]} : vector<28x8xf32> to vector<1x8xf32>
    %64 = arith.maximumf %62, %63 : vector<1x8xf32>
    %65 = tpu.concatenate %61, %64 in 0 : vector<1x8xf32>, vector<1x8xf32> -> vector<2x8xf32>
    %66 = vector.extract_strided_slice %23 {offsets = [12, 0], sizes = [1, 8], strides = [1, 1]} : vector<28x8xf32> to vector<1x8xf32>
    %67 = vector.extract_strided_slice %23 {offsets = [13, 0], sizes = [1, 8], strides = [1, 1]} : vector<28x8xf32> to vector<1x8xf32>
    %68 = arith.maximumf %66, %67 : vector<1x8xf32>
    %69 = vector.extract_strided_slice %23 {offsets = [26, 0], sizes = [1, 8], strides = [1, 1]} : vector<28x8xf32> to vector<1x8xf32>
    %70 = vector.extract_strided_slice %23 {offsets = [27, 0], sizes = [1, 8], strides = [1, 1]} : vector<28x8xf32> to vector<1x8xf32>
    %71 = arith.maximumf %69, %70 : vector<1x8xf32>
    %72 = tpu.concatenate %68, %71 in 0 : vector<1x8xf32>, vector<1x8xf32> -> vector<2x8xf32>
    %73 = tpu.concatenate %30, %37, %44, %51, %58, %65, %72 in 0 : vector<2x8xf32>, vector<2x8xf32>, vector<2x8xf32>, vector<2x8xf32>, vector<2x8xf32>, vector<2x8xf32>, vector<2x8xf32> -> vector<14x8xf32>
    %c0_8 = arith.constant 0 : index
    %c0_9 = arith.constant 0 : index
    %74 = vector.load %arg4[%c0_8, %c0_9] : memref<8x32xf32, #tpu.memory_space<vmem>>, vector<8x32xf32>
    %cst_10 = arith.constant dense<0.000000e+00> : vector<14x32xf32>
    %75 = tpu.matmul %73, %74, %cst_10 {dimension_numbers = #tpu.dot_dimension_numbers<[1], [0], [0], [1], [0, 0, 1, 1], [], []>, precision = #tpu.contract_precision<fp32>} : vector<14x8xf32>, vector<8x32xf32>, vector<14x32xf32> -> vector<14x32xf32>
    %c0_11 = arith.constant 0 : index
    %c0_12 = arith.constant 0 : index
    %76 = vector.load %arg6[%c0_11, %c0_12] : memref<1x32xf32, #tpu.memory_space<vmem>>, vector<1x32xf32>
    %77 = vector.broadcast %76 : vector<1x32xf32> to vector<14x32xf32>
    %78 = arith.addf %75, %77 : vector<14x32xf32>
    %c0_13 = arith.constant 0 : index
    %c0_14 = arith.constant 0 : index
    %79 = vector.load %arg5[%c0_13, %c0_14] : memref<8x32xf32, #tpu.memory_space<vmem>>, vector<8x32xf32>
    %cst_15 = arith.constant 0.000000e+00 : f32
    %80 = vector.broadcast %cst_15 : f32 to vector<2x8xf32>
    %cst_16 = arith.constant 0.000000e+00 : f32
    %81 = vector.broadcast %cst_16 : f32 to vector<2x8xf32>
    %82 = vector.extract_strided_slice %78 {offsets = [0, 0], sizes = [2, 32], strides = [1, 1]} : vector<14x32xf32> to vector<2x32xf32>
    %cst_17 = arith.constant dense<0.000000e+00> : vector<2x32xf32>
    %83 = tpu.matmul %80, %79, %cst_17 {dimension_numbers = #tpu.dot_dimension_numbers<[1], [0], [0], [1], [0, 0, 1, 1], [], []>, precision = #tpu.contract_precision<fp32>} : vector<2x8xf32>, vector<8x32xf32>, vector<2x32xf32> -> vector<2x32xf32>
    %84 = arith.addf %82, %83 : vector<2x32xf32>
    %85 = vector.extract_strided_slice %84 {offsets = [0, 0], sizes = [2, 24], strides = [1, 1]} : vector<2x32xf32> to vector<2x24xf32>
    %86 = arith.negf %85 : vector<2x24xf32>
    %87 = math.exp %86 : vector<2x24xf32>
    %cst_18 = arith.constant 1.000000e+00 : f32
    %88 = vector.broadcast %cst_18 : f32 to vector<2x24xf32>
    %89 = arith.addf %88, %87 : vector<2x24xf32>
    %90 = arith.divf %88, %89 : vector<2x24xf32>
    %91 = vector.extract_strided_slice %84 {offsets = [0, 24], sizes = [2, 8], strides = [1, 1]} : vector<2x32xf32> to vector<2x8xf32>
    %92 = math.tanh %91 : vector<2x8xf32>
    %93 = vector.extract_strided_slice %90 {offsets = [0, 8], sizes = [2, 8], strides = [1, 1]} : vector<2x24xf32> to vector<2x8xf32>
    %94 = arith.mulf %93, %81 : vector<2x8xf32>
    %95 = vector.extract_strided_slice %90 {offsets = [0, 0], sizes = [2, 8], strides = [1, 1]} : vector<2x24xf32> to vector<2x8xf32>
    %96 = arith.mulf %95, %92 : vector<2x8xf32>
    %97 = arith.addf %94, %96 : vector<2x8xf32>
    %98 = vector.extract_strided_slice %90 {offsets = [0, 16], sizes = [2, 8], strides = [1, 1]} : vector<2x24xf32> to vector<2x8xf32>
    %99 = math.tanh %97 : vector<2x8xf32>
    %100 = arith.mulf %98, %99 : vector<2x8xf32>
    %101 = arith.addf %100, %100 : vector<2x8xf32>
    %102 = vector.extract_strided_slice %78 {offsets = [2, 0], sizes = [2, 32], strides = [1, 1]} : vector<14x32xf32> to vector<2x32xf32>
    %cst_19 = arith.constant dense<0.000000e+00> : vector<2x32xf32>
    %103 = tpu.matmul %100, %79, %cst_19 {dimension_numbers = #tpu.dot_dimension_numbers<[1], [0], [0], [1], [0, 0, 1, 1], [], []>, precision = #tpu.contract_precision<fp32>} : vector<2x8xf32>, vector<8x32xf32>, vector<2x32xf32> -> vector<2x32xf32>
    %104 = arith.addf %102, %103 : vector<2x32xf32>
    %105 = vector.extract_strided_slice %104 {offsets = [0, 0], sizes = [2, 24], strides = [1, 1]} : vector<2x32xf32> to vector<2x24xf32>
    %106 = arith.negf %105 : vector<2x24xf32>
    %107 = math.exp %106 : vector<2x24xf32>
    %cst_20 = arith.constant 1.000000e+00 : f32
    %108 = vector.broadcast %cst_20 : f32 to vector<2x24xf32>
    %109 = arith.addf %108, %107 : vector<2x24xf32>
    %110 = arith.divf %108, %109 : vector<2x24xf32>
    %111 = vector.extract_strided_slice %104 {offsets = [0, 24], sizes = [2, 8], strides = [1, 1]} : vector<2x32xf32> to vector<2x8xf32>
    %112 = math.tanh %111 : vector<2x8xf32>
    %113 = vector.extract_strided_slice %110 {offsets = [0, 8], sizes = [2, 8], strides = [1, 1]} : vector<2x24xf32> to vector<2x8xf32>
    %114 = arith.mulf %113, %97 : vector<2x8xf32>
    %115 = vector.extract_strided_slice %110 {offsets = [0, 0], sizes = [2, 8], strides = [1, 1]} : vector<2x24xf32> to vector<2x8xf32>
    %116 = arith.mulf %115, %112 : vector<2x8xf32>
    %117 = arith.addf %114, %116 : vector<2x8xf32>
    %118 = vector.extract_strided_slice %110 {offsets = [0, 16], sizes = [2, 8], strides = [1, 1]} : vector<2x24xf32> to vector<2x8xf32>
    %119 = math.tanh %117 : vector<2x8xf32>
    %120 = arith.mulf %118, %119 : vector<2x8xf32>
    %121 = arith.addf %120, %120 : vector<2x8xf32>
    %122 = vector.extract_strided_slice %78 {offsets = [4, 0], sizes = [2, 32], strides = [1, 1]} : vector<14x32xf32> to vector<2x32xf32>
    %cst_21 = arith.constant dense<0.000000e+00> : vector<2x32xf32>
    %123 = tpu.matmul %120, %79, %cst_21 {dimension_numbers = #tpu.dot_dimension_numbers<[1], [0], [0], [1], [0, 0, 1, 1], [], []>, precision = #tpu.contract_precision<fp32>} : vector<2x8xf32>, vector<8x32xf32>, vector<2x32xf32> -> vector<2x32xf32>
    %124 = arith.addf %122, %123 : vector<2x32xf32>
    %125 = vector.extract_strided_slice %124 {offsets = [0, 0], sizes = [2, 24], strides = [1, 1]} : vector<2x32xf32> to vector<2x24xf32>
    %126 = arith.negf %125 : vector<2x24xf32>
    %127 = math.exp %126 : vector<2x24xf32>
    %cst_22 = arith.constant 1.000000e+00 : f32
    %128 = vector.broadcast %cst_22 : f32 to vector<2x24xf32>
    %129 = arith.addf %128, %127 : vector<2x24xf32>
    %130 = arith.divf %128, %129 : vector<2x24xf32>
    %131 = vector.extract_strided_slice %124 {offsets = [0, 24], sizes = [2, 8], strides = [1, 1]} : vector<2x32xf32> to vector<2x8xf32>
    %132 = math.tanh %131 : vector<2x8xf32>
    %133 = vector.extract_strided_slice %130 {offsets = [0, 8], sizes = [2, 8], strides = [1, 1]} : vector<2x24xf32> to vector<2x8xf32>
    %134 = arith.mulf %133, %117 : vector<2x8xf32>
    %135 = vector.extract_strided_slice %130 {offsets = [0, 0], sizes = [2, 8], strides = [1, 1]} : vector<2x24xf32> to vector<2x8xf32>
    %136 = arith.mulf %135, %132 : vector<2x8xf32>
    %137 = arith.addf %134, %136 : vector<2x8xf32>
    %138 = vector.extract_strided_slice %130 {offsets = [0, 16], sizes = [2, 8], strides = [1, 1]} : vector<2x24xf32> to vector<2x8xf32>
    %139 = math.tanh %137 : vector<2x8xf32>
    %140 = arith.mulf %138, %139 : vector<2x8xf32>
    %141 = arith.addf %140, %140 : vector<2x8xf32>
    %142 = vector.extract_strided_slice %78 {offsets = [6, 0], sizes = [2, 32], strides = [1, 1]} : vector<14x32xf32> to vector<2x32xf32>
    %cst_23 = arith.constant dense<0.000000e+00> : vector<2x32xf32>
    %143 = tpu.matmul %140, %79, %cst_23 {dimension_numbers = #tpu.dot_dimension_numbers<[1], [0], [0], [1], [0, 0, 1, 1], [], []>, precision = #tpu.contract_precision<fp32>} : vector<2x8xf32>, vector<8x32xf32>, vector<2x32xf32> -> vector<2x32xf32>
    %144 = arith.addf %142, %143 : vector<2x32xf32>
    %145 = vector.extract_strided_slice %144 {offsets = [0, 0], sizes = [2, 24], strides = [1, 1]} : vector<2x32xf32> to vector<2x24xf32>
    %146 = arith.negf %145 : vector<2x24xf32>
    %147 = math.exp %146 : vector<2x24xf32>
    %cst_24 = arith.constant 1.000000e+00 : f32
    %148 = vector.broadcast %cst_24 : f32 to vector<2x24xf32>
    %149 = arith.addf %148, %147 : vector<2x24xf32>
    %150 = arith.divf %148, %149 : vector<2x24xf32>
    %151 = vector.extract_strided_slice %144 {offsets = [0, 24], sizes = [2, 8], strides = [1, 1]} : vector<2x32xf32> to vector<2x8xf32>
    %152 = math.tanh %151 : vector<2x8xf32>
    %153 = vector.extract_strided_slice %150 {offsets = [0, 8], sizes = [2, 8], strides = [1, 1]} : vector<2x24xf32> to vector<2x8xf32>
    %154 = arith.mulf %153, %137 : vector<2x8xf32>
    %155 = vector.extract_strided_slice %150 {offsets = [0, 0], sizes = [2, 8], strides = [1, 1]} : vector<2x24xf32> to vector<2x8xf32>
    %156 = arith.mulf %155, %152 : vector<2x8xf32>
    %157 = arith.addf %154, %156 : vector<2x8xf32>
    %158 = vector.extract_strided_slice %150 {offsets = [0, 16], sizes = [2, 8], strides = [1, 1]} : vector<2x24xf32> to vector<2x8xf32>
    %159 = math.tanh %157 : vector<2x8xf32>
    %160 = arith.mulf %158, %159 : vector<2x8xf32>
    %161 = arith.addf %160, %160 : vector<2x8xf32>
    %162 = vector.extract_strided_slice %78 {offsets = [8, 0], sizes = [2, 32], strides = [1, 1]} : vector<14x32xf32> to vector<2x32xf32>
    %cst_25 = arith.constant dense<0.000000e+00> : vector<2x32xf32>
    %163 = tpu.matmul %160, %79, %cst_25 {dimension_numbers = #tpu.dot_dimension_numbers<[1], [0], [0], [1], [0, 0, 1, 1], [], []>, precision = #tpu.contract_precision<fp32>} : vector<2x8xf32>, vector<8x32xf32>, vector<2x32xf32> -> vector<2x32xf32>
    %164 = arith.addf %162, %163 : vector<2x32xf32>
    %165 = vector.extract_strided_slice %164 {offsets = [0, 0], sizes = [2, 24], strides = [1, 1]} : vector<2x32xf32> to vector<2x24xf32>
    %166 = arith.negf %165 : vector<2x24xf32>
    %167 = math.exp %166 : vector<2x24xf32>
    %cst_26 = arith.constant 1.000000e+00 : f32
    %168 = vector.broadcast %cst_26 : f32 to vector<2x24xf32>
    %169 = arith.addf %168, %167 : vector<2x24xf32>
    %170 = arith.divf %168, %169 : vector<2x24xf32>
    %171 = vector.extract_strided_slice %164 {offsets = [0, 24], sizes = [2, 8], strides = [1, 1]} : vector<2x32xf32> to vector<2x8xf32>
    %172 = math.tanh %171 : vector<2x8xf32>
    %173 = vector.extract_strided_slice %170 {offsets = [0, 8], sizes = [2, 8], strides = [1, 1]} : vector<2x24xf32> to vector<2x8xf32>
    %174 = arith.mulf %173, %157 : vector<2x8xf32>
    %175 = vector.extract_strided_slice %170 {offsets = [0, 0], sizes = [2, 8], strides = [1, 1]} : vector<2x24xf32> to vector<2x8xf32>
    %176 = arith.mulf %175, %172 : vector<2x8xf32>
    %177 = arith.addf %174, %176 : vector<2x8xf32>
    %178 = vector.extract_strided_slice %170 {offsets = [0, 16], sizes = [2, 8], strides = [1, 1]} : vector<2x24xf32> to vector<2x8xf32>
    %179 = math.tanh %177 : vector<2x8xf32>
    %180 = arith.mulf %178, %179 : vector<2x8xf32>
    %181 = arith.addf %180, %180 : vector<2x8xf32>
    %182 = vector.extract_strided_slice %78 {offsets = [10, 0], sizes = [2, 32], strides = [1, 1]} : vector<14x32xf32> to vector<2x32xf32>
    %cst_27 = arith.constant dense<0.000000e+00> : vector<2x32xf32>
    %183 = tpu.matmul %180, %79, %cst_27 {dimension_numbers = #tpu.dot_dimension_numbers<[1], [0], [0], [1], [0, 0, 1, 1], [], []>, precision = #tpu.contract_precision<fp32>} : vector<2x8xf32>, vector<8x32xf32>, vector<2x32xf32> -> vector<2x32xf32>
    %184 = arith.addf %182, %183 : vector<2x32xf32>
    %185 = vector.extract_strided_slice %184 {offsets = [0, 0], sizes = [2, 24], strides = [1, 1]} : vector<2x32xf32> to vector<2x24xf32>
    %186 = arith.negf %185 : vector<2x24xf32>
    %187 = math.exp %186 : vector<2x24xf32>
    %cst_28 = arith.constant 1.000000e+00 : f32
    %188 = vector.broadcast %cst_28 : f32 to vector<2x24xf32>
    %189 = arith.addf %188, %187 : vector<2x24xf32>
    %190 = arith.divf %188, %189 : vector<2x24xf32>
    %191 = vector.extract_strided_slice %184 {offsets = [0, 24], sizes = [2, 8], strides = [1, 1]} : vector<2x32xf32> to vector<2x8xf32>
    %192 = math.tanh %191 : vector<2x8xf32>
    %193 = vector.extract_strided_slice %190 {offsets = [0, 8], sizes = [2, 8], strides = [1, 1]} : vector<2x24xf32> to vector<2x8xf32>
    %194 = arith.mulf %193, %177 : vector<2x8xf32>
    %195 = vector.extract_strided_slice %190 {offsets = [0, 0], sizes = [2, 8], strides = [1, 1]} : vector<2x24xf32> to vector<2x8xf32>
    %196 = arith.mulf %195, %192 : vector<2x8xf32>
    %197 = arith.addf %194, %196 : vector<2x8xf32>
    %198 = vector.extract_strided_slice %190 {offsets = [0, 16], sizes = [2, 8], strides = [1, 1]} : vector<2x24xf32> to vector<2x8xf32>
    %199 = math.tanh %197 : vector<2x8xf32>
    %200 = arith.mulf %198, %199 : vector<2x8xf32>
    %201 = arith.addf %200, %200 : vector<2x8xf32>
    %202 = vector.extract_strided_slice %78 {offsets = [12, 0], sizes = [2, 32], strides = [1, 1]} : vector<14x32xf32> to vector<2x32xf32>
    %cst_29 = arith.constant dense<0.000000e+00> : vector<2x32xf32>
    %203 = tpu.matmul %200, %79, %cst_29 {dimension_numbers = #tpu.dot_dimension_numbers<[1], [0], [0], [1], [0, 0, 1, 1], [], []>, precision = #tpu.contract_precision<fp32>} : vector<2x8xf32>, vector<8x32xf32>, vector<2x32xf32> -> vector<2x32xf32>
    %204 = arith.addf %202, %203 : vector<2x32xf32>
    %205 = vector.extract_strided_slice %204 {offsets = [0, 0], sizes = [2, 24], strides = [1, 1]} : vector<2x32xf32> to vector<2x24xf32>
    %206 = arith.negf %205 : vector<2x24xf32>
    %207 = math.exp %206 : vector<2x24xf32>
    %cst_30 = arith.constant 1.000000e+00 : f32
    %208 = vector.broadcast %cst_30 : f32 to vector<2x24xf32>
    %209 = arith.addf %208, %207 : vector<2x24xf32>
    %210 = arith.divf %208, %209 : vector<2x24xf32>
    %211 = vector.extract_strided_slice %204 {offsets = [0, 24], sizes = [2, 8], strides = [1, 1]} : vector<2x32xf32> to vector<2x8xf32>
    %212 = math.tanh %211 : vector<2x8xf32>
    %213 = vector.extract_strided_slice %210 {offsets = [0, 8], sizes = [2, 8], strides = [1, 1]} : vector<2x24xf32> to vector<2x8xf32>
    %214 = arith.mulf %213, %197 : vector<2x8xf32>
    %215 = vector.extract_strided_slice %210 {offsets = [0, 0], sizes = [2, 8], strides = [1, 1]} : vector<2x24xf32> to vector<2x8xf32>
    %216 = arith.mulf %215, %212 : vector<2x8xf32>
    %217 = arith.addf %214, %216 : vector<2x8xf32>
    %218 = vector.extract_strided_slice %210 {offsets = [0, 16], sizes = [2, 8], strides = [1, 1]} : vector<2x24xf32> to vector<2x8xf32>
    %219 = math.tanh %217 : vector<2x8xf32>
    %220 = arith.mulf %218, %219 : vector<2x8xf32>
    %221 = arith.addf %220, %220 : vector<2x8xf32>
    %222 = tpu.concatenate %101, %121, %141, %161, %181, %201, %221 in 0 : vector<2x8xf32>, vector<2x8xf32>, vector<2x8xf32>, vector<2x8xf32>, vector<2x8xf32>, vector<2x8xf32>, vector<2x8xf32> -> vector<14x8xf32>
    %c0_31 = arith.constant 0 : index
    %c0_32 = arith.constant 0 : index
    %223 = vector.load %arg7[%c0_31, %c0_32] : memref<8x4xf32, #tpu.memory_space<vmem>>, vector<8x4xf32>
    %cst_33 = arith.constant dense<0.000000e+00> : vector<14x4xf32>
    %224 = tpu.matmul %222, %223, %cst_33 {dimension_numbers = #tpu.dot_dimension_numbers<[1], [0], [0], [1], [0, 0, 1, 1], [], []>, precision = #tpu.contract_precision<fp32>} : vector<14x8xf32>, vector<8x4xf32>, vector<14x4xf32> -> vector<14x4xf32>
    %c0_34 = arith.constant 0 : index
    %c0_35 = arith.constant 0 : index
    %225 = vector.load %arg9[%c0_34, %c0_35] : memref<1x4xf32, #tpu.memory_space<vmem>>, vector<1x4xf32>
    %226 = vector.broadcast %225 : vector<1x4xf32> to vector<14x4xf32>
    %227 = arith.addf %224, %226 : vector<14x4xf32>
    %c0_36 = arith.constant 0 : index
    %c0_37 = arith.constant 0 : index
    %228 = vector.load %arg10[%c0_36, %c0_37] : memref<8x4xf32, #tpu.memory_space<vmem>>, vector<8x4xf32>
    %cst_38 = arith.constant dense<0.000000e+00> : vector<14x4xf32>
    %229 = tpu.matmul %222, %228, %cst_38 {dimension_numbers = #tpu.dot_dimension_numbers<[1], [0], [0], [1], [0, 0, 1, 1], [], []>, precision = #tpu.contract_precision<fp32>} : vector<14x8xf32>, vector<8x4xf32>, vector<14x4xf32> -> vector<14x4xf32>
    %c0_39 = arith.constant 0 : index
    %c0_40 = arith.constant 0 : index
    %230 = vector.load %arg12[%c0_39, %c0_40] : memref<1x4xf32, #tpu.memory_space<vmem>>, vector<1x4xf32>
    %231 = vector.broadcast %230 : vector<1x4xf32> to vector<14x4xf32>
    %232 = arith.addf %229, %231 : vector<14x4xf32>
    %c0_41 = arith.constant 0 : index
    %c0_42 = arith.constant 0 : index
    %233 = vector.load %arg8[%c0_41, %c0_42] : memref<1x4xf32, #tpu.memory_space<vmem>>, vector<1x4xf32>
    %c0_43 = arith.constant 0 : index
    %c0_44 = arith.constant 0 : index
    %234 = vector.load %arg11[%c0_43, %c0_44] : memref<1x4xf32, #tpu.memory_space<vmem>>, vector<1x4xf32>
    %cst_45 = arith.constant 0.000000e+00 : f32
    %235 = vector.broadcast %cst_45 : f32 to vector<2x1xf32>
    %236 = vector.extract_strided_slice %227 {offsets = [0, 0], sizes = [2, 4], strides = [1, 1]} : vector<14x4xf32> to vector<2x4xf32>
    %237 = vector.broadcast %235 : vector<2x1xf32> to vector<2x4xf32>
    %238 = vector.broadcast %233 : vector<1x4xf32> to vector<2x4xf32>
    %239 = arith.mulf %237, %238 : vector<2x4xf32>
    %240 = arith.addf %236, %239 : vector<2x4xf32>
    %241 = vector.extract_strided_slice %240 {offsets = [0, 0], sizes = [2, 3], strides = [1, 1]} : vector<2x4xf32> to vector<2x3xf32>
    %242 = arith.negf %241 : vector<2x3xf32>
    %243 = math.exp %242 : vector<2x3xf32>
    %cst_46 = arith.constant 1.000000e+00 : f32
    %244 = vector.broadcast %cst_46 : f32 to vector<2x3xf32>
    %245 = arith.addf %244, %243 : vector<2x3xf32>
    %246 = arith.divf %244, %245 : vector<2x3xf32>
    %247 = vector.extract_strided_slice %240 {offsets = [0, 3], sizes = [2, 1], strides = [1, 1]} : vector<2x4xf32> to vector<2x1xf32>
    %248 = math.tanh %247 : vector<2x1xf32>
    %249 = vector.extract_strided_slice %246 {offsets = [0, 1], sizes = [2, 1], strides = [1, 1]} : vector<2x3xf32> to vector<2x1xf32>
    %250 = arith.mulf %249, %235 : vector<2x1xf32>
    %251 = vector.extract_strided_slice %246 {offsets = [0, 0], sizes = [2, 1], strides = [1, 1]} : vector<2x3xf32> to vector<2x1xf32>
    %252 = arith.mulf %251, %248 : vector<2x1xf32>
    %253 = arith.addf %250, %252 : vector<2x1xf32>
    %254 = vector.extract_strided_slice %246 {offsets = [0, 2], sizes = [2, 1], strides = [1, 1]} : vector<2x3xf32> to vector<2x1xf32>
    %255 = math.tanh %253 : vector<2x1xf32>
    %256 = arith.mulf %254, %255 : vector<2x1xf32>
    %257 = vector.extract_strided_slice %227 {offsets = [2, 0], sizes = [2, 4], strides = [1, 1]} : vector<14x4xf32> to vector<2x4xf32>
    %258 = vector.broadcast %256 : vector<2x1xf32> to vector<2x4xf32>
    %259 = vector.broadcast %233 : vector<1x4xf32> to vector<2x4xf32>
    %260 = arith.mulf %258, %259 : vector<2x4xf32>
    %261 = arith.addf %257, %260 : vector<2x4xf32>
    %262 = vector.extract_strided_slice %261 {offsets = [0, 0], sizes = [2, 3], strides = [1, 1]} : vector<2x4xf32> to vector<2x3xf32>
    %263 = arith.negf %262 : vector<2x3xf32>
    %264 = math.exp %263 : vector<2x3xf32>
    %cst_47 = arith.constant 1.000000e+00 : f32
    %265 = vector.broadcast %cst_47 : f32 to vector<2x3xf32>
    %266 = arith.addf %265, %264 : vector<2x3xf32>
    %267 = arith.divf %265, %266 : vector<2x3xf32>
    %268 = vector.extract_strided_slice %261 {offsets = [0, 3], sizes = [2, 1], strides = [1, 1]} : vector<2x4xf32> to vector<2x1xf32>
    %269 = math.tanh %268 : vector<2x1xf32>
    %270 = vector.extract_strided_slice %267 {offsets = [0, 1], sizes = [2, 1], strides = [1, 1]} : vector<2x3xf32> to vector<2x1xf32>
    %271 = arith.mulf %270, %253 : vector<2x1xf32>
    %272 = vector.extract_strided_slice %267 {offsets = [0, 0], sizes = [2, 1], strides = [1, 1]} : vector<2x3xf32> to vector<2x1xf32>
    %273 = arith.mulf %272, %269 : vector<2x1xf32>
    %274 = arith.addf %271, %273 : vector<2x1xf32>
    %275 = vector.extract_strided_slice %267 {offsets = [0, 2], sizes = [2, 1], strides = [1, 1]} : vector<2x3xf32> to vector<2x1xf32>
    %276 = math.tanh %274 : vector<2x1xf32>
    %277 = arith.mulf %275, %276 : vector<2x1xf32>
    %278 = vector.extract_strided_slice %227 {offsets = [4, 0], sizes = [2, 4], strides = [1, 1]} : vector<14x4xf32> to vector<2x4xf32>
    %279 = vector.broadcast %277 : vector<2x1xf32> to vector<2x4xf32>
    %280 = vector.broadcast %233 : vector<1x4xf32> to vector<2x4xf32>
    %281 = arith.mulf %279, %280 : vector<2x4xf32>
    %282 = arith.addf %278, %281 : vector<2x4xf32>
    %283 = vector.extract_strided_slice %282 {offsets = [0, 0], sizes = [2, 3], strides = [1, 1]} : vector<2x4xf32> to vector<2x3xf32>
    %284 = arith.negf %283 : vector<2x3xf32>
    %285 = math.exp %284 : vector<2x3xf32>
    %cst_48 = arith.constant 1.000000e+00 : f32
    %286 = vector.broadcast %cst_48 : f32 to vector<2x3xf32>
    %287 = arith.addf %286, %285 : vector<2x3xf32>
    %288 = arith.divf %286, %287 : vector<2x3xf32>
    %289 = vector.extract_strided_slice %282 {offsets = [0, 3], sizes = [2, 1], strides = [1, 1]} : vector<2x4xf32> to vector<2x1xf32>
    %290 = math.tanh %289 : vector<2x1xf32>
    %291 = vector.extract_strided_slice %288 {offsets = [0, 1], sizes = [2, 1], strides = [1, 1]} : vector<2x3xf32> to vector<2x1xf32>
    %292 = arith.mulf %291, %274 : vector<2x1xf32>
    %293 = vector.extract_strided_slice %288 {offsets = [0, 0], sizes = [2, 1], strides = [1, 1]} : vector<2x3xf32> to vector<2x1xf32>
    %294 = arith.mulf %293, %290 : vector<2x1xf32>
    %295 = arith.addf %292, %294 : vector<2x1xf32>
    %296 = vector.extract_strided_slice %288 {offsets = [0, 2], sizes = [2, 1], strides = [1, 1]} : vector<2x3xf32> to vector<2x1xf32>
    %297 = math.tanh %295 : vector<2x1xf32>
    %298 = arith.mulf %296, %297 : vector<2x1xf32>
    %299 = vector.extract_strided_slice %227 {offsets = [6, 0], sizes = [2, 4], strides = [1, 1]} : vector<14x4xf32> to vector<2x4xf32>
    %300 = vector.broadcast %298 : vector<2x1xf32> to vector<2x4xf32>
    %301 = vector.broadcast %233 : vector<1x4xf32> to vector<2x4xf32>
    %302 = arith.mulf %300, %301 : vector<2x4xf32>
    %303 = arith.addf %299, %302 : vector<2x4xf32>
    %304 = vector.extract_strided_slice %303 {offsets = [0, 0], sizes = [2, 3], strides = [1, 1]} : vector<2x4xf32> to vector<2x3xf32>
    %305 = arith.negf %304 : vector<2x3xf32>
    %306 = math.exp %305 : vector<2x3xf32>
    %cst_49 = arith.constant 1.000000e+00 : f32
    %307 = vector.broadcast %cst_49 : f32 to vector<2x3xf32>
    %308 = arith.addf %307, %306 : vector<2x3xf32>
    %309 = arith.divf %307, %308 : vector<2x3xf32>
    %310 = vector.extract_strided_slice %303 {offsets = [0, 3], sizes = [2, 1], strides = [1, 1]} : vector<2x4xf32> to vector<2x1xf32>
    %311 = math.tanh %310 : vector<2x1xf32>
    %312 = vector.extract_strided_slice %309 {offsets = [0, 1], sizes = [2, 1], strides = [1, 1]} : vector<2x3xf32> to vector<2x1xf32>
    %313 = arith.mulf %312, %295 : vector<2x1xf32>
    %314 = vector.extract_strided_slice %309 {offsets = [0, 0], sizes = [2, 1], strides = [1, 1]} : vector<2x3xf32> to vector<2x1xf32>
    %315 = arith.mulf %314, %311 : vector<2x1xf32>
    %316 = arith.addf %313, %315 : vector<2x1xf32>
    %317 = vector.extract_strided_slice %309 {offsets = [0, 2], sizes = [2, 1], strides = [1, 1]} : vector<2x3xf32> to vector<2x1xf32>
    %318 = math.tanh %316 : vector<2x1xf32>
    %319 = arith.mulf %317, %318 : vector<2x1xf32>
    %320 = vector.extract_strided_slice %227 {offsets = [8, 0], sizes = [2, 4], strides = [1, 1]} : vector<14x4xf32> to vector<2x4xf32>
    %321 = vector.broadcast %319 : vector<2x1xf32> to vector<2x4xf32>
    %322 = vector.broadcast %233 : vector<1x4xf32> to vector<2x4xf32>
    %323 = arith.mulf %321, %322 : vector<2x4xf32>
    %324 = arith.addf %320, %323 : vector<2x4xf32>
    %325 = vector.extract_strided_slice %324 {offsets = [0, 0], sizes = [2, 3], strides = [1, 1]} : vector<2x4xf32> to vector<2x3xf32>
    %326 = arith.negf %325 : vector<2x3xf32>
    %327 = math.exp %326 : vector<2x3xf32>
    %cst_50 = arith.constant 1.000000e+00 : f32
    %328 = vector.broadcast %cst_50 : f32 to vector<2x3xf32>
    %329 = arith.addf %328, %327 : vector<2x3xf32>
    %330 = arith.divf %328, %329 : vector<2x3xf32>
    %331 = vector.extract_strided_slice %324 {offsets = [0, 3], sizes = [2, 1], strides = [1, 1]} : vector<2x4xf32> to vector<2x1xf32>
    %332 = math.tanh %331 : vector<2x1xf32>
    %333 = vector.extract_strided_slice %330 {offsets = [0, 1], sizes = [2, 1], strides = [1, 1]} : vector<2x3xf32> to vector<2x1xf32>
    %334 = arith.mulf %333, %316 : vector<2x1xf32>
    %335 = vector.extract_strided_slice %330 {offsets = [0, 0], sizes = [2, 1], strides = [1, 1]} : vector<2x3xf32> to vector<2x1xf32>
    %336 = arith.mulf %335, %332 : vector<2x1xf32>
    %337 = arith.addf %334, %336 : vector<2x1xf32>
    %338 = vector.extract_strided_slice %330 {offsets = [0, 2], sizes = [2, 1], strides = [1, 1]} : vector<2x3xf32> to vector<2x1xf32>
    %339 = math.tanh %337 : vector<2x1xf32>
    %340 = arith.mulf %338, %339 : vector<2x1xf32>
    %341 = vector.extract_strided_slice %227 {offsets = [10, 0], sizes = [2, 4], strides = [1, 1]} : vector<14x4xf32> to vector<2x4xf32>
    %342 = vector.broadcast %340 : vector<2x1xf32> to vector<2x4xf32>
    %343 = vector.broadcast %233 : vector<1x4xf32> to vector<2x4xf32>
    %344 = arith.mulf %342, %343 : vector<2x4xf32>
    %345 = arith.addf %341, %344 : vector<2x4xf32>
    %346 = vector.extract_strided_slice %345 {offsets = [0, 0], sizes = [2, 3], strides = [1, 1]} : vector<2x4xf32> to vector<2x3xf32>
    %347 = arith.negf %346 : vector<2x3xf32>
    %348 = math.exp %347 : vector<2x3xf32>
    %cst_51 = arith.constant 1.000000e+00 : f32
    %349 = vector.broadcast %cst_51 : f32 to vector<2x3xf32>
    %350 = arith.addf %349, %348 : vector<2x3xf32>
    %351 = arith.divf %349, %350 : vector<2x3xf32>
    %352 = vector.extract_strided_slice %345 {offsets = [0, 3], sizes = [2, 1], strides = [1, 1]} : vector<2x4xf32> to vector<2x1xf32>
    %353 = math.tanh %352 : vector<2x1xf32>
    %354 = vector.extract_strided_slice %351 {offsets = [0, 1], sizes = [2, 1], strides = [1, 1]} : vector<2x3xf32> to vector<2x1xf32>
    %355 = arith.mulf %354, %337 : vector<2x1xf32>
    %356 = vector.extract_strided_slice %351 {offsets = [0, 0], sizes = [2, 1], strides = [1, 1]} : vector<2x3xf32> to vector<2x1xf32>
    %357 = arith.mulf %356, %353 : vector<2x1xf32>
    %358 = arith.addf %355, %357 : vector<2x1xf32>
    %359 = vector.extract_strided_slice %351 {offsets = [0, 2], sizes = [2, 1], strides = [1, 1]} : vector<2x3xf32> to vector<2x1xf32>
    %360 = math.tanh %358 : vector<2x1xf32>
    %361 = arith.mulf %359, %360 : vector<2x1xf32>
    %362 = vector.extract_strided_slice %227 {offsets = [12, 0], sizes = [2, 4], strides = [1, 1]} : vector<14x4xf32> to vector<2x4xf32>
    %363 = vector.broadcast %361 : vector<2x1xf32> to vector<2x4xf32>
    %364 = vector.broadcast %233 : vector<1x4xf32> to vector<2x4xf32>
    %365 = arith.mulf %363, %364 : vector<2x4xf32>
    %366 = arith.addf %362, %365 : vector<2x4xf32>
    %367 = vector.extract_strided_slice %366 {offsets = [0, 0], sizes = [2, 3], strides = [1, 1]} : vector<2x4xf32> to vector<2x3xf32>
    %368 = arith.negf %367 : vector<2x3xf32>
    %369 = math.exp %368 : vector<2x3xf32>
    %cst_52 = arith.constant 1.000000e+00 : f32
    %370 = vector.broadcast %cst_52 : f32 to vector<2x3xf32>
    %371 = arith.addf %370, %369 : vector<2x3xf32>
    %372 = arith.divf %370, %371 : vector<2x3xf32>
    %373 = vector.extract_strided_slice %366 {offsets = [0, 3], sizes = [2, 1], strides = [1, 1]} : vector<2x4xf32> to vector<2x1xf32>
    %374 = math.tanh %373 : vector<2x1xf32>
    %375 = vector.extract_strided_slice %372 {offsets = [0, 1], sizes = [2, 1], strides = [1, 1]} : vector<2x3xf32> to vector<2x1xf32>
    %376 = arith.mulf %375, %358 : vector<2x1xf32>
    %377 = vector.extract_strided_slice %372 {offsets = [0, 0], sizes = [2, 1], strides = [1, 1]} : vector<2x3xf32> to vector<2x1xf32>
    %378 = arith.mulf %377, %374 : vector<2x1xf32>
    %379 = arith.addf %376, %378 : vector<2x1xf32>
    %380 = vector.extract_strided_slice %372 {offsets = [0, 2], sizes = [2, 1], strides = [1, 1]} : vector<2x3xf32> to vector<2x1xf32>
    %381 = math.tanh %379 : vector<2x1xf32>
    %382 = arith.mulf %380, %381 : vector<2x1xf32>
    %383 = vector.extract_strided_slice %232 {offsets = [12, 0], sizes = [2, 4], strides = [1, 1]} : vector<14x4xf32> to vector<2x4xf32>
    %384 = vector.broadcast %235 : vector<2x1xf32> to vector<2x4xf32>
    %385 = vector.broadcast %234 : vector<1x4xf32> to vector<2x4xf32>
    %386 = arith.mulf %384, %385 : vector<2x4xf32>
    %387 = arith.addf %383, %386 : vector<2x4xf32>
    %388 = vector.extract_strided_slice %387 {offsets = [0, 0], sizes = [2, 3], strides = [1, 1]} : vector<2x4xf32> to vector<2x3xf32>
    %389 = arith.negf %388 : vector<2x3xf32>
    %390 = math.exp %389 : vector<2x3xf32>
    %cst_53 = arith.constant 1.000000e+00 : f32
    %391 = vector.broadcast %cst_53 : f32 to vector<2x3xf32>
    %392 = arith.addf %391, %390 : vector<2x3xf32>
    %393 = arith.divf %391, %392 : vector<2x3xf32>
    %394 = vector.extract_strided_slice %387 {offsets = [0, 3], sizes = [2, 1], strides = [1, 1]} : vector<2x4xf32> to vector<2x1xf32>
    %395 = math.tanh %394 : vector<2x1xf32>
    %396 = vector.extract_strided_slice %393 {offsets = [0, 1], sizes = [2, 1], strides = [1, 1]} : vector<2x3xf32> to vector<2x1xf32>
    %397 = arith.mulf %396, %235 : vector<2x1xf32>
    %398 = vector.extract_strided_slice %393 {offsets = [0, 0], sizes = [2, 1], strides = [1, 1]} : vector<2x3xf32> to vector<2x1xf32>
    %399 = arith.mulf %398, %395 : vector<2x1xf32>
    %400 = arith.addf %397, %399 : vector<2x1xf32>
    %401 = vector.extract_strided_slice %393 {offsets = [0, 2], sizes = [2, 1], strides = [1, 1]} : vector<2x3xf32> to vector<2x1xf32>
    %402 = math.tanh %400 : vector<2x1xf32>
    %403 = arith.mulf %401, %402 : vector<2x1xf32>
    %404 = vector.extract_strided_slice %232 {offsets = [10, 0], sizes = [2, 4], strides = [1, 1]} : vector<14x4xf32> to vector<2x4xf32>
    %405 = vector.broadcast %403 : vector<2x1xf32> to vector<2x4xf32>
    %406 = vector.broadcast %234 : vector<1x4xf32> to vector<2x4xf32>
    %407 = arith.mulf %405, %406 : vector<2x4xf32>
    %408 = arith.addf %404, %407 : vector<2x4xf32>
    %409 = vector.extract_strided_slice %408 {offsets = [0, 0], sizes = [2, 3], strides = [1, 1]} : vector<2x4xf32> to vector<2x3xf32>
    %410 = arith.negf %409 : vector<2x3xf32>
    %411 = math.exp %410 : vector<2x3xf32>
    %cst_54 = arith.constant 1.000000e+00 : f32
    %412 = vector.broadcast %cst_54 : f32 to vector<2x3xf32>
    %413 = arith.addf %412, %411 : vector<2x3xf32>
    %414 = arith.divf %412, %413 : vector<2x3xf32>
    %415 = vector.extract_strided_slice %408 {offsets = [0, 3], sizes = [2, 1], strides = [1, 1]} : vector<2x4xf32> to vector<2x1xf32>
    %416 = math.tanh %415 : vector<2x1xf32>
    %417 = vector.extract_strided_slice %414 {offsets = [0, 1], sizes = [2, 1], strides = [1, 1]} : vector<2x3xf32> to vector<2x1xf32>
    %418 = arith.mulf %417, %400 : vector<2x1xf32>
    %419 = vector.extract_strided_slice %414 {offsets = [0, 0], sizes = [2, 1], strides = [1, 1]} : vector<2x3xf32> to vector<2x1xf32>
    %420 = arith.mulf %419, %416 : vector<2x1xf32>
    %421 = arith.addf %418, %420 : vector<2x1xf32>
    %422 = vector.extract_strided_slice %414 {offsets = [0, 2], sizes = [2, 1], strides = [1, 1]} : vector<2x3xf32> to vector<2x1xf32>
    %423 = math.tanh %421 : vector<2x1xf32>
    %424 = arith.mulf %422, %423 : vector<2x1xf32>
    %425 = vector.extract_strided_slice %232 {offsets = [8, 0], sizes = [2, 4], strides = [1, 1]} : vector<14x4xf32> to vector<2x4xf32>
    %426 = vector.broadcast %424 : vector<2x1xf32> to vector<2x4xf32>
    %427 = vector.broadcast %234 : vector<1x4xf32> to vector<2x4xf32>
    %428 = arith.mulf %426, %427 : vector<2x4xf32>
    %429 = arith.addf %425, %428 : vector<2x4xf32>
    %430 = vector.extract_strided_slice %429 {offsets = [0, 0], sizes = [2, 3], strides = [1, 1]} : vector<2x4xf32> to vector<2x3xf32>
    %431 = arith.negf %430 : vector<2x3xf32>
    %432 = math.exp %431 : vector<2x3xf32>
    %cst_55 = arith.constant 1.000000e+00 : f32
    %433 = vector.broadcast %cst_55 : f32 to vector<2x3xf32>
    %434 = arith.addf %433, %432 : vector<2x3xf32>
    %435 = arith.divf %433, %434 : vector<2x3xf32>
    %436 = vector.extract_strided_slice %429 {offsets = [0, 3], sizes = [2, 1], strides = [1, 1]} : vector<2x4xf32> to vector<2x1xf32>
    %437 = math.tanh %436 : vector<2x1xf32>
    %438 = vector.extract_strided_slice %435 {offsets = [0, 1], sizes = [2, 1], strides = [1, 1]} : vector<2x3xf32> to vector<2x1xf32>
    %439 = arith.mulf %438, %421 : vector<2x1xf32>
    %440 = vector.extract_strided_slice %435 {offsets = [0, 0], sizes = [2, 1], strides = [1, 1]} : vector<2x3xf32> to vector<2x1xf32>
    %441 = arith.mulf %440, %437 : vector<2x1xf32>
    %442 = arith.addf %439, %441 : vector<2x1xf32>
    %443 = vector.extract_strided_slice %435 {offsets = [0, 2], sizes = [2, 1], strides = [1, 1]} : vector<2x3xf32> to vector<2x1xf32>
    %444 = math.tanh %442 : vector<2x1xf32>
    %445 = arith.mulf %443, %444 : vector<2x1xf32>
    %446 = vector.extract_strided_slice %232 {offsets = [6, 0], sizes = [2, 4], strides = [1, 1]} : vector<14x4xf32> to vector<2x4xf32>
    %447 = vector.broadcast %445 : vector<2x1xf32> to vector<2x4xf32>
    %448 = vector.broadcast %234 : vector<1x4xf32> to vector<2x4xf32>
    %449 = arith.mulf %447, %448 : vector<2x4xf32>
    %450 = arith.addf %446, %449 : vector<2x4xf32>
    %451 = vector.extract_strided_slice %450 {offsets = [0, 0], sizes = [2, 3], strides = [1, 1]} : vector<2x4xf32> to vector<2x3xf32>
    %452 = arith.negf %451 : vector<2x3xf32>
    %453 = math.exp %452 : vector<2x3xf32>
    %cst_56 = arith.constant 1.000000e+00 : f32
    %454 = vector.broadcast %cst_56 : f32 to vector<2x3xf32>
    %455 = arith.addf %454, %453 : vector<2x3xf32>
    %456 = arith.divf %454, %455 : vector<2x3xf32>
    %457 = vector.extract_strided_slice %450 {offsets = [0, 3], sizes = [2, 1], strides = [1, 1]} : vector<2x4xf32> to vector<2x1xf32>
    %458 = math.tanh %457 : vector<2x1xf32>
    %459 = vector.extract_strided_slice %456 {offsets = [0, 1], sizes = [2, 1], strides = [1, 1]} : vector<2x3xf32> to vector<2x1xf32>
    %460 = arith.mulf %459, %442 : vector<2x1xf32>
    %461 = vector.extract_strided_slice %456 {offsets = [0, 0], sizes = [2, 1], strides = [1, 1]} : vector<2x3xf32> to vector<2x1xf32>
    %462 = arith.mulf %461, %458 : vector<2x1xf32>
    %463 = arith.addf %460, %462 : vector<2x1xf32>
    %464 = vector.extract_strided_slice %456 {offsets = [0, 2], sizes = [2, 1], strides = [1, 1]} : vector<2x3xf32> to vector<2x1xf32>
    %465 = math.tanh %463 : vector<2x1xf32>
    %466 = arith.mulf %464, %465 : vector<2x1xf32>
    %467 = vector.extract_strided_slice %232 {offsets = [4, 0], sizes = [2, 4], strides = [1, 1]} : vector<14x4xf32> to vector<2x4xf32>
    %468 = vector.broadcast %466 : vector<2x1xf32> to vector<2x4xf32>
    %469 = vector.broadcast %234 : vector<1x4xf32> to vector<2x4xf32>
    %470 = arith.mulf %468, %469 : vector<2x4xf32>
    %471 = arith.addf %467, %470 : vector<2x4xf32>
    %472 = vector.extract_strided_slice %471 {offsets = [0, 0], sizes = [2, 3], strides = [1, 1]} : vector<2x4xf32> to vector<2x3xf32>
    %473 = arith.negf %472 : vector<2x3xf32>
    %474 = math.exp %473 : vector<2x3xf32>
    %cst_57 = arith.constant 1.000000e+00 : f32
    %475 = vector.broadcast %cst_57 : f32 to vector<2x3xf32>
    %476 = arith.addf %475, %474 : vector<2x3xf32>
    %477 = arith.divf %475, %476 : vector<2x3xf32>
    %478 = vector.extract_strided_slice %471 {offsets = [0, 3], sizes = [2, 1], strides = [1, 1]} : vector<2x4xf32> to vector<2x1xf32>
    %479 = math.tanh %478 : vector<2x1xf32>
    %480 = vector.extract_strided_slice %477 {offsets = [0, 1], sizes = [2, 1], strides = [1, 1]} : vector<2x3xf32> to vector<2x1xf32>
    %481 = arith.mulf %480, %463 : vector<2x1xf32>
    %482 = vector.extract_strided_slice %477 {offsets = [0, 0], sizes = [2, 1], strides = [1, 1]} : vector<2x3xf32> to vector<2x1xf32>
    %483 = arith.mulf %482, %479 : vector<2x1xf32>
    %484 = arith.addf %481, %483 : vector<2x1xf32>
    %485 = vector.extract_strided_slice %477 {offsets = [0, 2], sizes = [2, 1], strides = [1, 1]} : vector<2x3xf32> to vector<2x1xf32>
    %486 = math.tanh %484 : vector<2x1xf32>
    %487 = arith.mulf %485, %486 : vector<2x1xf32>
    %488 = vector.extract_strided_slice %232 {offsets = [2, 0], sizes = [2, 4], strides = [1, 1]} : vector<14x4xf32> to vector<2x4xf32>
    %489 = vector.broadcast %487 : vector<2x1xf32> to vector<2x4xf32>
    %490 = vector.broadcast %234 : vector<1x4xf32> to vector<2x4xf32>
    %491 = arith.mulf %489, %490 : vector<2x4xf32>
    %492 = arith.addf %488, %491 : vector<2x4xf32>
    %493 = vector.extract_strided_slice %492 {offsets = [0, 0], sizes = [2, 3], strides = [1, 1]} : vector<2x4xf32> to vector<2x3xf32>
    %494 = arith.negf %493 : vector<2x3xf32>
    %495 = math.exp %494 : vector<2x3xf32>
    %cst_58 = arith.constant 1.000000e+00 : f32
    %496 = vector.broadcast %cst_58 : f32 to vector<2x3xf32>
    %497 = arith.addf %496, %495 : vector<2x3xf32>
    %498 = arith.divf %496, %497 : vector<2x3xf32>
    %499 = vector.extract_strided_slice %492 {offsets = [0, 3], sizes = [2, 1], strides = [1, 1]} : vector<2x4xf32> to vector<2x1xf32>
    %500 = math.tanh %499 : vector<2x1xf32>
    %501 = vector.extract_strided_slice %498 {offsets = [0, 1], sizes = [2, 1], strides = [1, 1]} : vector<2x3xf32> to vector<2x1xf32>
    %502 = arith.mulf %501, %484 : vector<2x1xf32>
    %503 = vector.extract_strided_slice %498 {offsets = [0, 0], sizes = [2, 1], strides = [1, 1]} : vector<2x3xf32> to vector<2x1xf32>
    %504 = arith.mulf %503, %500 : vector<2x1xf32>
    %505 = arith.addf %502, %504 : vector<2x1xf32>
    %506 = vector.extract_strided_slice %498 {offsets = [0, 2], sizes = [2, 1], strides = [1, 1]} : vector<2x3xf32> to vector<2x1xf32>
    %507 = math.tanh %505 : vector<2x1xf32>
    %508 = arith.mulf %506, %507 : vector<2x1xf32>
    %509 = vector.extract_strided_slice %232 {offsets = [0, 0], sizes = [2, 4], strides = [1, 1]} : vector<14x4xf32> to vector<2x4xf32>
    %510 = vector.broadcast %508 : vector<2x1xf32> to vector<2x4xf32>
    %511 = vector.broadcast %234 : vector<1x4xf32> to vector<2x4xf32>
    %512 = arith.mulf %510, %511 : vector<2x4xf32>
    %513 = arith.addf %509, %512 : vector<2x4xf32>
    %514 = vector.extract_strided_slice %513 {offsets = [0, 0], sizes = [2, 3], strides = [1, 1]} : vector<2x4xf32> to vector<2x3xf32>
    %515 = arith.negf %514 : vector<2x3xf32>
    %516 = math.exp %515 : vector<2x3xf32>
    %cst_59 = arith.constant 1.000000e+00 : f32
    %517 = vector.broadcast %cst_59 : f32 to vector<2x3xf32>
    %518 = arith.addf %517, %516 : vector<2x3xf32>
    %519 = arith.divf %517, %518 : vector<2x3xf32>
    %520 = vector.extract_strided_slice %513 {offsets = [0, 3], sizes = [2, 1], strides = [1, 1]} : vector<2x4xf32> to vector<2x1xf32>
    %521 = math.tanh %520 : vector<2x1xf32>
    %522 = vector.extract_strided_slice %519 {offsets = [0, 1], sizes = [2, 1], strides = [1, 1]} : vector<2x3xf32> to vector<2x1xf32>
    %523 = arith.mulf %522, %505 : vector<2x1xf32>
    %524 = vector.extract_strided_slice %519 {offsets = [0, 0], sizes = [2, 1], strides = [1, 1]} : vector<2x3xf32> to vector<2x1xf32>
    %525 = arith.mulf %524, %521 : vector<2x1xf32>
    %526 = arith.addf %523, %525 : vector<2x1xf32>
    %527 = vector.extract_strided_slice %519 {offsets = [0, 2], sizes = [2, 1], strides = [1, 1]} : vector<2x3xf32> to vector<2x1xf32>
    %528 = math.tanh %526 : vector<2x1xf32>
    %529 = arith.mulf %527, %528 : vector<2x1xf32>
    %530 = arith.addf %256, %529 : vector<2x1xf32>
    %531 = arith.addf %277, %508 : vector<2x1xf32>
    %532 = arith.addf %298, %487 : vector<2x1xf32>
    %533 = arith.addf %319, %466 : vector<2x1xf32>
    %534 = arith.addf %340, %445 : vector<2x1xf32>
    %535 = arith.addf %361, %424 : vector<2x1xf32>
    %536 = arith.addf %382, %403 : vector<2x1xf32>
    %537 = tpu.concatenate %530, %531, %532, %533, %534, %535, %536 in 1 : vector<2x1xf32>, vector<2x1xf32>, vector<2x1xf32>, vector<2x1xf32>, vector<2x1xf32>, vector<2x1xf32>, vector<2x1xf32> -> vector<2x7xf32>
    %c0_60 = arith.constant 0 : index
    %c0_61 = arith.constant 0 : index
    %538 = vector.load %arg13[%c0_60, %c0_61] : memref<2x7xf32, #tpu.memory_space<vmem>>, vector<2x7xf32>
    tpu.vector_store %arg13[%c0_60, %c0_61], %537 {strides = array<i32>} : memref<2x7xf32, #tpu.memory_space<vmem>>, vector<2x7xf32>,
    return
  }
  func.func @transform_0(%arg0: i32) -> (i32, i32, i32) {
    %c0_i32 = arith.constant 0 : i32
    %c0_i32_0 = arith.constant 0 : i32
    %c0_i32_1 = arith.constant 0 : i32
    %c0_i32_2 = arith.constant 0 : i32
    return %c0_i32, %c0_i32_0, %c0_i32_1 : i32, i32, i32
  }
  func.func @transform_1(%arg0: i32) -> (i32, i32) {
    %c0_i32 = arith.constant 0 : i32
    %c0_i32_0 = arith.constant 0 : i32
    %c0_i32_1 = arith.constant 0 : i32
    return %c0_i32, %c0_i32_0 : i32, i32
  }
  func.func @transform_2(%arg0: i32) -> (i32, i32) {
    %c0_i32 = arith.constant 0 : i32
    %c0_i32_0 = arith.constant 0 : i32
    %c0_i32_1 = arith.constant 0 : i32
    return %c0_i32, %c0_i32_0 : i32, i32
  }
  func.func @transform_3(%arg0: i32) -> (i32, i32) {
    %c0_i32 = arith.constant 0 : i32
    %c0_i32_0 = arith.constant 0 : i32
    %c0_i32_1 = arith.constant 0 : i32
    return %c0_i32, %c0_i32_0 : i32, i32
  }
  func.func @transform_4(%arg0: i32) -> (i32, i32) {
    %c0_i32 = arith.constant 0 : i32
    %c0_i32_0 = arith.constant 0 : i32
    %c0_i32_1 = arith.constant 0 : i32
    return %c0_i32, %c0_i32_0 : i32, i32
  }
  func.func @transform_5(%arg0: i32) -> (i32, i32) {
    %c0_i32 = arith.constant 0 : i32
    %c0_i32_0 = arith.constant 0 : i32
    %c0_i32_1 = arith.constant 0 : i32
    return %c0_i32, %c0_i32_0 : i32, i32
  }
  func.func @transform_6(%arg0: i32) -> (i32, i32) {
    %c0_i32 = arith.constant 0 : i32
    %c0_i32_0 = arith.constant 0 : i32
    %c0_i32_1 = arith.constant 0 : i32
    return %c0_i32, %c0_i32_0 : i32, i32
  }
  func.func @transform_7(%arg0: i32) -> (i32, i32) {
    %c0_i32 = arith.constant 0 : i32
    %c0_i32_0 = arith.constant 0 : i32
    %c0_i32_1 = arith.constant 0 : i32
    return %c0_i32, %c0_i32_0 : i32, i32
  }
  func.func @transform_8(%arg0: i32) -> (i32, i32) {
    %c0_i32 = arith.constant 0 : i32
    %c0_i32_0 = arith.constant 0 : i32
    %c0_i32_1 = arith.constant 0 : i32
    return %c0_i32, %c0_i32_0 : i32, i32
  }
  func.func @transform_9(%arg0: i32) -> (i32, i32) {
    %c0_i32 = arith.constant 0 : i32
    %c0_i32_0 = arith.constant 0 : i32
    %c0_i32_1 = arith.constant 0 : i32
    return %c0_i32, %c0_i32_0 : i32, i32
  }
  func.func @transform_10(%arg0: i32) -> (i32, i32) {
    %c0_i32 = arith.constant 0 : i32
    %c0_i32_0 = arith.constant 0 : i32
    %c0_i32_1 = arith.constant 0 : i32
    return %c0_i32, %c0_i32_0 : i32, i32
  }
  func.func @transform_11(%arg0: i32) -> (i32, i32) {
    %c0_i32 = arith.constant 0 : i32
    %c0_i32_0 = arith.constant 0 : i32
    %c0_i32_1 = arith.constant 0 : i32
    return %c0_i32, %c0_i32_0 : i32, i32
  }
  func.func @transform_12(%arg0: i32) -> (i32, i32) {
    %c0_i32 = arith.constant 0 : i32
    %c0_i32_0 = arith.constant 0 : i32
    %c0_i32_1 = arith.constant 0 : i32
    return %c0_i32, %c0_i32_0 : i32, i32
  }
}

</mosaic_0001>

<llo_original>
// kernel: encoder_forward.1
$region0: #{encoder_forward.1}
  #allocation0 [shape = 'u32[]', space=smem, size = 0x4, offset = 0x4, fixed_abs, tag = 'smem constant byte address 0x4 - core index']
  #allocation1 [shape = 'u32[144,128]{1,0:T(1,128)}', space=vmem, size = 0x12000, scoped, tag = 'internal scratch']
  %s0 = inlined_call_operand.vmem [shape: f32[2,16,4], index: 0, kind: input, shape index: {}]
  %s1 = inlined_call_operand.vmem [shape: f32[12,8], index: 1, kind: input, shape index: {}]
  %s2 = inlined_call_operand.vmem [shape: f32[1,8], index: 2, kind: input, shape index: {}]
  %s3 = inlined_call_operand.vmem [shape: f32[8,32], index: 3, kind: input, shape index: {}]
  %s4 = inlined_call_operand.vmem [shape: f32[8,32], index: 4, kind: input, shape index: {}]
  %s5 = inlined_call_operand.vmem [shape: f32[1,32], index: 5, kind: input, shape index: {}]
  %s6 = inlined_call_operand.vmem [shape: f32[8,4], index: 6, kind: input, shape index: {}]
  %s7 = inlined_call_operand.vmem [shape: f32[1,4], index: 7, kind: input, shape index: {}]
  %s8 = inlined_call_operand.vmem [shape: f32[1,4], index: 8, kind: input, shape index: {}]
  %s9 = inlined_call_operand.vmem [shape: f32[8,4], index: 9, kind: input, shape index: {}]
  %s10 = inlined_call_operand.vmem [shape: f32[1,4], index: 10, kind: input, shape index: {}]
  %s11 = inlined_call_operand.vmem [shape: f32[1,4], index: 11, kind: input, shape index: {}]
  %s12 = inlined_call_operand.hbm [shape: f32[2,7], index: 12, kind: output, shape index: {}]
  %s13 = sld [smem:[#allocation0]]
  $region58: #{encoder_forward.1} parent=0
    _
  %s15 = ssub.s32 1, %s13
  %s16 = scalar_select 0, %s15, %s13
  $region1: #{encoder_forward.1} parent=0
    #allocation2 [shape = 'u8[1024]{0}', space=vmem, size = 0x400, scoped, tag = 'output window, operand 0, single buffered']
    #allocation3 [shape = 's32[1]{0}', space=sflag, size = 0x4, scoped, tag = 'scoped memory for encoder_forward.1']
    %17 = vsyncpa [#allocation3], 0
    // Predicated region
    $region2: #{encoder_forward.1} parent=1 // pred_check
      _
    $region3: #{encoder_forward.1} parent=1 // pred_check_branch
      %19 = sbr.rel (0) target = $region5
    $region4: #{encoder_forward.1} parent=1 // pred_region
      _
    $region5: #{encoder_forward.1} parent=1 // pred_fallthru
      _
    // Predicated region
    $region6: #{encoder_forward.1} parent=1 // pred_check
      _
    $region7: #{encoder_forward.1} parent=1 // pred_check_branch
      %21 = sbr.rel (0) target = $region9
    $region8: #{encoder_forward.1} parent=1 // pred_region
      _
    $region9: #{encoder_forward.1} parent=1 // pred_fallthru
      _
    // Predicated region
    $region10: #{encoder_forward.1} parent=1 // pred_check
      _
    $region11: #{encoder_forward.1} parent=1 // pred_check_branch
      %23 = sbr.rel (0) target = $region13
    $region12: #{encoder_forward.1} parent=1 // pred_region
      _
    $region13: #{encoder_forward.1} parent=1 // pred_fallthru
      _
    // Predicated region
    $region14: #{encoder_forward.1} parent=1 // pred_check
      _
    $region15: #{encoder_forward.1} parent=1 // pred_check_branch
      %25 = sbr.rel (0) target = $region17
    $region16: #{encoder_forward.1} parent=1 // pred_region
      _
    $region17: #{encoder_forward.1} parent=1 // pred_fallthru
      _
    // Predicated region
    $region18: #{encoder_forward.1} parent=1 // pred_check
      _
    $region19: #{encoder_forward.1} parent=1 // pred_check_branch
      %27 = sbr.rel (0) target = $region21
    $region20: #{encoder_forward.1} parent=1 // pred_region
      _
    $region21: #{encoder_forward.1} parent=1 // pred_fallthru
      _
    // Predicated region
    $region22: #{encoder_forward.1} parent=1 // pred_check
      _
    $region23: #{encoder_forward.1} parent=1 // pred_check_branch
      %29 = sbr.rel (0) target = $region25
    $region24: #{encoder_forward.1} parent=1 // pred_region
      _
    $region25: #{encoder_forward.1} parent=1 // pred_fallthru
      _
    // Predicated region
    $region26: #{encoder_forward.1} parent=1 // pred_check
      _
    $region27: #{encoder_forward.1} parent=1 // pred_check_branch
      %31 = sbr.rel (0) target = $region29
    $region28: #{encoder_forward.1} parent=1 // pred_region
      _
    $region29: #{encoder_forward.1} parent=1 // pred_fallthru
      _
    // Predicated region
    $region30: #{encoder_forward.1} parent=1 // pred_check
      _
    $region31: #{encoder_forward.1} parent=1 // pred_check_branch
      %33 = sbr.rel (0) target = $region33
    $region32: #{encoder_forward.1} parent=1 // pred_region
      _
    $region33: #{encoder_forward.1} parent=1 // pred_fallthru
      _
    // Predicated region
    $region34: #{encoder_forward.1} parent=1 // pred_check
      _
    $region35: #{encoder_forward.1} parent=1 // pred_check_branch
      %35 = sbr.rel (0) target = $region37
    $region36: #{encoder_forward.1} parent=1 // pred_region
      _
    $region37: #{encoder_forward.1} parent=1 // pred_fallthru
      _
    // Predicated region
    $region38: #{encoder_forward.1} parent=1 // pred_check
      _
    $region39: #{encoder_forward.1} parent=1 // pred_check_branch
      %37 = sbr.rel (0) target = $region41
    $region40: #{encoder_forward.1} parent=1 // pred_region
      _
    $region41: #{encoder_forward.1} parent=1 // pred_fallthru
      _
    // Predicated region
    $region42: #{encoder_forward.1} parent=1 // pred_check
      _
    $region43: #{encoder_forward.1} parent=1 // pred_check_branch
      %39 = sbr.rel (0) target = $region45
    $region44: #{encoder_forward.1} parent=1 // pred_region
      _
    $region45: #{encoder_forward.1} parent=1 // pred_fallthru
      _
    // Predicated region
    $region46: #{encoder_forward.1} parent=1 // pred_check
      _
    $region47: #{encoder_forward.1} parent=1 // pred_check_branch
      %41 = sbr.rel (0) target = $region49
    $region48: #{encoder_forward.1} parent=1 // pred_region
      _
    $region49: #{encoder_forward.1} parent=1 // pred_fallthru
      _
    %v42 = vld [vmem:[%s0] sm:$0xff]
    %v43 = vld [vmem:[%s0 + $0x8] sm:$0xff]
    %v44 = vld [vmem:[%s0 + $0x10] sm:$0xff]
    %v45 = vld [vmem:[%s0 + $0x18] sm:$0xff]
    %vm48 = vcmask 1046528
    %v49 = vrot.slane %v42, 1
    %v50 = vrot.slane %v43, 1
    %v51 = vsel %vm48, %v49, %v50
    %52 = vrot.lane.b32.xlu0 %v51, 4
    %v53 = vpop.permute.xlu0 %52
    %54 = vrot.lane.b32.xlu0 %v50, 4
    %v55 = vpop.permute.xlu0 %54
    %vm58 = vcmask 1045504
    %v59 = vrot.slane %v42, 2
    %v60 = vrot.slane %v43, 2
    %v61 = vsel %vm58, %v59, %v60
    %62 = vrot.lane.b32.xlu0 %v61, 8
    %v63 = vpop.permute.xlu0 %62
    %64 = vrot.lane.b32.xlu0 %v60, 8
    %v65 = vpop.permute.xlu0 %64
    %vm68 = vcmask 31744
    %v69 = vsel %vm68, %v42, %v53
    %v70 = vsel %vm68, %v43, %v55
    %vm71 = vcmask 64512
    %v72 = vsel %vm71, %v69, %v63
    %v73 = vsel %vm71, %v70, %v65
    %v76 = vrot.slane %v44, 1
    %v77 = vrot.slane %v45, 1
    %v78 = vsel %vm48, %v76, %v77
    %79 = vrot.lane.b32.xlu0 %v78, 4
    %v80 = vpop.permute.xlu0 %79
    %81 = vrot.lane.b32.xlu0 %v77, 4
    %v82 = vpop.permute.xlu0 %81
    %v85 = vrot.slane %v44, 2
    %v86 = vrot.slane %v45, 2
    %v87 = vsel %vm58, %v85, %v86
    %88 = vrot.lane.b32.xlu0 %v87, 8
    %v89 = vpop.permute.xlu0 %88
    %90 = vrot.lane.b32.xlu0 %v86, 8
    %v91 = vpop.permute.xlu0 %90
    %v94 = vsel %vm68, %v44, %v80
    %v95 = vsel %vm68, %v45, %v82
    %v96 = vsel %vm71, %v94, %v89
    %v97 = vsel %vm71, %v95, %v91
    %v100 = vrot.slane %v96, 2
    %v101 = vrot.slane %v97, 2
    %v102 = vsel %vm58, %v100, %v101
    %v104 = vsel %vm58, %v73, %v100
    %v105 = vld [vmem:[%s1] sm:$0xff]
    %v106 = vld [vmem:[%s1 + $0x8] sm:$0xf]
    %v107 = vld [vmem:[%s2] sm:$0x1]
    %v109 = vlaneseq
    %v110 = vshrl.u32 %v109, 7
    %v111 = vsub.s32 0, %v110
    %v112 = vrot.slane %v107, %v111
    %vm114 = vcmask 97280
    %v116 = vsel %vm114, %v72, 0
    %v119 = vsel %vm114, %v104, 0
    %v121 = vsel %vm114, %v102, 0
    %v123 = vsel %vm114, %v101, 0
    %vm125 = vcmask 1043456
    %v127 = vsel %vm125, %v106, 0
    %129 = vmatprep.subr.mxu0 0.0
    %130 = vmatpush1.msra.mxu0 0.0
    %131 = vmatprep.subr.mxu0 0.0
    %132 = vmatpush1.msra.mxu0 0.0
    %133 = vmatprep.subr.mxu0 0.0
    %134 = vmatpush1.msra.mxu0 0.0
    %135 = vmatprep.subr.mxu0 0.0
    %136 = vmatpush1.msra.mxu0 0.0
    %137 = vmatprep.subr.mxu0 0.0
    %138 = vmatpush1.msra.mxu0 0.0
    %139 = vmatprep.subr.mxu0 0.0
    %140 = vmatpush1.msra.mxu0 0.0
    %141 = vmatprep.subr.mxu0 0.0
    %142 = vmatpush1.msra.mxu0 0.0
    %143 = vmatprep.subr.mxu0 0.0
    %144 = vmatpush1.msra.mxu0 0.0
    %145 = vmatprep.subr.mxu0 0.0
    %146 = vmatpush1.msra.mxu0 0.0
    %147 = vmatprep.subr.mxu0 0.0
    %148 = vmatpush1.msra.mxu0 0.0
    %149 = vmatprep.subr.mxu0 0.0
    %150 = vmatpush1.msra.mxu0 0.0
    %151 = vmatprep.subr.mxu0 0.0
    %152 = vmatpush1.msra.mxu0 0.0
    %153 = vmatprep.subr.mxu0 0.0
    %154 = vmatpush1.msra.mxu0 0.0
    %155 = vmatprep.subr.mxu0 0.0
    %156 = vmatpush1.msra.mxu0 0.0
    %157 = vmatprep.subr.mxu0 0.0
    %v158 = vand.u32 %v127, 4294901760
    %159 = vmatpush1.msra.mxu0 %v158
    %160 = vmatprep.subr.mxu0 0.0
    %v161 = vand.u32 %v105, 4294901760
    %162 = vmatpush1.msra.mxu0 %v161
    %163 = vmatprep.subr.mxu0 0.0
    %164 = vmatpush2.msra.mxu0 0.0
    %165 = vmatprep.subr.mxu0 0.0
    %166 = vmatpush2.msra.mxu0 0.0
    %167 = vmatprep.subr.mxu0 0.0
    %168 = vmatpush2.msra.mxu0 0.0
    %169 = vmatprep.subr.mxu0 0.0
    %170 = vmatpush2.msra.mxu0 0.0
    %171 = vmatprep.subr.mxu0 0.0
    %172 = vmatpush2.msra.mxu0 0.0
    %173 = vmatprep.subr.mxu0 0.0
    %174 = vmatpush2.msra.mxu0 0.0
    %175 = vmatprep.subr.mxu0 0.0
    %176 = vmatpush2.msra.mxu0 0.0
    %177 = vmatprep.subr.mxu0 0.0
    %178 = vmatpush2.msra.mxu0 0.0
    %179 = vmatprep.subr.mxu0 0.0
    %180 = vmatpush2.msra.mxu0 0.0
    %181 = vmatprep.subr.mxu0 0.0
    %182 = vmatpush2.msra.mxu0 0.0
    %183 = vmatprep.subr.mxu0 0.0
    %184 = vmatpush2.msra.mxu0 0.0
    %185 = vmatprep.subr.mxu0 0.0
    %186 = vmatpush2.msra.mxu0 0.0
    %187 = vmatprep.subr.mxu0 0.0
    %188 = vmatpush2.msra.mxu0 0.0
    %189 = vmatprep.subr.mxu0 0.0
    %190 = vmatpush2.msra.mxu0 0.0
    %191 = vmatprep.subr.mxu0 0.0
    %192 = vmatpush2.msra.mxu0 0.0
    %193 = vmatprep.subr.mxu0 0.0
    %194 = vmatpush2.msra.mxu0 0.0
    %195 = vmatprep.mubr.f32.mxu0 0.0
    %v196 = vand.u32 %v116, 4294901760
    %v197 = vsub.f32 %v116, %v196
    %v198 = vand.u32 %v197, 4294901760
    %v199 = vsub.f32 %v197, %v198
    %v200 = vand.u32 %v199, 4294901760
    %201 = vmatmul.mubr.f32.gmra.mxu0 %v200
    %v202 = vpop.f32.mrf.mxu0
    %v203 = vadd.f32 %v112, %v202
    %v204 = vpop.f32.mrf.mxu0
    %205 = vmatprep.mubr.f32.mxu0 0.0
    %v206 = vand.u32 %v119, 4294901760
    %v207 = vsub.f32 %v119, %v206
    %v208 = vand.u32 %v207, 4294901760
    %v209 = vsub.f32 %v207, %v208
    %v210 = vand.u32 %v209, 4294901760
    %211 = vmatmul.mubr.f32.gmra.mxu0 %v210
    %v212 = vpop.f32.mrf.mxu0
    %v213 = vadd.f32 %v112, %v212
    %v214 = vpop.f32.mrf.mxu0
    %215 = vmatprep.mubr.f32.mxu0 0.0
    %v216 = vand.u32 %v121, 4294901760
    %v217 = vsub.f32 %v121, %v216
    %v218 = vand.u32 %v217, 4294901760
    %v219 = vsub.f32 %v217, %v218
    %v220 = vand.u32 %v219, 4294901760
    %221 = vmatmul.mubr.f32.gmra.mxu0 %v220
    %v222 = vpop.f32.mrf.mxu0
    %v223 = vadd.f32 %v112, %v222
    %v224 = vpop.f32.mrf.mxu0
    %225 = vmatprep.mubr.f32.mxu0 0.0
    %v226 = vand.u32 %v123, 4294901760
    %v227 = vsub.f32 %v123, %v226
    %v228 = vand.u32 %v227, 4294901760
    %v229 = vsub.f32 %v227, %v228
    %v230 = vand.u32 %v229, 4294901760
    %231 = vmatmul.mubr.f32.gmra.mxu0 %v230
    %v232 = vpop.f32.mrf.mxu0
    %v233 = vadd.f32 %v112, %v232
    %v234 = vpop.f32.mrf.mxu0
    %235 = vdwg.mxu0
    %236 = vmatprep.subr.mxu0 0.0
    %237 = vmatpush1.msra.mxu0 0.0
    %238 = vmatprep.subr.mxu0 0.0
    %239 = vmatpush1.msra.mxu0 0.0
    %240 = vmatprep.subr.mxu0 0.0
    %241 = vmatpush1.msra.mxu0 0.0
    %242 = vmatprep.subr.mxu0 0.0
    %243 = vmatpush1.msra.mxu0 0.0
    %244 = vmatprep.subr.mxu0 0.0
    %245 = vmatpush1.msra.mxu0 0.0
    %246 = vmatprep.subr.mxu0 0.0
    %247 = vmatpush1.msra.mxu0 0.0
    %248 = vmatprep.subr.mxu0 0.0
    %249 = vmatpush1.msra.mxu0 0.0
    %250 = vmatprep.subr.mxu0 0.0
    %251 = vmatpush1.msra.mxu0 0.0
    %252 = vmatprep.subr.mxu0 0.0
    %253 = vmatpush1.msra.mxu0 0.0
    %254 = vmatprep.subr.mxu0 0.0
    %255 = vmatpush1.msra.mxu0 0.0
    %256 = vmatprep.subr.mxu0 0.0
    %257 = vmatpush1.msra.mxu0 0.0
    %258 = vmatprep.subr.mxu0 0.0
    %259 = vmatpush1.msra.mxu0 0.0
    %260 = vmatprep.subr.mxu0 0.0
    %261 = vmatpush1.msra.mxu0 0.0
    %262 = vmatprep.subr.mxu0 0.0
    %263 = vmatpush1.msra.mxu0 0.0
    %264 = vmatprep.subr.mxu0 0.0
    %v265 = vand.u32 %v127, 4294901760
    %v266 = vsub.f32 %v127, %v265
    %v267 = vand.u32 %v266, 4294901760
    %v268 = vsub.f32 %v266, %v267
    %v269 = vand.u32 %v268, 4294901760
    %270 = vmatpush1.msra.mxu0 %v269
    %271 = vmatprep.subr.mxu0 0.0
    %v272 = vand.u32 %v105, 4294901760
    %v273 = vsub.f32 %v105, %v272
    %v274 = vand.u32 %v273, 4294901760
    %v275 = vsub.f32 %v273, %v274
    %v276 = vand.u32 %v275, 4294901760
    %277 = vmatpush1.msra.mxu0 %v276
    %278 = vmatprep.subr.mxu0 0.0
    %279 = vmatpush2.msra.mxu0 0.0
    %280 = vmatprep.subr.mxu0 0.0
    %281 = vmatpush2.msra.mxu0 0.0
    %282 = vmatprep.subr.mxu0 0.0
    %283 = vmatpush2.msra.mxu0 0.0
    %284 = vmatprep.subr.mxu0 0.0
    %285 = vmatpush2.msra.mxu0 0.0
    %286 = vmatprep.subr.mxu0 0.0
    %287 = vmatpush2.msra.mxu0 0.0
    %288 = vmatprep.subr.mxu0 0.0
    %289 = vmatpush2.msra.mxu0 0.0
    %290 = vmatprep.subr.mxu0 0.0
    %291 = vmatpush2.msra.mxu0 0.0
    %292 = vmatprep.subr.mxu0 0.0
    %293 = vmatpush2.msra.mxu0 0.0
    %294 = vmatprep.subr.mxu0 0.0
    %295 = vmatpush2.msra.mxu0 0.0
    %296 = vmatprep.subr.mxu0 0.0
    %297 = vmatpush2.msra.mxu0 0.0
    %298 = vmatprep.subr.mxu0 0.0
    %299 = vmatpush2.msra.mxu0 0.0
    %300 = vmatprep.subr.mxu0 0.0
    %301 = vmatpush2.msra.mxu0 0.0
    %302 = vmatprep.subr.mxu0 0.0
    %303 = vmatpush2.msra.mxu0 0.0
    %304 = vmatprep.subr.mxu0 0.0
    %305 = vmatpush2.msra.mxu0 0.0
    %306 = vmatprep.subr.mxu0 0.0
    %307 = vmatpush2.msra.mxu0 0.0
    %308 = vmatprep.subr.mxu0 0.0
    %309 = vmatpush2.msra.mxu0 0.0
    %310 = vmatprep.mubr.f32.mxu0 0.0
    %v311 = vand.u32 %v116, 4294901760
    %312 = vmatmul.mubr.f32.gmra.mxu0 %v311
    %v313 = vpop.f32.mrf.mxu0
    %v314 = vadd.f32 %v203, %v313
    %v315 = vpop.f32.mrf.mxu0
    %316 = vmatprep.mubr.f32.mxu0 0.0
    %v317 = vand.u32 %v119, 4294901760
    %318 = vmatmul.mubr.f32.gmra.mxu0 %v317
    %v319 = vpop.f32.mrf.mxu0
    %v320 = vadd.f32 %v213, %v319
    %v321 = vpop.f32.mrf.mxu0
    %322 = vmatprep.mubr.f32.mxu0 0.0
    %v323 = vand.u32 %v121, 4294901760
    %324 = vmatmul.mubr.f32.gmra.mxu0 %v323
    %v325 = vpop.f32.mrf.mxu0
    %v326 = vadd.f32 %v223, %v325
    %v327 = vpop.f32.mrf.mxu0
    %328 = vmatprep.mubr.f32.mxu0 0.0
    %v329 = vand.u32 %v123, 4294901760
    %330 = vmatmul.mubr.f32.gmra.mxu0 %v329
    %v331 = vpop.f32.mrf.mxu0
    %v332 = vadd.f32 %v233, %v331
    %v333 = vpop.f32.mrf.mxu0
    %334 = vdwg.mxu0
    %335 = vmatprep.subr.mxu0 0.0
    %336 = vmatpush1.msra.mxu0 0.0
    %337 = vmatprep.subr.mxu0 0.0
    %338 = vmatpush1.msra.mxu0 0.0
    %339 = vmatprep.subr.mxu0 0.0
    %340 = vmatpush1.msra.mxu0 0.0
    %341 = vmatprep.subr.mxu0 0.0
    %342 = vmatpush1.msra.mxu0 0.0
    %343 = vmatprep.subr.mxu0 0.0
    %344 = vmatpush1.msra.mxu0 0.0
    %345 = vmatprep.subr.mxu0 0.0
    %346 = vmatpush1.msra.mxu0 0.0
    %347 = vmatprep.subr.mxu0 0.0
    %348 = vmatpush1.msra.mxu0 0.0
    %349 = vmatprep.subr.mxu0 0.0
    %350 = vmatpush1.msra.mxu0 0.0
    %351 = vmatprep.subr.mxu0 0.0
    %352 = vmatpush1.msra.mxu0 0.0
    %353 = vmatprep.subr.mxu0 0.0
    %354 = vmatpush1.msra.mxu0 0.0
    %355 = vmatprep.subr.mxu0 0.0
    %356 = vmatpush1.msra.mxu0 0.0
    %357 = vmatprep.subr.mxu0 0.0
    %358 = vmatpush1.msra.mxu0 0.0
    %359 = vmatprep.subr.mxu0 0.0
    %360 = vmatpush1.msra.mxu0 0.0
    %361 = vmatprep.subr.mxu0 0.0
    %362 = vmatpush1.msra.mxu0 0.0
    %363 = vmatprep.subr.mxu0 0.0
    %v364 = vand.u32 %v127, 4294901760
    %v365 = vsub.f32 %v127, %v364
    %366 = vmatpush1.msra.mxu0 %v365
    %367 = vmatprep.subr.mxu0 0.0
    %v368 = vand.u32 %v105, 4294901760
    %v369 = vsub.f32 %v105, %v368
    %370 = vmatpush1.msra.mxu0 %v369
    %371 = vmatprep.subr.mxu0 0.0
    %372 = vmatpush2.msra.mxu0 0.0
    %373 = vmatprep.subr.mxu0 0.0
    %374 = vmatpush2.msra.mxu0 0.0
    %375 = vmatprep.subr.mxu0 0.0
    %376 = vmatpush2.msra.mxu0 0.0
    %377 = vmatprep.subr.mxu0 0.0
    %378 = vmatpush2.msra.mxu0 0.0
    %379 = vmatprep.subr.mxu0 0.0
    %380 = vmatpush2.msra.mxu0 0.0
    %381 = vmatprep.subr.mxu0 0.0
    %382 = vmatpush2.msra.mxu0 0.0
    %383 = vmatprep.subr.mxu0 0.0
    %384 = vmatpush2.msra.mxu0 0.0
    %385 = vmatprep.subr.mxu0 0.0
    %386 = vmatpush2.msra.mxu0 0.0
    %387 = vmatprep.subr.mxu0 0.0
    %388 = vmatpush2.msra.mxu0 0.0
    %389 = vmatprep.subr.mxu0 0.0
    %390 = vmatpush2.msra.mxu0 0.0
    %391 = vmatprep.subr.mxu0 0.0
    %392 = vmatpush2.msra.mxu0 0.0
    %393 = vmatprep.subr.mxu0 0.0
    %394 = vmatpush2.msra.mxu0 0.0
    %395 = vmatprep.subr.mxu0 0.0
    %396 = vmatpush2.msra.mxu0 0.0
    %397 = vmatprep.subr.mxu0 0.0
    %398 = vmatpush2.msra.mxu0 0.0
    %399 = vmatprep.subr.mxu0 0.0
    %400 = vmatpush2.msra.mxu0 0.0
    %401 = vmatprep.subr.mxu0 0.0
    %402 = vmatpush2.msra.mxu0 0.0
    %403 = vmatprep.mubr.f32.mxu0 0.0
    %v404 = vand.u32 %v116, 4294901760
    %v405 = vsub.f32 %v116, %v404
    %406 = vmatmul.mubr.f32.gmra.mxu0 %v405
    %v407 = vpop.f32.mrf.mxu0
    %v408 = vadd.f32 %v314, %v407
    %v409 = vpop.f32.mrf.mxu0
    %410 = vmatprep.mubr.f32.mxu0 0.0
    %v411 = vand.u32 %v119, 4294901760
    %v412 = vsub.f32 %v119, %v411
    %413 = vmatmul.mubr.f32.gmra.mxu0 %v412
    %v414 = vpop.f32.mrf.mxu0
    %v415 = vadd.f32 %v320, %v414
    %v416 = vpop.f32.mrf.mxu0
    %417 = vmatprep.mubr.f32.mxu0 0.0
    %v418 = vand.u32 %v121, 4294901760
    %v419 = vsub.f32 %v121, %v418
    %420 = vmatmul.mubr.f32.gmra.mxu0 %v419
    %v421 = vpop.f32.mrf.mxu0
    %v422 = vadd.f32 %v326, %v421
    %v423 = vpop.f32.mrf.mxu0
    %424 = vmatprep.mubr.f32.mxu0 0.0
    %v425 = vand.u32 %v123, 4294901760
    %v426 = vsub.f32 %v123, %v425
    %427 = vmatmul.mubr.f32.gmra.mxu0 %v426
    %v428 = vpop.f32.mrf.mxu0
    %v429 = vadd.f32 %v332, %v428
    %v430 = vpop.f32.mrf.mxu0
    %431 = vdwg.mxu0
    %432 = vmatprep.subr.mxu0 0.0
    %433 = vmatpush1.msra.mxu0 0.0
    %434 = vmatprep.subr.mxu0 0.0
    %435 = vmatpush1.msra.mxu0 0.0
    %436 = vmatprep.subr.mxu0 0.0
    %437 = vmatpush1.msra.mxu0 0.0
    %438 = vmatprep.subr.mxu0 0.0
    %439 = vmatpush1.msra.mxu0 0.0
    %440 = vmatprep.subr.mxu0 0.0
    %441 = vmatpush1.msra.mxu0 0.0
    %442 = vmatprep.subr.mxu0 0.0
    %443 = vmatpush1.msra.mxu0 0.0
    %444 = vmatprep.subr.mxu0 0.0
    %445 = vmatpush1.msra.mxu0 0.0
    %446 = vmatprep.subr.mxu0 0.0
    %447 = vmatpush1.msra.mxu0 0.0
    %448 = vmatprep.subr.mxu0 0.0
    %449 = vmatpush1.msra.mxu0 0.0
    %450 = vmatprep.subr.mxu0 0.0
    %451 = vmatpush1.msra.mxu0 0.0
    %452 = vmatprep.subr.mxu0 0.0
    %453 = vmatpush1.msra.mxu0 0.0
    %454 = vmatprep.subr.mxu0 0.0
    %455 = vmatpush1.msra.mxu0 0.0
    %456 = vmatprep.subr.mxu0 0.0
    %457 = vmatpush1.msra.mxu0 0.0
    %458 = vmatprep.subr.mxu0 0.0
    %459 = vmatpush1.msra.mxu0 0.0
    %460 = vmatprep.subr.mxu0 0.0
    %v461 = vand.u32 %v127, 4294901760
    %462 = vmatpush1.msra.mxu0 %v461
    %463 = vmatprep.subr.mxu0 0.0
    %v464 = vand.u32 %v105, 4294901760
    %465 = vmatpush1.msra.mxu0 %v464
    %466 = vmatprep.subr.mxu0 0.0
    %467 = vmatpush2.msra.mxu0 0.0
    %468 = vmatprep.subr.mxu0 0.0
    %469 = vmatpush2.msra.mxu0 0.0
    %470 = vmatprep.subr.mxu0 0.0
    %471 = vmatpush2.msra.mxu0 0.0
    %472 = vmatprep.subr.mxu0 0.0
    %473 = vmatpush2.msra.mxu0 0.0
    %474 = vmatprep.subr.mxu0 0.0
    %475 = vmatpush2.msra.mxu0 0.0
    %476 = vmatprep.subr.mxu0 0.0
    %477 = vmatpush2.msra.mxu0 0.0
    %478 = vmatprep.subr.mxu0 0.0
    %479 = vmatpush2.msra.mxu0 0.0
    %480 = vmatprep.subr.mxu0 0.0
    %481 = vmatpush2.msra.mxu0 0.0
    %482 = vmatprep.subr.mxu0 0.0
    %483 = vmatpush2.msra.mxu0 0.0
    %484 = vmatprep.subr.mxu0 0.0
    %485 = vmatpush2.msra.mxu0 0.0
    %486 = vmatprep.subr.mxu0 0.0
    %487 = vmatpush2.msra.mxu0 0.0
    %488 = vmatprep.subr.mxu0 0.0
    %489 = vmatpush2.msra.mxu0 0.0
    %490 = vmatprep.subr.mxu0 0.0
    %491 = vmatpush2.msra.mxu0 0.0
    %492 = vmatprep.subr.mxu0 0.0
    %493 = vmatpush2.msra.mxu0 0.0
    %494 = vmatprep.subr.mxu0 0.0
    %495 = vmatpush2.msra.mxu0 0.0
    %496 = vmatprep.subr.mxu0 0.0
    %497 = vmatpush2.msra.mxu0 0.0
    %498 = vmatprep.mubr.f32.mxu0 0.0
    %v499 = vand.u32 %v116, 4294901760
    %v500 = vsub.f32 %v116, %v499
    %v501 = vand.u32 %v500, 4294901760
    %502 = vmatmul.mubr.f32.gmra.mxu0 %v501
    %v503 = vpop.f32.mrf.mxu0
    %v504 = vadd.f32 %v408, %v503
    %v505 = vpop.f32.mrf.mxu0
    %506 = vmatprep.mubr.f32.mxu0 0.0
    %v507 = vand.u32 %v119, 4294901760
    %v508 = vsub.f32 %v119, %v507
    %v509 = vand.u32 %v508, 4294901760
    %510 = vmatmul.mubr.f32.gmra.mxu0 %v509
    %v511 = vpop.f32.mrf.mxu0
    %v512 = vadd.f32 %v415, %v511
    %v513 = vpop.f32.mrf.mxu0
    %514 = vmatprep.mubr.f32.mxu0 0.0
    %v515 = vand.u32 %v121, 4294901760
    %v516 = vsub.f32 %v121, %v515
    %v517 = vand.u32 %v516, 4294901760
    %518 = vmatmul.mubr.f32.gmra.mxu0 %v517
    %v519 = vpop.f32.mrf.mxu0
    %v520 = vadd.f32 %v422, %v519
    %v521 = vpop.f32.mrf.mxu0
    %522 = vmatprep.mubr.f32.mxu0 0.0
    %v523 = vand.u32 %v123, 4294901760
    %v524 = vsub.f32 %v123, %v523
    %v525 = vand.u32 %v524, 4294901760
    %526 = vmatmul.mubr.f32.gmra.mxu0 %v525
    %v527 = vpop.f32.mrf.mxu0
    %v528 = vadd.f32 %v429, %v527
    %v529 = vpop.f32.mrf.mxu0
    %530 = vdwg.mxu0
    %531 = vmatprep.subr.mxu0 0.0
    %532 = vmatpush1.msra.mxu0 0.0
    %533 = vmatprep.subr.mxu0 0.0
    %534 = vmatpush1.msra.mxu0 0.0
    %535 = vmatprep.subr.mxu0 0.0
    %536 = vmatpush1.msra.mxu0 0.0
    %537 = vmatprep.subr.mxu0 0.0
    %538 = vmatpush1.msra.mxu0 0.0
    %539 = vmatprep.subr.mxu0 0.0
    %540 = vmatpush1.msra.mxu0 0.0
    %541 = vmatprep.subr.mxu0 0.0
    %542 = vmatpush1.msra.mxu0 0.0
    %543 = vmatprep.subr.mxu0 0.0
    %544 = vmatpush1.msra.mxu0 0.0
    %545 = vmatprep.subr.mxu0 0.0
    %546 = vmatpush1.msra.mxu0 0.0
    %547 = vmatprep.subr.mxu0 0.0
    %548 = vmatpush1.msra.mxu0 0.0
    %549 = vmatprep.subr.mxu0 0.0
    %550 = vmatpush1.msra.mxu0 0.0
    %551 = vmatprep.subr.mxu0 0.0
    %552 = vmatpush1.msra.mxu0 0.0
    %553 = vmatprep.subr.mxu0 0.0
    %554 = vmatpush1.msra.mxu0 0.0
    %555 = vmatprep.subr.mxu0 0.0
    %556 = vmatpush1.msra.mxu0 0.0
    %557 = vmatprep.subr.mxu0 0.0
    %558 = vmatpush1.msra.mxu0 0.0
    %559 = vmatprep.subr.mxu0 0.0
    %v560 = vand.u32 %v127, 4294901760
    %v561 = vsub.f32 %v127, %v560
    %v562 = vand.u32 %v561, 4294901760
    %563 = vmatpush1.msra.mxu0 %v562
    %564 = vmatprep.subr.mxu0 0.0
    %v565 = vand.u32 %v105, 4294901760
    %v566 = vsub.f32 %v105, %v565
    %v567 = vand.u32 %v566, 4294901760
    %568 = vmatpush1.msra.mxu0 %v567
    %569 = vmatprep.subr.mxu0 0.0
    %570 = vmatpush2.msra.mxu0 0.0
    %571 = vmatprep.subr.mxu0 0.0
    %572 = vmatpush2.msra.mxu0 0.0
    %573 = vmatprep.subr.mxu0 0.0
    %574 = vmatpush2.msra.mxu0 0.0
    %575 = vmatprep.subr.mxu0 0.0
    %576 = vmatpush2.msra.mxu0 0.0
    %577 = vmatprep.subr.mxu0 0.0
    %578 = vmatpush2.msra.mxu0 0.0
    %579 = vmatprep.subr.mxu0 0.0
    %580 = vmatpush2.msra.mxu0 0.0
    %581 = vmatprep.subr.mxu0 0.0
    %582 = vmatpush2.msra.mxu0 0.0
    %583 = vmatprep.subr.mxu0 0.0
    %584 = vmatpush2.msra.mxu0 0.0
    %585 = vmatprep.subr.mxu0 0.0
    %586 = vmatpush2.msra.mxu0 0.0
    %587 = vmatprep.subr.mxu0 0.0
    %588 = vmatpush2.msra.mxu0 0.0
    %589 = vmatprep.subr.mxu0 0.0
    %590 = vmatpush2.msra.mxu0 0.0
    %591 = vmatprep.subr.mxu0 0.0
    %592 = vmatpush2.msra.mxu0 0.0
    %593 = vmatprep.subr.mxu0 0.0
    %594 = vmatpush2.msra.mxu0 0.0
    %595 = vmatprep.subr.mxu0 0.0
    %596 = vmatpush2.msra.mxu0 0.0
    %597 = vmatprep.subr.mxu0 0.0
    %598 = vmatpush2.msra.mxu0 0.0
    %599 = vmatprep.subr.mxu0 0.0
    %600 = vmatpush2.msra.mxu0 0.0
    %601 = vmatprep.mubr.f32.mxu0 0.0
    %v602 = vand.u32 %v116, 4294901760
    %603 = vmatmul.mubr.f32.gmra.mxu0 %v602
    %v604 = vpop.f32.mrf.mxu0
    %v605 = vadd.f32 %v504, %v604
    %v606 = vpop.f32.mrf.mxu0
    %607 = vmatprep.mubr.f32.mxu0 0.0
    %v608 = vand.u32 %v119, 4294901760
    %609 = vmatmul.mubr.f32.gmra.mxu0 %v608
    %v610 = vpop.f32.mrf.mxu0
    %v611 = vadd.f32 %v512, %v610
    %v612 = vpop.f32.mrf.mxu0
    %613 = vmatprep.mubr.f32.mxu0 0.0
    %v614 = vand.u32 %v121, 4294901760
    %615 = vmatmul.mubr.f32.gmra.mxu0 %v614
    %v616 = vpop.f32.mrf.mxu0
    %v617 = vadd.f32 %v520, %v616
    %v618 = vpop.f32.mrf.mxu0
    %619 = vmatprep.mubr.f32.mxu0 0.0
    %v620 = vand.u32 %v123, 4294901760
    %621 = vmatmul.mubr.f32.gmra.mxu0 %v620
    %v622 = vpop.f32.mrf.mxu0
    %v623 = vadd.f32 %v528, %v622
    %v624 = vpop.f32.mrf.mxu0
    %625 = vdwg.mxu0
    %626 = vmatprep.subr.mxu0 0.0
    %627 = vmatpush1.msra.mxu0 0.0
    %628 = vmatprep.subr.mxu0 0.0
    %629 = vmatpush1.msra.mxu0 0.0
    %630 = vmatprep.subr.mxu0 0.0
    %631 = vmatpush1.msra.mxu0 0.0
    %632 = vmatprep.subr.mxu0 0.0
    %633 = vmatpush1.msra.mxu0 0.0
    %634 = vmatprep.subr.mxu0 0.0
    %635 = vmatpush1.msra.mxu0 0.0
    %636 = vmatprep.subr.mxu0 0.0
    %637 = vmatpush1.msra.mxu0 0.0
    %638 = vmatprep.subr.mxu0 0.0
    %639 = vmatpush1.msra.mxu0 0.0
    %640 = vmatprep.subr.mxu0 0.0
    %641 = vmatpush1.msra.mxu0 0.0
    %642 = vmatprep.subr.mxu0 0.0
    %643 = vmatpush1.msra.mxu0 0.0
    %644 = vmatprep.subr.mxu0 0.0
    %645 = vmatpush1.msra.mxu0 0.0
    %646 = vmatprep.subr.mxu0 0.0
    %647 = vmatpush1.msra.mxu0 0.0
    %648 = vmatprep.subr.mxu0 0.0
    %649 = vmatpush1.msra.mxu0 0.0
    %650 = vmatprep.subr.mxu0 0.0
    %651 = vmatpush1.msra.mxu0 0.0
    %652 = vmatprep.subr.mxu0 0.0
    %653 = vmatpush1.msra.mxu0 0.0
    %654 = vmatprep.subr.mxu0 0.0
    %v655 = vand.u32 %v127, 4294901760
    %656 = vmatpush1.msra.mxu0 %v655
    %657 = vmatprep.subr.mxu0 0.0
    %v658 = vand.u32 %v105, 4294901760
    %659 = vmatpush1.msra.mxu0 %v658
    %660 = vmatprep.subr.mxu0 0.0
    %661 = vmatpush2.msra.mxu0 0.0
    %662 = vmatprep.subr.mxu0 0.0
    %663 = vmatpush2.msra.mxu0 0.0
    %664 = vmatprep.subr.mxu0 0.0
    %665 = vmatpush2.msra.mxu0 0.0
    %666 = vmatprep.subr.mxu0 0.0
    %667 = vmatpush2.msra.mxu0 0.0
    %668 = vmatprep.subr.mxu0 0.0
    %669 = vmatpush2.msra.mxu0 0.0
    %670 = vmatprep.subr.mxu0 0.0
    %671 = vmatpush2.msra.mxu0 0.0
    %672 = vmatprep.subr.mxu0 0.0
    %673 = vmatpush2.msra.mxu0 0.0
    %674 = vmatprep.subr.mxu0 0.0
    %675 = vmatpush2.msra.mxu0 0.0
    %676 = vmatprep.subr.mxu0 0.0
    %677 = vmatpush2.msra.mxu0 0.0
    %678 = vmatprep.subr.mxu0 0.0
    %679 = vmatpush2.msra.mxu0 0.0
    %680 = vmatprep.subr.mxu0 0.0
    %681 = vmatpush2.msra.mxu0 0.0
    %682 = vmatprep.subr.mxu0 0.0
    %683 = vmatpush2.msra.mxu0 0.0
    %684 = vmatprep.subr.mxu0 0.0
    %685 = vmatpush2.msra.mxu0 0.0
    %686 = vmatprep.subr.mxu0 0.0
    %687 = vmatpush2.msra.mxu0 0.0
    %688 = vmatprep.subr.mxu0 0.0
    %689 = vmatpush2.msra.mxu0 0.0
    %690 = vmatprep.subr.mxu0 0.0
    %691 = vmatpush2.msra.mxu0 0.0
    %692 = vmatprep.mubr.f32.mxu0 0.0
    %v693 = vand.u32 %v116, 4294901760
    %694 = vmatmul.mubr.f32.gmra.mxu0 %v693
    %v695 = vpop.f32.mrf.mxu0
    %v696 = vadd.f32 %v605, %v695
    %v697 = vpop.f32.mrf.mxu0
    %698 = vmatprep.mubr.f32.mxu0 0.0
    %v699 = vand.u32 %v119, 4294901760
    %700 = vmatmul.mubr.f32.gmra.mxu0 %v699
    %v701 = vpop.f32.mrf.mxu0
    %v702 = vadd.f32 %v611, %v701
    %v703 = vpop.f32.mrf.mxu0
    %704 = vmatprep.mubr.f32.mxu0 0.0
    %v705 = vand.u32 %v121, 4294901760
    %706 = vmatmul.mubr.f32.gmra.mxu0 %v705
    %v707 = vpop.f32.mrf.mxu0
    %v708 = vadd.f32 %v617, %v707
    %v709 = vpop.f32.mrf.mxu0
    %710 = vmatprep.mubr.f32.mxu0 0.0
    %v711 = vand.u32 %v123, 4294901760
    %712 = vmatmul.mubr.f32.gmra.mxu0 %v711
    %v713 = vpop.f32.mrf.mxu0
    %v714 = vadd.f32 %v623, %v713
    %v715 = vpop.f32.mrf.mxu0
    %716 = vdwg.mxu0
    %vm717 = vcmp.ge.f32.partialorder %v696, 0.0
    %vm718 = vcmp.ge.f32.partialorder %v702, 0.0
    %vm719 = vcmp.ge.f32.partialorder %v708, 0.0
    %vm720 = vcmp.ge.f32.partialorder %v714, 0.0
    %v721 = vmul.f32 %v696, 0.01
    %v722 = vmul.f32 %v702, 0.01
    %v723 = vmul.f32 %v708, 0.01
    %v724 = vmul.f32 %v714, 0.01
    %v725 = vsel %vm717, %v696, %v721
    %v726 = vsel %vm718, %v702, %v722
    %v727 = vsel %vm719, %v708, %v723
    %v728 = vsel %vm720, %v714, %v724
    %v730 = vrot.slane %v725, 1
    %v732 = vmax.f32 %v725, %v730
    %v734 = vrot.slane %v726, 1
    %v736 = vmax.f32 %v726, %v734
    %v738 = vrot.slane %v736, 5
    %vm740 = vcmask 1040384
    %v741 = vsel %vm740, %v732, %v738
    %v743 = vrot.slane %v727, 1
    %v745 = vmax.f32 %v727, %v743
    %v747 = vrot.slane %v732, 2
    %v750 = vrot.slane %v745, 7
    %v752 = vsel %vm740, %v747, %v750
    %v753 = vrot.slane %v732, 4
    %v755 = vrot.slane %v745, 1
    %v757 = vsel %vm740, %v753, %v755
    %v758 = vrot.slane %v732, 6
    %v760 = vrot.slane %v745, 3
    %v762 = vsel %vm740, %v758, %v760
    %v763 = vrot.slane %v745, 5
    %v765 = vsel %vm740, %v736, %v763
    %v767 = vrot.slane %v728, 1
    %v769 = vmax.f32 %v728, %v767
    %v770 = vrot.slane %v736, 2
    %v773 = vrot.slane %v769, 7
    %v775 = vsel %vm740, %v770, %v773
    %v776 = vrot.slane %v736, 4
    %v778 = vrot.slane %v769, 1
    %v780 = vsel %vm740, %v776, %v778
    %v782 = vrot.slane %v752, 6
    %v785 = vrot.slane %v757, 4
    %v788 = vrot.slane %v762, 2
    %v791 = vrot.slane %v775, 6
    %v794 = vrot.slane %v780, 4
    %vm796 = vcmask 1041408
    %v797 = vsel %vm796, %v741, %v782
    %v798 = vsel %vm125, %v797, %v785
    %v799 = vsel %vm58, %v798, %v788
    %v800 = vsel %vm796, %v765, %v791
    %v801 = vsel %vm125, %v800, %v794
    %v802 = vld [vmem:[%s3] sm:$0xff]
    %v803 = vld [vmem:[%s5] sm:$0x1]
    %v805 = vlaneseq
    %v806 = vshrl.u32 %v805, 7
    %v807 = vsub.s32 0, %v806
    %v808 = vrot.slane %v803, %v807
    %v811 = vsel %vm71, %v799, 0
    %v814 = vsel %vm71, %v801, 0
    %816 = vmatprep.subr.mxu0 0.0
    %817 = vmatpush1.msra.mxu0 0.0
    %818 = vmatprep.subr.mxu0 0.0
    %819 = vmatpush1.msra.mxu0 0.0
    %820 = vmatprep.subr.mxu0 0.0
    %821 = vmatpush1.msra.mxu0 0.0
    %822 = vmatprep.subr.mxu0 0.0
    %823 = vmatpush1.msra.mxu0 0.0
    %824 = vmatprep.subr.mxu0 0.0
    %825 = vmatpush1.msra.mxu0 0.0
    %826 = vmatprep.subr.mxu0 0.0
    %827 = vmatpush1.msra.mxu0 0.0
    %828 = vmatprep.subr.mxu0 0.0
    %829 = vmatpush1.msra.mxu0 0.0
    %830 = vmatprep.subr.mxu0 0.0
    %831 = vmatpush1.msra.mxu0 0.0
    %832 = vmatprep.subr.mxu0 0.0
    %833 = vmatpush1.msra.mxu0 0.0
    %834 = vmatprep.subr.mxu0 0.0
    %835 = vmatpush1.msra.mxu0 0.0
    %836 = vmatprep.subr.mxu0 0.0
    %837 = vmatpush1.msra.mxu0 0.0
    %838 = vmatprep.subr.mxu0 0.0
    %839 = vmatpush1.msra.mxu0 0.0
    %840 = vmatprep.subr.mxu0 0.0
    %841 = vmatpush1.msra.mxu0 0.0
    %842 = vmatprep.subr.mxu0 0.0
    %843 = vmatpush1.msra.mxu0 0.0
    %844 = vmatprep.subr.mxu0 0.0
    %845 = vmatpush1.msra.mxu0 0.0
    %846 = vmatprep.subr.mxu0 0.0
    %v847 = vand.u32 %v802, 4294901760
    %848 = vmatpush1.msra.mxu0 %v847
    %849 = vmatprep.subr.mxu0 0.0
    %850 = vmatpush2.msra.mxu0 0.0
    %851 = vmatprep.subr.mxu0 0.0
    %852 = vmatpush2.msra.mxu0 0.0
    %853 = vmatprep.subr.mxu0 0.0
    %854 = vmatpush2.msra.mxu0 0.0
    %855 = vmatprep.subr.mxu0 0.0
    %856 = vmatpush2.msra.mxu0 0.0
    %857 = vmatprep.subr.mxu0 0.0
    %858 = vmatpush2.msra.mxu0 0.0
    %859 = vmatprep.subr.mxu0 0.0
    %860 = vmatpush2.msra.mxu0 0.0
    %861 = vmatprep.subr.mxu0 0.0
    %862 = vmatpush2.msra.mxu0 0.0
    %863 = vmatprep.subr.mxu0 0.0
    %864 = vmatpush2.msra.mxu0 0.0
    %865 = vmatprep.subr.mxu0 0.0
    %866 = vmatpush2.msra.mxu0 0.0
    %867 = vmatprep.subr.mxu0 0.0
    %868 = vmatpush2.msra.mxu0 0.0
    %869 = vmatprep.subr.mxu0 0.0
    %870 = vmatpush2.msra.mxu0 0.0
    %871 = vmatprep.subr.mxu0 0.0
    %872 = vmatpush2.msra.mxu0 0.0
    %873 = vmatprep.subr.mxu0 0.0
    %874 = vmatpush2.msra.mxu0 0.0
    %875 = vmatprep.subr.mxu0 0.0
    %876 = vmatpush2.msra.mxu0 0.0
    %877 = vmatprep.subr.mxu0 0.0
    %878 = vmatpush2.msra.mxu0 0.0
    %879 = vmatprep.subr.mxu0 0.0
    %880 = vmatpush2.msra.mxu0 0.0
    %881 = vmatprep.mubr.f32.mxu0 0.0
    %v882 = vand.u32 %v811, 4294901760
    %v883 = vsub.f32 %v811, %v882
    %v884 = vand.u32 %v883, 4294901760
    %v885 = vsub.f32 %v883, %v884
    %v886 = vand.u32 %v885, 4294901760
    %887 = vmatmul.mubr.f32.gmra.mxu0 %v886
    %v888 = vpop.f32.mrf.mxu0
    %v889 = vadd.f32 %v808, %v888
    %v890 = vpop.f32.mrf.mxu0
    %891 = vmatprep.mubr.f32.mxu0 0.0
    %v892 = vand.u32 %v814, 4294901760
    %v893 = vsub.f32 %v814, %v892
    %v894 = vand.u32 %v893, 4294901760
    %v895 = vsub.f32 %v893, %v894
    %v896 = vand.u32 %v895, 4294901760
    %897 = vmatmul.mubr.f32.gmra.mxu0 %v896
    %v898 = vpop.f32.mrf.mxu0
    %v899 = vadd.f32 %v808, %v898
    %v900 = vpop.f32.mrf.mxu0
    %901 = vdwg.mxu0
    %902 = vmatprep.subr.mxu0 0.0
    %903 = vmatpush1.msra.mxu0 0.0
    %904 = vmatprep.subr.mxu0 0.0
    %905 = vmatpush1.msra.mxu0 0.0
    %906 = vmatprep.subr.mxu0 0.0
    %907 = vmatpush1.msra.mxu0 0.0
    %908 = vmatprep.subr.mxu0 0.0
    %909 = vmatpush1.msra.mxu0 0.0
    %910 = vmatprep.subr.mxu0 0.0
    %911 = vmatpush1.msra.mxu0 0.0
    %912 = vmatprep.subr.mxu0 0.0
    %913 = vmatpush1.msra.mxu0 0.0
    %914 = vmatprep.subr.mxu0 0.0
    %915 = vmatpush1.msra.mxu0 0.0
    %916 = vmatprep.subr.mxu0 0.0
    %917 = vmatpush1.msra.mxu0 0.0
    %918 = vmatprep.subr.mxu0 0.0
    %919 = vmatpush1.msra.mxu0 0.0
    %920 = vmatprep.subr.mxu0 0.0
    %921 = vmatpush1.msra.mxu0 0.0
    %922 = vmatprep.subr.mxu0 0.0
    %923 = vmatpush1.msra.mxu0 0.0
    %924 = vmatprep.subr.mxu0 0.0
    %925 = vmatpush1.msra.mxu0 0.0
    %926 = vmatprep.subr.mxu0 0.0
    %927 = vmatpush1.msra.mxu0 0.0
    %928 = vmatprep.subr.mxu0 0.0
    %929 = vmatpush1.msra.mxu0 0.0
    %930 = vmatprep.subr.mxu0 0.0
    %931 = vmatpush1.msra.mxu0 0.0
    %932 = vmatprep.subr.mxu0 0.0
    %v933 = vand.u32 %v802, 4294901760
    %v934 = vsub.f32 %v802, %v933
    %v935 = vand.u32 %v934, 4294901760
    %v936 = vsub.f32 %v934, %v935
    %v937 = vand.u32 %v936, 4294901760
    %938 = vmatpush1.msra.mxu0 %v937
    %939 = vmatprep.subr.mxu0 0.0
    %940 = vmatpush2.msra.mxu0 0.0
    %941 = vmatprep.subr.mxu0 0.0
    %942 = vmatpush2.msra.mxu0 0.0
    %943 = vmatprep.subr.mxu0 0.0
    %944 = vmatpush2.msra.mxu0 0.0
    %945 = vmatprep.subr.mxu0 0.0
    %946 = vmatpush2.msra.mxu0 0.0
    %947 = vmatprep.subr.mxu0 0.0
    %948 = vmatpush2.msra.mxu0 0.0
    %949 = vmatprep.subr.mxu0 0.0
    %950 = vmatpush2.msra.mxu0 0.0
    %951 = vmatprep.subr.mxu0 0.0
    %952 = vmatpush2.msra.mxu0 0.0
    %953 = vmatprep.subr.mxu0 0.0
    %954 = vmatpush2.msra.mxu0 0.0
    %955 = vmatprep.subr.mxu0 0.0
    %956 = vmatpush2.msra.mxu0 0.0
    %957 = vmatprep.subr.mxu0 0.0
    %958 = vmatpush2.msra.mxu0 0.0
    %959 = vmatprep.subr.mxu0 0.0
    %960 = vmatpush2.msra.mxu0 0.0
    %961 = vmatprep.subr.mxu0 0.0
    %962 = vmatpush2.msra.mxu0 0.0
    %963 = vmatprep.subr.mxu0 0.0
    %964 = vmatpush2.msra.mxu0 0.0
    %965 = vmatprep.subr.mxu0 0.0
    %966 = vmatpush2.msra.mxu0 0.0
    %967 = vmatprep.subr.mxu0 0.0
    %968 = vmatpush2.msra.mxu0 0.0
    %969 = vmatprep.subr.mxu0 0.0
    %970 = vmatpush2.msra.mxu0 0.0
    %971 = vmatprep.mubr.f32.mxu0 0.0
    %v972 = vand.u32 %v811, 4294901760
    %973 = vmatmul.mubr.f32.gmra.mxu0 %v972
    %v974 = vpop.f32.mrf.mxu0
    %v975 = vadd.f32 %v889, %v974
    %v976 = vpop.f32.mrf.mxu0
    %977 = vmatprep.mubr.f32.mxu0 0.0
    %v978 = vand.u32 %v814, 4294901760
    %979 = vmatmul.mubr.f32.gmra.mxu0 %v978
    %v980 = vpop.f32.mrf.mxu0
    %v981 = vadd.f32 %v899, %v980
    %v982 = vpop.f32.mrf.mxu0
    %983 = vdwg.mxu0
    %984 = vmatprep.subr.mxu0 0.0
    %985 = vmatpush1.msra.mxu0 0.0
    %986 = vmatprep.subr.mxu0 0.0
    %987 = vmatpush1.msra.mxu0 0.0
    %988 = vmatprep.subr.mxu0 0.0
    %989 = vmatpush1.msra.mxu0 0.0
    %990 = vmatprep.subr.mxu0 0.0
    %991 = vmatpush1.msra.mxu0 0.0
    %992 = vmatprep.subr.mxu0 0.0
    %993 = vmatpush1.msra.mxu0 0.0
    %994 = vmatprep.subr.mxu0 0.0
    %995 = vmatpush1.msra.mxu0 0.0
    %996 = vmatprep.subr.mxu0 0.0
    %997 = vmatpush1.msra.mxu0 0.0
    %998 = vmatprep.subr.mxu0 0.0
    %999 = vmatpush1.msra.mxu0 0.0
    %1000 = vmatprep.subr.mxu0 0.0
    %1001 = vmatpush1.msra.mxu0 0.0
    %1002 = vmatprep.subr.mxu0 0.0
    %1003 = vmatpush1.msra.mxu0 0.0
    %1004 = vmatprep.subr.mxu0 0.0
    %1005 = vmatpush1.msra.mxu0 0.0
    %1006 = vmatprep.subr.mxu0 0.0
    %1007 = vmatpush1.msra.mxu0 0.0
    %1008 = vmatprep.subr.mxu0 0.0
    %1009 = vmatpush1.msra.mxu0 0.0
    %1010 = vmatprep.subr.mxu0 0.0
    %1011 = vmatpush1.msra.mxu0 0.0
    %1012 = vmatprep.subr.mxu0 0.0
    %1013 = vmatpush1.msra.mxu0 0.0
    %1014 = vmatprep.subr.mxu0 0.0
    %v1015 = vand.u32 %v802, 4294901760
    %v1016 = vsub.f32 %v802, %v1015
    %1017 = vmatpush1.msra.mxu0 %v1016
    %1018 = vmatprep.subr.mxu0 0.0
    %1019 = vmatpush2.msra.mxu0 0.0
    %1020 = vmatprep.subr.mxu0 0.0
    %1021 = vmatpush2.msra.mxu0 0.0
    %1022 = vmatprep.subr.mxu0 0.0
    %1023 = vmatpush2.msra.mxu0 0.0
    %1024 = vmatprep.subr.mxu0 0.0
    %1025 = vmatpush2.msra.mxu0 0.0
    %1026 = vmatprep.subr.mxu0 0.0
    %1027 = vmatpush2.msra.mxu0 0.0
    %1028 = vmatprep.subr.mxu0 0.0
    %1029 = vmatpush2.msra.mxu0 0.0
    %1030 = vmatprep.subr.mxu0 0.0
    %1031 = vmatpush2.msra.mxu0 0.0
    %1032 = vmatprep.subr.mxu0 0.0
    %1033 = vmatpush2.msra.mxu0 0.0
    %1034 = vmatprep.subr.mxu0 0.0
    %1035 = vmatpush2.msra.mxu0 0.0
    %1036 = vmatprep.subr.mxu0 0.0
    %1037 = vmatpush2.msra.mxu0 0.0
    %1038 = vmatprep.subr.mxu0 0.0
    %1039 = vmatpush2.msra.mxu0 0.0
    %1040 = vmatprep.subr.mxu0 0.0
    %1041 = vmatpush2.msra.mxu0 0.0
    %1042 = vmatprep.subr.mxu0 0.0
    %1043 = vmatpush2.msra.mxu0 0.0
    %1044 = vmatprep.subr.mxu0 0.0
    %1045 = vmatpush2.msra.mxu0 0.0
    %1046 = vmatprep.subr.mxu0 0.0
    %1047 = vmatpush2.msra.mxu0 0.0
    %1048 = vmatprep.subr.mxu0 0.0
    %1049 = vmatpush2.msra.mxu0 0.0
    %1050 = vmatprep.mubr.f32.mxu0 0.0
    %v1051 = vand.u32 %v811, 4294901760
    %v1052 = vsub.f32 %v811, %v1051
    %1053 = vmatmul.mubr.f32.gmra.mxu0 %v1052
    %v1054 = vpop.f32.mrf.mxu0
    %v1055 = vadd.f32 %v975, %v1054
    %v1056 = vpop.f32.mrf.mxu0
    %1057 = vmatprep.mubr.f32.mxu0 0.0
    %v1058 = vand.u32 %v814, 4294901760
    %v1059 = vsub.f32 %v814, %v1058
    %1060 = vmatmul.mubr.f32.gmra.mxu0 %v1059
    %v1061 = vpop.f32.mrf.mxu0
    %v1062 = vadd.f32 %v981, %v1061
    %v1063 = vpop.f32.mrf.mxu0
    %1064 = vdwg.mxu0
    %1065 = vmatprep.subr.mxu0 0.0
    %1066 = vmatpush1.msra.mxu0 0.0
    %1067 = vmatprep.subr.mxu0 0.0
    %1068 = vmatpush1.msra.mxu0 0.0
    %1069 = vmatprep.subr.mxu0 0.0
    %1070 = vmatpush1.msra.mxu0 0.0
    %1071 = vmatprep.subr.mxu0 0.0
    %1072 = vmatpush1.msra.mxu0 0.0
    %1073 = vmatprep.subr.mxu0 0.0
    %1074 = vmatpush1.msra.mxu0 0.0
    %1075 = vmatprep.subr.mxu0 0.0
    %1076 = vmatpush1.msra.mxu0 0.0
    %1077 = vmatprep.subr.mxu0 0.0
    %1078 = vmatpush1.msra.mxu0 0.0
    %1079 = vmatprep.subr.mxu0 0.0
    %1080 = vmatpush1.msra.mxu0 0.0
    %1081 = vmatprep.subr.mxu0 0.0
    %1082 = vmatpush1.msra.mxu0 0.0
    %1083 = vmatprep.subr.mxu0 0.0
    %1084 = vmatpush1.msra.mxu0 0.0
    %1085 = vmatprep.subr.mxu0 0.0
    %1086 = vmatpush1.msra.mxu0 0.0
    %1087 = vmatprep.subr.mxu0 0.0
    %1088 = vmatpush1.msra.mxu0 0.0
    %1089 = vmatprep.subr.mxu0 0.0
    %1090 = vmatpush1.msra.mxu0 0.0
    %1091 = vmatprep.subr.mxu0 0.0
    %1092 = vmatpush1.msra.mxu0 0.0
    %1093 = vmatprep.subr.mxu0 0.0
    %1094 = vmatpush1.msra.mxu0 0.0
    %1095 = vmatprep.subr.mxu0 0.0
    %v1096 = vand.u32 %v802, 4294901760
    %1097 = vmatpush1.msra.mxu0 %v1096
    %1098 = vmatprep.subr.mxu0 0.0
    %1099 = vmatpush2.msra.mxu0 0.0
    %1100 = vmatprep.subr.mxu0 0.0
    %1101 = vmatpush2.msra.mxu0 0.0
    %1102 = vmatprep.subr.mxu0 0.0
    %1103 = vmatpush2.msra.mxu0 0.0
    %1104 = vmatprep.subr.mxu0 0.0
    %1105 = vmatpush2.msra.mxu0 0.0
    %1106 = vmatprep.subr.mxu0 0.0
    %1107 = vmatpush2.msra.mxu0 0.0
    %1108 = vmatprep.subr.mxu0 0.0
    %1109 = vmatpush2.msra.mxu0 0.0
    %1110 = vmatprep.subr.mxu0 0.0
    %1111 = vmatpush2.msra.mxu0 0.0
    %1112 = vmatprep.subr.mxu0 0.0
    %1113 = vmatpush2.msra.mxu0 0.0
    %1114 = vmatprep.subr.mxu0 0.0
    %1115 = vmatpush2.msra.mxu0 0.0
    %1116 = vmatprep.subr.mxu0 0.0
    %1117 = vmatpush2.msra.mxu0 0.0
    %1118 = vmatprep.subr.mxu0 0.0
    %1119 = vmatpush2.msra.mxu0 0.0
    %1120 = vmatprep.subr.mxu0 0.0
    %1121 = vmatpush2.msra.mxu0 0.0
    %1122 = vmatprep.subr.mxu0 0.0
    %1123 = vmatpush2.msra.mxu0 0.0
    %1124 = vmatprep.subr.mxu0 0.0
    %1125 = vmatpush2.msra.mxu0 0.0
    %1126 = vmatprep.subr.mxu0 0.0
    %1127 = vmatpush2.msra.mxu0 0.0
    %1128 = vmatprep.subr.mxu0 0.0
    %1129 = vmatpush2.msra.mxu0 0.0
    %1130 = vmatprep.mubr.f32.mxu0 0.0
    %v1131 = vand.u32 %v811, 4294901760
    %v1132 = vsub.f32 %v811, %v1131
    %v1133 = vand.u32 %v1132, 4294901760
    %1134 = vmatmul.mubr.f32.gmra.mxu0 %v1133
    %v1135 = vpop.f32.mrf.mxu0
    %v1136 = vadd.f32 %v1055, %v1135
    %v1137 = vpop.f32.mrf.mxu0
    %1138 = vmatprep.mubr.f32.mxu0 0.0
    %v1139 = vand.u32 %v814, 4294901760
    %v1140 = vsub.f32 %v814, %v1139
    %v1141 = vand.u32 %v1140, 4294901760
    %1142 = vmatmul.mubr.f32.gmra.mxu0 %v1141
    %v1143 = vpop.f32.mrf.mxu0
    %v1144 = vadd.f32 %v1062, %v1143
    %v1145 = vpop.f32.mrf.mxu0
    %1146 = vdwg.mxu0
    %1147 = vmatprep.subr.mxu0 0.0
    %1148 = vmatpush1.msra.mxu0 0.0
    %1149 = vmatprep.subr.mxu0 0.0
    %1150 = vmatpush1.msra.mxu0 0.0
    %1151 = vmatprep.subr.mxu0 0.0
    %1152 = vmatpush1.msra.mxu0 0.0
    %1153 = vmatprep.subr.mxu0 0.0
    %1154 = vmatpush1.msra.mxu0 0.0
    %1155 = vmatprep.subr.mxu0 0.0
    %1156 = vmatpush1.msra.mxu0 0.0
    %1157 = vmatprep.subr.mxu0 0.0
    %1158 = vmatpush1.msra.mxu0 0.0
    %1159 = vmatprep.subr.mxu0 0.0
    %1160 = vmatpush1.msra.mxu0 0.0
    %1161 = vmatprep.subr.mxu0 0.0
    %1162 = vmatpush1.msra.mxu0 0.0
    %1163 = vmatprep.subr.mxu0 0.0
    %1164 = vmatpush1.msra.mxu0 0.0
    %1165 = vmatprep.subr.mxu0 0.0
    %1166 = vmatpush1.msra.mxu0 0.0
    %1167 = vmatprep.subr.mxu0 0.0
    %1168 = vmatpush1.msra.mxu0 0.0
    %1169 = vmatprep.subr.mxu0 0.0
    %1170 = vmatpush1.msra.mxu0 0.0
    %1171 = vmatprep.subr.mxu0 0.0
    %1172 = vmatpush1.msra.mxu0 0.0
    %1173 = vmatprep.subr.mxu0 0.0
    %1174 = vmatpush1.msra.mxu0 0.0
    %1175 = vmatprep.subr.mxu0 0.0
    %1176 = vmatpush1.msra.mxu0 0.0
    %1177 = vmatprep.subr.mxu0 0.0
    %v1178 = vand.u32 %v802, 4294901760
    %v1179 = vsub.f32 %v802, %v1178
    %v1180 = vand.u32 %v1179, 4294901760
    %1181 = vmatpush1.msra.mxu0 %v1180
    %1182 = vmatprep.subr.mxu0 0.0
    %1183 = vmatpush2.msra.mxu0 0.0
    %1184 = vmatprep.subr.mxu0 0.0
    %1185 = vmatpush2.msra.mxu0 0.0
    %1186 = vmatprep.subr.mxu0 0.0
    %1187 = vmatpush2.msra.mxu0 0.0
    %1188 = vmatprep.subr.mxu0 0.0
    %1189 = vmatpush2.msra.mxu0 0.0
    %1190 = vmatprep.subr.mxu0 0.0
    %1191 = vmatpush2.msra.mxu0 0.0
    %1192 = vmatprep.subr.mxu0 0.0
    %1193 = vmatpush2.msra.mxu0 0.0
    %1194 = vmatprep.subr.mxu0 0.0
    %1195 = vmatpush2.msra.mxu0 0.0
    %1196 = vmatprep.subr.mxu0 0.0
    %1197 = vmatpush2.msra.mxu0 0.0
    %1198 = vmatprep.subr.mxu0 0.0
    %1199 = vmatpush2.msra.mxu0 0.0
    %1200 = vmatprep.subr.mxu0 0.0
    %1201 = vmatpush2.msra.mxu0 0.0
    %1202 = vmatprep.subr.mxu0 0.0
    %1203 = vmatpush2.msra.mxu0 0.0
    %1204 = vmatprep.subr.mxu0 0.0
    %1205 = vmatpush2.msra.mxu0 0.0
    %1206 = vmatprep.subr.mxu0 0.0
    %1207 = vmatpush2.msra.mxu0 0.0
    %1208 = vmatprep.subr.mxu0 0.0
    %1209 = vmatpush2.msra.mxu0 0.0
    %1210 = vmatprep.subr.mxu0 0.0
    %1211 = vmatpush2.msra.mxu0 0.0
    %1212 = vmatprep.subr.mxu0 0.0
    %1213 = vmatpush2.msra.mxu0 0.0
    %1214 = vmatprep.mubr.f32.mxu0 0.0
    %v1215 = vand.u32 %v811, 4294901760
    %1216 = vmatmul.mubr.f32.gmra.mxu0 %v1215
    %v1217 = vpop.f32.mrf.mxu0
    %v1218 = vadd.f32 %v1136, %v1217
    %v1219 = vpop.f32.mrf.mxu0
    %1220 = vmatprep.mubr.f32.mxu0 0.0
    %v1221 = vand.u32 %v814, 4294901760
    %1222 = vmatmul.mubr.f32.gmra.mxu0 %v1221
    %v1223 = vpop.f32.mrf.mxu0
    %v1224 = vadd.f32 %v1144, %v1223
    %v1225 = vpop.f32.mrf.mxu0
    %1226 = vdwg.mxu0
    %1227 = vmatprep.subr.mxu0 0.0
    %1228 = vmatpush1.msra.mxu0 0.0
    %1229 = vmatprep.subr.mxu0 0.0
    %1230 = vmatpush1.msra.mxu0 0.0
    %1231 = vmatprep.subr.mxu0 0.0
    %1232 = vmatpush1.msra.mxu0 0.0
    %1233 = vmatprep.subr.mxu0 0.0
    %1234 = vmatpush1.msra.mxu0 0.0
    %1235 = vmatprep.subr.mxu0 0.0
    %1236 = vmatpush1.msra.mxu0 0.0
    %1237 = vmatprep.subr.mxu0 0.0
    %1238 = vmatpush1.msra.mxu0 0.0
    %1239 = vmatprep.subr.mxu0 0.0
    %1240 = vmatpush1.msra.mxu0 0.0
    %1241 = vmatprep.subr.mxu0 0.0
    %1242 = vmatpush1.msra.mxu0 0.0
    %1243 = vmatprep.subr.mxu0 0.0
    %1244 = vmatpush1.msra.mxu0 0.0
    %1245 = vmatprep.subr.mxu0 0.0
    %1246 = vmatpush1.msra.mxu0 0.0
    %1247 = vmatprep.subr.mxu0 0.0
    %1248 = vmatpush1.msra.mxu0 0.0
    %1249 = vmatprep.subr.mxu0 0.0
    %1250 = vmatpush1.msra.mxu0 0.0
    %1251 = vmatprep.subr.mxu0 0.0
    %1252 = vmatpush1.msra.mxu0 0.0
    %1253 = vmatprep.subr.mxu0 0.0
    %1254 = vmatpush1.msra.mxu0 0.0
    %1255 = vmatprep.subr.mxu0 0.0
    %1256 = vmatpush1.msra.mxu0 0.0
    %1257 = vmatprep.subr.mxu0 0.0
    %v1258 = vand.u32 %v802, 4294901760
    %1259 = vmatpush1.msra.mxu0 %v1258
    %1260 = vmatprep.subr.mxu0 0.0
    %1261 = vmatpush2.msra.mxu0 0.0
    %1262 = vmatprep.subr.mxu0 0.0
    %1263 = vmatpush2.msra.mxu0 0.0
    %1264 = vmatprep.subr.mxu0 0.0
    %1265 = vmatpush2.msra.mxu0 0.0
    %1266 = vmatprep.subr.mxu0 0.0
    %1267 = vmatpush2.msra.mxu0 0.0
    %1268 = vmatprep.subr.mxu0 0.0
    %1269 = vmatpush2.msra.mxu0 0.0
    %1270 = vmatprep.subr.mxu0 0.0
    %1271 = vmatpush2.msra.mxu0 0.0
    %1272 = vmatprep.subr.mxu0 0.0
    %1273 = vmatpush2.msra.mxu0 0.0
    %1274 = vmatprep.subr.mxu0 0.0
    %1275 = vmatpush2.msra.mxu0 0.0
    %1276 = vmatprep.subr.mxu0 0.0
    %1277 = vmatpush2.msra.mxu0 0.0
    %1278 = vmatprep.subr.mxu0 0.0
    %1279 = vmatpush2.msra.mxu0 0.0
    %1280 = vmatprep.subr.mxu0 0.0
    %1281 = vmatpush2.msra.mxu0 0.0
    %1282 = vmatprep.subr.mxu0 0.0
    %1283 = vmatpush2.msra.mxu0 0.0
    %1284 = vmatprep.subr.mxu0 0.0
    %1285 = vmatpush2.msra.mxu0 0.0
    %1286 = vmatprep.subr.mxu0 0.0
    %1287 = vmatpush2.msra.mxu0 0.0
    %1288 = vmatprep.subr.mxu0 0.0
    %1289 = vmatpush2.msra.mxu0 0.0
    %1290 = vmatprep.subr.mxu0 0.0
    %1291 = vmatpush2.msra.mxu0 0.0
    %1292 = vmatprep.mubr.f32.mxu0 0.0
    %v1293 = vand.u32 %v811, 4294901760
    %1294 = vmatmul.mubr.f32.gmra.mxu0 %v1293
    %v1295 = vpop.f32.mrf.mxu0
    %v1296 = vadd.f32 %v1218, %v1295
    %v1297 = vpop.f32.mrf.mxu0
    %1298 = vmatprep.mubr.f32.mxu0 0.0
    %v1299 = vand.u32 %v814, 4294901760
    %1300 = vmatmul.mubr.f32.gmra.mxu0 %v1299
    %v1301 = vpop.f32.mrf.mxu0
    %v1302 = vadd.f32 %v1224, %v1301
    %v1303 = vpop.f32.mrf.mxu0
    %1304 = vdwg.mxu0
    %v1305 = vld [vmem:[%s4] sm:$0xff]
    %v1307 = vsel %vm71, 0.0, 0
    %1309 = vmatprep.subr.mxu0 0.0
    %1310 = vmatpush1.msra.mxu0 0.0
    %1311 = vmatprep.subr.mxu0 0.0
    %1312 = vmatpush1.msra.mxu0 0.0
    %1313 = vmatprep.subr.mxu0 0.0
    %1314 = vmatpush1.msra.mxu0 0.0
    %1315 = vmatprep.subr.mxu0 0.0
    %1316 = vmatpush1.msra.mxu0 0.0
    %1317 = vmatprep.subr.mxu0 0.0
    %1318 = vmatpush1.msra.mxu0 0.0
    %1319 = vmatprep.subr.mxu0 0.0
    %1320 = vmatpush1.msra.mxu0 0.0
    %1321 = vmatprep.subr.mxu0 0.0
    %1322 = vmatpush1.msra.mxu0 0.0
    %1323 = vmatprep.subr.mxu0 0.0
    %1324 = vmatpush1.msra.mxu0 0.0
    %1325 = vmatprep.subr.mxu0 0.0
    %1326 = vmatpush1.msra.mxu0 0.0
    %1327 = vmatprep.subr.mxu0 0.0
    %1328 = vmatpush1.msra.mxu0 0.0
    %1329 = vmatprep.subr.mxu0 0.0
    %1330 = vmatpush1.msra.mxu0 0.0
    %1331 = vmatprep.subr.mxu0 0.0
    %1332 = vmatpush1.msra.mxu0 0.0
    %1333 = vmatprep.subr.mxu0 0.0
    %1334 = vmatpush1.msra.mxu0 0.0
    %1335 = vmatprep.subr.mxu0 0.0
    %1336 = vmatpush1.msra.mxu0 0.0
    %1337 = vmatprep.subr.mxu0 0.0
    %1338 = vmatpush1.msra.mxu0 0.0
    %1339 = vmatprep.subr.mxu0 0.0
    %v1340 = vand.u32 %v1305, 4294901760
    %1341 = vmatpush1.msra.mxu0 %v1340
    %1342 = vmatprep.subr.mxu0 0.0
    %1343 = vmatpush2.msra.mxu0 0.0
    %1344 = vmatprep.subr.mxu0 0.0
    %1345 = vmatpush2.msra.mxu0 0.0
    %1346 = vmatprep.subr.mxu0 0.0
    %1347 = vmatpush2.msra.mxu0 0.0
    %1348 = vmatprep.subr.mxu0 0.0
    %1349 = vmatpush2.msra.mxu0 0.0
    %1350 = vmatprep.subr.mxu0 0.0
    %1351 = vmatpush2.msra.mxu0 0.0
    %1352 = vmatprep.subr.mxu0 0.0
    %1353 = vmatpush2.msra.mxu0 0.0
    %1354 = vmatprep.subr.mxu0 0.0
    %1355 = vmatpush2.msra.mxu0 0.0
    %1356 = vmatprep.subr.mxu0 0.0
    %1357 = vmatpush2.msra.mxu0 0.0
    %1358 = vmatprep.subr.mxu0 0.0
    %1359 = vmatpush2.msra.mxu0 0.0
    %1360 = vmatprep.subr.mxu0 0.0
    %1361 = vmatpush2.msra.mxu0 0.0
    %1362 = vmatprep.subr.mxu0 0.0
    %1363 = vmatpush2.msra.mxu0 0.0
    %1364 = vmatprep.subr.mxu0 0.0
    %1365 = vmatpush2.msra.mxu0 0.0
    %1366 = vmatprep.subr.mxu0 0.0
    %1367 = vmatpush2.msra.mxu0 0.0
    %1368 = vmatprep.subr.mxu0 0.0
    %1369 = vmatpush2.msra.mxu0 0.0
    %1370 = vmatprep.subr.mxu0 0.0
    %1371 = vmatpush2.msra.mxu0 0.0
    %1372 = vmatprep.subr.mxu0 0.0
    %1373 = vmatpush2.msra.mxu0 0.0
    %1374 = vmatprep.mubr.f32.mxu0 0.0
    %v1375 = vand.u32 %v1307, 4294901760
    %v1376 = vsub.f32 %v1307, %v1375
    %v1377 = vand.u32 %v1376, 4294901760
    %v1378 = vsub.f32 %v1376, %v1377
    %v1379 = vand.u32 %v1378, 4294901760
    %1380 = vmatmul.mubr.f32.gmra.mxu0 %v1379
    %v1381 = vpop.f32.mrf.mxu0
    %v1382 = vadd.f32 0.0, %v1381
    %v1383 = vpop.f32.mrf.mxu0
    %1384 = vdwg.mxu0
    %1385 = vmatprep.subr.mxu0 0.0
    %1386 = vmatpush1.msra.mxu0 0.0
    %1387 = vmatprep.subr.mxu0 0.0
    %1388 = vmatpush1.msra.mxu0 0.0
    %1389 = vmatprep.subr.mxu0 0.0
    %1390 = vmatpush1.msra.mxu0 0.0
    %1391 = vmatprep.subr.mxu0 0.0
    %1392 = vmatpush1.msra.mxu0 0.0
    %1393 = vmatprep.subr.mxu0 0.0
    %1394 = vmatpush1.msra.mxu0 0.0
    %1395 = vmatprep.subr.mxu0 0.0
    %1396 = vmatpush1.msra.mxu0 0.0
    %1397 = vmatprep.subr.mxu0 0.0
    %1398 = vmatpush1.msra.mxu0 0.0
    %1399 = vmatprep.subr.mxu0 0.0
    %1400 = vmatpush1.msra.mxu0 0.0
    %1401 = vmatprep.subr.mxu0 0.0
    %1402 = vmatpush1.msra.mxu0 0.0
    %1403 = vmatprep.subr.mxu0 0.0
    %1404 = vmatpush1.msra.mxu0 0.0
    %1405 = vmatprep.subr.mxu0 0.0
    %1406 = vmatpush1.msra.mxu0 0.0
    %1407 = vmatprep.subr.mxu0 0.0
    %1408 = vmatpush1.msra.mxu0 0.0
    %1409 = vmatprep.subr.mxu0 0.0
    %1410 = vmatpush1.msra.mxu0 0.0
    %1411 = vmatprep.subr.mxu0 0.0
    %1412 = vmatpush1.msra.mxu0 0.0
    %1413 = vmatprep.subr.mxu0 0.0
    %1414 = vmatpush1.msra.mxu0 0.0
    %1415 = vmatprep.subr.mxu0 0.0
    %v1416 = vand.u32 %v1305, 4294901760
    %v1417 = vsub.f32 %v1305, %v1416
    %v1418 = vand.u32 %v1417, 4294901760
    %v1419 = vsub.f32 %v1417, %v1418
    %v1420 = vand.u32 %v1419, 4294901760
    %1421 = vmatpush1.msra.mxu0 %v1420
    %1422 = vmatprep.subr.mxu0 0.0
    %1423 = vmatpush2.msra.mxu0 0.0
    %1424 = vmatprep.subr.mxu0 0.0
    %1425 = vmatpush2.msra.mxu0 0.0
    %1426 = vmatprep.subr.mxu0 0.0
    %1427 = vmatpush2.msra.mxu0 0.0
    %1428 = vmatprep.subr.mxu0 0.0
    %1429 = vmatpush2.msra.mxu0 0.0
    %1430 = vmatprep.subr.mxu0 0.0
    %1431 = vmatpush2.msra.mxu0 0.0
    %1432 = vmatprep.subr.mxu0 0.0
    %1433 = vmatpush2.msra.mxu0 0.0
    %1434 = vmatprep.subr.mxu0 0.0
    %1435 = vmatpush2.msra.mxu0 0.0
    %1436 = vmatprep.subr.mxu0 0.0
    %1437 = vmatpush2.msra.mxu0 0.0
    %1438 = vmatprep.subr.mxu0 0.0
    %1439 = vmatpush2.msra.mxu0 0.0
    %1440 = vmatprep.subr.mxu0 0.0
    %1441 = vmatpush2.msra.mxu0 0.0
    %1442 = vmatprep.subr.mxu0 0.0
    %1443 = vmatpush2.msra.mxu0 0.0
    %1444 = vmatprep.subr.mxu0 0.0
    %1445 = vmatpush2.msra.mxu0 0.0
    %1446 = vmatprep.subr.mxu0 0.0
    %1447 = vmatpush2.msra.mxu0 0.0
    %1448 = vmatprep.subr.mxu0 0.0
    %1449 = vmatpush2.msra.mxu0 0.0
    %1450 = vmatprep.subr.mxu0 0.0
    %1451 = vmatpush2.msra.mxu0 0.0
    %1452 = vmatprep.subr.mxu0 0.0
    %1453 = vmatpush2.msra.mxu0 0.0
    %1454 = vmatprep.mubr.f32.mxu0 0.0
    %v1455 = vand.u32 %v1307, 4294901760
    %1456 = vmatmul.mubr.f32.gmra.mxu0 %v1455
    %v1457 = vpop.f32.mrf.mxu0
    %v1458 = vadd.f32 %v1382, %v1457
    %v1459 = vpop.f32.mrf.mxu0
    %1460 = vdwg.mxu0
    %1461 = vmatprep.subr.mxu0 0.0
    %1462 = vmatpush1.msra.mxu0 0.0
    %1463 = vmatprep.subr.mxu0 0.0
    %1464 = vmatpush1.msra.mxu0 0.0
    %1465 = vmatprep.subr.mxu0 0.0
    %1466 = vmatpush1.msra.mxu0 0.0
    %1467 = vmatprep.subr.mxu0 0.0
    %1468 = vmatpush1.msra.mxu0 0.0
    %1469 = vmatprep.subr.mxu0 0.0
    %1470 = vmatpush1.msra.mxu0 0.0
    %1471 = vmatprep.subr.mxu0 0.0
    %1472 = vmatpush1.msra.mxu0 0.0
    %1473 = vmatprep.subr.mxu0 0.0
    %1474 = vmatpush1.msra.mxu0 0.0
    %1475 = vmatprep.subr.mxu0 0.0
    %1476 = vmatpush1.msra.mxu0 0.0
    %1477 = vmatprep.subr.mxu0 0.0
    %1478 = vmatpush1.msra.mxu0 0.0
    %1479 = vmatprep.subr.mxu0 0.0
    %1480 = vmatpush1.msra.mxu0 0.0
    %1481 = vmatprep.subr.mxu0 0.0
    %1482 = vmatpush1.msra.mxu0 0.0
    %1483 = vmatprep.subr.mxu0 0.0
    %1484 = vmatpush1.msra.mxu0 0.0
    %1485 = vmatprep.subr.mxu0 0.0
    %1486 = vmatpush1.msra.mxu0 0.0
    %1487 = vmatprep.subr.mxu0 0.0
    %1488 = vmatpush1.msra.mxu0 0.0
    %1489 = vmatprep.subr.mxu0 0.0
    %1490 = vmatpush1.msra.mxu0 0.0
    %1491 = vmatprep.subr.mxu0 0.0
    %v1492 = vand.u32 %v1305, 4294901760
    %v1493 = vsub.f32 %v1305, %v1492
    %1494 = vmatpush1.msra.mxu0 %v1493
    %1495 = vmatprep.subr.mxu0 0.0
    %1496 = vmatpush2.msra.mxu0 0.0
    %1497 = vmatprep.subr.mxu0 0.0
    %1498 = vmatpush2.msra.mxu0 0.0
    %1499 = vmatprep.subr.mxu0 0.0
    %1500 = vmatpush2.msra.mxu0 0.0
    %1501 = vmatprep.subr.mxu0 0.0
    %1502 = vmatpush2.msra.mxu0 0.0
    %1503 = vmatprep.subr.mxu0 0.0
    %1504 = vmatpush2.msra.mxu0 0.0
    %1505 = vmatprep.subr.mxu0 0.0
    %1506 = vmatpush2.msra.mxu0 0.0
    %1507 = vmatprep.subr.mxu0 0.0
    %1508 = vmatpush2.msra.mxu0 0.0
    %1509 = vmatprep.subr.mxu0 0.0
    %1510 = vmatpush2.msra.mxu0 0.0
    %1511 = vmatprep.subr.mxu0 0.0
    %1512 = vmatpush2.msra.mxu0 0.0
    %1513 = vmatprep.subr.mxu0 0.0
    %1514 = vmatpush2.msra.mxu0 0.0
    %1515 = vmatprep.subr.mxu0 0.0
    %1516 = vmatpush2.msra.mxu0 0.0
    %1517 = vmatprep.subr.mxu0 0.0
    %1518 = vmatpush2.msra.mxu0 0.0
    %1519 = vmatprep.subr.mxu0 0.0
    %1520 = vmatpush2.msra.mxu0 0.0
    %1521 = vmatprep.subr.mxu0 0.0
    %1522 = vmatpush2.msra.mxu0 0.0
    %1523 = vmatprep.subr.mxu0 0.0
    %1524 = vmatpush2.msra.mxu0 0.0
    %1525 = vmatprep.subr.mxu0 0.0
    %1526 = vmatpush2.msra.mxu0 0.0
    %1527 = vmatprep.mubr.f32.mxu0 0.0
    %v1528 = vand.u32 %v1307, 4294901760
    %v1529 = vsub.f32 %v1307, %v1528
    %1530 = vmatmul.mubr.f32.gmra.mxu0 %v1529
    %v1531 = vpop.f32.mrf.mxu0
    %v1532 = vadd.f32 %v1458, %v1531
    %v1533 = vpop.f32.mrf.mxu0
    %1534 = vdwg.mxu0
    %1535 = vmatprep.subr.mxu0 0.0
    %1536 = vmatpush1.msra.mxu0 0.0
    %1537 = vmatprep.subr.mxu0 0.0
    %1538 = vmatpush1.msra.mxu0 0.0
    %1539 = vmatprep.subr.mxu0 0.0
    %1540 = vmatpush1.msra.mxu0 0.0
    %1541 = vmatprep.subr.mxu0 0.0
    %1542 = vmatpush1.msra.mxu0 0.0
    %1543 = vmatprep.subr.mxu0 0.0
    %1544 = vmatpush1.msra.mxu0 0.0
    %1545 = vmatprep.subr.mxu0 0.0
    %1546 = vmatpush1.msra.mxu0 0.0
    %1547 = vmatprep.subr.mxu0 0.0
    %1548 = vmatpush1.msra.mxu0 0.0
    %1549 = vmatprep.subr.mxu0 0.0
    %1550 = vmatpush1.msra.mxu0 0.0
    %1551 = vmatprep.subr.mxu0 0.0
    %1552 = vmatpush1.msra.mxu0 0.0
    %1553 = vmatprep.subr.mxu0 0.0
    %1554 = vmatpush1.msra.mxu0 0.0
    %1555 = vmatprep.subr.mxu0 0.0
    %1556 = vmatpush1.msra.mxu0 0.0
    %1557 = vmatprep.subr.mxu0 0.0
    %1558 = vmatpush1.msra.mxu0 0.0
    %1559 = vmatprep.subr.mxu0 0.0
    %1560 = vmatpush1.msra.mxu0 0.0
    %1561 = vmatprep.subr.mxu0 0.0
    %1562 = vmatpush1.msra.mxu0 0.0
    %1563 = vmatprep.subr.mxu0 0.0
    %1564 = vmatpush1.msra.mxu0 0.0
    %1565 = vmatprep.subr.mxu0 0.0
    %v1566 = vand.u32 %v1305, 4294901760
    %1567 = vmatpush1.msra.mxu0 %v1566
    %1568 = vmatprep.subr.mxu0 0.0
    %1569 = vmatpush2.msra.mxu0 0.0
    %1570 = vmatprep.subr.mxu0 0.0
    %1571 = vmatpush2.msra.mxu0 0.0
    %1572 = vmatprep.subr.mxu0 0.0
    %1573 = vmatpush2.msra.mxu0 0.0
    %1574 = vmatprep.subr.mxu0 0.0
    %1575 = vmatpush2.msra.mxu0 0.0
    %1576 = vmatprep.subr.mxu0 0.0
    %1577 = vmatpush2.msra.mxu0 0.0
    %1578 = vmatprep.subr.mxu0 0.0
    %1579 = vmatpush2.msra.mxu0 0.0
    %1580 = vmatprep.subr.mxu0 0.0
    %1581 = vmatpush2.msra.mxu0 0.0
    %1582 = vmatprep.subr.mxu0 0.0
    %1583 = vmatpush2.msra.mxu0 0.0
    %1584 = vmatprep.subr.mxu0 0.0
    %1585 = vmatpush2.msra.mxu0 0.0
    %1586 = vmatprep.subr.mxu0 0.0
    %1587 = vmatpush2.msra.mxu0 0.0
    %1588 = vmatprep.subr.mxu0 0.0
    %1589 = vmatpush2.msra.mxu0 0.0
    %1590 = vmatprep.subr.mxu0 0.0
    %1591 = vmatpush2.msra.mxu0 0.0
    %1592 = vmatprep.subr.mxu0 0.0
    %1593 = vmatpush2.msra.mxu0 0.0
    %1594 = vmatprep.subr.mxu0 0.0
    %1595 = vmatpush2.msra.mxu0 0.0
    %1596 = vmatprep.subr.mxu0 0.0
    %1597 = vmatpush2.msra.mxu0 0.0
    %1598 = vmatprep.subr.mxu0 0.0
    %1599 = vmatpush2.msra.mxu0 0.0
    %1600 = vmatprep.mubr.f32.mxu0 0.0
    %v1601 = vand.u32 %v1307, 4294901760
    %v1602 = vsub.f32 %v1307, %v1601
    %v1603 = vand.u32 %v1602, 4294901760
    %1604 = vmatmul.mubr.f32.gmra.mxu0 %v1603
    %v1605 = vpop.f32.mrf.mxu0
    %v1606 = vadd.f32 %v1532, %v1605
    %v1607 = vpop.f32.mrf.mxu0
    %1608 = vdwg.mxu0
    %1609 = vmatprep.subr.mxu0 0.0
    %1610 = vmatpush1.msra.mxu0 0.0
    %1611 = vmatprep.subr.mxu0 0.0
    %1612 = vmatpush1.msra.mxu0 0.0
    %1613 = vmatprep.subr.mxu0 0.0
    %1614 = vmatpush1.msra.mxu0 0.0
    %1615 = vmatprep.subr.mxu0 0.0
    %1616 = vmatpush1.msra.mxu0 0.0
    %1617 = vmatprep.subr.mxu0 0.0
    %1618 = vmatpush1.msra.mxu0 0.0
    %1619 = vmatprep.subr.mxu0 0.0
    %1620 = vmatpush1.msra.mxu0 0.0
    %1621 = vmatprep.subr.mxu0 0.0
    %1622 = vmatpush1.msra.mxu0 0.0
    %1623 = vmatprep.subr.mxu0 0.0
    %1624 = vmatpush1.msra.mxu0 0.0
    %1625 = vmatprep.subr.mxu0 0.0
    %1626 = vmatpush1.msra.mxu0 0.0
    %1627 = vmatprep.subr.mxu0 0.0
    %1628 = vmatpush1.msra.mxu0 0.0
    %1629 = vmatprep.subr.mxu0 0.0
    %1630 = vmatpush1.msra.mxu0 0.0
    %1631 = vmatprep.subr.mxu0 0.0
    %1632 = vmatpush1.msra.mxu0 0.0
    %1633 = vmatprep.subr.mxu0 0.0
    %1634 = vmatpush1.msra.mxu0 0.0
    %1635 = vmatprep.subr.mxu0 0.0
    %1636 = vmatpush1.msra.mxu0 0.0
    %1637 = vmatprep.subr.mxu0 0.0
    %1638 = vmatpush1.msra.mxu0 0.0
    %1639 = vmatprep.subr.mxu0 0.0
    %v1640 = vand.u32 %v1305, 4294901760
    %v1641 = vsub.f32 %v1305, %v1640
    %v1642 = vand.u32 %v1641, 4294901760
    %1643 = vmatpush1.msra.mxu0 %v1642
    %1644 = vmatprep.subr.mxu0 0.0
    %1645 = vmatpush2.msra.mxu0 0.0
    %1646 = vmatprep.subr.mxu0 0.0
    %1647 = vmatpush2.msra.mxu0 0.0
    %1648 = vmatprep.subr.mxu0 0.0
    %1649 = vmatpush2.msra.mxu0 0.0
    %1650 = vmatprep.subr.mxu0 0.0
    %1651 = vmatpush2.msra.mxu0 0.0
    %1652 = vmatprep.subr.mxu0 0.0
    %1653 = vmatpush2.msra.mxu0 0.0
    %1654 = vmatprep.subr.mxu0 0.0
    %1655 = vmatpush2.msra.mxu0 0.0
    %1656 = vmatprep.subr.mxu0 0.0
    %1657 = vmatpush2.msra.mxu0 0.0
    %1658 = vmatprep.subr.mxu0 0.0
    %1659 = vmatpush2.msra.mxu0 0.0
    %1660 = vmatprep.subr.mxu0 0.0
    %1661 = vmatpush2.msra.mxu0 0.0
    %1662 = vmatprep.subr.mxu0 0.0
    %1663 = vmatpush2.msra.mxu0 0.0
    %1664 = vmatprep.subr.mxu0 0.0
    %1665 = vmatpush2.msra.mxu0 0.0
    %1666 = vmatprep.subr.mxu0 0.0
    %1667 = vmatpush2.msra.mxu0 0.0
    %1668 = vmatprep.subr.mxu0 0.0
    %1669 = vmatpush2.msra.mxu0 0.0
    %1670 = vmatprep.subr.mxu0 0.0
    %1671 = vmatpush2.msra.mxu0 0.0
    %1672 = vmatprep.subr.mxu0 0.0
    %1673 = vmatpush2.msra.mxu0 0.0
    %1674 = vmatprep.subr.mxu0 0.0
    %1675 = vmatpush2.msra.mxu0 0.0
    %1676 = vmatprep.mubr.f32.mxu0 0.0
    %v1677 = vand.u32 %v1307, 4294901760
    %1678 = vmatmul.mubr.f32.gmra.mxu0 %v1677
    %v1679 = vpop.f32.mrf.mxu0
    %v1680 = vadd.f32 %v1606, %v1679
    %v1681 = vpop.f32.mrf.mxu0
    %1682 = vdwg.mxu0
    %1683 = vmatprep.subr.mxu0 0.0
    %1684 = vmatpush1.msra.mxu0 0.0
    %1685 = vmatprep.subr.mxu0 0.0
    %1686 = vmatpush1.msra.mxu0 0.0
    %1687 = vmatprep.subr.mxu0 0.0
    %1688 = vmatpush1.msra.mxu0 0.0
    %1689 = vmatprep.subr.mxu0 0.0
    %1690 = vmatpush1.msra.mxu0 0.0
    %1691 = vmatprep.subr.mxu0 0.0
    %1692 = vmatpush1.msra.mxu0 0.0
    %1693 = vmatprep.subr.mxu0 0.0
    %1694 = vmatpush1.msra.mxu0 0.0
    %1695 = vmatprep.subr.mxu0 0.0
    %1696 = vmatpush1.msra.mxu0 0.0
    %1697 = vmatprep.subr.mxu0 0.0
    %1698 = vmatpush1.msra.mxu0 0.0
    %1699 = vmatprep.subr.mxu0 0.0
    %1700 = vmatpush1.msra.mxu0 0.0
    %1701 = vmatprep.subr.mxu0 0.0
    %1702 = vmatpush1.msra.mxu0 0.0
    %1703 = vmatprep.subr.mxu0 0.0
    %1704 = vmatpush1.msra.mxu0 0.0
    %1705 = vmatprep.subr.mxu0 0.0
    %1706 = vmatpush1.msra.mxu0 0.0
    %1707 = vmatprep.subr.mxu0 0.0
    %1708 = vmatpush1.msra.mxu0 0.0
    %1709 = vmatprep.subr.mxu0 0.0
    %1710 = vmatpush1.msra.mxu0 0.0
    %1711 = vmatprep.subr.mxu0 0.0
    %1712 = vmatpush1.msra.mxu0 0.0
    %1713 = vmatprep.subr.mxu0 0.0
    %v1714 = vand.u32 %v1305, 4294901760
    %1715 = vmatpush1.msra.mxu0 %v1714
    %1716 = vmatprep.subr.mxu0 0.0
    %1717 = vmatpush2.msra.mxu0 0.0
    %1718 = vmatprep.subr.mxu0 0.0
    %1719 = vmatpush2.msra.mxu0 0.0
    %1720 = vmatprep.subr.mxu0 0.0
    %1721 = vmatpush2.msra.mxu0 0.0
    %1722 = vmatprep.subr.mxu0 0.0
    %1723 = vmatpush2.msra.mxu0 0.0
    %1724 = vmatprep.subr.mxu0 0.0
    %1725 = vmatpush2.msra.mxu0 0.0
    %1726 = vmatprep.subr.mxu0 0.0
    %1727 = vmatpush2.msra.mxu0 0.0
    %1728 = vmatprep.subr.mxu0 0.0
    %1729 = vmatpush2.msra.mxu0 0.0
    %1730 = vmatprep.subr.mxu0 0.0
    %1731 = vmatpush2.msra.mxu0 0.0
    %1732 = vmatprep.subr.mxu0 0.0
    %1733 = vmatpush2.msra.mxu0 0.0
    %1734 = vmatprep.subr.mxu0 0.0
    %1735 = vmatpush2.msra.mxu0 0.0
    %1736 = vmatprep.subr.mxu0 0.0
    %1737 = vmatpush2.msra.mxu0 0.0
    %1738 = vmatprep.subr.mxu0 0.0
    %1739 = vmatpush2.msra.mxu0 0.0
    %1740 = vmatprep.subr.mxu0 0.0
    %1741 = vmatpush2.msra.mxu0 0.0
    %1742 = vmatprep.subr.mxu0 0.0
    %1743 = vmatpush2.msra.mxu0 0.0
    %1744 = vmatprep.subr.mxu0 0.0
    %1745 = vmatpush2.msra.mxu0 0.0
    %1746 = vmatprep.subr.mxu0 0.0
    %1747 = vmatpush2.msra.mxu0 0.0
    %1748 = vmatprep.mubr.f32.mxu0 0.0
    %v1749 = vand.u32 %v1307, 4294901760
    %1750 = vmatmul.mubr.f32.gmra.mxu0 %v1749
    %v1751 = vpop.f32.mrf.mxu0
    %v1752 = vadd.f32 %v1680, %v1751
    %v1753 = vpop.f32.mrf.mxu0
    %1754 = vdwg.mxu0
    %v1755 = vadd.f32 %v1296, %v1752
    %v1756 = vxor.u32 %v1755, 2147483648
    %v1757 = vmul.f32 %v1756, 1.442695
    %v1758 = vpow.pop %v1757
    %v1759 = vadd.f32 %v1758, 1.0
    %v1760 = vrcp.pop %v1759
    %v1761 = vmul.f32 1.0, %v1760
    %v1762 = vtanh.pop %v1755
    %v1763 = vmul.f32 %v1761, 0.0
    %1765 = vrot.lane.b32.xlu0 %v1762, 104
    %v1766 = vpop.permute.xlu0 %1765
    %v1768 = vmul.f32 %v1761, %v1766
    %1770 = vrot.lane.b32.xlu0 %v1768, 8
    %v1771 = vpop.permute.xlu0 %1770
    %v1773 = vadd.f32 %v1763, %v1771
    %v1774 = vtanh.pop %v1773
    %1776 = vrot.lane.b32.xlu0 %v1774, 8
    %v1777 = vpop.permute.xlu0 %1776
    %v1779 = vmul.f32 %v1761, %v1777
    %v1780 = vadd.f32 %v1779, %v1779
    %1782 = vrot.lane.b32.xlu0 %v1779, 112
    %v1783 = vpop.permute.xlu0 %1782
    %v1784 = vsel %vm71, %v1783, 0
    %1786 = vmatprep.subr.mxu0 0.0
    %1787 = vmatpush1.msra.mxu0 0.0
    %1788 = vmatprep.subr.mxu0 0.0
    %1789 = vmatpush1.msra.mxu0 0.0
    %1790 = vmatprep.subr.mxu0 0.0
    %1791 = vmatpush1.msra.mxu0 0.0
    %1792 = vmatprep.subr.mxu0 0.0
    %1793 = vmatpush1.msra.mxu0 0.0
    %1794 = vmatprep.subr.mxu0 0.0
    %1795 = vmatpush1.msra.mxu0 0.0
    %1796 = vmatprep.subr.mxu0 0.0
    %1797 = vmatpush1.msra.mxu0 0.0
    %1798 = vmatprep.subr.mxu0 0.0
    %1799 = vmatpush1.msra.mxu0 0.0
    %1800 = vmatprep.subr.mxu0 0.0
    %1801 = vmatpush1.msra.mxu0 0.0
    %1802 = vmatprep.subr.mxu0 0.0
    %1803 = vmatpush1.msra.mxu0 0.0
    %1804 = vmatprep.subr.mxu0 0.0
    %1805 = vmatpush1.msra.mxu0 0.0
    %1806 = vmatprep.subr.mxu0 0.0
    %1807 = vmatpush1.msra.mxu0 0.0
    %1808 = vmatprep.subr.mxu0 0.0
    %1809 = vmatpush1.msra.mxu0 0.0
    %1810 = vmatprep.subr.mxu0 0.0
    %1811 = vmatpush1.msra.mxu0 0.0
    %1812 = vmatprep.subr.mxu0 0.0
    %1813 = vmatpush1.msra.mxu0 0.0
    %1814 = vmatprep.subr.mxu0 0.0
    %1815 = vmatpush1.msra.mxu0 0.0
    %1816 = vmatprep.subr.mxu0 0.0
    %v1817 = vand.u32 %v1305, 4294901760
    %1818 = vmatpush1.msra.mxu0 %v1817
    %1819 = vmatprep.subr.mxu0 0.0
    %1820 = vmatpush2.msra.mxu0 0.0
    %1821 = vmatprep.subr.mxu0 0.0
    %1822 = vmatpush2.msra.mxu0 0.0
    %1823 = vmatprep.subr.mxu0 0.0
    %1824 = vmatpush2.msra.mxu0 0.0
    %1825 = vmatprep.subr.mxu0 0.0
    %1826 = vmatpush2.msra.mxu0 0.0
    %1827 = vmatprep.subr.mxu0 0.0
    %1828 = vmatpush2.msra.mxu0 0.0
    %1829 = vmatprep.subr.mxu0 0.0
    %1830 = vmatpush2.msra.mxu0 0.0
    %1831 = vmatprep.subr.mxu0 0.0
    %1832 = vmatpush2.msra.mxu0 0.0
    %1833 = vmatprep.subr.mxu0 0.0
    %1834 = vmatpush2.msra.mxu0 0.0
    %1835 = vmatprep.subr.mxu0 0.0
    %1836 = vmatpush2.msra.mxu0 0.0
    %1837 = vmatprep.subr.mxu0 0.0
    %1838 = vmatpush2.msra.mxu0 0.0
    %1839 = vmatprep.subr.mxu0 0.0
    %1840 = vmatpush2.msra.mxu0 0.0
    %1841 = vmatprep.subr.mxu0 0.0
    %1842 = vmatpush2.msra.mxu0 0.0
    %1843 = vmatprep.subr.mxu0 0.0
    %1844 = vmatpush2.msra.mxu0 0.0
    %1845 = vmatprep.subr.mxu0 0.0
    %1846 = vmatpush2.msra.mxu0 0.0
    %1847 = vmatprep.subr.mxu0 0.0
    %1848 = vmatpush2.msra.mxu0 0.0
    %1849 = vmatprep.subr.mxu0 0.0
    %1850 = vmatpush2.msra.mxu0 0.0
    %1851 = vmatprep.mubr.f32.mxu0 0.0
    %v1852 = vand.u32 %v1784, 4294901760
    %v1853 = vsub.f32 %v1784, %v1852
    %v1854 = vand.u32 %v1853, 4294901760
    %v1855 = vsub.f32 %v1853, %v1854
    %v1856 = vand.u32 %v1855, 4294901760
    %1857 = vmatmul.mubr.f32.gmra.mxu0 %v1856
    %v1858 = vpop.f32.mrf.mxu0
    %v1859 = vadd.f32 0.0, %v1858
    %v1860 = vpop.f32.mrf.mxu0
    %1861 = vdwg.mxu0
    %1862 = vmatprep.subr.mxu0 0.0
    %1863 = vmatpush1.msra.mxu0 0.0
    %1864 = vmatprep.subr.mxu0 0.0
    %1865 = vmatpush1.msra.mxu0 0.0
    %1866 = vmatprep.subr.mxu0 0.0
    %1867 = vmatpush1.msra.mxu0 0.0
    %1868 = vmatprep.subr.mxu0 0.0
    %1869 = vmatpush1.msra.mxu0 0.0
    %1870 = vmatprep.subr.mxu0 0.0
    %1871 = vmatpush1.msra.mxu0 0.0
    %1872 = vmatprep.subr.mxu0 0.0
    %1873 = vmatpush1.msra.mxu0 0.0
    %1874 = vmatprep.subr.mxu0 0.0
    %1875 = vmatpush1.msra.mxu0 0.0
    %1876 = vmatprep.subr.mxu0 0.0
    %1877 = vmatpush1.msra.mxu0 0.0
    %1878 = vmatprep.subr.mxu0 0.0
    %1879 = vmatpush1.msra.mxu0 0.0
    %1880 = vmatprep.subr.mxu0 0.0
    %1881 = vmatpush1.msra.mxu0 0.0
    %1882 = vmatprep.subr.mxu0 0.0
    %1883 = vmatpush1.msra.mxu0 0.0
    %1884 = vmatprep.subr.mxu0 0.0
    %1885 = vmatpush1.msra.mxu0 0.0
    %1886 = vmatprep.subr.mxu0 0.0
    %1887 = vmatpush1.msra.mxu0 0.0
    %1888 = vmatprep.subr.mxu0 0.0
    %1889 = vmatpush1.msra.mxu0 0.0
    %1890 = vmatprep.subr.mxu0 0.0
    %1891 = vmatpush1.msra.mxu0 0.0
    %1892 = vmatprep.subr.mxu0 0.0
    %v1893 = vand.u32 %v1305, 4294901760
    %v1894 = vsub.f32 %v1305, %v1893
    %v1895 = vand.u32 %v1894, 4294901760
    %v1896 = vsub.f32 %v1894, %v1895
    %v1897 = vand.u32 %v1896, 4294901760
    %1898 = vmatpush1.msra.mxu0 %v1897
    %1899 = vmatprep.subr.mxu0 0.0
    %1900 = vmatpush2.msra.mxu0 0.0
    %1901 = vmatprep.subr.mxu0 0.0
    %1902 = vmatpush2.msra.mxu0 0.0
    %1903 = vmatprep.subr.mxu0 0.0
    %1904 = vmatpush2.msra.mxu0 0.0
    %1905 = vmatprep.subr.mxu0 0.0
    %1906 = vmatpush2.msra.mxu0 0.0
    %1907 = vmatprep.subr.mxu0 0.0
    %1908 = vmatpush2.msra.mxu0 0.0
    %1909 = vmatprep.subr.mxu0 0.0
    %1910 = vmatpush2.msra.mxu0 0.0
    %1911 = vmatprep.subr.mxu0 0.0
    %1912 = vmatpush2.msra.mxu0 0.0
    %1913 = vmatprep.subr.mxu0 0.0
    %1914 = vmatpush2.msra.mxu0 0.0
    %1915 = vmatprep.subr.mxu0 0.0
    %1916 = vmatpush2.msra.mxu0 0.0
    %1917 = vmatprep.subr.mxu0 0.0
    %1918 = vmatpush2.msra.mxu0 0.0
    %1919 = vmatprep.subr.mxu0 0.0
    %1920 = vmatpush2.msra.mxu0 0.0
    %1921 = vmatprep.subr.mxu0 0.0
    %1922 = vmatpush2.msra.mxu0 0.0
    %1923 = vmatprep.subr.mxu0 0.0
    %1924 = vmatpush2.msra.mxu0 0.0
    %1925 = vmatprep.subr.mxu0 0.0
    %1926 = vmatpush2.msra.mxu0 0.0
    %1927 = vmatprep.subr.mxu0 0.0
    %1928 = vmatpush2.msra.mxu0 0.0
    %1929 = vmatprep.subr.mxu0 0.0
    %1930 = vmatpush2.msra.mxu0 0.0
    %1931 = vmatprep.mubr.f32.mxu0 0.0
    %v1932 = vand.u32 %v1784, 4294901760
    %1933 = vmatmul.mubr.f32.gmra.mxu0 %v1932
    %v1934 = vpop.f32.mrf.mxu0
    %v1935 = vadd.f32 %v1859, %v1934
    %v1936 = vpop.f32.mrf.mxu0
    %1937 = vdwg.mxu0
    %1938 = vmatprep.subr.mxu0 0.0
    %1939 = vmatpush1.msra.mxu0 0.0
    %1940 = vmatprep.subr.mxu0 0.0
    %1941 = vmatpush1.msra.mxu0 0.0
    %1942 = vmatprep.subr.mxu0 0.0
    %1943 = vmatpush1.msra.mxu0 0.0
    %1944 = vmatprep.subr.mxu0 0.0
    %1945 = vmatpush1.msra.mxu0 0.0
    %1946 = vmatprep.subr.mxu0 0.0
    %1947 = vmatpush1.msra.mxu0 0.0
    %1948 = vmatprep.subr.mxu0 0.0
    %1949 = vmatpush1.msra.mxu0 0.0
    %1950 = vmatprep.subr.mxu0 0.0
    %1951 = vmatpush1.msra.mxu0 0.0
    %1952 = vmatprep.subr.mxu0 0.0
    %1953 = vmatpush1.msra.mxu0 0.0
    %1954 = vmatprep.subr.mxu0 0.0
    %1955 = vmatpush1.msra.mxu0 0.0
    %1956 = vmatprep.subr.mxu0 0.0
    %1957 = vmatpush1.msra.mxu0 0.0
    %1958 = vmatprep.subr.mxu0 0.0
    %1959 = vmatpush1.msra.mxu0 0.0
    %1960 = vmatprep.subr.mxu0 0.0
    %1961 = vmatpush1.msra.mxu0 0.0
    %1962 = vmatprep.subr.mxu0 0.0
    %1963 = vmatpush1.msra.mxu0 0.0
    %1964 = vmatprep.subr.mxu0 0.0
    %1965 = vmatpush1.msra.mxu0 0.0
    %1966 = vmatprep.subr.mxu0 0.0
    %1967 = vmatpush1.msra.mxu0 0.0
    %1968 = vmatprep.subr.mxu0 0.0
    %v1969 = vand.u32 %v1305, 4294901760
    %v1970 = vsub.f32 %v1305, %v1969
    %1971 = vmatpush1.msra.mxu0 %v1970
    %1972 = vmatprep.subr.mxu0 0.0
    %1973 = vmatpush2.msra.mxu0 0.0
    %1974 = vmatprep.subr.mxu0 0.0
    %1975 = vmatpush2.msra.mxu0 0.0
    %1976 = vmatprep.subr.mxu0 0.0
    %1977 = vmatpush2.msra.mxu0 0.0
    %1978 = vmatprep.subr.mxu0 0.0
    %1979 = vmatpush2.msra.mxu0 0.0
    %1980 = vmatprep.subr.mxu0 0.0
    %1981 = vmatpush2.msra.mxu0 0.0
    %1982 = vmatprep.subr.mxu0 0.0
    %1983 = vmatpush2.msra.mxu0 0.0
    %1984 = vmatprep.subr.mxu0 0.0
    %1985 = vmatpush2.msra.mxu0 0.0
    %1986 = vmatprep.subr.mxu0 0.0
    %1987 = vmatpush2.msra.mxu0 0.0
    %1988 = vmatprep.subr.mxu0 0.0
    %1989 = vmatpush2.msra.mxu0 0.0
    %1990 = vmatprep.subr.mxu0 0.0
    %1991 = vmatpush2.msra.mxu0 0.0
    %1992 = vmatprep.subr.mxu0 0.0
    %1993 = vmatpush2.msra.mxu0 0.0
    %1994 = vmatprep.subr.mxu0 0.0
    %1995 = vmatpush2.msra.mxu0 0.0
    %1996 = vmatprep.subr.mxu0 0.0
    %1997 = vmatpush2.msra.mxu0 0.0
    %1998 = vmatprep.subr.mxu0 0.0
    %1999 = vmatpush2.msra.mxu0 0.0
    %2000 = vmatprep.subr.mxu0 0.0
    %2001 = vmatpush2.msra.mxu0 0.0
    %2002 = vmatprep.subr.mxu0 0.0
    %2003 = vmatpush2.msra.mxu0 0.0
    %2004 = vmatprep.mubr.f32.mxu0 0.0
    %v2005 = vand.u32 %v1784, 4294901760
    %v2006 = vsub.f32 %v1784, %v2005
    %2007 = vmatmul.mubr.f32.gmra.mxu0 %v2006
    %v2008 = vpop.f32.mrf.mxu0
    %v2009 = vadd.f32 %v1935, %v2008
    %v2010 = vpop.f32.mrf.mxu0
    %2011 = vdwg.mxu0
    %2012 = vmatprep.subr.mxu0 0.0
    %2013 = vmatpush1.msra.mxu0 0.0
    %2014 = vmatprep.subr.mxu0 0.0
    %2015 = vmatpush1.msra.mxu0 0.0
    %2016 = vmatprep.subr.mxu0 0.0
    %2017 = vmatpush1.msra.mxu0 0.0
    %2018 = vmatprep.subr.mxu0 0.0
    %2019 = vmatpush1.msra.mxu0 0.0
    %2020 = vmatprep.subr.mxu0 0.0
    %2021 = vmatpush1.msra.mxu0 0.0
    %2022 = vmatprep.subr.mxu0 0.0
    %2023 = vmatpush1.msra.mxu0 0.0
    %2024 = vmatprep.subr.mxu0 0.0
    %2025 = vmatpush1.msra.mxu0 0.0
    %2026 = vmatprep.subr.mxu0 0.0
    %2027 = vmatpush1.msra.mxu0 0.0
    %2028 = vmatprep.subr.mxu0 0.0
    %2029 = vmatpush1.msra.mxu0 0.0
    %2030 = vmatprep.subr.mxu0 0.0
    %2031 = vmatpush1.msra.mxu0 0.0
    %2032 = vmatprep.subr.mxu0 0.0
    %2033 = vmatpush1.msra.mxu0 0.0
    %2034 = vmatprep.subr.mxu0 0.0
    %2035 = vmatpush1.msra.mxu0 0.0
    %2036 = vmatprep.subr.mxu0 0.0
    %2037 = vmatpush1.msra.mxu0 0.0
    %2038 = vmatprep.subr.mxu0 0.0
    %2039 = vmatpush1.msra.mxu0 0.0
    %2040 = vmatprep.subr.mxu0 0.0
    %2041 = vmatpush1.msra.mxu0 0.0
    %2042 = vmatprep.subr.mxu0 0.0
    %v2043 = vand.u32 %v1305, 4294901760
    %2044 = vmatpush1.msra.mxu0 %v2043
    %2045 = vmatprep.subr.mxu0 0.0
    %2046 = vmatpush2.msra.mxu0 0.0
    %2047 = vmatprep.subr.mxu0 0.0
    %2048 = vmatpush2.msra.mxu0 0.0
    %2049 = vmatprep.subr.mxu0 0.0
    %2050 = vmatpush2.msra.mxu0 0.0
    %2051 = vmatprep.subr.mxu0 0.0
    %2052 = vmatpush2.msra.mxu0 0.0
    %2053 = vmatprep.subr.mxu0 0.0
    %2054 = vmatpush2.msra.mxu0 0.0
    %2055 = vmatprep.subr.mxu0 0.0
    %2056 = vmatpush2.msra.mxu0 0.0
    %2057 = vmatprep.subr.mxu0 0.0
    %2058 = vmatpush2.msra.mxu0 0.0
    %2059 = vmatprep.subr.mxu0 0.0
    %2060 = vmatpush2.msra.mxu0 0.0
    %2061 = vmatprep.subr.mxu0 0.0
    %2062 = vmatpush2.msra.mxu0 0.0
    %2063 = vmatprep.subr.mxu0 0.0
    %2064 = vmatpush2.msra.mxu0 0.0
    %2065 = vmatprep.subr.mxu0 0.0
    %2066 = vmatpush2.msra.mxu0 0.0
    %2067 = vmatprep.subr.mxu0 0.0
    %2068 = vmatpush2.msra.mxu0 0.0
    %2069 = vmatprep.subr.mxu0 0.0
    %2070 = vmatpush2.msra.mxu0 0.0
    %2071 = vmatprep.subr.mxu0 0.0
    %2072 = vmatpush2.msra.mxu0 0.0
    %2073 = vmatprep.subr.mxu0 0.0
    %2074 = vmatpush2.msra.mxu0 0.0
    %2075 = vmatprep.subr.mxu0 0.0
    %2076 = vmatpush2.msra.mxu0 0.0
    %2077 = vmatprep.mubr.f32.mxu0 0.0
    %v2078 = vand.u32 %v1784, 4294901760
    %v2079 = vsub.f32 %v1784, %v2078
    %v2080 = vand.u32 %v2079, 4294901760
    %2081 = vmatmul.mubr.f32.gmra.mxu0 %v2080
    %v2082 = vpop.f32.mrf.mxu0
    %v2083 = vadd.f32 %v2009, %v2082
    %v2084 = vpop.f32.mrf.mxu0
    %2085 = vdwg.mxu0
    %2086 = vmatprep.subr.mxu0 0.0
    %2087 = vmatpush1.msra.mxu0 0.0
    %2088 = vmatprep.subr.mxu0 0.0
    %2089 = vmatpush1.msra.mxu0 0.0
    %2090 = vmatprep.subr.mxu0 0.0
    %2091 = vmatpush1.msra.mxu0 0.0
    %2092 = vmatprep.subr.mxu0 0.0
    %2093 = vmatpush1.msra.mxu0 0.0
    %2094 = vmatprep.subr.mxu0 0.0
    %2095 = vmatpush1.msra.mxu0 0.0
    %2096 = vmatprep.subr.mxu0 0.0
    %2097 = vmatpush1.msra.mxu0 0.0
    %2098 = vmatprep.subr.mxu0 0.0
    %2099 = vmatpush1.msra.mxu0 0.0
    %2100 = vmatprep.subr.mxu0 0.0
    %2101 = vmatpush1.msra.mxu0 0.0
    %2102 = vmatprep.subr.mxu0 0.0
    %2103 = vmatpush1.msra.mxu0 0.0
    %2104 = vmatprep.subr.mxu0 0.0
    %2105 = vmatpush1.msra.mxu0 0.0
    %2106 = vmatprep.subr.mxu0 0.0
    %2107 = vmatpush1.msra.mxu0 0.0
    %2108 = vmatprep.subr.mxu0 0.0
    %2109 = vmatpush1.msra.mxu0 0.0
    %2110 = vmatprep.subr.mxu0 0.0
    %2111 = vmatpush1.msra.mxu0 0.0
    %2112 = vmatprep.subr.mxu0 0.0
    %2113 = vmatpush1.msra.mxu0 0.0
    %2114 = vmatprep.subr.mxu0 0.0
    %2115 = vmatpush1.msra.mxu0 0.0
    %2116 = vmatprep.subr.mxu0 0.0
    %v2117 = vand.u32 %v1305, 4294901760
    %v2118 = vsub.f32 %v1305, %v2117
    %v2119 = vand.u32 %v2118, 4294901760
    %2120 = vmatpush1.msra.mxu0 %v2119
    %2121 = vmatprep.subr.mxu0 0.0
    %2122 = vmatpush2.msra.mxu0 0.0
    %2123 = vmatprep.subr.mxu0 0.0
    %2124 = vmatpush2.msra.mxu0 0.0
    %2125 = vmatprep.subr.mxu0 0.0
    %2126 = vmatpush2.msra.mxu0 0.0
    %2127 = vmatprep.subr.mxu0 0.0
    %2128 = vmatpush2.msra.mxu0 0.0
    %2129 = vmatprep.subr.mxu0 0.0
    %2130 = vmatpush2.msra.mxu0 0.0
    %2131 = vmatprep.subr.mxu0 0.0
    %2132 = vmatpush2.msra.mxu0 0.0
    %2133 = vmatprep.subr.mxu0 0.0
    %2134 = vmatpush2.msra.mxu0 0.0
    %2135 = vmatprep.subr.mxu0 0.0
    %2136 = vmatpush2.msra.mxu0 0.0
    %2137 = vmatprep.subr.mxu0 0.0
    %2138 = vmatpush2.msra.mxu0 0.0
    %2139 = vmatprep.subr.mxu0 0.0
    %2140 = vmatpush2.msra.mxu0 0.0
    %2141 = vmatprep.subr.mxu0 0.0
    %2142 = vmatpush2.msra.mxu0 0.0
    %2143 = vmatprep.subr.mxu0 0.0
    %2144 = vmatpush2.msra.mxu0 0.0
    %2145 = vmatprep.subr.mxu0 0.0
    %2146 = vmatpush2.msra.mxu0 0.0
    %2147 = vmatprep.subr.mxu0 0.0
    %2148 = vmatpush2.msra.mxu0 0.0
    %2149 = vmatprep.subr.mxu0 0.0
    %2150 = vmatpush2.msra.mxu0 0.0
    %2151 = vmatprep.subr.mxu0 0.0
    %2152 = vmatpush2.msra.mxu0 0.0
    %2153 = vmatprep.mubr.f32.mxu0 0.0
    %v2154 = vand.u32 %v1784, 4294901760
    %2155 = vmatmul.mubr.f32.gmra.mxu0 %v2154
    %v2156 = vpop.f32.mrf.mxu0
    %v2157 = vadd.f32 %v2083, %v2156
    %v2158 = vpop.f32.mrf.mxu0
    %2159 = vdwg.mxu0
    %2160 = vmatprep.subr.mxu0 0.0
    %2161 = vmatpush1.msra.mxu0 0.0
    %2162 = vmatprep.subr.mxu0 0.0
    %2163 = vmatpush1.msra.mxu0 0.0
    %2164 = vmatprep.subr.mxu0 0.0
    %2165 = vmatpush1.msra.mxu0 0.0
    %2166 = vmatprep.subr.mxu0 0.0
    %2167 = vmatpush1.msra.mxu0 0.0
    %2168 = vmatprep.subr.mxu0 0.0
    %2169 = vmatpush1.msra.mxu0 0.0
    %2170 = vmatprep.subr.mxu0 0.0
    %2171 = vmatpush1.msra.mxu0 0.0
    %2172 = vmatprep.subr.mxu0 0.0
    %2173 = vmatpush1.msra.mxu0 0.0
    %2174 = vmatprep.subr.mxu0 0.0
    %2175 = vmatpush1.msra.mxu0 0.0
    %2176 = vmatprep.subr.mxu0 0.0
    %2177 = vmatpush1.msra.mxu0 0.0
    %2178 = vmatprep.subr.mxu0 0.0
    %2179 = vmatpush1.msra.mxu0 0.0
    %2180 = vmatprep.subr.mxu0 0.0
    %2181 = vmatpush1.msra.mxu0 0.0
    %2182 = vmatprep.subr.mxu0 0.0
    %2183 = vmatpush1.msra.mxu0 0.0
    %2184 = vmatprep.subr.mxu0 0.0
    %2185 = vmatpush1.msra.mxu0 0.0
    %2186 = vmatprep.subr.mxu0 0.0
    %2187 = vmatpush1.msra.mxu0 0.0
    %2188 = vmatprep.subr.mxu0 0.0
    %2189 = vmatpush1.msra.mxu0 0.0
    %2190 = vmatprep.subr.mxu0 0.0
    %v2191 = vand.u32 %v1305, 4294901760
    %2192 = vmatpush1.msra.mxu0 %v2191
    %2193 = vmatprep.subr.mxu0 0.0
    %2194 = vmatpush2.msra.mxu0 0.0
    %2195 = vmatprep.subr.mxu0 0.0
    %2196 = vmatpush2.msra.mxu0 0.0
    %2197 = vmatprep.subr.mxu0 0.0
    %2198 = vmatpush2.msra.mxu0 0.0
    %2199 = vmatprep.subr.mxu0 0.0
    %2200 = vmatpush2.msra.mxu0 0.0
    %2201 = vmatprep.subr.mxu0 0.0
    %2202 = vmatpush2.msra.mxu0 0.0
    %2203 = vmatprep.subr.mxu0 0.0
    %2204 = vmatpush2.msra.mxu0 0.0
    %2205 = vmatprep.subr.mxu0 0.0
    %2206 = vmatpush2.msra.mxu0 0.0
    %2207 = vmatprep.subr.mxu0 0.0
    %2208 = vmatpush2.msra.mxu0 0.0
    %2209 = vmatprep.subr.mxu0 0.0
    %2210 = vmatpush2.msra.mxu0 0.0
    %2211 = vmatprep.subr.mxu0 0.0
    %2212 = vmatpush2.msra.mxu0 0.0
    %2213 = vmatprep.subr.mxu0 0.0
    %2214 = vmatpush2.msra.mxu0 0.0
    %2215 = vmatprep.subr.mxu0 0.0
    %2216 = vmatpush2.msra.mxu0 0.0
    %2217 = vmatprep.subr.mxu0 0.0
    %2218 = vmatpush2.msra.mxu0 0.0
    %2219 = vmatprep.subr.mxu0 0.0
    %2220 = vmatpush2.msra.mxu0 0.0
    %2221 = vmatprep.subr.mxu0 0.0
    %2222 = vmatpush2.msra.mxu0 0.0
    %2223 = vmatprep.subr.mxu0 0.0
    %2224 = vmatpush2.msra.mxu0 0.0
    %2225 = vmatprep.mubr.f32.mxu0 0.0
    %v2226 = vand.u32 %v1784, 4294901760
    %2227 = vmatmul.mubr.f32.gmra.mxu0 %v2226
    %v2228 = vpop.f32.mrf.mxu0
    %v2229 = vadd.f32 %v2157, %v2228
    %v2230 = vpop.f32.mrf.mxu0
    %2231 = vdwg.mxu0
    %v2233 = vrot.slane %v2229, 6
    %v2235 = vadd.f32 %v1296, %v2233
    %v2236 = vxor.u32 %v2235, 2147483648
    %v2237 = vmul.f32 %v2236, 1.442695
    %v2238 = vpow.pop %v2237
    %v2239 = vadd.f32 %v2238, 1.0
    %v2240 = vrcp.pop %v2239
    %v2241 = vmul.f32 1.0, %v2240
    %v2242 = vtanh.pop %v2235
    %v2244 = vrot.slane %v1773, 6
    %v2246 = vmul.f32 %v2241, %v2244
    %2248 = vrot.lane.b32.xlu0 %v2242, 104
    %v2249 = vpop.permute.xlu0 %2248
    %v2251 = vmul.f32 %v2241, %v2249
    %2253 = vrot.lane.b32.xlu0 %v2251, 8
    %v2254 = vpop.permute.xlu0 %2253
    %v2256 = vadd.f32 %v2246, %v2254
    %v2257 = vtanh.pop %v2256
    %2259 = vrot.lane.b32.xlu0 %v2257, 8
    %v2260 = vpop.permute.xlu0 %2259
    %v2262 = vmul.f32 %v2241, %v2260
    %v2263 = vadd.f32 %v2262, %v2262
    %v2265 = vrot.slane %v2262, 2
    %2266 = vrot.lane.b32.xlu0 %v2265, 112
    %v2267 = vpop.permute.xlu0 %2266
    %v2268 = vsel %vm71, %v2267, 0
    %2270 = vmatprep.subr.mxu0 0.0
    %2271 = vmatpush1.msra.mxu0 0.0
    %2272 = vmatprep.subr.mxu0 0.0
    %2273 = vmatpush1.msra.mxu0 0.0
    %2274 = vmatprep.subr.mxu0 0.0
    %2275 = vmatpush1.msra.mxu0 0.0
    %2276 = vmatprep.subr.mxu0 0.0
    %2277 = vmatpush1.msra.mxu0 0.0
    %2278 = vmatprep.subr.mxu0 0.0
    %2279 = vmatpush1.msra.mxu0 0.0
    %2280 = vmatprep.subr.mxu0 0.0
    %2281 = vmatpush1.msra.mxu0 0.0
    %2282 = vmatprep.subr.mxu0 0.0
    %2283 = vmatpush1.msra.mxu0 0.0
    %2284 = vmatprep.subr.mxu0 0.0
    %2285 = vmatpush1.msra.mxu0 0.0
    %2286 = vmatprep.subr.mxu0 0.0
    %2287 = vmatpush1.msra.mxu0 0.0
    %2288 = vmatprep.subr.mxu0 0.0
    %2289 = vmatpush1.msra.mxu0 0.0
    %2290 = vmatprep.subr.mxu0 0.0
    %2291 = vmatpush1.msra.mxu0 0.0
    %2292 = vmatprep.subr.mxu0 0.0
    %2293 = vmatpush1.msra.mxu0 0.0
    %2294 = vmatprep.subr.mxu0 0.0
    %2295 = vmatpush1.msra.mxu0 0.0
    %2296 = vmatprep.subr.mxu0 0.0
    %2297 = vmatpush1.msra.mxu0 0.0
    %2298 = vmatprep.subr.mxu0 0.0
    %2299 = vmatpush1.msra.mxu0 0.0
    %2300 = vmatprep.subr.mxu0 0.0
    %v2301 = vand.u32 %v1305, 4294901760
    %2302 = vmatpush1.msra.mxu0 %v2301
    %2303 = vmatprep.subr.mxu0 0.0
    %2304 = vmatpush2.msra.mxu0 0.0
    %2305 = vmatprep.subr.mxu0 0.0
    %2306 = vmatpush2.msra.mxu0 0.0
    %2307 = vmatprep.subr.mxu0 0.0
    %2308 = vmatpush2.msra.mxu0 0.0
    %2309 = vmatprep.subr.mxu0 0.0
    %2310 = vmatpush2.msra.mxu0 0.0
    %2311 = vmatprep.subr.mxu0 0.0
    %2312 = vmatpush2.msra.mxu0 0.0
    %2313 = vmatprep.subr.mxu0 0.0
    %2314 = vmatpush2.msra.mxu0 0.0
    %2315 = vmatprep.subr.mxu0 0.0
    %2316 = vmatpush2.msra.mxu0 0.0
    %2317 = vmatprep.subr.mxu0 0.0
    %2318 = vmatpush2.msra.mxu0 0.0
    %2319 = vmatprep.subr.mxu0 0.0
    %2320 = vmatpush2.msra.mxu0 0.0
    %2321 = vmatprep.subr.mxu0 0.0
    %2322 = vmatpush2.msra.mxu0 0.0
    %2323 = vmatprep.subr.mxu0 0.0
    %2324 = vmatpush2.msra.mxu0 0.0
    %2325 = vmatprep.subr.mxu0 0.0
    %2326 = vmatpush2.msra.mxu0 0.0
    %2327 = vmatprep.subr.mxu0 0.0
    %2328 = vmatpush2.msra.mxu0 0.0
    %2329 = vmatprep.subr.mxu0 0.0
    %2330 = vmatpush2.msra.mxu0 0.0
    %2331 = vmatprep.subr.mxu0 0.0
    %2332 = vmatpush2.msra.mxu0 0.0
    %2333 = vmatprep.subr.mxu0 0.0
    %2334 = vmatpush2.msra.mxu0 0.0
    %2335 = vmatprep.mubr.f32.mxu0 0.0
    %v2336 = vand.u32 %v2268, 4294901760
    %v2337 = vsub.f32 %v2268, %v2336
    %v2338 = vand.u32 %v2337, 4294901760
    %v2339 = vsub.f32 %v2337, %v2338
    %v2340 = vand.u32 %v2339, 4294901760
    %2341 = vmatmul.mubr.f32.gmra.mxu0 %v2340
    %v2342 = vpop.f32.mrf.mxu0
    %v2343 = vadd.f32 0.0, %v2342
    %v2344 = vpop.f32.mrf.mxu0
    %2345 = vdwg.mxu0
    %2346 = vmatprep.subr.mxu0 0.0
    %2347 = vmatpush1.msra.mxu0 0.0
    %2348 = vmatprep.subr.mxu0 0.0
    %2349 = vmatpush1.msra.mxu0 0.0
    %2350 = vmatprep.subr.mxu0 0.0
    %2351 = vmatpush1.msra.mxu0 0.0
    %2352 = vmatprep.subr.mxu0 0.0
    %2353 = vmatpush1.msra.mxu0 0.0
    %2354 = vmatprep.subr.mxu0 0.0
    %2355 = vmatpush1.msra.mxu0 0.0
    %2356 = vmatprep.subr.mxu0 0.0
    %2357 = vmatpush1.msra.mxu0 0.0
    %2358 = vmatprep.subr.mxu0 0.0
    %2359 = vmatpush1.msra.mxu0 0.0
    %2360 = vmatprep.subr.mxu0 0.0
    %2361 = vmatpush1.msra.mxu0 0.0
    %2362 = vmatprep.subr.mxu0 0.0
    %2363 = vmatpush1.msra.mxu0 0.0
    %2364 = vmatprep.subr.mxu0 0.0
    %2365 = vmatpush1.msra.mxu0 0.0
    %2366 = vmatprep.subr.mxu0 0.0
    %2367 = vmatpush1.msra.mxu0 0.0
    %2368 = vmatprep.subr.mxu0 0.0
    %2369 = vmatpush1.msra.mxu0 0.0
    %2370 = vmatprep.subr.mxu0 0.0
    %2371 = vmatpush1.msra.mxu0 0.0
    %2372 = vmatprep.subr.mxu0 0.0
    %2373 = vmatpush1.msra.mxu0 0.0
    %2374 = vmatprep.subr.mxu0 0.0
    %2375 = vmatpush1.msra.mxu0 0.0
    %2376 = vmatprep.subr.mxu0 0.0
    %v2377 = vand.u32 %v1305, 4294901760
    %v2378 = vsub.f32 %v1305, %v2377
    %v2379 = vand.u32 %v2378, 4294901760
    %v2380 = vsub.f32 %v2378, %v2379
    %v2381 = vand.u32 %v2380, 4294901760
    %2382 = vmatpush1.msra.mxu0 %v2381
    %2383 = vmatprep.subr.mxu0 0.0
    %2384 = vmatpush2.msra.mxu0 0.0
    %2385 = vmatprep.subr.mxu0 0.0
    %2386 = vmatpush2.msra.mxu0 0.0
    %2387 = vmatprep.subr.mxu0 0.0
    %2388 = vmatpush2.msra.mxu0 0.0
    %2389 = vmatprep.subr.mxu0 0.0
    %2390 = vmatpush2.msra.mxu0 0.0
    %2391 = vmatprep.subr.mxu0 0.0
    %2392 = vmatpush2.msra.mxu0 0.0
    %2393 = vmatprep.subr.mxu0 0.0
    %2394 = vmatpush2.msra.mxu0 0.0
    %2395 = vmatprep.subr.mxu0 0.0
    %2396 = vmatpush2.msra.mxu0 0.0
    %2397 = vmatprep.subr.mxu0 0.0
    %2398 = vmatpush2.msra.mxu0 0.0
    %2399 = vmatprep.subr.mxu0 0.0
    %2400 = vmatpush2.msra.mxu0 0.0
    %2401 = vmatprep.subr.mxu0 0.0
    %2402 = vmatpush2.msra.mxu0 0.0
    %2403 = vmatprep.subr.mxu0 0.0
    %2404 = vmatpush2.msra.mxu0 0.0
    %2405 = vmatprep.subr.mxu0 0.0
    %2406 = vmatpush2.msra.mxu0 0.0
    %2407 = vmatprep.subr.mxu0 0.0
    %2408 = vmatpush2.msra.mxu0 0.0
    %2409 = vmatprep.subr.mxu0 0.0
    %2410 = vmatpush2.msra.mxu0 0.0
    %2411 = vmatprep.subr.mxu0 0.0
    %2412 = vmatpush2.msra.mxu0 0.0
    %2413 = vmatprep.subr.mxu0 0.0
    %2414 = vmatpush2.msra.mxu0 0.0
    %2415 = vmatprep.mubr.f32.mxu0 0.0
    %v2416 = vand.u32 %v2268, 4294901760
    %2417 = vmatmul.mubr.f32.gmra.mxu0 %v2416
    %v2418 = vpop.f32.mrf.mxu0
    %v2419 = vadd.f32 %v2343, %v2418
    %v2420 = vpop.f32.mrf.mxu0
    %2421 = vdwg.mxu0
    %2422 = vmatprep.subr.mxu0 0.0
    %2423 = vmatpush1.msra.mxu0 0.0
    %2424 = vmatprep.subr.mxu0 0.0
    %2425 = vmatpush1.msra.mxu0 0.0
    %2426 = vmatprep.subr.mxu0 0.0
    %2427 = vmatpush1.msra.mxu0 0.0
    %2428 = vmatprep.subr.mxu0 0.0
    %2429 = vmatpush1.msra.mxu0 0.0
    %2430 = vmatprep.subr.mxu0 0.0
    %2431 = vmatpush1.msra.mxu0 0.0
    %2432 = vmatprep.subr.mxu0 0.0
    %2433 = vmatpush1.msra.mxu0 0.0
    %2434 = vmatprep.subr.mxu0 0.0
    %2435 = vmatpush1.msra.mxu0 0.0
    %2436 = vmatprep.subr.mxu0 0.0
    %2437 = vmatpush1.msra.mxu0 0.0
    %2438 = vmatprep.subr.mxu0 0.0
    %2439 = vmatpush1.msra.mxu0 0.0
    %2440 = vmatprep.subr.mxu0 0.0
    %2441 = vmatpush1.msra.mxu0 0.0
    %2442 = vmatprep.subr.mxu0 0.0
    %2443 = vmatpush1.msra.mxu0 0.0
    %2444 = vmatprep.subr.mxu0 0.0
    %2445 = vmatpush1.msra.mxu0 0.0
    %2446 = vmatprep.subr.mxu0 0.0
    %2447 = vmatpush1.msra.mxu0 0.0
    %2448 = vmatprep.subr.mxu0 0.0
    %2449 = vmatpush1.msra.mxu0 0.0
    %2450 = vmatprep.subr.mxu0 0.0
    %2451 = vmatpush1.msra.mxu0 0.0
    %2452 = vmatprep.subr.mxu0 0.0
    %v2453 = vand.u32 %v1305, 4294901760
    %v2454 = vsub.f32 %v1305, %v2453
    %2455 = vmatpush1.msra.mxu0 %v2454
    %2456 = vmatprep.subr.mxu0 0.0
    %2457 = vmatpush2.msra.mxu0 0.0
    %2458 = vmatprep.subr.mxu0 0.0
    %2459 = vmatpush2.msra.mxu0 0.0
    %2460 = vmatprep.subr.mxu0 0.0
    %2461 = vmatpush2.msra.mxu0 0.0
    %2462 = vmatprep.subr.mxu0 0.0
    %2463 = vmatpush2.msra.mxu0 0.0
    %2464 = vmatprep.subr.mxu0 0.0
    %2465 = vmatpush2.msra.mxu0 0.0
    %2466 = vmatprep.subr.mxu0 0.0
    %2467 = vmatpush2.msra.mxu0 0.0
    %2468 = vmatprep.subr.mxu0 0.0
    %2469 = vmatpush2.msra.mxu0 0.0
    %2470 = vmatprep.subr.mxu0 0.0
    %2471 = vmatpush2.msra.mxu0 0.0
    %2472 = vmatprep.subr.mxu0 0.0
    %2473 = vmatpush2.msra.mxu0 0.0
    %2474 = vmatprep.subr.mxu0 0.0
    %2475 = vmatpush2.msra.mxu0 0.0
    %2476 = vmatprep.subr.mxu0 0.0
    %2477 = vmatpush2.msra.mxu0 0.0
    %2478 = vmatprep.subr.mxu0 0.0
    %2479 = vmatpush2.msra.mxu0 0.0
    %2480 = vmatprep.subr.mxu0 0.0
    %2481 = vmatpush2.msra.mxu0 0.0
    %2482 = vmatprep.subr.mxu0 0.0
    %2483 = vmatpush2.msra.mxu0 0.0
    %2484 = vmatprep.subr.mxu0 0.0
    %2485 = vmatpush2.msra.mxu0 0.0
    %2486 = vmatprep.subr.mxu0 0.0
    %2487 = vmatpush2.msra.mxu0 0.0
    %2488 = vmatprep.mubr.f32.mxu0 0.0
    %v2489 = vand.u32 %v2268, 4294901760
    %v2490 = vsub.f32 %v2268, %v2489
    %2491 = vmatmul.mubr.f32.gmra.mxu0 %v2490
    %v2492 = vpop.f32.mrf.mxu0
    %v2493 = vadd.f32 %v2419, %v2492
    %v2494 = vpop.f32.mrf.mxu0
    %2495 = vdwg.mxu0
    %2496 = vmatprep.subr.mxu0 0.0
    %2497 = vmatpush1.msra.mxu0 0.0
    %2498 = vmatprep.subr.mxu0 0.0
    %2499 = vmatpush1.msra.mxu0 0.0
    %2500 = vmatprep.subr.mxu0 0.0
    %2501 = vmatpush1.msra.mxu0 0.0
    %2502 = vmatprep.subr.mxu0 0.0
    %2503 = vmatpush1.msra.mxu0 0.0
    %2504 = vmatprep.subr.mxu0 0.0
    %2505 = vmatpush1.msra.mxu0 0.0
    %2506 = vmatprep.subr.mxu0 0.0
    %2507 = vmatpush1.msra.mxu0 0.0
    %2508 = vmatprep.subr.mxu0 0.0
    %2509 = vmatpush1.msra.mxu0 0.0
    %2510 = vmatprep.subr.mxu0 0.0
    %2511 = vmatpush1.msra.mxu0 0.0
    %2512 = vmatprep.subr.mxu0 0.0
    %2513 = vmatpush1.msra.mxu0 0.0
    %2514 = vmatprep.subr.mxu0 0.0
    %2515 = vmatpush1.msra.mxu0 0.0
    %2516 = vmatprep.subr.mxu0 0.0
    %2517 = vmatpush1.msra.mxu0 0.0
    %2518 = vmatprep.subr.mxu0 0.0
    %2519 = vmatpush1.msra.mxu0 0.0
    %2520 = vmatprep.subr.mxu0 0.0
    %2521 = vmatpush1.msra.mxu0 0.0
    %2522 = vmatprep.subr.mxu0 0.0
    %2523 = vmatpush1.msra.mxu0 0.0
    %2524 = vmatprep.subr.mxu0 0.0
    %2525 = vmatpush1.msra.mxu0 0.0
    %2526 = vmatprep.subr.mxu0 0.0
    %v2527 = vand.u32 %v1305, 4294901760
    %2528 = vmatpush1.msra.mxu0 %v2527
    %2529 = vmatprep.subr.mxu0 0.0
    %2530 = vmatpush2.msra.mxu0 0.0
    %2531 = vmatprep.subr.mxu0 0.0
    %2532 = vmatpush2.msra.mxu0 0.0
    %2533 = vmatprep.subr.mxu0 0.0
    %2534 = vmatpush2.msra.mxu0 0.0
    %2535 = vmatprep.subr.mxu0 0.0
    %2536 = vmatpush2.msra.mxu0 0.0
    %2537 = vmatprep.subr.mxu0 0.0
    %2538 = vmatpush2.msra.mxu0 0.0
    %2539 = vmatprep.subr.mxu0 0.0
    %2540 = vmatpush2.msra.mxu0 0.0
    %2541 = vmatprep.subr.mxu0 0.0
    %2542 = vmatpush2.msra.mxu0 0.0
    %2543 = vmatprep.subr.mxu0 0.0
    %2544 = vmatpush2.msra.mxu0 0.0
    %2545 = vmatprep.subr.mxu0 0.0
    %2546 = vmatpush2.msra.mxu0 0.0
    %2547 = vmatprep.subr.mxu0 0.0
    %2548 = vmatpush2.msra.mxu0 0.0
    %2549 = vmatprep.subr.mxu0 0.0
    %2550 = vmatpush2.msra.mxu0 0.0
    %2551 = vmatprep.subr.mxu0 0.0
    %2552 = vmatpush2.msra.mxu0 0.0
    %2553 = vmatprep.subr.mxu0 0.0
    %2554 = vmatpush2.msra.mxu0 0.0
    %2555 = vmatprep.subr.mxu0 0.0
    %2556 = vmatpush2.msra.mxu0 0.0
    %2557 = vmatprep.subr.mxu0 0.0
    %2558 = vmatpush2.msra.mxu0 0.0
    %2559 = vmatprep.subr.mxu0 0.0
    %2560 = vmatpush2.msra.mxu0 0.0
    %2561 = vmatprep.mubr.f32.mxu0 0.0
    %v2562 = vand.u32 %v2268, 4294901760
    %v2563 = vsub.f32 %v2268, %v2562
    %v2564 = vand.u32 %v2563, 4294901760
    %2565 = vmatmul.mubr.f32.gmra.mxu0 %v2564
    %v2566 = vpop.f32.mrf.mxu0
    %v2567 = vadd.f32 %v2493, %v2566
    %v2568 = vpop.f32.mrf.mxu0
    %2569 = vdwg.mxu0
    %2570 = vmatprep.subr.mxu0 0.0
    %2571 = vmatpush1.msra.mxu0 0.0
    %2572 = vmatprep.subr.mxu0 0.0
    %2573 = vmatpush1.msra.mxu0 0.0
    %2574 = vmatprep.subr.mxu0 0.0
    %2575 = vmatpush1.msra.mxu0 0.0
    %2576 = vmatprep.subr.mxu0 0.0
    %2577 = vmatpush1.msra.mxu0 0.0
    %2578 = vmatprep.subr.mxu0 0.0
    %2579 = vmatpush1.msra.mxu0 0.0
    %2580 = vmatprep.subr.mxu0 0.0
    %2581 = vmatpush1.msra.mxu0 0.0
    %2582 = vmatprep.subr.mxu0 0.0
    %2583 = vmatpush1.msra.mxu0 0.0
    %2584 = vmatprep.subr.mxu0 0.0
    %2585 = vmatpush1.msra.mxu0 0.0
    %2586 = vmatprep.subr.mxu0 0.0
    %2587 = vmatpush1.msra.mxu0 0.0
    %2588 = vmatprep.subr.mxu0 0.0
    %2589 = vmatpush1.msra.mxu0 0.0
    %2590 = vmatprep.subr.mxu0 0.0
    %2591 = vmatpush1.msra.mxu0 0.0
    %2592 = vmatprep.subr.mxu0 0.0
    %2593 = vmatpush1.msra.mxu0 0.0
    %2594 = vmatprep.subr.mxu0 0.0
    %2595 = vmatpush1.msra.mxu0 0.0
    %2596 = vmatprep.subr.mxu0 0.0
    %2597 = vmatpush1.msra.mxu0 0.0
    %2598 = vmatprep.subr.mxu0 0.0
    %2599 = vmatpush1.msra.mxu0 0.0
    %2600 = vmatprep.subr.mxu0 0.0
    %v2601 = vand.u32 %v1305, 4294901760
    %v2602 = vsub.f32 %v1305, %v2601
    %v2603 = vand.u32 %v2602, 4294901760
    %2604 = vmatpush1.msra.mxu0 %v2603
    %2605 = vmatprep.subr.mxu0 0.0
    %2606 = vmatpush2.msra.mxu0 0.0
    %2607 = vmatprep.subr.mxu0 0.0
    %2608 = vmatpush2.msra.mxu0 0.0
    %2609 = vmatprep.subr.mxu0 0.0
    %2610 = vmatpush2.msra.mxu0 0.0
    %2611 = vmatprep.subr.mxu0 0.0
    %2612 = vmatpush2.msra.mxu0 0.0
    %2613 = vmatprep.subr.mxu0 0.0
    %2614 = vmatpush2.msra.mxu0 0.0
    %2615 = vmatprep.subr.mxu0 0.0
    %2616 = vmatpush2.msra.mxu0 0.0
    %2617 = vmatprep.subr.mxu0 0.0
    %2618 = vmatpush2.msra.mxu0 0.0
    %2619 = vmatprep.subr.mxu0 0.0
    %2620 = vmatpush2.msra.mxu0 0.0
    %2621 = vmatprep.subr.mxu0 0.0
    %2622 = vmatpush2.msra.mxu0 0.0
    %2623 = vmatprep.subr.mxu0 0.0
    %2624 = vmatpush2.msra.mxu0 0.0
    %2625 = vmatprep.subr.mxu0 0.0
    %2626 = vmatpush2.msra.mxu0 0.0
    %2627 = vmatprep.subr.mxu0 0.0
    %2628 = vmatpush2.msra.mxu0 0.0
    %2629 = vmatprep.subr.mxu0 0.0
    %2630 = vmatpush2.msra.mxu0 0.0
    %2631 = vmatprep.subr.mxu0 0.0
    %2632 = vmatpush2.msra.mxu0 0.0
    %2633 = vmatprep.subr.mxu0 0.0
    %2634 = vmatpush2.msra.mxu0 0.0
    %2635 = vmatprep.subr.mxu0 0.0
    %2636 = vmatpush2.msra.mxu0 0.0
    %2637 = vmatprep.mubr.f32.mxu0 0.0
    %v2638 = vand.u32 %v2268, 4294901760
    %2639 = vmatmul.mubr.f32.gmra.mxu0 %v2638
    %v2640 = vpop.f32.mrf.mxu0
    %v2641 = vadd.f32 %v2567, %v2640
    %v2642 = vpop.f32.mrf.mxu0
    %2643 = vdwg.mxu0
    %2644 = vmatprep.subr.mxu0 0.0
    %2645 = vmatpush1.msra.mxu0 0.0
    %2646 = vmatprep.subr.mxu0 0.0
    %2647 = vmatpush1.msra.mxu0 0.0
    %2648 = vmatprep.subr.mxu0 0.0
    %2649 = vmatpush1.msra.mxu0 0.0
    %2650 = vmatprep.subr.mxu0 0.0
    %2651 = vmatpush1.msra.mxu0 0.0
    %2652 = vmatprep.subr.mxu0 0.0
    %2653 = vmatpush1.msra.mxu0 0.0
    %2654 = vmatprep.subr.mxu0 0.0
    %2655 = vmatpush1.msra.mxu0 0.0
    %2656 = vmatprep.subr.mxu0 0.0
    %2657 = vmatpush1.msra.mxu0 0.0
    %2658 = vmatprep.subr.mxu0 0.0
    %2659 = vmatpush1.msra.mxu0 0.0
    %2660 = vmatprep.subr.mxu0 0.0
    %2661 = vmatpush1.msra.mxu0 0.0
    %2662 = vmatprep.subr.mxu0 0.0
    %2663 = vmatpush1.msra.mxu0 0.0
    %2664 = vmatprep.subr.mxu0 0.0
    %2665 = vmatpush1.msra.mxu0 0.0
    %2666 = vmatprep.subr.mxu0 0.0
    %2667 = vmatpush1.msra.mxu0 0.0
    %2668 = vmatprep.subr.mxu0 0.0
    %2669 = vmatpush1.msra.mxu0 0.0
    %2670 = vmatprep.subr.mxu0 0.0
    %2671 = vmatpush1.msra.mxu0 0.0
    %2672 = vmatprep.subr.mxu0 0.0
    %2673 = vmatpush1.msra.mxu0 0.0
    %2674 = vmatprep.subr.mxu0 0.0
    %v2675 = vand.u32 %v1305, 4294901760
    %2676 = vmatpush1.msra.mxu0 %v2675
    %2677 = vmatprep.subr.mxu0 0.0
    %2678 = vmatpush2.msra.mxu0 0.0
    %2679 = vmatprep.subr.mxu0 0.0
    %2680 = vmatpush2.msra.mxu0 0.0
    %2681 = vmatprep.subr.mxu0 0.0
    %2682 = vmatpush2.msra.mxu0 0.0
    %2683 = vmatprep.subr.mxu0 0.0
    %2684 = vmatpush2.msra.mxu0 0.0
    %2685 = vmatprep.subr.mxu0 0.0
    %2686 = vmatpush2.msra.mxu0 0.0
    %2687 = vmatprep.subr.mxu0 0.0
    %2688 = vmatpush2.msra.mxu0 0.0
    %2689 = vmatprep.subr.mxu0 0.0
    %2690 = vmatpush2.msra.mxu0 0.0
    %2691 = vmatprep.subr.mxu0 0.0
    %2692 = vmatpush2.msra.mxu0 0.0
    %2693 = vmatprep.subr.mxu0 0.0
    %2694 = vmatpush2.msra.mxu0 0.0
    %2695 = vmatprep.subr.mxu0 0.0
    %2696 = vmatpush2.msra.mxu0 0.0
    %2697 = vmatprep.subr.mxu0 0.0
    %2698 = vmatpush2.msra.mxu0 0.0
    %2699 = vmatprep.subr.mxu0 0.0
    %2700 = vmatpush2.msra.mxu0 0.0
    %2701 = vmatprep.subr.mxu0 0.0
    %2702 = vmatpush2.msra.mxu0 0.0
    %2703 = vmatprep.subr.mxu0 0.0
    %2704 = vmatpush2.msra.mxu0 0.0
    %2705 = vmatprep.subr.mxu0 0.0
    %2706 = vmatpush2.msra.mxu0 0.0
    %2707 = vmatprep.subr.mxu0 0.0
    %2708 = vmatpush2.msra.mxu0 0.0
    %2709 = vmatprep.mubr.f32.mxu0 0.0
    %v2710 = vand.u32 %v2268, 4294901760
    %2711 = vmatmul.mubr.f32.gmra.mxu0 %v2710
    %v2712 = vpop.f32.mrf.mxu0
    %v2713 = vadd.f32 %v2641, %v2712
    %v2714 = vpop.f32.mrf.mxu0
    %2715 = vdwg.mxu0
    %v2717 = vrot.slane %v2713, 4
    %v2719 = vadd.f32 %v1296, %v2717
    %v2720 = vxor.u32 %v2719, 2147483648
    %v2721 = vmul.f32 %v2720, 1.442695
    %v2722 = vpow.pop %v2721
    %v2723 = vadd.f32 %v2722, 1.0
    %v2724 = vrcp.pop %v2723
    %v2725 = vmul.f32 1.0, %v2724
    %v2726 = vtanh.pop %v2719
    %v2728 = vrot.slane %v2256, 6
    %v2730 = vmul.f32 %v2725, %v2728
    %2732 = vrot.lane.b32.xlu0 %v2726, 104
    %v2733 = vpop.permute.xlu0 %2732
    %v2735 = vmul.f32 %v2725, %v2733
    %2737 = vrot.lane.b32.xlu0 %v2735, 8
    %v2738 = vpop.permute.xlu0 %2737
    %v2740 = vadd.f32 %v2730, %v2738
    %v2741 = vtanh.pop %v2740
    %2743 = vrot.lane.b32.xlu0 %v2741, 8
    %v2744 = vpop.permute.xlu0 %2743
    %v2746 = vmul.f32 %v2725, %v2744
    %v2747 = vadd.f32 %v2746, %v2746
    %v2749 = vrot.slane %v2746, 4
    %2750 = vrot.lane.b32.xlu0 %v2749, 112
    %v2751 = vpop.permute.xlu0 %2750
    %v2752 = vsel %vm71, %v2751, 0
    %2754 = vmatprep.subr.mxu0 0.0
    %2755 = vmatpush1.msra.mxu0 0.0
    %2756 = vmatprep.subr.mxu0 0.0
    %2757 = vmatpush1.msra.mxu0 0.0
    %2758 = vmatprep.subr.mxu0 0.0
    %2759 = vmatpush1.msra.mxu0 0.0
    %2760 = vmatprep.subr.mxu0 0.0
    %2761 = vmatpush1.msra.mxu0 0.0
    %2762 = vmatprep.subr.mxu0 0.0
    %2763 = vmatpush1.msra.mxu0 0.0
    %2764 = vmatprep.subr.mxu0 0.0
    %2765 = vmatpush1.msra.mxu0 0.0
    %2766 = vmatprep.subr.mxu0 0.0
    %2767 = vmatpush1.msra.mxu0 0.0
    %2768 = vmatprep.subr.mxu0 0.0
    %2769 = vmatpush1.msra.mxu0 0.0
    %2770 = vmatprep.subr.mxu0 0.0
    %2771 = vmatpush1.msra.mxu0 0.0
    %2772 = vmatprep.subr.mxu0 0.0
    %2773 = vmatpush1.msra.mxu0 0.0
    %2774 = vmatprep.subr.mxu0 0.0
    %2775 = vmatpush1.msra.mxu0 0.0
    %2776 = vmatprep.subr.mxu0 0.0
    %2777 = vmatpush1.msra.mxu0 0.0
    %2778 = vmatprep.subr.mxu0 0.0
    %2779 = vmatpush1.msra.mxu0 0.0
    %2780 = vmatprep.subr.mxu0 0.0
    %2781 = vmatpush1.msra.mxu0 0.0
    %2782 = vmatprep.subr.mxu0 0.0
    %2783 = vmatpush1.msra.mxu0 0.0
    %2784 = vmatprep.subr.mxu0 0.0
    %v2785 = vand.u32 %v1305, 4294901760
    %2786 = vmatpush1.msra.mxu0 %v2785
    %2787 = vmatprep.subr.mxu0 0.0
    %2788 = vmatpush2.msra.mxu0 0.0
    %2789 = vmatprep.subr.mxu0 0.0
    %2790 = vmatpush2.msra.mxu0 0.0
    %2791 = vmatprep.subr.mxu0 0.0
    %2792 = vmatpush2.msra.mxu0 0.0
    %2793 = vmatprep.subr.mxu0 0.0
    %2794 = vmatpush2.msra.mxu0 0.0
    %2795 = vmatprep.subr.mxu0 0.0
    %2796 = vmatpush2.msra.mxu0 0.0
    %2797 = vmatprep.subr.mxu0 0.0
    %2798 = vmatpush2.msra.mxu0 0.0
    %2799 = vmatprep.subr.mxu0 0.0
    %2800 = vmatpush2.msra.mxu0 0.0
    %2801 = vmatprep.subr.mxu0 0.0
    %2802 = vmatpush2.msra.mxu0 0.0
    %2803 = vmatprep.subr.mxu0 0.0
    %2804 = vmatpush2.msra.mxu0 0.0
    %2805 = vmatprep.subr.mxu0 0.0
    %2806 = vmatpush2.msra.mxu0 0.0
    %2807 = vmatprep.subr.mxu0 0.0
    %2808 = vmatpush2.msra.mxu0 0.0
    %2809 = vmatprep.subr.mxu0 0.0
    %2810 = vmatpush2.msra.mxu0 0.0
    %2811 = vmatprep.subr.mxu0 0.0
    %2812 = vmatpush2.msra.mxu0 0.0
    %2813 = vmatprep.subr.mxu0 0.0
    %2814 = vmatpush2.msra.mxu0 0.0
    %2815 = vmatprep.subr.mxu0 0.0
    %2816 = vmatpush2.msra.mxu0 0.0
    %2817 = vmatprep.subr.mxu0 0.0
    %2818 = vmatpush2.msra.mxu0 0.0
    %2819 = vmatprep.mubr.f32.mxu0 0.0
    %v2820 = vand.u32 %v2752, 4294901760
    %v2821 = vsub.f32 %v2752, %v2820
    %v2822 = vand.u32 %v2821, 4294901760
    %v2823 = vsub.f32 %v2821, %v2822
    %v2824 = vand.u32 %v2823, 4294901760
    %2825 = vmatmul.mubr.f32.gmra.mxu0 %v2824
    %v2826 = vpop.f32.mrf.mxu0
    %v2827 = vadd.f32 0.0, %v2826
    %v2828 = vpop.f32.mrf.mxu0
    %2829 = vdwg.mxu0
    %2830 = vmatprep.subr.mxu0 0.0
    %2831 = vmatpush1.msra.mxu0 0.0
    %2832 = vmatprep.subr.mxu0 0.0
    %2833 = vmatpush1.msra.mxu0 0.0
    %2834 = vmatprep.subr.mxu0 0.0
    %2835 = vmatpush1.msra.mxu0 0.0
    %2836 = vmatprep.subr.mxu0 0.0
    %2837 = vmatpush1.msra.mxu0 0.0
    %2838 = vmatprep.subr.mxu0 0.0
    %2839 = vmatpush1.msra.mxu0 0.0
    %2840 = vmatprep.subr.mxu0 0.0
    %2841 = vmatpush1.msra.mxu0 0.0
    %2842 = vmatprep.subr.mxu0 0.0
    %2843 = vmatpush1.msra.mxu0 0.0
    %2844 = vmatprep.subr.mxu0 0.0
    %2845 = vmatpush1.msra.mxu0 0.0
    %2846 = vmatprep.subr.mxu0 0.0
    %2847 = vmatpush1.msra.mxu0 0.0
    %2848 = vmatprep.subr.mxu0 0.0
    %2849 = vmatpush1.msra.mxu0 0.0
    %2850 = vmatprep.subr.mxu0 0.0
    %2851 = vmatpush1.msra.mxu0 0.0
    %2852 = vmatprep.subr.mxu0 0.0
    %2853 = vmatpush1.msra.mxu0 0.0
    %2854 = vmatprep.subr.mxu0 0.0
    %2855 = vmatpush1.msra.mxu0 0.0
    %2856 = vmatprep.subr.mxu0 0.0
    %2857 = vmatpush1.msra.mxu0 0.0
    %2858 = vmatprep.subr.mxu0 0.0
    %2859 = vmatpush1.msra.mxu0 0.0
    %2860 = vmatprep.subr.mxu0 0.0
    %v2861 = vand.u32 %v1305, 4294901760
    %v2862 = vsub.f32 %v1305, %v2861
    %v2863 = vand.u32 %v2862, 4294901760
    %v2864 = vsub.f32 %v2862, %v2863
    %v2865 = vand.u32 %v2864, 4294901760
    %2866 = vmatpush1.msra.mxu0 %v2865
    %2867 = vmatprep.subr.mxu0 0.0
    %2868 = vmatpush2.msra.mxu0 0.0
    %2869 = vmatprep.subr.mxu0 0.0
    %2870 = vmatpush2.msra.mxu0 0.0
    %2871 = vmatprep.subr.mxu0 0.0
    %2872 = vmatpush2.msra.mxu0 0.0
    %2873 = vmatprep.subr.mxu0 0.0
    %2874 = vmatpush2.msra.mxu0 0.0
    %2875 = vmatprep.subr.mxu0 0.0
    %2876 = vmatpush2.msra.mxu0 0.0
    %2877 = vmatprep.subr.mxu0 0.0
    %2878 = vmatpush2.msra.mxu0 0.0
    %2879 = vmatprep.subr.mxu0 0.0
    %2880 = vmatpush2.msra.mxu0 0.0
    %2881 = vmatprep.subr.mxu0 0.0
    %2882 = vmatpush2.msra.mxu0 0.0
    %2883 = vmatprep.subr.mxu0 0.0
    %2884 = vmatpush2.msra.mxu0 0.0
    %2885 = vmatprep.subr.mxu0 0.0
    %2886 = vmatpush2.msra.mxu0 0.0
    %2887 = vmatprep.subr.mxu0 0.0
    %2888 = vmatpush2.msra.mxu0 0.0
    %2889 = vmatprep.subr.mxu0 0.0
    %2890 = vmatpush2.msra.mxu0 0.0
    %2891 = vmatprep.subr.mxu0 0.0
    %2892 = vmatpush2.msra.mxu0 0.0
    %2893 = vmatprep.subr.mxu0 0.0
    %2894 = vmatpush2.msra.mxu0 0.0
    %2895 = vmatprep.subr.mxu0 0.0
    %2896 = vmatpush2.msra.mxu0 0.0
    %2897 = vmatprep.subr.mxu0 0.0
    %2898 = vmatpush2.msra.mxu0 0.0
    %2899 = vmatprep.mubr.f32.mxu0 0.0
    %v2900 = vand.u32 %v2752, 4294901760
    %2901 = vmatmul.mubr.f32.gmra.mxu0 %v2900
    %v2902 = vpop.f32.mrf.mxu0
    %v2903 = vadd.f32 %v2827, %v2902
    %v2904 = vpop.f32.mrf.mxu0
    %2905 = vdwg.mxu0
    %2906 = vmatprep.subr.mxu0 0.0
    %2907 = vmatpush1.msra.mxu0 0.0
    %2908 = vmatprep.subr.mxu0 0.0
    %2909 = vmatpush1.msra.mxu0 0.0
    %2910 = vmatprep.subr.mxu0 0.0
    %2911 = vmatpush1.msra.mxu0 0.0
    %2912 = vmatprep.subr.mxu0 0.0
    %2913 = vmatpush1.msra.mxu0 0.0
    %2914 = vmatprep.subr.mxu0 0.0
    %2915 = vmatpush1.msra.mxu0 0.0
    %2916 = vmatprep.subr.mxu0 0.0
    %2917 = vmatpush1.msra.mxu0 0.0
    %2918 = vmatprep.subr.mxu0 0.0
    %2919 = vmatpush1.msra.mxu0 0.0
    %2920 = vmatprep.subr.mxu0 0.0
    %2921 = vmatpush1.msra.mxu0 0.0
    %2922 = vmatprep.subr.mxu0 0.0
    %2923 = vmatpush1.msra.mxu0 0.0
    %2924 = vmatprep.subr.mxu0 0.0
    %2925 = vmatpush1.msra.mxu0 0.0
    %2926 = vmatprep.subr.mxu0 0.0
    %2927 = vmatpush1.msra.mxu0 0.0
    %2928 = vmatprep.subr.mxu0 0.0
    %2929 = vmatpush1.msra.mxu0 0.0
    %2930 = vmatprep.subr.mxu0 0.0
    %2931 = vmatpush1.msra.mxu0 0.0
    %2932 = vmatprep.subr.mxu0 0.0
    %2933 = vmatpush1.msra.mxu0 0.0
    %2934 = vmatprep.subr.mxu0 0.0
    %2935 = vmatpush1.msra.mxu0 0.0
    %2936 = vmatprep.subr.mxu0 0.0
    %v2937 = vand.u32 %v1305, 4294901760
    %v2938 = vsub.f32 %v1305, %v2937
    %2939 = vmatpush1.msra.mxu0 %v2938
    %2940 = vmatprep.subr.mxu0 0.0
    %2941 = vmatpush2.msra.mxu0 0.0
    %2942 = vmatprep.subr.mxu0 0.0
    %2943 = vmatpush2.msra.mxu0 0.0
    %2944 = vmatprep.subr.mxu0 0.0
    %2945 = vmatpush2.msra.mxu0 0.0
    %2946 = vmatprep.subr.mxu0 0.0
    %2947 = vmatpush2.msra.mxu0 0.0
    %2948 = vmatprep.subr.mxu0 0.0
    %2949 = vmatpush2.msra.mxu0 0.0
    %2950 = vmatprep.subr.mxu0 0.0
    %2951 = vmatpush2.msra.mxu0 0.0
    %2952 = vmatprep.subr.mxu0 0.0
    %2953 = vmatpush2.msra.mxu0 0.0
    %2954 = vmatprep.subr.mxu0 0.0
    %2955 = vmatpush2.msra.mxu0 0.0
    %2956 = vmatprep.subr.mxu0 0.0
    %2957 = vmatpush2.msra.mxu0 0.0
    %2958 = vmatprep.subr.mxu0 0.0
    %2959 = vmatpush2.msra.mxu0 0.0
    %2960 = vmatprep.subr.mxu0 0.0
    %2961 = vmatpush2.msra.mxu0 0.0
    %2962 = vmatprep.subr.mxu0 0.0
    %2963 = vmatpush2.msra.mxu0 0.0
    %2964 = vmatprep.subr.mxu0 0.0
    %2965 = vmatpush2.msra.mxu0 0.0
    %2966 = vmatprep.subr.mxu0 0.0
    %2967 = vmatpush2.msra.mxu0 0.0
    %2968 = vmatprep.subr.mxu0 0.0
    %2969 = vmatpush2.msra.mxu0 0.0
    %2970 = vmatprep.subr.mxu0 0.0
    %2971 = vmatpush2.msra.mxu0 0.0
    %2972 = vmatprep.mubr.f32.mxu0 0.0
    %v2973 = vand.u32 %v2752, 4294901760
    %v2974 = vsub.f32 %v2752, %v2973
    %2975 = vmatmul.mubr.f32.gmra.mxu0 %v2974
    %v2976 = vpop.f32.mrf.mxu0
    %v2977 = vadd.f32 %v2903, %v2976
    %v2978 = vpop.f32.mrf.mxu0
    %2979 = vdwg.mxu0
    %2980 = vmatprep.subr.mxu0 0.0
    %2981 = vmatpush1.msra.mxu0 0.0
    %2982 = vmatprep.subr.mxu0 0.0
    %2983 = vmatpush1.msra.mxu0 0.0
    %2984 = vmatprep.subr.mxu0 0.0
    %2985 = vmatpush1.msra.mxu0 0.0
    %2986 = vmatprep.subr.mxu0 0.0
    %2987 = vmatpush1.msra.mxu0 0.0
    %2988 = vmatprep.subr.mxu0 0.0
    %2989 = vmatpush1.msra.mxu0 0.0
    %2990 = vmatprep.subr.mxu0 0.0
    %2991 = vmatpush1.msra.mxu0 0.0
    %2992 = vmatprep.subr.mxu0 0.0
    %2993 = vmatpush1.msra.mxu0 0.0
    %2994 = vmatprep.subr.mxu0 0.0
    %2995 = vmatpush1.msra.mxu0 0.0
    %2996 = vmatprep.subr.mxu0 0.0
    %2997 = vmatpush1.msra.mxu0 0.0
    %2998 = vmatprep.subr.mxu0 0.0
    %2999 = vmatpush1.msra.mxu0 0.0
    %3000 = vmatprep.subr.mxu0 0.0
    %3001 = vmatpush1.msra.mxu0 0.0
    %3002 = vmatprep.subr.mxu0 0.0
    %3003 = vmatpush1.msra.mxu0 0.0
    %3004 = vmatprep.subr.mxu0 0.0
    %3005 = vmatpush1.msra.mxu0 0.0
    %3006 = vmatprep.subr.mxu0 0.0
    %3007 = vmatpush1.msra.mxu0 0.0
    %3008 = vmatprep.subr.mxu0 0.0
    %3009 = vmatpush1.msra.mxu0 0.0
    %3010 = vmatprep.subr.mxu0 0.0
    %v3011 = vand.u32 %v1305, 4294901760
    %3012 = vmatpush1.msra.mxu0 %v3011
    %3013 = vmatprep.subr.mxu0 0.0
    %3014 = vmatpush2.msra.mxu0 0.0
    %3015 = vmatprep.subr.mxu0 0.0
    %3016 = vmatpush2.msra.mxu0 0.0
    %3017 = vmatprep.subr.mxu0 0.0
    %3018 = vmatpush2.msra.mxu0 0.0
    %3019 = vmatprep.subr.mxu0 0.0
    %3020 = vmatpush2.msra.mxu0 0.0
    %3021 = vmatprep.subr.mxu0 0.0
    %3022 = vmatpush2.msra.mxu0 0.0
    %3023 = vmatprep.subr.mxu0 0.0
    %3024 = vmatpush2.msra.mxu0 0.0
    %3025 = vmatprep.subr.mxu0 0.0
    %3026 = vmatpush2.msra.mxu0 0.0
    %3027 = vmatprep.subr.mxu0 0.0
    %3028 = vmatpush2.msra.mxu0 0.0
    %3029 = vmatprep.subr.mxu0 0.0
    %3030 = vmatpush2.msra.mxu0 0.0
    %3031 = vmatprep.subr.mxu0 0.0
    %3032 = vmatpush2.msra.mxu0 0.0
    %3033 = vmatprep.subr.mxu0 0.0
    %3034 = vmatpush2.msra.mxu0 0.0
    %3035 = vmatprep.subr.mxu0 0.0
    %3036 = vmatpush2.msra.mxu0 0.0
    %3037 = vmatprep.subr.mxu0 0.0
    %3038 = vmatpush2.msra.mxu0 0.0
    %3039 = vmatprep.subr.mxu0 0.0
    %3040 = vmatpush2.msra.mxu0 0.0
    %3041 = vmatprep.subr.mxu0 0.0
    %3042 = vmatpush2.msra.mxu0 0.0
    %3043 = vmatprep.subr.mxu0 0.0
    %3044 = vmatpush2.msra.mxu0 0.0
    %3045 = vmatprep.mubr.f32.mxu0 0.0
    %v3046 = vand.u32 %v2752, 4294901760
    %v3047 = vsub.f32 %v2752, %v3046
    %v3048 = vand.u32 %v3047, 4294901760
    %3049 = vmatmul.mubr.f32.gmra.mxu0 %v3048
    %v3050 = vpop.f32.mrf.mxu0
    %v3051 = vadd.f32 %v2977, %v3050
    %v3052 = vpop.f32.mrf.mxu0
    %3053 = vdwg.mxu0
    %3054 = vmatprep.subr.mxu0 0.0
    %3055 = vmatpush1.msra.mxu0 0.0
    %3056 = vmatprep.subr.mxu0 0.0
    %3057 = vmatpush1.msra.mxu0 0.0
    %3058 = vmatprep.subr.mxu0 0.0
    %3059 = vmatpush1.msra.mxu0 0.0
    %3060 = vmatprep.subr.mxu0 0.0
    %3061 = vmatpush1.msra.mxu0 0.0
    %3062 = vmatprep.subr.mxu0 0.0
    %3063 = vmatpush1.msra.mxu0 0.0
    %3064 = vmatprep.subr.mxu0 0.0
    %3065 = vmatpush1.msra.mxu0 0.0
    %3066 = vmatprep.subr.mxu0 0.0
    %3067 = vmatpush1.msra.mxu0 0.0
    %3068 = vmatprep.subr.mxu0 0.0
    %3069 = vmatpush1.msra.mxu0 0.0
    %3070 = vmatprep.subr.mxu0 0.0
    %3071 = vmatpush1.msra.mxu0 0.0
    %3072 = vmatprep.subr.mxu0 0.0
    %3073 = vmatpush1.msra.mxu0 0.0
    %3074 = vmatprep.subr.mxu0 0.0
    %3075 = vmatpush1.msra.mxu0 0.0
    %3076 = vmatprep.subr.mxu0 0.0
    %3077 = vmatpush1.msra.mxu0 0.0
    %3078 = vmatprep.subr.mxu0 0.0
    %3079 = vmatpush1.msra.mxu0 0.0
    %3080 = vmatprep.subr.mxu0 0.0
    %3081 = vmatpush1.msra.mxu0 0.0
    %3082 = vmatprep.subr.mxu0 0.0
    %3083 = vmatpush1.msra.mxu0 0.0
    %3084 = vmatprep.subr.mxu0 0.0
    %v3085 = vand.u32 %v1305, 4294901760
    %v3086 = vsub.f32 %v1305, %v3085
    %v3087 = vand.u32 %v3086, 4294901760
    %3088 = vmatpush1.msra.mxu0 %v3087
    %3089 = vmatprep.subr.mxu0 0.0
    %3090 = vmatpush2.msra.mxu0 0.0
    %3091 = vmatprep.subr.mxu0 0.0
    %3092 = vmatpush2.msra.mxu0 0.0
    %3093 = vmatprep.subr.mxu0 0.0
    %3094 = vmatpush2.msra.mxu0 0.0
    %3095 = vmatprep.subr.mxu0 0.0
    %3096 = vmatpush2.msra.mxu0 0.0
    %3097 = vmatprep.subr.mxu0 0.0
    %3098 = vmatpush2.msra.mxu0 0.0
    %3099 = vmatprep.subr.mxu0 0.0
    %3100 = vmatpush2.msra.mxu0 0.0
    %3101 = vmatprep.subr.mxu0 0.0
    %3102 = vmatpush2.msra.mxu0 0.0
    %3103 = vmatprep.subr.mxu0 0.0
    %3104 = vmatpush2.msra.mxu0 0.0
    %3105 = vmatprep.subr.mxu0 0.0
    %3106 = vmatpush2.msra.mxu0 0.0
    %3107 = vmatprep.subr.mxu0 0.0
    %3108 = vmatpush2.msra.mxu0 0.0
    %3109 = vmatprep.subr.mxu0 0.0
    %3110 = vmatpush2.msra.mxu0 0.0
    %3111 = vmatprep.subr.mxu0 0.0
    %3112 = vmatpush2.msra.mxu0 0.0
    %3113 = vmatprep.subr.mxu0 0.0
    %3114 = vmatpush2.msra.mxu0 0.0
    %3115 = vmatprep.subr.mxu0 0.0
    %3116 = vmatpush2.msra.mxu0 0.0
    %3117 = vmatprep.subr.mxu0 0.0
    %3118 = vmatpush2.msra.mxu0 0.0
    %3119 = vmatprep.subr.mxu0 0.0
    %3120 = vmatpush2.msra.mxu0 0.0
    %3121 = vmatprep.mubr.f32.mxu0 0.0
    %v3122 = vand.u32 %v2752, 4294901760
    %3123 = vmatmul.mubr.f32.gmra.mxu0 %v3122
    %v3124 = vpop.f32.mrf.mxu0
    %v3125 = vadd.f32 %v3051, %v3124
    %v3126 = vpop.f32.mrf.mxu0
    %3127 = vdwg.mxu0
    %3128 = vmatprep.subr.mxu0 0.0
    %3129 = vmatpush1.msra.mxu0 0.0
    %3130 = vmatprep.subr.mxu0 0.0
    %3131 = vmatpush1.msra.mxu0 0.0
    %3132 = vmatprep.subr.mxu0 0.0
    %3133 = vmatpush1.msra.mxu0 0.0
    %3134 = vmatprep.subr.mxu0 0.0
    %3135 = vmatpush1.msra.mxu0 0.0
    %3136 = vmatprep.subr.mxu0 0.0
    %3137 = vmatpush1.msra.mxu0 0.0
    %3138 = vmatprep.subr.mxu0 0.0
    %3139 = vmatpush1.msra.mxu0 0.0
    %3140 = vmatprep.subr.mxu0 0.0
    %3141 = vmatpush1.msra.mxu0 0.0
    %3142 = vmatprep.subr.mxu0 0.0
    %3143 = vmatpush1.msra.mxu0 0.0
    %3144 = vmatprep.subr.mxu0 0.0
    %3145 = vmatpush1.msra.mxu0 0.0
    %3146 = vmatprep.subr.mxu0 0.0
    %3147 = vmatpush1.msra.mxu0 0.0
    %3148 = vmatprep.subr.mxu0 0.0
    %3149 = vmatpush1.msra.mxu0 0.0
    %3150 = vmatprep.subr.mxu0 0.0
    %3151 = vmatpush1.msra.mxu0 0.0
    %3152 = vmatprep.subr.mxu0 0.0
    %3153 = vmatpush1.msra.mxu0 0.0
    %3154 = vmatprep.subr.mxu0 0.0
    %3155 = vmatpush1.msra.mxu0 0.0
    %3156 = vmatprep.subr.mxu0 0.0
    %3157 = vmatpush1.msra.mxu0 0.0
    %3158 = vmatprep.subr.mxu0 0.0
    %v3159 = vand.u32 %v1305, 4294901760
    %3160 = vmatpush1.msra.mxu0 %v3159
    %3161 = vmatprep.subr.mxu0 0.0
    %3162 = vmatpush2.msra.mxu0 0.0
    %3163 = vmatprep.subr.mxu0 0.0
    %3164 = vmatpush2.msra.mxu0 0.0
    %3165 = vmatprep.subr.mxu0 0.0
    %3166 = vmatpush2.msra.mxu0 0.0
    %3167 = vmatprep.subr.mxu0 0.0
    %3168 = vmatpush2.msra.mxu0 0.0
    %3169 = vmatprep.subr.mxu0 0.0
    %3170 = vmatpush2.msra.mxu0 0.0
    %3171 = vmatprep.subr.mxu0 0.0
    %3172 = vmatpush2.msra.mxu0 0.0
    %3173 = vmatprep.subr.mxu0 0.0
    %3174 = vmatpush2.msra.mxu0 0.0
    %3175 = vmatprep.subr.mxu0 0.0
    %3176 = vmatpush2.msra.mxu0 0.0
    %3177 = vmatprep.subr.mxu0 0.0
    %3178 = vmatpush2.msra.mxu0 0.0
    %3179 = vmatprep.subr.mxu0 0.0
    %3180 = vmatpush2.msra.mxu0 0.0
    %3181 = vmatprep.subr.mxu0 0.0
    %3182 = vmatpush2.msra.mxu0 0.0
    %3183 = vmatprep.subr.mxu0 0.0
    %3184 = vmatpush2.msra.mxu0 0.0
    %3185 = vmatprep.subr.mxu0 0.0
    %3186 = vmatpush2.msra.mxu0 0.0
    %3187 = vmatprep.subr.mxu0 0.0
    %3188 = vmatpush2.msra.mxu0 0.0
    %3189 = vmatprep.subr.mxu0 0.0
    %3190 = vmatpush2.msra.mxu0 0.0
    %3191 = vmatprep.subr.mxu0 0.0
    %3192 = vmatpush2.msra.mxu0 0.0
    %3193 = vmatprep.mubr.f32.mxu0 0.0
    %v3194 = vand.u32 %v2752, 4294901760
    %3195 = vmatmul.mubr.f32.gmra.mxu0 %v3194
    %v3196 = vpop.f32.mrf.mxu0
    %v3197 = vadd.f32 %v3125, %v3196
    %v3198 = vpop.f32.mrf.mxu0
    %3199 = vdwg.mxu0
    %v3201 = vrot.slane %v3197, 2
    %v3203 = vadd.f32 %v1296, %v3201
    %v3204 = vxor.u32 %v3203, 2147483648
    %v3205 = vmul.f32 %v3204, 1.442695
    %v3206 = vpow.pop %v3205
    %v3207 = vadd.f32 %v3206, 1.0
    %v3208 = vrcp.pop %v3207
    %v3209 = vmul.f32 1.0, %v3208
    %v3210 = vtanh.pop %v3203
    %v3212 = vrot.slane %v2740, 6
    %v3214 = vmul.f32 %v3209, %v3212
    %3216 = vrot.lane.b32.xlu0 %v3210, 104
    %v3217 = vpop.permute.xlu0 %3216
    %v3219 = vmul.f32 %v3209, %v3217
    %3221 = vrot.lane.b32.xlu0 %v3219, 8
    %v3222 = vpop.permute.xlu0 %3221
    %v3224 = vadd.f32 %v3214, %v3222
    %v3225 = vtanh.pop %v3224
    %3227 = vrot.lane.b32.xlu0 %v3225, 8
    %v3228 = vpop.permute.xlu0 %3227
    %v3230 = vmul.f32 %v3209, %v3228
    %v3231 = vadd.f32 %v3230, %v3230
    %v3233 = vrot.slane %v3230, 6
    %3234 = vrot.lane.b32.xlu0 %v3233, 112
    %v3235 = vpop.permute.xlu0 %3234
    %v3236 = vsel %vm71, %v3235, 0
    %3238 = vmatprep.subr.mxu0 0.0
    %3239 = vmatpush1.msra.mxu0 0.0
    %3240 = vmatprep.subr.mxu0 0.0
    %3241 = vmatpush1.msra.mxu0 0.0
    %3242 = vmatprep.subr.mxu0 0.0
    %3243 = vmatpush1.msra.mxu0 0.0
    %3244 = vmatprep.subr.mxu0 0.0
    %3245 = vmatpush1.msra.mxu0 0.0
    %3246 = vmatprep.subr.mxu0 0.0
    %3247 = vmatpush1.msra.mxu0 0.0
    %3248 = vmatprep.subr.mxu0 0.0
    %3249 = vmatpush1.msra.mxu0 0.0
    %3250 = vmatprep.subr.mxu0 0.0
    %3251 = vmatpush1.msra.mxu0 0.0
    %3252 = vmatprep.subr.mxu0 0.0
    %3253 = vmatpush1.msra.mxu0 0.0
    %3254 = vmatprep.subr.mxu0 0.0
    %3255 = vmatpush1.msra.mxu0 0.0
    %3256 = vmatprep.subr.mxu0 0.0
    %3257 = vmatpush1.msra.mxu0 0.0
    %3258 = vmatprep.subr.mxu0 0.0
    %3259 = vmatpush1.msra.mxu0 0.0
    %3260 = vmatprep.subr.mxu0 0.0
    %3261 = vmatpush1.msra.mxu0 0.0
    %3262 = vmatprep.subr.mxu0 0.0
    %3263 = vmatpush1.msra.mxu0 0.0
    %3264 = vmatprep.subr.mxu0 0.0
    %3265 = vmatpush1.msra.mxu0 0.0
    %3266 = vmatprep.subr.mxu0 0.0
    %3267 = vmatpush1.msra.mxu0 0.0
    %3268 = vmatprep.subr.mxu0 0.0
    %v3269 = vand.u32 %v1305, 4294901760
    %3270 = vmatpush1.msra.mxu0 %v3269
    %3271 = vmatprep.subr.mxu0 0.0
    %3272 = vmatpush2.msra.mxu0 0.0
    %3273 = vmatprep.subr.mxu0 0.0
    %3274 = vmatpush2.msra.mxu0 0.0
    %3275 = vmatprep.subr.mxu0 0.0
    %3276 = vmatpush2.msra.mxu0 0.0
    %3277 = vmatprep.subr.mxu0 0.0
    %3278 = vmatpush2.msra.mxu0 0.0
    %3279 = vmatprep.subr.mxu0 0.0
    %3280 = vmatpush2.msra.mxu0 0.0
    %3281 = vmatprep.subr.mxu0 0.0
    %3282 = vmatpush2.msra.mxu0 0.0
    %3283 = vmatprep.subr.mxu0 0.0
    %3284 = vmatpush2.msra.mxu0 0.0
    %3285 = vmatprep.subr.mxu0 0.0
    %3286 = vmatpush2.msra.mxu0 0.0
    %3287 = vmatprep.subr.mxu0 0.0
    %3288 = vmatpush2.msra.mxu0 0.0
    %3289 = vmatprep.subr.mxu0 0.0
    %3290 = vmatpush2.msra.mxu0 0.0
    %3291 = vmatprep.subr.mxu0 0.0
    %3292 = vmatpush2.msra.mxu0 0.0
    %3293 = vmatprep.subr.mxu0 0.0
    %3294 = vmatpush2.msra.mxu0 0.0
    %3295 = vmatprep.subr.mxu0 0.0
    %3296 = vmatpush2.msra.mxu0 0.0
    %3297 = vmatprep.subr.mxu0 0.0
    %3298 = vmatpush2.msra.mxu0 0.0
    %3299 = vmatprep.subr.mxu0 0.0
    %3300 = vmatpush2.msra.mxu0 0.0
    %3301 = vmatprep.subr.mxu0 0.0
    %3302 = vmatpush2.msra.mxu0 0.0
    %3303 = vmatprep.mubr.f32.mxu0 0.0
    %v3304 = vand.u32 %v3236, 4294901760
    %v3305 = vsub.f32 %v3236, %v3304
    %v3306 = vand.u32 %v3305, 4294901760
    %v3307 = vsub.f32 %v3305, %v3306
    %v3308 = vand.u32 %v3307, 4294901760
    %3309 = vmatmul.mubr.f32.gmra.mxu0 %v3308
    %v3310 = vpop.f32.mrf.mxu0
    %v3311 = vadd.f32 0.0, %v3310
    %v3312 = vpop.f32.mrf.mxu0
    %3313 = vdwg.mxu0
    %3314 = vmatprep.subr.mxu0 0.0
    %3315 = vmatpush1.msra.mxu0 0.0
    %3316 = vmatprep.subr.mxu0 0.0
    %3317 = vmatpush1.msra.mxu0 0.0
    %3318 = vmatprep.subr.mxu0 0.0
    %3319 = vmatpush1.msra.mxu0 0.0
    %3320 = vmatprep.subr.mxu0 0.0
    %3321 = vmatpush1.msra.mxu0 0.0
    %3322 = vmatprep.subr.mxu0 0.0
    %3323 = vmatpush1.msra.mxu0 0.0
    %3324 = vmatprep.subr.mxu0 0.0
    %3325 = vmatpush1.msra.mxu0 0.0
    %3326 = vmatprep.subr.mxu0 0.0
    %3327 = vmatpush1.msra.mxu0 0.0
    %3328 = vmatprep.subr.mxu0 0.0
    %3329 = vmatpush1.msra.mxu0 0.0
    %3330 = vmatprep.subr.mxu0 0.0
    %3331 = vmatpush1.msra.mxu0 0.0
    %3332 = vmatprep.subr.mxu0 0.0
    %3333 = vmatpush1.msra.mxu0 0.0
    %3334 = vmatprep.subr.mxu0 0.0
    %3335 = vmatpush1.msra.mxu0 0.0
    %3336 = vmatprep.subr.mxu0 0.0
    %3337 = vmatpush1.msra.mxu0 0.0
    %3338 = vmatprep.subr.mxu0 0.0
    %3339 = vmatpush1.msra.mxu0 0.0
    %3340 = vmatprep.subr.mxu0 0.0
    %3341 = vmatpush1.msra.mxu0 0.0
    %3342 = vmatprep.subr.mxu0 0.0
    %3343 = vmatpush1.msra.mxu0 0.0
    %3344 = vmatprep.subr.mxu0 0.0
    %v3345 = vand.u32 %v1305, 4294901760
    %v3346 = vsub.f32 %v1305, %v3345
    %v3347 = vand.u32 %v3346, 4294901760
    %v3348 = vsub.f32 %v3346, %v3347
    %v3349 = vand.u32 %v3348, 4294901760
    %3350 = vmatpush1.msra.mxu0 %v3349
    %3351 = vmatprep.subr.mxu0 0.0
    %3352 = vmatpush2.msra.mxu0 0.0
    %3353 = vmatprep.subr.mxu0 0.0
    %3354 = vmatpush2.msra.mxu0 0.0
    %3355 = vmatprep.subr.mxu0 0.0
    %3356 = vmatpush2.msra.mxu0 0.0
    %3357 = vmatprep.subr.mxu0 0.0
    %3358 = vmatpush2.msra.mxu0 0.0
    %3359 = vmatprep.subr.mxu0 0.0
    %3360 = vmatpush2.msra.mxu0 0.0
    %3361 = vmatprep.subr.mxu0 0.0
    %3362 = vmatpush2.msra.mxu0 0.0
    %3363 = vmatprep.subr.mxu0 0.0
    %3364 = vmatpush2.msra.mxu0 0.0
    %3365 = vmatprep.subr.mxu0 0.0
    %3366 = vmatpush2.msra.mxu0 0.0
    %3367 = vmatprep.subr.mxu0 0.0
    %3368 = vmatpush2.msra.mxu0 0.0
    %3369 = vmatprep.subr.mxu0 0.0
    %3370 = vmatpush2.msra.mxu0 0.0
    %3371 = vmatprep.subr.mxu0 0.0
    %3372 = vmatpush2.msra.mxu0 0.0
    %3373 = vmatprep.subr.mxu0 0.0
    %3374 = vmatpush2.msra.mxu0 0.0
    %3375 = vmatprep.subr.mxu0 0.0
    %3376 = vmatpush2.msra.mxu0 0.0
    %3377 = vmatprep.subr.mxu0 0.0
    %3378 = vmatpush2.msra.mxu0 0.0
    %3379 = vmatprep.subr.mxu0 0.0
    %3380 = vmatpush2.msra.mxu0 0.0
    %3381 = vmatprep.subr.mxu0 0.0
    %3382 = vmatpush2.msra.mxu0 0.0
    %3383 = vmatprep.mubr.f32.mxu0 0.0
    %v3384 = vand.u32 %v3236, 4294901760
    %3385 = vmatmul.mubr.f32.gmra.mxu0 %v3384
    %v3386 = vpop.f32.mrf.mxu0
    %v3387 = vadd.f32 %v3311, %v3386
    %v3388 = vpop.f32.mrf.mxu0
    %3389 = vdwg.mxu0
    %3390 = vmatprep.subr.mxu0 0.0
    %3391 = vmatpush1.msra.mxu0 0.0
    %3392 = vmatprep.subr.mxu0 0.0
    %3393 = vmatpush1.msra.mxu0 0.0
    %3394 = vmatprep.subr.mxu0 0.0
    %3395 = vmatpush1.msra.mxu0 0.0
    %3396 = vmatprep.subr.mxu0 0.0
    %3397 = vmatpush1.msra.mxu0 0.0
    %3398 = vmatprep.subr.mxu0 0.0
    %3399 = vmatpush1.msra.mxu0 0.0
    %3400 = vmatprep.subr.mxu0 0.0
    %3401 = vmatpush1.msra.mxu0 0.0
    %3402 = vmatprep.subr.mxu0 0.0
    %3403 = vmatpush1.msra.mxu0 0.0
    %3404 = vmatprep.subr.mxu0 0.0
    %3405 = vmatpush1.msra.mxu0 0.0
    %3406 = vmatprep.subr.mxu0 0.0
    %3407 = vmatpush1.msra.mxu0 0.0
    %3408 = vmatprep.subr.mxu0 0.0
    %3409 = vmatpush1.msra.mxu0 0.0
    %3410 = vmatprep.subr.mxu0 0.0
    %3411 = vmatpush1.msra.mxu0 0.0
    %3412 = vmatprep.subr.mxu0 0.0
    %3413 = vmatpush1.msra.mxu0 0.0
    %3414 = vmatprep.subr.mxu0 0.0
    %3415 = vmatpush1.msra.mxu0 0.0
    %3416 = vmatprep.subr.mxu0 0.0
    %3417 = vmatpush1.msra.mxu0 0.0
    %3418 = vmatprep.subr.mxu0 0.0
    %3419 = vmatpush1.msra.mxu0 0.0
    %3420 = vmatprep.subr.mxu0 0.0
    %v3421 = vand.u32 %v1305, 4294901760
    %v3422 = vsub.f32 %v1305, %v3421
    %3423 = vmatpush1.msra.mxu0 %v3422
    %3424 = vmatprep.subr.mxu0 0.0
    %3425 = vmatpush2.msra.mxu0 0.0
    %3426 = vmatprep.subr.mxu0 0.0
    %3427 = vmatpush2.msra.mxu0 0.0
    %3428 = vmatprep.subr.mxu0 0.0
    %3429 = vmatpush2.msra.mxu0 0.0
    %3430 = vmatprep.subr.mxu0 0.0
    %3431 = vmatpush2.msra.mxu0 0.0
    %3432 = vmatprep.subr.mxu0 0.0
    %3433 = vmatpush2.msra.mxu0 0.0
    %3434 = vmatprep.subr.mxu0 0.0
    %3435 = vmatpush2.msra.mxu0 0.0
    %3436 = vmatprep.subr.mxu0 0.0
    %3437 = vmatpush2.msra.mxu0 0.0
    %3438 = vmatprep.subr.mxu0 0.0
    %3439 = vmatpush2.msra.mxu0 0.0
    %3440 = vmatprep.subr.mxu0 0.0
    %3441 = vmatpush2.msra.mxu0 0.0
    %3442 = vmatprep.subr.mxu0 0.0
    %3443 = vmatpush2.msra.mxu0 0.0
    %3444 = vmatprep.subr.mxu0 0.0
    %3445 = vmatpush2.msra.mxu0 0.0
    %3446 = vmatprep.subr.mxu0 0.0
    %3447 = vmatpush2.msra.mxu0 0.0
    %3448 = vmatprep.subr.mxu0 0.0
    %3449 = vmatpush2.msra.mxu0 0.0
    %3450 = vmatprep.subr.mxu0 0.0
    %3451 = vmatpush2.msra.mxu0 0.0
    %3452 = vmatprep.subr.mxu0 0.0
    %3453 = vmatpush2.msra.mxu0 0.0
    %3454 = vmatprep.subr.mxu0 0.0
    %3455 = vmatpush2.msra.mxu0 0.0
    %3456 = vmatprep.mubr.f32.mxu0 0.0
    %v3457 = vand.u32 %v3236, 4294901760
    %v3458 = vsub.f32 %v3236, %v3457
    %3459 = vmatmul.mubr.f32.gmra.mxu0 %v3458
    %v3460 = vpop.f32.mrf.mxu0
    %v3461 = vadd.f32 %v3387, %v3460
    %v3462 = vpop.f32.mrf.mxu0
    %3463 = vdwg.mxu0
    %3464 = vmatprep.subr.mxu0 0.0
    %3465 = vmatpush1.msra.mxu0 0.0
    %3466 = vmatprep.subr.mxu0 0.0
    %3467 = vmatpush1.msra.mxu0 0.0
    %3468 = vmatprep.subr.mxu0 0.0
    %3469 = vmatpush1.msra.mxu0 0.0
    %3470 = vmatprep.subr.mxu0 0.0
    %3471 = vmatpush1.msra.mxu0 0.0
    %3472 = vmatprep.subr.mxu0 0.0
    %3473 = vmatpush1.msra.mxu0 0.0
    %3474 = vmatprep.subr.mxu0 0.0
    %3475 = vmatpush1.msra.mxu0 0.0
    %3476 = vmatprep.subr.mxu0 0.0
    %3477 = vmatpush1.msra.mxu0 0.0
    %3478 = vmatprep.subr.mxu0 0.0
    %3479 = vmatpush1.msra.mxu0 0.0
    %3480 = vmatprep.subr.mxu0 0.0
    %3481 = vmatpush1.msra.mxu0 0.0
    %3482 = vmatprep.subr.mxu0 0.0
    %3483 = vmatpush1.msra.mxu0 0.0
    %3484 = vmatprep.subr.mxu0 0.0
    %3485 = vmatpush1.msra.mxu0 0.0
    %3486 = vmatprep.subr.mxu0 0.0
    %3487 = vmatpush1.msra.mxu0 0.0
    %3488 = vmatprep.subr.mxu0 0.0
    %3489 = vmatpush1.msra.mxu0 0.0
    %3490 = vmatprep.subr.mxu0 0.0
    %3491 = vmatpush1.msra.mxu0 0.0
    %3492 = vmatprep.subr.mxu0 0.0
    %3493 = vmatpush1.msra.mxu0 0.0
    %3494 = vmatprep.subr.mxu0 0.0
    %v3495 = vand.u32 %v1305, 4294901760
    %3496 = vmatpush1.msra.mxu0 %v3495
    %3497 = vmatprep.subr.mxu0 0.0
    %3498 = vmatpush2.msra.mxu0 0.0
    %3499 = vmatprep.subr.mxu0 0.0
    %3500 = vmatpush2.msra.mxu0 0.0
    %3501 = vmatprep.subr.mxu0 0.0
    %3502 = vmatpush2.msra.mxu0 0.0
    %3503 = vmatprep.subr.mxu0 0.0
    %3504 = vmatpush2.msra.mxu0 0.0
    %3505 = vmatprep.subr.mxu0 0.0
    %3506 = vmatpush2.msra.mxu0 0.0
    %3507 = vmatprep.subr.mxu0 0.0
    %3508 = vmatpush2.msra.mxu0 0.0
    %3509 = vmatprep.subr.mxu0 0.0
    %3510 = vmatpush2.msra.mxu0 0.0
    %3511 = vmatprep.subr.mxu0 0.0
    %3512 = vmatpush2.msra.mxu0 0.0
    %3513 = vmatprep.subr.mxu0 0.0
    %3514 = vmatpush2.msra.mxu0 0.0
    %3515 = vmatprep.subr.mxu0 0.0
    %3516 = vmatpush2.msra.mxu0 0.0
    %3517 = vmatprep.subr.mxu0 0.0
    %3518 = vmatpush2.msra.mxu0 0.0
    %3519 = vmatprep.subr.mxu0 0.0
    %3520 = vmatpush2.msra.mxu0 0.0
    %3521 = vmatprep.subr.mxu0 0.0
    %3522 = vmatpush2.msra.mxu0 0.0
    %3523 = vmatprep.subr.mxu0 0.0
    %3524 = vmatpush2.msra.mxu0 0.0
    %3525 = vmatprep.subr.mxu0 0.0
    %3526 = vmatpush2.msra.mxu0 0.0
    %3527 = vmatprep.subr.mxu0 0.0
    %3528 = vmatpush2.msra.mxu0 0.0
    %3529 = vmatprep.mubr.f32.mxu0 0.0
    %v3530 = vand.u32 %v3236, 4294901760
    %v3531 = vsub.f32 %v3236, %v3530
    %v3532 = vand.u32 %v3531, 4294901760
    %3533 = vmatmul.mubr.f32.gmra.mxu0 %v3532
    %v3534 = vpop.f32.mrf.mxu0
    %v3535 = vadd.f32 %v3461, %v3534
    %v3536 = vpop.f32.mrf.mxu0
    %3537 = vdwg.mxu0
    %3538 = vmatprep.subr.mxu0 0.0
    %3539 = vmatpush1.msra.mxu0 0.0
    %3540 = vmatprep.subr.mxu0 0.0
    %3541 = vmatpush1.msra.mxu0 0.0
    %3542 = vmatprep.subr.mxu0 0.0
    %3543 = vmatpush1.msra.mxu0 0.0
    %3544 = vmatprep.subr.mxu0 0.0
    %3545 = vmatpush1.msra.mxu0 0.0
    %3546 = vmatprep.subr.mxu0 0.0
    %3547 = vmatpush1.msra.mxu0 0.0
    %3548 = vmatprep.subr.mxu0 0.0
    %3549 = vmatpush1.msra.mxu0 0.0
    %3550 = vmatprep.subr.mxu0 0.0
    %3551 = vmatpush1.msra.mxu0 0.0
    %3552 = vmatprep.subr.mxu0 0.0
    %3553 = vmatpush1.msra.mxu0 0.0
    %3554 = vmatprep.subr.mxu0 0.0
    %3555 = vmatpush1.msra.mxu0 0.0
    %3556 = vmatprep.subr.mxu0 0.0
    %3557 = vmatpush1.msra.mxu0 0.0
    %3558 = vmatprep.subr.mxu0 0.0
    %3559 = vmatpush1.msra.mxu0 0.0
    %3560 = vmatprep.subr.mxu0 0.0
    %3561 = vmatpush1.msra.mxu0 0.0
    %3562 = vmatprep.subr.mxu0 0.0
    %3563 = vmatpush1.msra.mxu0 0.0
    %3564 = vmatprep.subr.mxu0 0.0
    %3565 = vmatpush1.msra.mxu0 0.0
    %3566 = vmatprep.subr.mxu0 0.0
    %3567 = vmatpush1.msra.mxu0 0.0
    %3568 = vmatprep.subr.mxu0 0.0
    %v3569 = vand.u32 %v1305, 4294901760
    %v3570 = vsub.f32 %v1305, %v3569
    %v3571 = vand.u32 %v3570, 4294901760
    %3572 = vmatpush1.msra.mxu0 %v3571
    %3573 = vmatprep.subr.mxu0 0.0
    %3574 = vmatpush2.msra.mxu0 0.0
    %3575 = vmatprep.subr.mxu0 0.0
    %3576 = vmatpush2.msra.mxu0 0.0
    %3577 = vmatprep.subr.mxu0 0.0
    %3578 = vmatpush2.msra.mxu0 0.0
    %3579 = vmatprep.subr.mxu0 0.0
    %3580 = vmatpush2.msra.mxu0 0.0
    %3581 = vmatprep.subr.mxu0 0.0
    %3582 = vmatpush2.msra.mxu0 0.0
    %3583 = vmatprep.subr.mxu0 0.0
    %3584 = vmatpush2.msra.mxu0 0.0
    %3585 = vmatprep.subr.mxu0 0.0
    %3586 = vmatpush2.msra.mxu0 0.0
    %3587 = vmatprep.subr.mxu0 0.0
    %3588 = vmatpush2.msra.mxu0 0.0
    %3589 = vmatprep.subr.mxu0 0.0
    %3590 = vmatpush2.msra.mxu0 0.0
    %3591 = vmatprep.subr.mxu0 0.0
    %3592 = vmatpush2.msra.mxu0 0.0
    %3593 = vmatprep.subr.mxu0 0.0
    %3594 = vmatpush2.msra.mxu0 0.0
    %3595 = vmatprep.subr.mxu0 0.0
    %3596 = vmatpush2.msra.mxu0 0.0
    %3597 = vmatprep.subr.mxu0 0.0
    %3598 = vmatpush2.msra.mxu0 0.0
    %3599 = vmatprep.subr.mxu0 0.0
    %3600 = vmatpush2.msra.mxu0 0.0
    %3601 = vmatprep.subr.mxu0 0.0
    %3602 = vmatpush2.msra.mxu0 0.0
    %3603 = vmatprep.subr.mxu0 0.0
    %3604 = vmatpush2.msra.mxu0 0.0
    %3605 = vmatprep.mubr.f32.mxu0 0.0
    %v3606 = vand.u32 %v3236, 4294901760
    %3607 = vmatmul.mubr.f32.gmra.mxu0 %v3606
    %v3608 = vpop.f32.mrf.mxu0
    %v3609 = vadd.f32 %v3535, %v3608
    %v3610 = vpop.f32.mrf.mxu0
    %3611 = vdwg.mxu0
    %3612 = vmatprep.subr.mxu0 0.0
    %3613 = vmatpush1.msra.mxu0 0.0
    %3614 = vmatprep.subr.mxu0 0.0
    %3615 = vmatpush1.msra.mxu0 0.0
    %3616 = vmatprep.subr.mxu0 0.0
    %3617 = vmatpush1.msra.mxu0 0.0
    %3618 = vmatprep.subr.mxu0 0.0
    %3619 = vmatpush1.msra.mxu0 0.0
    %3620 = vmatprep.subr.mxu0 0.0
    %3621 = vmatpush1.msra.mxu0 0.0
    %3622 = vmatprep.subr.mxu0 0.0
    %3623 = vmatpush1.msra.mxu0 0.0
    %3624 = vmatprep.subr.mxu0 0.0
    %3625 = vmatpush1.msra.mxu0 0.0
    %3626 = vmatprep.subr.mxu0 0.0
    %3627 = vmatpush1.msra.mxu0 0.0
    %3628 = vmatprep.subr.mxu0 0.0
    %3629 = vmatpush1.msra.mxu0 0.0
    %3630 = vmatprep.subr.mxu0 0.0
    %3631 = vmatpush1.msra.mxu0 0.0
    %3632 = vmatprep.subr.mxu0 0.0
    %3633 = vmatpush1.msra.mxu0 0.0
    %3634 = vmatprep.subr.mxu0 0.0
    %3635 = vmatpush1.msra.mxu0 0.0
    %3636 = vmatprep.subr.mxu0 0.0
    %3637 = vmatpush1.msra.mxu0 0.0
    %3638 = vmatprep.subr.mxu0 0.0
    %3639 = vmatpush1.msra.mxu0 0.0
    %3640 = vmatprep.subr.mxu0 0.0
    %3641 = vmatpush1.msra.mxu0 0.0
    %3642 = vmatprep.subr.mxu0 0.0
    %v3643 = vand.u32 %v1305, 4294901760
    %3644 = vmatpush1.msra.mxu0 %v3643
    %3645 = vmatprep.subr.mxu0 0.0
    %3646 = vmatpush2.msra.mxu0 0.0
    %3647 = vmatprep.subr.mxu0 0.0
    %3648 = vmatpush2.msra.mxu0 0.0
    %3649 = vmatprep.subr.mxu0 0.0
    %3650 = vmatpush2.msra.mxu0 0.0
    %3651 = vmatprep.subr.mxu0 0.0
    %3652 = vmatpush2.msra.mxu0 0.0
    %3653 = vmatprep.subr.mxu0 0.0
    %3654 = vmatpush2.msra.mxu0 0.0
    %3655 = vmatprep.subr.mxu0 0.0
    %3656 = vmatpush2.msra.mxu0 0.0
    %3657 = vmatprep.subr.mxu0 0.0
    %3658 = vmatpush2.msra.mxu0 0.0
    %3659 = vmatprep.subr.mxu0 0.0
    %3660 = vmatpush2.msra.mxu0 0.0
    %3661 = vmatprep.subr.mxu0 0.0
    %3662 = vmatpush2.msra.mxu0 0.0
    %3663 = vmatprep.subr.mxu0 0.0
    %3664 = vmatpush2.msra.mxu0 0.0
    %3665 = vmatprep.subr.mxu0 0.0
    %3666 = vmatpush2.msra.mxu0 0.0
    %3667 = vmatprep.subr.mxu0 0.0
    %3668 = vmatpush2.msra.mxu0 0.0
    %3669 = vmatprep.subr.mxu0 0.0
    %3670 = vmatpush2.msra.mxu0 0.0
    %3671 = vmatprep.subr.mxu0 0.0
    %3672 = vmatpush2.msra.mxu0 0.0
    %3673 = vmatprep.subr.mxu0 0.0
    %3674 = vmatpush2.msra.mxu0 0.0
    %3675 = vmatprep.subr.mxu0 0.0
    %3676 = vmatpush2.msra.mxu0 0.0
    %3677 = vmatprep.mubr.f32.mxu0 0.0
    %v3678 = vand.u32 %v3236, 4294901760
    %3679 = vmatmul.mubr.f32.gmra.mxu0 %v3678
    %v3680 = vpop.f32.mrf.mxu0
    %v3681 = vadd.f32 %v3609, %v3680
    %v3682 = vpop.f32.mrf.mxu0
    %3683 = vdwg.mxu0
    %v3684 = vadd.f32 %v1302, %v3681
    %v3685 = vxor.u32 %v3684, 2147483648
    %v3686 = vmul.f32 %v3685, 1.442695
    %v3687 = vpow.pop %v3686
    %v3688 = vadd.f32 %v3687, 1.0
    %v3689 = vrcp.pop %v3688
    %v3690 = vmul.f32 1.0, %v3689
    %v3691 = vtanh.pop %v3684
    %v3693 = vrot.slane %v3224, 6
    %v3695 = vmul.f32 %v3690, %v3693
    %3697 = vrot.lane.b32.xlu0 %v3691, 104
    %v3698 = vpop.permute.xlu0 %3697
    %v3700 = vmul.f32 %v3690, %v3698
    %3702 = vrot.lane.b32.xlu0 %v3700, 8
    %v3703 = vpop.permute.xlu0 %3702
    %v3705 = vadd.f32 %v3695, %v3703
    %v3706 = vtanh.pop %v3705
    %3708 = vrot.lane.b32.xlu0 %v3706, 8
    %v3709 = vpop.permute.xlu0 %3708
    %v3711 = vmul.f32 %v3690, %v3709
    %v3712 = vadd.f32 %v3711, %v3711
    %3714 = vrot.lane.b32.xlu0 %v3711, 112
    %v3715 = vpop.permute.xlu0 %3714
    %v3716 = vsel %vm71, %v3715, 0
    %3718 = vmatprep.subr.mxu0 0.0
    %3719 = vmatpush1.msra.mxu0 0.0
    %3720 = vmatprep.subr.mxu0 0.0
    %3721 = vmatpush1.msra.mxu0 0.0
    %3722 = vmatprep.subr.mxu0 0.0
    %3723 = vmatpush1.msra.mxu0 0.0
    %3724 = vmatprep.subr.mxu0 0.0
    %3725 = vmatpush1.msra.mxu0 0.0
    %3726 = vmatprep.subr.mxu0 0.0
    %3727 = vmatpush1.msra.mxu0 0.0
    %3728 = vmatprep.subr.mxu0 0.0
    %3729 = vmatpush1.msra.mxu0 0.0
    %3730 = vmatprep.subr.mxu0 0.0
    %3731 = vmatpush1.msra.mxu0 0.0
    %3732 = vmatprep.subr.mxu0 0.0
    %3733 = vmatpush1.msra.mxu0 0.0
    %3734 = vmatprep.subr.mxu0 0.0
    %3735 = vmatpush1.msra.mxu0 0.0
    %3736 = vmatprep.subr.mxu0 0.0
    %3737 = vmatpush1.msra.mxu0 0.0
    %3738 = vmatprep.subr.mxu0 0.0
    %3739 = vmatpush1.msra.mxu0 0.0
    %3740 = vmatprep.subr.mxu0 0.0
    %3741 = vmatpush1.msra.mxu0 0.0
    %3742 = vmatprep.subr.mxu0 0.0
    %3743 = vmatpush1.msra.mxu0 0.0
    %3744 = vmatprep.subr.mxu0 0.0
    %3745 = vmatpush1.msra.mxu0 0.0
    %3746 = vmatprep.subr.mxu0 0.0
    %3747 = vmatpush1.msra.mxu0 0.0
    %3748 = vmatprep.subr.mxu0 0.0
    %v3749 = vand.u32 %v1305, 4294901760
    %3750 = vmatpush1.msra.mxu0 %v3749
    %3751 = vmatprep.subr.mxu0 0.0
    %3752 = vmatpush2.msra.mxu0 0.0
    %3753 = vmatprep.subr.mxu0 0.0
    %3754 = vmatpush2.msra.mxu0 0.0
    %3755 = vmatprep.subr.mxu0 0.0
    %3756 = vmatpush2.msra.mxu0 0.0
    %3757 = vmatprep.subr.mxu0 0.0
    %3758 = vmatpush2.msra.mxu0 0.0
    %3759 = vmatprep.subr.mxu0 0.0
    %3760 = vmatpush2.msra.mxu0 0.0
    %3761 = vmatprep.subr.mxu0 0.0
    %3762 = vmatpush2.msra.mxu0 0.0
    %3763 = vmatprep.subr.mxu0 0.0
    %3764 = vmatpush2.msra.mxu0 0.0
    %3765 = vmatprep.subr.mxu0 0.0
    %3766 = vmatpush2.msra.mxu0 0.0
    %3767 = vmatprep.subr.mxu0 0.0
    %3768 = vmatpush2.msra.mxu0 0.0
    %3769 = vmatprep.subr.mxu0 0.0
    %3770 = vmatpush2.msra.mxu0 0.0
    %3771 = vmatprep.subr.mxu0 0.0
    %3772 = vmatpush2.msra.mxu0 0.0
    %3773 = vmatprep.subr.mxu0 0.0
    %3774 = vmatpush2.msra.mxu0 0.0
    %3775 = vmatprep.subr.mxu0 0.0
    %3776 = vmatpush2.msra.mxu0 0.0
    %3777 = vmatprep.subr.mxu0 0.0
    %3778 = vmatpush2.msra.mxu0 0.0
    %3779 = vmatprep.subr.mxu0 0.0
    %3780 = vmatpush2.msra.mxu0 0.0
    %3781 = vmatprep.subr.mxu0 0.0
    %3782 = vmatpush2.msra.mxu0 0.0
    %3783 = vmatprep.mubr.f32.mxu0 0.0
    %v3784 = vand.u32 %v3716, 4294901760
    %v3785 = vsub.f32 %v3716, %v3784
    %v3786 = vand.u32 %v3785, 4294901760
    %v3787 = vsub.f32 %v3785, %v3786
    %v3788 = vand.u32 %v3787, 4294901760
    %3789 = vmatmul.mubr.f32.gmra.mxu0 %v3788
    %v3790 = vpop.f32.mrf.mxu0
    %v3791 = vadd.f32 0.0, %v3790
    %v3792 = vpop.f32.mrf.mxu0
    %3793 = vdwg.mxu0
    %3794 = vmatprep.subr.mxu0 0.0
    %3795 = vmatpush1.msra.mxu0 0.0
    %3796 = vmatprep.subr.mxu0 0.0
    %3797 = vmatpush1.msra.mxu0 0.0
    %3798 = vmatprep.subr.mxu0 0.0
    %3799 = vmatpush1.msra.mxu0 0.0
    %3800 = vmatprep.subr.mxu0 0.0
    %3801 = vmatpush1.msra.mxu0 0.0
    %3802 = vmatprep.subr.mxu0 0.0
    %3803 = vmatpush1.msra.mxu0 0.0
    %3804 = vmatprep.subr.mxu0 0.0
    %3805 = vmatpush1.msra.mxu0 0.0
    %3806 = vmatprep.subr.mxu0 0.0
    %3807 = vmatpush1.msra.mxu0 0.0
    %3808 = vmatprep.subr.mxu0 0.0
    %3809 = vmatpush1.msra.mxu0 0.0
    %3810 = vmatprep.subr.mxu0 0.0
    %3811 = vmatpush1.msra.mxu0 0.0
    %3812 = vmatprep.subr.mxu0 0.0
    %3813 = vmatpush1.msra.mxu0 0.0
    %3814 = vmatprep.subr.mxu0 0.0
    %3815 = vmatpush1.msra.mxu0 0.0
    %3816 = vmatprep.subr.mxu0 0.0
    %3817 = vmatpush1.msra.mxu0 0.0
    %3818 = vmatprep.subr.mxu0 0.0
    %3819 = vmatpush1.msra.mxu0 0.0
    %3820 = vmatprep.subr.mxu0 0.0
    %3821 = vmatpush1.msra.mxu0 0.0
    %3822 = vmatprep.subr.mxu0 0.0
    %3823 = vmatpush1.msra.mxu0 0.0
    %3824 = vmatprep.subr.mxu0 0.0
    %v3825 = vand.u32 %v1305, 4294901760
    %v3826 = vsub.f32 %v1305, %v3825
    %v3827 = vand.u32 %v3826, 4294901760
    %v3828 = vsub.f32 %v3826, %v3827
    %v3829 = vand.u32 %v3828, 4294901760
    %3830 = vmatpush1.msra.mxu0 %v3829
    %3831 = vmatprep.subr.mxu0 0.0
    %3832 = vmatpush2.msra.mxu0 0.0
    %3833 = vmatprep.subr.mxu0 0.0
    %3834 = vmatpush2.msra.mxu0 0.0
    %3835 = vmatprep.subr.mxu0 0.0
    %3836 = vmatpush2.msra.mxu0 0.0
    %3837 = vmatprep.subr.mxu0 0.0
    %3838 = vmatpush2.msra.mxu0 0.0
    %3839 = vmatprep.subr.mxu0 0.0
    %3840 = vmatpush2.msra.mxu0 0.0
    %3841 = vmatprep.subr.mxu0 0.0
    %3842 = vmatpush2.msra.mxu0 0.0
    %3843 = vmatprep.subr.mxu0 0.0
    %3844 = vmatpush2.msra.mxu0 0.0
    %3845 = vmatprep.subr.mxu0 0.0
    %3846 = vmatpush2.msra.mxu0 0.0
    %3847 = vmatprep.subr.mxu0 0.0
    %3848 = vmatpush2.msra.mxu0 0.0
    %3849 = vmatprep.subr.mxu0 0.0
    %3850 = vmatpush2.msra.mxu0 0.0
    %3851 = vmatprep.subr.mxu0 0.0
    %3852 = vmatpush2.msra.mxu0 0.0
    %3853 = vmatprep.subr.mxu0 0.0
    %3854 = vmatpush2.msra.mxu0 0.0
    %3855 = vmatprep.subr.mxu0 0.0
    %3856 = vmatpush2.msra.mxu0 0.0
    %3857 = vmatprep.subr.mxu0 0.0
    %3858 = vmatpush2.msra.mxu0 0.0
    %3859 = vmatprep.subr.mxu0 0.0
    %3860 = vmatpush2.msra.mxu0 0.0
    %3861 = vmatprep.subr.mxu0 0.0
    %3862 = vmatpush2.msra.mxu0 0.0
    %3863 = vmatprep.mubr.f32.mxu0 0.0
    %v3864 = vand.u32 %v3716, 4294901760
    %3865 = vmatmul.mubr.f32.gmra.mxu0 %v3864
    %v3866 = vpop.f32.mrf.mxu0
    %v3867 = vadd.f32 %v3791, %v3866
    %v3868 = vpop.f32.mrf.mxu0
    %3869 = vdwg.mxu0
    %3870 = vmatprep.subr.mxu0 0.0
    %3871 = vmatpush1.msra.mxu0 0.0
    %3872 = vmatprep.subr.mxu0 0.0
    %3873 = vmatpush1.msra.mxu0 0.0
    %3874 = vmatprep.subr.mxu0 0.0
    %3875 = vmatpush1.msra.mxu0 0.0
    %3876 = vmatprep.subr.mxu0 0.0
    %3877 = vmatpush1.msra.mxu0 0.0
    %3878 = vmatprep.subr.mxu0 0.0
    %3879 = vmatpush1.msra.mxu0 0.0
    %3880 = vmatprep.subr.mxu0 0.0
    %3881 = vmatpush1.msra.mxu0 0.0
    %3882 = vmatprep.subr.mxu0 0.0
    %3883 = vmatpush1.msra.mxu0 0.0
    %3884 = vmatprep.subr.mxu0 0.0
    %3885 = vmatpush1.msra.mxu0 0.0
    %3886 = vmatprep.subr.mxu0 0.0
    %3887 = vmatpush1.msra.mxu0 0.0
    %3888 = vmatprep.subr.mxu0 0.0
    %3889 = vmatpush1.msra.mxu0 0.0
    %3890 = vmatprep.subr.mxu0 0.0
    %3891 = vmatpush1.msra.mxu0 0.0
    %3892 = vmatprep.subr.mxu0 0.0
    %3893 = vmatpush1.msra.mxu0 0.0
    %3894 = vmatprep.subr.mxu0 0.0
    %3895 = vmatpush1.msra.mxu0 0.0
    %3896 = vmatprep.subr.mxu0 0.0
    %3897 = vmatpush1.msra.mxu0 0.0
    %3898 = vmatprep.subr.mxu0 0.0
    %3899 = vmatpush1.msra.mxu0 0.0
    %3900 = vmatprep.subr.mxu0 0.0
    %v3901 = vand.u32 %v1305, 4294901760
    %v3902 = vsub.f32 %v1305, %v3901
    %3903 = vmatpush1.msra.mxu0 %v3902
    %3904 = vmatprep.subr.mxu0 0.0
    %3905 = vmatpush2.msra.mxu0 0.0
    %3906 = vmatprep.subr.mxu0 0.0
    %3907 = vmatpush2.msra.mxu0 0.0
    %3908 = vmatprep.subr.mxu0 0.0
    %3909 = vmatpush2.msra.mxu0 0.0
    %3910 = vmatprep.subr.mxu0 0.0
    %3911 = vmatpush2.msra.mxu0 0.0
    %3912 = vmatprep.subr.mxu0 0.0
    %3913 = vmatpush2.msra.mxu0 0.0
    %3914 = vmatprep.subr.mxu0 0.0
    %3915 = vmatpush2.msra.mxu0 0.0
    %3916 = vmatprep.subr.mxu0 0.0
    %3917 = vmatpush2.msra.mxu0 0.0
    %3918 = vmatprep.subr.mxu0 0.0
    %3919 = vmatpush2.msra.mxu0 0.0
    %3920 = vmatprep.subr.mxu0 0.0
    %3921 = vmatpush2.msra.mxu0 0.0
    %3922 = vmatprep.subr.mxu0 0.0
    %3923 = vmatpush2.msra.mxu0 0.0
    %3924 = vmatprep.subr.mxu0 0.0
    %3925 = vmatpush2.msra.mxu0 0.0
    %3926 = vmatprep.subr.mxu0 0.0
    %3927 = vmatpush2.msra.mxu0 0.0
    %3928 = vmatprep.subr.mxu0 0.0
    %3929 = vmatpush2.msra.mxu0 0.0
    %3930 = vmatprep.subr.mxu0 0.0
    %3931 = vmatpush2.msra.mxu0 0.0
    %3932 = vmatprep.subr.mxu0 0.0
    %3933 = vmatpush2.msra.mxu0 0.0
    %3934 = vmatprep.subr.mxu0 0.0
    %3935 = vmatpush2.msra.mxu0 0.0
    %3936 = vmatprep.mubr.f32.mxu0 0.0
    %v3937 = vand.u32 %v3716, 4294901760
    %v3938 = vsub.f32 %v3716, %v3937
    %3939 = vmatmul.mubr.f32.gmra.mxu0 %v3938
    %v3940 = vpop.f32.mrf.mxu0
    %v3941 = vadd.f32 %v3867, %v3940
    %v3942 = vpop.f32.mrf.mxu0
    %3943 = vdwg.mxu0
    %3944 = vmatprep.subr.mxu0 0.0
    %3945 = vmatpush1.msra.mxu0 0.0
    %3946 = vmatprep.subr.mxu0 0.0
    %3947 = vmatpush1.msra.mxu0 0.0
    %3948 = vmatprep.subr.mxu0 0.0
    %3949 = vmatpush1.msra.mxu0 0.0
    %3950 = vmatprep.subr.mxu0 0.0
    %3951 = vmatpush1.msra.mxu0 0.0
    %3952 = vmatprep.subr.mxu0 0.0
    %3953 = vmatpush1.msra.mxu0 0.0
    %3954 = vmatprep.subr.mxu0 0.0
    %3955 = vmatpush1.msra.mxu0 0.0
    %3956 = vmatprep.subr.mxu0 0.0
    %3957 = vmatpush1.msra.mxu0 0.0
    %3958 = vmatprep.subr.mxu0 0.0
    %3959 = vmatpush1.msra.mxu0 0.0
    %3960 = vmatprep.subr.mxu0 0.0
    %3961 = vmatpush1.msra.mxu0 0.0
    %3962 = vmatprep.subr.mxu0 0.0
    %3963 = vmatpush1.msra.mxu0 0.0
    %3964 = vmatprep.subr.mxu0 0.0
    %3965 = vmatpush1.msra.mxu0 0.0
    %3966 = vmatprep.subr.mxu0 0.0
    %3967 = vmatpush1.msra.mxu0 0.0
    %3968 = vmatprep.subr.mxu0 0.0
    %3969 = vmatpush1.msra.mxu0 0.0
    %3970 = vmatprep.subr.mxu0 0.0
    %3971 = vmatpush1.msra.mxu0 0.0
    %3972 = vmatprep.subr.mxu0 0.0
    %3973 = vmatpush1.msra.mxu0 0.0
    %3974 = vmatprep.subr.mxu0 0.0
    %v3975 = vand.u32 %v1305, 4294901760
    %3976 = vmatpush1.msra.mxu0 %v3975
    %3977 = vmatprep.subr.mxu0 0.0
    %3978 = vmatpush2.msra.mxu0 0.0
    %3979 = vmatprep.subr.mxu0 0.0
    %3980 = vmatpush2.msra.mxu0 0.0
    %3981 = vmatprep.subr.mxu0 0.0
    %3982 = vmatpush2.msra.mxu0 0.0
    %3983 = vmatprep.subr.mxu0 0.0
    %3984 = vmatpush2.msra.mxu0 0.0
    %3985 = vmatprep.subr.mxu0 0.0
    %3986 = vmatpush2.msra.mxu0 0.0
    %3987 = vmatprep.subr.mxu0 0.0
    %3988 = vmatpush2.msra.mxu0 0.0
    %3989 = vmatprep.subr.mxu0 0.0
    %3990 = vmatpush2.msra.mxu0 0.0
    %3991 = vmatprep.subr.mxu0 0.0
    %3992 = vmatpush2.msra.mxu0 0.0
    %3993 = vmatprep.subr.mxu0 0.0
    %3994 = vmatpush2.msra.mxu0 0.0
    %3995 = vmatprep.subr.mxu0 0.0
    %3996 = vmatpush2.msra.mxu0 0.0
    %3997 = vmatprep.subr.mxu0 0.0
    %3998 = vmatpush2.msra.mxu0 0.0
    %3999 = vmatprep.subr.mxu0 0.0
    %4000 = vmatpush2.msra.mxu0 0.0
    %4001 = vmatprep.subr.mxu0 0.0
    %4002 = vmatpush2.msra.mxu0 0.0
    %4003 = vmatprep.subr.mxu0 0.0
    %4004 = vmatpush2.msra.mxu0 0.0
    %4005 = vmatprep.subr.mxu0 0.0
    %4006 = vmatpush2.msra.mxu0 0.0
    %4007 = vmatprep.subr.mxu0 0.0
    %4008 = vmatpush2.msra.mxu0 0.0
    %4009 = vmatprep.mubr.f32.mxu0 0.0
    %v4010 = vand.u32 %v3716, 4294901760
    %v4011 = vsub.f32 %v3716, %v4010
    %v4012 = vand.u32 %v4011, 4294901760
    %4013 = vmatmul.mubr.f32.gmra.mxu0 %v4012
    %v4014 = vpop.f32.mrf.mxu0
    %v4015 = vadd.f32 %v3941, %v4014
    %v4016 = vpop.f32.mrf.mxu0
    %4017 = vdwg.mxu0
    %4018 = vmatprep.subr.mxu0 0.0
    %4019 = vmatpush1.msra.mxu0 0.0
    %4020 = vmatprep.subr.mxu0 0.0
    %4021 = vmatpush1.msra.mxu0 0.0
    %4022 = vmatprep.subr.mxu0 0.0
    %4023 = vmatpush1.msra.mxu0 0.0
    %4024 = vmatprep.subr.mxu0 0.0
    %4025 = vmatpush1.msra.mxu0 0.0
    %4026 = vmatprep.subr.mxu0 0.0
    %4027 = vmatpush1.msra.mxu0 0.0
    %4028 = vmatprep.subr.mxu0 0.0
    %4029 = vmatpush1.msra.mxu0 0.0
    %4030 = vmatprep.subr.mxu0 0.0
    %4031 = vmatpush1.msra.mxu0 0.0
    %4032 = vmatprep.subr.mxu0 0.0
    %4033 = vmatpush1.msra.mxu0 0.0
    %4034 = vmatprep.subr.mxu0 0.0
    %4035 = vmatpush1.msra.mxu0 0.0
    %4036 = vmatprep.subr.mxu0 0.0
    %4037 = vmatpush1.msra.mxu0 0.0
    %4038 = vmatprep.subr.mxu0 0.0
    %4039 = vmatpush1.msra.mxu0 0.0
    %4040 = vmatprep.subr.mxu0 0.0
    %4041 = vmatpush1.msra.mxu0 0.0
    %4042 = vmatprep.subr.mxu0 0.0
    %4043 = vmatpush1.msra.mxu0 0.0
    %4044 = vmatprep.subr.mxu0 0.0
    %4045 = vmatpush1.msra.mxu0 0.0
    %4046 = vmatprep.subr.mxu0 0.0
    %4047 = vmatpush1.msra.mxu0 0.0
    %4048 = vmatprep.subr.mxu0 0.0
    %v4049 = vand.u32 %v1305, 4294901760
    %v4050 = vsub.f32 %v1305, %v4049
    %v4051 = vand.u32 %v4050, 4294901760
    %4052 = vmatpush1.msra.mxu0 %v4051
    %4053 = vmatprep.subr.mxu0 0.0
    %4054 = vmatpush2.msra.mxu0 0.0
    %4055 = vmatprep.subr.mxu0 0.0
    %4056 = vmatpush2.msra.mxu0 0.0
    %4057 = vmatprep.subr.mxu0 0.0
    %4058 = vmatpush2.msra.mxu0 0.0
    %4059 = vmatprep.subr.mxu0 0.0
    %4060 = vmatpush2.msra.mxu0 0.0
    %4061 = vmatprep.subr.mxu0 0.0
    %4062 = vmatpush2.msra.mxu0 0.0
    %4063 = vmatprep.subr.mxu0 0.0
    %4064 = vmatpush2.msra.mxu0 0.0
    %4065 = vmatprep.subr.mxu0 0.0
    %4066 = vmatpush2.msra.mxu0 0.0
    %4067 = vmatprep.subr.mxu0 0.0
    %4068 = vmatpush2.msra.mxu0 0.0
    %4069 = vmatprep.subr.mxu0 0.0
    %4070 = vmatpush2.msra.mxu0 0.0
    %4071 = vmatprep.subr.mxu0 0.0
    %4072 = vmatpush2.msra.mxu0 0.0
    %4073 = vmatprep.subr.mxu0 0.0
    %4074 = vmatpush2.msra.mxu0 0.0
    %4075 = vmatprep.subr.mxu0 0.0
    %4076 = vmatpush2.msra.mxu0 0.0
    %4077 = vmatprep.subr.mxu0 0.0
    %4078 = vmatpush2.msra.mxu0 0.0
    %4079 = vmatprep.subr.mxu0 0.0
    %4080 = vmatpush2.msra.mxu0 0.0
    %4081 = vmatprep.subr.mxu0 0.0
    %4082 = vmatpush2.msra.mxu0 0.0
    %4083 = vmatprep.subr.mxu0 0.0
    %4084 = vmatpush2.msra.mxu0 0.0
    %4085 = vmatprep.mubr.f32.mxu0 0.0
    %v4086 = vand.u32 %v3716, 4294901760
    %4087 = vmatmul.mubr.f32.gmra.mxu0 %v4086
    %v4088 = vpop.f32.mrf.mxu0
    %v4089 = vadd.f32 %v4015, %v4088
    %v4090 = vpop.f32.mrf.mxu0
    %4091 = vdwg.mxu0
    %4092 = vmatprep.subr.mxu0 0.0
    %4093 = vmatpush1.msra.mxu0 0.0
    %4094 = vmatprep.subr.mxu0 0.0
    %4095 = vmatpush1.msra.mxu0 0.0
    %4096 = vmatprep.subr.mxu0 0.0
    %4097 = vmatpush1.msra.mxu0 0.0
    %4098 = vmatprep.subr.mxu0 0.0
    %4099 = vmatpush1.msra.mxu0 0.0
    %4100 = vmatprep.subr.mxu0 0.0
    %4101 = vmatpush1.msra.mxu0 0.0
    %4102 = vmatprep.subr.mxu0 0.0
    %4103 = vmatpush1.msra.mxu0 0.0
    %4104 = vmatprep.subr.mxu0 0.0
    %4105 = vmatpush1.msra.mxu0 0.0
    %4106 = vmatprep.subr.mxu0 0.0
    %4107 = vmatpush1.msra.mxu0 0.0
    %4108 = vmatprep.subr.mxu0 0.0
    %4109 = vmatpush1.msra.mxu0 0.0
    %4110 = vmatprep.subr.mxu0 0.0
    %4111 = vmatpush1.msra.mxu0 0.0
    %4112 = vmatprep.subr.mxu0 0.0
    %4113 = vmatpush1.msra.mxu0 0.0
    %4114 = vmatprep.subr.mxu0 0.0
    %4115 = vmatpush1.msra.mxu0 0.0
    %4116 = vmatprep.subr.mxu0 0.0
    %4117 = vmatpush1.msra.mxu0 0.0
    %4118 = vmatprep.subr.mxu0 0.0
    %4119 = vmatpush1.msra.mxu0 0.0
    %4120 = vmatprep.subr.mxu0 0.0
    %4121 = vmatpush1.msra.mxu0 0.0
    %4122 = vmatprep.subr.mxu0 0.0
    %v4123 = vand.u32 %v1305, 4294901760
    %4124 = vmatpush1.msra.mxu0 %v4123
    %4125 = vmatprep.subr.mxu0 0.0
    %4126 = vmatpush2.msra.mxu0 0.0
    %4127 = vmatprep.subr.mxu0 0.0
    %4128 = vmatpush2.msra.mxu0 0.0
    %4129 = vmatprep.subr.mxu0 0.0
    %4130 = vmatpush2.msra.mxu0 0.0
    %4131 = vmatprep.subr.mxu0 0.0
    %4132 = vmatpush2.msra.mxu0 0.0
    %4133 = vmatprep.subr.mxu0 0.0
    %4134 = vmatpush2.msra.mxu0 0.0
    %4135 = vmatprep.subr.mxu0 0.0
    %4136 = vmatpush2.msra.mxu0 0.0
    %4137 = vmatprep.subr.mxu0 0.0
    %4138 = vmatpush2.msra.mxu0 0.0
    %4139 = vmatprep.subr.mxu0 0.0
    %4140 = vmatpush2.msra.mxu0 0.0
    %4141 = vmatprep.subr.mxu0 0.0
    %4142 = vmatpush2.msra.mxu0 0.0
    %4143 = vmatprep.subr.mxu0 0.0
    %4144 = vmatpush2.msra.mxu0 0.0
    %4145 = vmatprep.subr.mxu0 0.0
    %4146 = vmatpush2.msra.mxu0 0.0
    %4147 = vmatprep.subr.mxu0 0.0
    %4148 = vmatpush2.msra.mxu0 0.0
    %4149 = vmatprep.subr.mxu0 0.0
    %4150 = vmatpush2.msra.mxu0 0.0
    %4151 = vmatprep.subr.mxu0 0.0
    %4152 = vmatpush2.msra.mxu0 0.0
    %4153 = vmatprep.subr.mxu0 0.0
    %4154 = vmatpush2.msra.mxu0 0.0
    %4155 = vmatprep.subr.mxu0 0.0
    %4156 = vmatpush2.msra.mxu0 0.0
    %4157 = vmatprep.mubr.f32.mxu0 0.0
    %v4158 = vand.u32 %v3716, 4294901760
    %4159 = vmatmul.mubr.f32.gmra.mxu0 %v4158
    %v4160 = vpop.f32.mrf.mxu0
    %v4161 = vadd.f32 %v4089, %v4160
    %v4162 = vpop.f32.mrf.mxu0
    %4163 = vdwg.mxu0
    %v4165 = vrot.slane %v4161, 6
    %v4167 = vadd.f32 %v1302, %v4165
    %v4168 = vxor.u32 %v4167, 2147483648
    %v4169 = vmul.f32 %v4168, 1.442695
    %v4170 = vpow.pop %v4169
    %v4171 = vadd.f32 %v4170, 1.0
    %v4172 = vrcp.pop %v4171
    %v4173 = vmul.f32 1.0, %v4172
    %v4174 = vtanh.pop %v4167
    %v4176 = vrot.slane %v3705, 6
    %v4178 = vmul.f32 %v4173, %v4176
    %4180 = vrot.lane.b32.xlu0 %v4174, 104
    %v4181 = vpop.permute.xlu0 %4180
    %v4183 = vmul.f32 %v4173, %v4181
    %4185 = vrot.lane.b32.xlu0 %v4183, 8
    %v4186 = vpop.permute.xlu0 %4185
    %v4188 = vadd.f32 %v4178, %v4186
    %v4189 = vtanh.pop %v4188
    %4191 = vrot.lane.b32.xlu0 %v4189, 8
    %v4192 = vpop.permute.xlu0 %4191
    %v4194 = vmul.f32 %v4173, %v4192
    %v4195 = vadd.f32 %v4194, %v4194
    %v4197 = vrot.slane %v4194, 2
    %4198 = vrot.lane.b32.xlu0 %v4197, 112
    %v4199 = vpop.permute.xlu0 %4198
    %v4200 = vsel %vm71, %v4199, 0
    %4202 = vmatprep.subr.mxu0 0.0
    %4203 = vmatpush1.msra.mxu0 0.0
    %4204 = vmatprep.subr.mxu0 0.0
    %4205 = vmatpush1.msra.mxu0 0.0
    %4206 = vmatprep.subr.mxu0 0.0
    %4207 = vmatpush1.msra.mxu0 0.0
    %4208 = vmatprep.subr.mxu0 0.0
    %4209 = vmatpush1.msra.mxu0 0.0
    %4210 = vmatprep.subr.mxu0 0.0
    %4211 = vmatpush1.msra.mxu0 0.0
    %4212 = vmatprep.subr.mxu0 0.0
    %4213 = vmatpush1.msra.mxu0 0.0
    %4214 = vmatprep.subr.mxu0 0.0
    %4215 = vmatpush1.msra.mxu0 0.0
    %4216 = vmatprep.subr.mxu0 0.0
    %4217 = vmatpush1.msra.mxu0 0.0
    %4218 = vmatprep.subr.mxu0 0.0
    %4219 = vmatpush1.msra.mxu0 0.0
    %4220 = vmatprep.subr.mxu0 0.0
    %4221 = vmatpush1.msra.mxu0 0.0
    %4222 = vmatprep.subr.mxu0 0.0
    %4223 = vmatpush1.msra.mxu0 0.0
    %4224 = vmatprep.subr.mxu0 0.0
    %4225 = vmatpush1.msra.mxu0 0.0
    %4226 = vmatprep.subr.mxu0 0.0
    %4227 = vmatpush1.msra.mxu0 0.0
    %4228 = vmatprep.subr.mxu0 0.0
    %4229 = vmatpush1.msra.mxu0 0.0
    %4230 = vmatprep.subr.mxu0 0.0
    %4231 = vmatpush1.msra.mxu0 0.0
    %4232 = vmatprep.subr.mxu0 0.0
    %v4233 = vand.u32 %v1305, 4294901760
    %4234 = vmatpush1.msra.mxu0 %v4233
    %4235 = vmatprep.subr.mxu0 0.0
    %4236 = vmatpush2.msra.mxu0 0.0
    %4237 = vmatprep.subr.mxu0 0.0
    %4238 = vmatpush2.msra.mxu0 0.0
    %4239 = vmatprep.subr.mxu0 0.0
    %4240 = vmatpush2.msra.mxu0 0.0
    %4241 = vmatprep.subr.mxu0 0.0
    %4242 = vmatpush2.msra.mxu0 0.0
    %4243 = vmatprep.subr.mxu0 0.0
    %4244 = vmatpush2.msra.mxu0 0.0
    %4245 = vmatprep.subr.mxu0 0.0
    %4246 = vmatpush2.msra.mxu0 0.0
    %4247 = vmatprep.subr.mxu0 0.0
    %4248 = vmatpush2.msra.mxu0 0.0
    %4249 = vmatprep.subr.mxu0 0.0
    %4250 = vmatpush2.msra.mxu0 0.0
    %4251 = vmatprep.subr.mxu0 0.0
    %4252 = vmatpush2.msra.mxu0 0.0
    %4253 = vmatprep.subr.mxu0 0.0
    %4254 = vmatpush2.msra.mxu0 0.0
    %4255 = vmatprep.subr.mxu0 0.0
    %4256 = vmatpush2.msra.mxu0 0.0
    %4257 = vmatprep.subr.mxu0 0.0
    %4258 = vmatpush2.msra.mxu0 0.0
    %4259 = vmatprep.subr.mxu0 0.0
    %4260 = vmatpush2.msra.mxu0 0.0
    %4261 = vmatprep.subr.mxu0 0.0
    %4262 = vmatpush2.msra.mxu0 0.0
    %4263 = vmatprep.subr.mxu0 0.0
    %4264 = vmatpush2.msra.mxu0 0.0
    %4265 = vmatprep.subr.mxu0 0.0
    %4266 = vmatpush2.msra.mxu0 0.0
    %4267 = vmatprep.mubr.f32.mxu0 0.0
    %v4268 = vand.u32 %v4200, 4294901760
    %v4269 = vsub.f32 %v4200, %v4268
    %v4270 = vand.u32 %v4269, 4294901760
    %v4271 = vsub.f32 %v4269, %v4270
    %v4272 = vand.u32 %v4271, 4294901760
    %4273 = vmatmul.mubr.f32.gmra.mxu0 %v4272
    %v4274 = vpop.f32.mrf.mxu0
    %v4275 = vadd.f32 0.0, %v4274
    %v4276 = vpop.f32.mrf.mxu0
    %4277 = vdwg.mxu0
    %4278 = vmatprep.subr.mxu0 0.0
    %4279 = vmatpush1.msra.mxu0 0.0
    %4280 = vmatprep.subr.mxu0 0.0
    %4281 = vmatpush1.msra.mxu0 0.0
    %4282 = vmatprep.subr.mxu0 0.0
    %4283 = vmatpush1.msra.mxu0 0.0
    %4284 = vmatprep.subr.mxu0 0.0
    %4285 = vmatpush1.msra.mxu0 0.0
    %4286 = vmatprep.subr.mxu0 0.0
    %4287 = vmatpush1.msra.mxu0 0.0
    %4288 = vmatprep.subr.mxu0 0.0
    %4289 = vmatpush1.msra.mxu0 0.0
    %4290 = vmatprep.subr.mxu0 0.0
    %4291 = vmatpush1.msra.mxu0 0.0
    %4292 = vmatprep.subr.mxu0 0.0
    %4293 = vmatpush1.msra.mxu0 0.0
    %4294 = vmatprep.subr.mxu0 0.0
    %4295 = vmatpush1.msra.mxu0 0.0
    %4296 = vmatprep.subr.mxu0 0.0
    %4297 = vmatpush1.msra.mxu0 0.0
    %4298 = vmatprep.subr.mxu0 0.0
    %4299 = vmatpush1.msra.mxu0 0.0
    %4300 = vmatprep.subr.mxu0 0.0
    %4301 = vmatpush1.msra.mxu0 0.0
    %4302 = vmatprep.subr.mxu0 0.0
    %4303 = vmatpush1.msra.mxu0 0.0
    %4304 = vmatprep.subr.mxu0 0.0
    %4305 = vmatpush1.msra.mxu0 0.0
    %4306 = vmatprep.subr.mxu0 0.0
    %4307 = vmatpush1.msra.mxu0 0.0
    %4308 = vmatprep.subr.mxu0 0.0
    %v4309 = vand.u32 %v1305, 4294901760
    %v4310 = vsub.f32 %v1305, %v4309
    %v4311 = vand.u32 %v4310, 4294901760
    %v4312 = vsub.f32 %v4310, %v4311
    %v4313 = vand.u32 %v4312, 4294901760
    %4314 = vmatpush1.msra.mxu0 %v4313
    %4315 = vmatprep.subr.mxu0 0.0
    %4316 = vmatpush2.msra.mxu0 0.0
    %4317 = vmatprep.subr.mxu0 0.0
    %4318 = vmatpush2.msra.mxu0 0.0
    %4319 = vmatprep.subr.mxu0 0.0
    %4320 = vmatpush2.msra.mxu0 0.0
    %4321 = vmatprep.subr.mxu0 0.0
    %4322 = vmatpush2.msra.mxu0 0.0
    %4323 = vmatprep.subr.mxu0 0.0
    %4324 = vmatpush2.msra.mxu0 0.0
    %4325 = vmatprep.subr.mxu0 0.0
    %4326 = vmatpush2.msra.mxu0 0.0
    %4327 = vmatprep.subr.mxu0 0.0
    %4328 = vmatpush2.msra.mxu0 0.0
    %4329 = vmatprep.subr.mxu0 0.0
    %4330 = vmatpush2.msra.mxu0 0.0
    %4331 = vmatprep.subr.mxu0 0.0
    %4332 = vmatpush2.msra.mxu0 0.0
    %4333 = vmatprep.subr.mxu0 0.0
    %4334 = vmatpush2.msra.mxu0 0.0
    %4335 = vmatprep.subr.mxu0 0.0
    %4336 = vmatpush2.msra.mxu0 0.0
    %4337 = vmatprep.subr.mxu0 0.0
    %4338 = vmatpush2.msra.mxu0 0.0
    %4339 = vmatprep.subr.mxu0 0.0
    %4340 = vmatpush2.msra.mxu0 0.0
    %4341 = vmatprep.subr.mxu0 0.0
    %4342 = vmatpush2.msra.mxu0 0.0
    %4343 = vmatprep.subr.mxu0 0.0
    %4344 = vmatpush2.msra.mxu0 0.0
    %4345 = vmatprep.subr.mxu0 0.0
    %4346 = vmatpush2.msra.mxu0 0.0
    %4347 = vmatprep.mubr.f32.mxu0 0.0
    %v4348 = vand.u32 %v4200, 4294901760
    %4349 = vmatmul.mubr.f32.gmra.mxu0 %v4348
    %v4350 = vpop.f32.mrf.mxu0
    %v4351 = vadd.f32 %v4275, %v4350
    %v4352 = vpop.f32.mrf.mxu0
    %4353 = vdwg.mxu0
    %4354 = vmatprep.subr.mxu0 0.0
    %4355 = vmatpush1.msra.mxu0 0.0
    %4356 = vmatprep.subr.mxu0 0.0
    %4357 = vmatpush1.msra.mxu0 0.0
    %4358 = vmatprep.subr.mxu0 0.0
    %4359 = vmatpush1.msra.mxu0 0.0
    %4360 = vmatprep.subr.mxu0 0.0
    %4361 = vmatpush1.msra.mxu0 0.0
    %4362 = vmatprep.subr.mxu0 0.0
    %4363 = vmatpush1.msra.mxu0 0.0
    %4364 = vmatprep.subr.mxu0 0.0
    %4365 = vmatpush1.msra.mxu0 0.0
    %4366 = vmatprep.subr.mxu0 0.0
    %4367 = vmatpush1.msra.mxu0 0.0
    %4368 = vmatprep.subr.mxu0 0.0
    %4369 = vmatpush1.msra.mxu0 0.0
    %4370 = vmatprep.subr.mxu0 0.0
    %4371 = vmatpush1.msra.mxu0 0.0
    %4372 = vmatprep.subr.mxu0 0.0
    %4373 = vmatpush1.msra.mxu0 0.0
    %4374 = vmatprep.subr.mxu0 0.0
    %4375 = vmatpush1.msra.mxu0 0.0
    %4376 = vmatprep.subr.mxu0 0.0
    %4377 = vmatpush1.msra.mxu0 0.0
    %4378 = vmatprep.subr.mxu0 0.0
    %4379 = vmatpush1.msra.mxu0 0.0
    %4380 = vmatprep.subr.mxu0 0.0
    %4381 = vmatpush1.msra.mxu0 0.0
    %4382 = vmatprep.subr.mxu0 0.0
    %4383 = vmatpush1.msra.mxu0 0.0
    %4384 = vmatprep.subr.mxu0 0.0
    %v4385 = vand.u32 %v1305, 4294901760
    %v4386 = vsub.f32 %v1305, %v4385
    %4387 = vmatpush1.msra.mxu0 %v4386
    %4388 = vmatprep.subr.mxu0 0.0
    %4389 = vmatpush2.msra.mxu0 0.0
    %4390 = vmatprep.subr.mxu0 0.0
    %4391 = vmatpush2.msra.mxu0 0.0
    %4392 = vmatprep.subr.mxu0 0.0
    %4393 = vmatpush2.msra.mxu0 0.0
    %4394 = vmatprep.subr.mxu0 0.0
    %4395 = vmatpush2.msra.mxu0 0.0
    %4396 = vmatprep.subr.mxu0 0.0
    %4397 = vmatpush2.msra.mxu0 0.0
    %4398 = vmatprep.subr.mxu0 0.0
    %4399 = vmatpush2.msra.mxu0 0.0
    %4400 = vmatprep.subr.mxu0 0.0
    %4401 = vmatpush2.msra.mxu0 0.0
    %4402 = vmatprep.subr.mxu0 0.0
    %4403 = vmatpush2.msra.mxu0 0.0
    %4404 = vmatprep.subr.mxu0 0.0
    %4405 = vmatpush2.msra.mxu0 0.0
    %4406 = vmatprep.subr.mxu0 0.0
    %4407 = vmatpush2.msra.mxu0 0.0
    %4408 = vmatprep.subr.mxu0 0.0
    %4409 = vmatpush2.msra.mxu0 0.0
    %4410 = vmatprep.subr.mxu0 0.0
    %4411 = vmatpush2.msra.mxu0 0.0
    %4412 = vmatprep.subr.mxu0 0.0
    %4413 = vmatpush2.msra.mxu0 0.0
    %4414 = vmatprep.subr.mxu0 0.0
    %4415 = vmatpush2.msra.mxu0 0.0
    %4416 = vmatprep.subr.mxu0 0.0
    %4417 = vmatpush2.msra.mxu0 0.0
    %4418 = vmatprep.subr.mxu0 0.0
    %4419 = vmatpush2.msra.mxu0 0.0
    %4420 = vmatprep.mubr.f32.mxu0 0.0
    %v4421 = vand.u32 %v4200, 4294901760
    %v4422 = vsub.f32 %v4200, %v4421
    %4423 = vmatmul.mubr.f32.gmra.mxu0 %v4422
    %v4424 = vpop.f32.mrf.mxu0
    %v4425 = vadd.f32 %v4351, %v4424
    %v4426 = vpop.f32.mrf.mxu0
    %4427 = vdwg.mxu0
    %4428 = vmatprep.subr.mxu0 0.0
    %4429 = vmatpush1.msra.mxu0 0.0
    %4430 = vmatprep.subr.mxu0 0.0
    %4431 = vmatpush1.msra.mxu0 0.0
    %4432 = vmatprep.subr.mxu0 0.0
    %4433 = vmatpush1.msra.mxu0 0.0
    %4434 = vmatprep.subr.mxu0 0.0
    %4435 = vmatpush1.msra.mxu0 0.0
    %4436 = vmatprep.subr.mxu0 0.0
    %4437 = vmatpush1.msra.mxu0 0.0
    %4438 = vmatprep.subr.mxu0 0.0
    %4439 = vmatpush1.msra.mxu0 0.0
    %4440 = vmatprep.subr.mxu0 0.0
    %4441 = vmatpush1.msra.mxu0 0.0
    %4442 = vmatprep.subr.mxu0 0.0
    %4443 = vmatpush1.msra.mxu0 0.0
    %4444 = vmatprep.subr.mxu0 0.0
    %4445 = vmatpush1.msra.mxu0 0.0
    %4446 = vmatprep.subr.mxu0 0.0
    %4447 = vmatpush1.msra.mxu0 0.0
    %4448 = vmatprep.subr.mxu0 0.0
    %4449 = vmatpush1.msra.mxu0 0.0
    %4450 = vmatprep.subr.mxu0 0.0
    %4451 = vmatpush1.msra.mxu0 0.0
    %4452 = vmatprep.subr.mxu0 0.0
    %4453 = vmatpush1.msra.mxu0 0.0
    %4454 = vmatprep.subr.mxu0 0.0
    %4455 = vmatpush1.msra.mxu0 0.0
    %4456 = vmatprep.subr.mxu0 0.0
    %4457 = vmatpush1.msra.mxu0 0.0
    %4458 = vmatprep.subr.mxu0 0.0
    %v4459 = vand.u32 %v1305, 4294901760
    %4460 = vmatpush1.msra.mxu0 %v4459
    %4461 = vmatprep.subr.mxu0 0.0
    %4462 = vmatpush2.msra.mxu0 0.0
    %4463 = vmatprep.subr.mxu0 0.0
    %4464 = vmatpush2.msra.mxu0 0.0
    %4465 = vmatprep.subr.mxu0 0.0
    %4466 = vmatpush2.msra.mxu0 0.0
    %4467 = vmatprep.subr.mxu0 0.0
    %4468 = vmatpush2.msra.mxu0 0.0
    %4469 = vmatprep.subr.mxu0 0.0
    %4470 = vmatpush2.msra.mxu0 0.0
    %4471 = vmatprep.subr.mxu0 0.0
    %4472 = vmatpush2.msra.mxu0 0.0
    %4473 = vmatprep.subr.mxu0 0.0
    %4474 = vmatpush2.msra.mxu0 0.0
    %4475 = vmatprep.subr.mxu0 0.0
    %4476 = vmatpush2.msra.mxu0 0.0
    %4477 = vmatprep.subr.mxu0 0.0
    %4478 = vmatpush2.msra.mxu0 0.0
    %4479 = vmatprep.subr.mxu0 0.0
    %4480 = vmatpush2.msra.mxu0 0.0
    %4481 = vmatprep.subr.mxu0 0.0
    %4482 = vmatpush2.msra.mxu0 0.0
    %4483 = vmatprep.subr.mxu0 0.0
    %4484 = vmatpush2.msra.mxu0 0.0
    %4485 = vmatprep.subr.mxu0 0.0
    %4486 = vmatpush2.msra.mxu0 0.0
    %4487 = vmatprep.subr.mxu0 0.0
    %4488 = vmatpush2.msra.mxu0 0.0
    %4489 = vmatprep.subr.mxu0 0.0
    %4490 = vmatpush2.msra.mxu0 0.0
    %4491 = vmatprep.subr.mxu0 0.0
    %4492 = vmatpush2.msra.mxu0 0.0
    %4493 = vmatprep.mubr.f32.mxu0 0.0
    %v4494 = vand.u32 %v4200, 4294901760
    %v4495 = vsub.f32 %v4200, %v4494
    %v4496 = vand.u32 %v4495, 4294901760
    %4497 = vmatmul.mubr.f32.gmra.mxu0 %v4496
    %v4498 = vpop.f32.mrf.mxu0
    %v4499 = vadd.f32 %v4425, %v4498
    %v4500 = vpop.f32.mrf.mxu0
    %4501 = vdwg.mxu0
    %4502 = vmatprep.subr.mxu0 0.0
    %4503 = vmatpush1.msra.mxu0 0.0
    %4504 = vmatprep.subr.mxu0 0.0
    %4505 = vmatpush1.msra.mxu0 0.0
    %4506 = vmatprep.subr.mxu0 0.0
    %4507 = vmatpush1.msra.mxu0 0.0
    %4508 = vmatprep.subr.mxu0 0.0
    %4509 = vmatpush1.msra.mxu0 0.0
    %4510 = vmatprep.subr.mxu0 0.0
    %4511 = vmatpush1.msra.mxu0 0.0
    %4512 = vmatprep.subr.mxu0 0.0
    %4513 = vmatpush1.msra.mxu0 0.0
    %4514 = vmatprep.subr.mxu0 0.0
    %4515 = vmatpush1.msra.mxu0 0.0
    %4516 = vmatprep.subr.mxu0 0.0
    %4517 = vmatpush1.msra.mxu0 0.0
    %4518 = vmatprep.subr.mxu0 0.0
    %4519 = vmatpush1.msra.mxu0 0.0
    %4520 = vmatprep.subr.mxu0 0.0
    %4521 = vmatpush1.msra.mxu0 0.0
    %4522 = vmatprep.subr.mxu0 0.0
    %4523 = vmatpush1.msra.mxu0 0.0
    %4524 = vmatprep.subr.mxu0 0.0
    %4525 = vmatpush1.msra.mxu0 0.0
    %4526 = vmatprep.subr.mxu0 0.0
    %4527 = vmatpush1.msra.mxu0 0.0
    %4528 = vmatprep.subr.mxu0 0.0
    %4529 = vmatpush1.msra.mxu0 0.0
    %4530 = vmatprep.subr.mxu0 0.0
    %4531 = vmatpush1.msra.mxu0 0.0
    %4532 = vmatprep.subr.mxu0 0.0
    %v4533 = vand.u32 %v1305, 4294901760
    %v4534 = vsub.f32 %v1305, %v4533
    %v4535 = vand.u32 %v4534, 4294901760
    %4536 = vmatpush1.msra.mxu0 %v4535
    %4537 = vmatprep.subr.mxu0 0.0
    %4538 = vmatpush2.msra.mxu0 0.0
    %4539 = vmatprep.subr.mxu0 0.0
    %4540 = vmatpush2.msra.mxu0 0.0
    %4541 = vmatprep.subr.mxu0 0.0
    %4542 = vmatpush2.msra.mxu0 0.0
    %4543 = vmatprep.subr.mxu0 0.0
    %4544 = vmatpush2.msra.mxu0 0.0
    %4545 = vmatprep.subr.mxu0 0.0
    %4546 = vmatpush2.msra.mxu0 0.0
    %4547 = vmatprep.subr.mxu0 0.0
    %4548 = vmatpush2.msra.mxu0 0.0
    %4549 = vmatprep.subr.mxu0 0.0
    %4550 = vmatpush2.msra.mxu0 0.0
    %4551 = vmatprep.subr.mxu0 0.0
    %4552 = vmatpush2.msra.mxu0 0.0
    %4553 = vmatprep.subr.mxu0 0.0
    %4554 = vmatpush2.msra.mxu0 0.0
    %4555 = vmatprep.subr.mxu0 0.0
    %4556 = vmatpush2.msra.mxu0 0.0
    %4557 = vmatprep.subr.mxu0 0.0
    %4558 = vmatpush2.msra.mxu0 0.0
    %4559 = vmatprep.subr.mxu0 0.0
    %4560 = vmatpush2.msra.mxu0 0.0
    %4561 = vmatprep.subr.mxu0 0.0
    %4562 = vmatpush2.msra.mxu0 0.0
    %4563 = vmatprep.subr.mxu0 0.0
    %4564 = vmatpush2.msra.mxu0 0.0
    %4565 = vmatprep.subr.mxu0 0.0
    %4566 = vmatpush2.msra.mxu0 0.0
    %4567 = vmatprep.subr.mxu0 0.0
    %4568 = vmatpush2.msra.mxu0 0.0
    %4569 = vmatprep.mubr.f32.mxu0 0.0
    %v4570 = vand.u32 %v4200, 4294901760
    %4571 = vmatmul.mubr.f32.gmra.mxu0 %v4570
    %v4572 = vpop.f32.mrf.mxu0
    %v4573 = vadd.f32 %v4499, %v4572
    %v4574 = vpop.f32.mrf.mxu0
    %4575 = vdwg.mxu0
    %4576 = vmatprep.subr.mxu0 0.0
    %4577 = vmatpush1.msra.mxu0 0.0
    %4578 = vmatprep.subr.mxu0 0.0
    %4579 = vmatpush1.msra.mxu0 0.0
    %4580 = vmatprep.subr.mxu0 0.0
    %4581 = vmatpush1.msra.mxu0 0.0
    %4582 = vmatprep.subr.mxu0 0.0
    %4583 = vmatpush1.msra.mxu0 0.0
    %4584 = vmatprep.subr.mxu0 0.0
    %4585 = vmatpush1.msra.mxu0 0.0
    %4586 = vmatprep.subr.mxu0 0.0
    %4587 = vmatpush1.msra.mxu0 0.0
    %4588 = vmatprep.subr.mxu0 0.0
    %4589 = vmatpush1.msra.mxu0 0.0
    %4590 = vmatprep.subr.mxu0 0.0
    %4591 = vmatpush1.msra.mxu0 0.0
    %4592 = vmatprep.subr.mxu0 0.0
    %4593 = vmatpush1.msra.mxu0 0.0
    %4594 = vmatprep.subr.mxu0 0.0
    %4595 = vmatpush1.msra.mxu0 0.0
    %4596 = vmatprep.subr.mxu0 0.0
    %4597 = vmatpush1.msra.mxu0 0.0
    %4598 = vmatprep.subr.mxu0 0.0
    %4599 = vmatpush1.msra.mxu0 0.0
    %4600 = vmatprep.subr.mxu0 0.0
    %4601 = vmatpush1.msra.mxu0 0.0
    %4602 = vmatprep.subr.mxu0 0.0
    %4603 = vmatpush1.msra.mxu0 0.0
    %4604 = vmatprep.subr.mxu0 0.0
    %4605 = vmatpush1.msra.mxu0 0.0
    %4606 = vmatprep.subr.mxu0 0.0
    %v4607 = vand.u32 %v1305, 4294901760
    %4608 = vmatpush1.msra.mxu0 %v4607
    %4609 = vmatprep.subr.mxu0 0.0
    %4610 = vmatpush2.msra.mxu0 0.0
    %4611 = vmatprep.subr.mxu0 0.0
    %4612 = vmatpush2.msra.mxu0 0.0
    %4613 = vmatprep.subr.mxu0 0.0
    %4614 = vmatpush2.msra.mxu0 0.0
    %4615 = vmatprep.subr.mxu0 0.0
    %4616 = vmatpush2.msra.mxu0 0.0
    %4617 = vmatprep.subr.mxu0 0.0
    %4618 = vmatpush2.msra.mxu0 0.0
    %4619 = vmatprep.subr.mxu0 0.0
    %4620 = vmatpush2.msra.mxu0 0.0
    %4621 = vmatprep.subr.mxu0 0.0
    %4622 = vmatpush2.msra.mxu0 0.0
    %4623 = vmatprep.subr.mxu0 0.0
    %4624 = vmatpush2.msra.mxu0 0.0
    %4625 = vmatprep.subr.mxu0 0.0
    %4626 = vmatpush2.msra.mxu0 0.0
    %4627 = vmatprep.subr.mxu0 0.0
    %4628 = vmatpush2.msra.mxu0 0.0
    %4629 = vmatprep.subr.mxu0 0.0
    %4630 = vmatpush2.msra.mxu0 0.0
    %4631 = vmatprep.subr.mxu0 0.0
    %4632 = vmatpush2.msra.mxu0 0.0
    %4633 = vmatprep.subr.mxu0 0.0
    %4634 = vmatpush2.msra.mxu0 0.0
    %4635 = vmatprep.subr.mxu0 0.0
    %4636 = vmatpush2.msra.mxu0 0.0
    %4637 = vmatprep.subr.mxu0 0.0
    %4638 = vmatpush2.msra.mxu0 0.0
    %4639 = vmatprep.subr.mxu0 0.0
    %4640 = vmatpush2.msra.mxu0 0.0
    %4641 = vmatprep.mubr.f32.mxu0 0.0
    %v4642 = vand.u32 %v4200, 4294901760
    %4643 = vmatmul.mubr.f32.gmra.mxu0 %v4642
    %v4644 = vpop.f32.mrf.mxu0
    %v4645 = vadd.f32 %v4573, %v4644
    %v4646 = vpop.f32.mrf.mxu0
    %4647 = vdwg.mxu0
    %v4649 = vrot.slane %v4645, 4
    %v4651 = vadd.f32 %v1302, %v4649
    %v4652 = vxor.u32 %v4651, 2147483648
    %v4653 = vmul.f32 %v4652, 1.442695
    %v4654 = vpow.pop %v4653
    %v4655 = vadd.f32 %v4654, 1.0
    %v4656 = vrcp.pop %v4655
    %v4657 = vmul.f32 1.0, %v4656
    %v4658 = vtanh.pop %v4651
    %v4660 = vrot.slane %v4188, 6
    %v4662 = vmul.f32 %v4657, %v4660
    %4664 = vrot.lane.b32.xlu0 %v4658, 104
    %v4665 = vpop.permute.xlu0 %4664
    %v4667 = vmul.f32 %v4657, %v4665
    %4669 = vrot.lane.b32.xlu0 %v4667, 8
    %v4670 = vpop.permute.xlu0 %4669
    %v4672 = vadd.f32 %v4662, %v4670
    %v4673 = vtanh.pop %v4672
    %4675 = vrot.lane.b32.xlu0 %v4673, 8
    %v4676 = vpop.permute.xlu0 %4675
    %v4678 = vmul.f32 %v4657, %v4676
    %v4679 = vadd.f32 %v4678, %v4678
    %v4680 = vsel %vm796, %v1780, %v2263
    %v4681 = vsel %vm125, %v4680, %v2747
    %v4682 = vsel %vm58, %v4681, %v3231
    %v4683 = vsel %vm796, %v3712, %v4195
    %v4684 = vsel %vm125, %v4683, %v4679
    %v4685 = vld [vmem:[%s6] sm:$0xff]
    %v4686 = vld [vmem:[%s8] sm:$0x1]
    %v4688 = vlaneseq
    %v4689 = vshrl.u32 %v4688, 7
    %v4690 = vsub.s32 0, %v4689
    %v4691 = vrot.slane %v4686, %v4690
    %4695 = vrot.lane.b32.xlu0 %v4682, 112
    %v4696 = vpop.permute.xlu0 %4695
    %4697 = vrot.lane.b32.xlu0 %v4684, 112
    %v4698 = vpop.permute.xlu0 %4697
    %v4699 = vsel %vm71, %v4696, 0
    %v4701 = vsel %vm71, %v4698, 0
    %4703 = vmatprep.subr.mxu0 0.0
    %4704 = vmatpush1.msra.mxu0 0.0
    %4705 = vmatprep.subr.mxu0 0.0
    %4706 = vmatpush1.msra.mxu0 0.0
    %4707 = vmatprep.subr.mxu0 0.0
    %4708 = vmatpush1.msra.mxu0 0.0
    %4709 = vmatprep.subr.mxu0 0.0
    %4710 = vmatpush1.msra.mxu0 0.0
    %4711 = vmatprep.subr.mxu0 0.0
    %4712 = vmatpush1.msra.mxu0 0.0
    %4713 = vmatprep.subr.mxu0 0.0
    %4714 = vmatpush1.msra.mxu0 0.0
    %4715 = vmatprep.subr.mxu0 0.0
    %4716 = vmatpush1.msra.mxu0 0.0
    %4717 = vmatprep.subr.mxu0 0.0
    %4718 = vmatpush1.msra.mxu0 0.0
    %4719 = vmatprep.subr.mxu0 0.0
    %4720 = vmatpush1.msra.mxu0 0.0
    %4721 = vmatprep.subr.mxu0 0.0
    %4722 = vmatpush1.msra.mxu0 0.0
    %4723 = vmatprep.subr.mxu0 0.0
    %4724 = vmatpush1.msra.mxu0 0.0
    %4725 = vmatprep.subr.mxu0 0.0
    %4726 = vmatpush1.msra.mxu0 0.0
    %4727 = vmatprep.subr.mxu0 0.0
    %4728 = vmatpush1.msra.mxu0 0.0
    %4729 = vmatprep.subr.mxu0 0.0
    %4730 = vmatpush1.msra.mxu0 0.0
    %4731 = vmatprep.subr.mxu0 0.0
    %4732 = vmatpush1.msra.mxu0 0.0
    %4733 = vmatprep.subr.mxu0 0.0
    %v4734 = vand.u32 %v4685, 4294901760
    %4735 = vmatpush1.msra.mxu0 %v4734
    %4736 = vmatprep.subr.mxu0 0.0
    %4737 = vmatpush2.msra.mxu0 0.0
    %4738 = vmatprep.subr.mxu0 0.0
    %4739 = vmatpush2.msra.mxu0 0.0
    %4740 = vmatprep.subr.mxu0 0.0
    %4741 = vmatpush2.msra.mxu0 0.0
    %4742 = vmatprep.subr.mxu0 0.0
    %4743 = vmatpush2.msra.mxu0 0.0
    %4744 = vmatprep.subr.mxu0 0.0
    %4745 = vmatpush2.msra.mxu0 0.0
    %4746 = vmatprep.subr.mxu0 0.0
    %4747 = vmatpush2.msra.mxu0 0.0
    %4748 = vmatprep.subr.mxu0 0.0
    %4749 = vmatpush2.msra.mxu0 0.0
    %4750 = vmatprep.subr.mxu0 0.0
    %4751 = vmatpush2.msra.mxu0 0.0
    %4752 = vmatprep.subr.mxu0 0.0
    %4753 = vmatpush2.msra.mxu0 0.0
    %4754 = vmatprep.subr.mxu0 0.0
    %4755 = vmatpush2.msra.mxu0 0.0
    %4756 = vmatprep.subr.mxu0 0.0
    %4757 = vmatpush2.msra.mxu0 0.0
    %4758 = vmatprep.subr.mxu0 0.0
    %4759 = vmatpush2.msra.mxu0 0.0
    %4760 = vmatprep.subr.mxu0 0.0
    %4761 = vmatpush2.msra.mxu0 0.0
    %4762 = vmatprep.subr.mxu0 0.0
    %4763 = vmatpush2.msra.mxu0 0.0
    %4764 = vmatprep.subr.mxu0 0.0
    %4765 = vmatpush2.msra.mxu0 0.0
    %4766 = vmatprep.subr.mxu0 0.0
    %4767 = vmatpush2.msra.mxu0 0.0
    %4768 = vmatprep.mubr.f32.mxu0 0.0
    %v4769 = vand.u32 %v4699, 4294901760
    %v4770 = vsub.f32 %v4699, %v4769
    %v4771 = vand.u32 %v4770, 4294901760
    %v4772 = vsub.f32 %v4770, %v4771
    %v4773 = vand.u32 %v4772, 4294901760
    %4774 = vmatmul.mubr.f32.gmra.mxu0 %v4773
    %v4775 = vpop.f32.mrf.mxu0
    %v4776 = vadd.f32 %v4691, %v4775
    %v4777 = vpop.f32.mrf.mxu0
    %4778 = vmatprep.mubr.f32.mxu0 0.0
    %v4779 = vand.u32 %v4701, 4294901760
    %v4780 = vsub.f32 %v4701, %v4779
    %v4781 = vand.u32 %v4780, 4294901760
    %v4782 = vsub.f32 %v4780, %v4781
    %v4783 = vand.u32 %v4782, 4294901760
    %4784 = vmatmul.mubr.f32.gmra.mxu0 %v4783
    %v4785 = vpop.f32.mrf.mxu0
    %v4786 = vadd.f32 %v4691, %v4785
    %v4787 = vpop.f32.mrf.mxu0
    %4788 = vdwg.mxu0
    %4789 = vmatprep.subr.mxu0 0.0
    %4790 = vmatpush1.msra.mxu0 0.0
    %4791 = vmatprep.subr.mxu0 0.0
    %4792 = vmatpush1.msra.mxu0 0.0
    %4793 = vmatprep.subr.mxu0 0.0
    %4794 = vmatpush1.msra.mxu0 0.0
    %4795 = vmatprep.subr.mxu0 0.0
    %4796 = vmatpush1.msra.mxu0 0.0
    %4797 = vmatprep.subr.mxu0 0.0
    %4798 = vmatpush1.msra.mxu0 0.0
    %4799 = vmatprep.subr.mxu0 0.0
    %4800 = vmatpush1.msra.mxu0 0.0
    %4801 = vmatprep.subr.mxu0 0.0
    %4802 = vmatpush1.msra.mxu0 0.0
    %4803 = vmatprep.subr.mxu0 0.0
    %4804 = vmatpush1.msra.mxu0 0.0
    %4805 = vmatprep.subr.mxu0 0.0
    %4806 = vmatpush1.msra.mxu0 0.0
    %4807 = vmatprep.subr.mxu0 0.0
    %4808 = vmatpush1.msra.mxu0 0.0
    %4809 = vmatprep.subr.mxu0 0.0
    %4810 = vmatpush1.msra.mxu0 0.0
    %4811 = vmatprep.subr.mxu0 0.0
    %4812 = vmatpush1.msra.mxu0 0.0
    %4813 = vmatprep.subr.mxu0 0.0
    %4814 = vmatpush1.msra.mxu0 0.0
    %4815 = vmatprep.subr.mxu0 0.0
    %4816 = vmatpush1.msra.mxu0 0.0
    %4817 = vmatprep.subr.mxu0 0.0
    %4818 = vmatpush1.msra.mxu0 0.0
    %4819 = vmatprep.subr.mxu0 0.0
    %v4820 = vand.u32 %v4685, 4294901760
    %v4821 = vsub.f32 %v4685, %v4820
    %v4822 = vand.u32 %v4821, 4294901760
    %v4823 = vsub.f32 %v4821, %v4822
    %v4824 = vand.u32 %v4823, 4294901760
    %4825 = vmatpush1.msra.mxu0 %v4824
    %4826 = vmatprep.subr.mxu0 0.0
    %4827 = vmatpush2.msra.mxu0 0.0
    %4828 = vmatprep.subr.mxu0 0.0
    %4829 = vmatpush2.msra.mxu0 0.0
    %4830 = vmatprep.subr.mxu0 0.0
    %4831 = vmatpush2.msra.mxu0 0.0
    %4832 = vmatprep.subr.mxu0 0.0
    %4833 = vmatpush2.msra.mxu0 0.0
    %4834 = vmatprep.subr.mxu0 0.0
    %4835 = vmatpush2.msra.mxu0 0.0
    %4836 = vmatprep.subr.mxu0 0.0
    %4837 = vmatpush2.msra.mxu0 0.0
    %4838 = vmatprep.subr.mxu0 0.0
    %4839 = vmatpush2.msra.mxu0 0.0
    %4840 = vmatprep.subr.mxu0 0.0
    %4841 = vmatpush2.msra.mxu0 0.0
    %4842 = vmatprep.subr.mxu0 0.0
    %4843 = vmatpush2.msra.mxu0 0.0
    %4844 = vmatprep.subr.mxu0 0.0
    %4845 = vmatpush2.msra.mxu0 0.0
    %4846 = vmatprep.subr.mxu0 0.0
    %4847 = vmatpush2.msra.mxu0 0.0
    %4848 = vmatprep.subr.mxu0 0.0
    %4849 = vmatpush2.msra.mxu0 0.0
    %4850 = vmatprep.subr.mxu0 0.0
    %4851 = vmatpush2.msra.mxu0 0.0
    %4852 = vmatprep.subr.mxu0 0.0
    %4853 = vmatpush2.msra.mxu0 0.0
    %4854 = vmatprep.subr.mxu0 0.0
    %4855 = vmatpush2.msra.mxu0 0.0
    %4856 = vmatprep.subr.mxu0 0.0
    %4857 = vmatpush2.msra.mxu0 0.0
    %4858 = vmatprep.mubr.f32.mxu0 0.0
    %v4859 = vand.u32 %v4699, 4294901760
    %4860 = vmatmul.mubr.f32.gmra.mxu0 %v4859
    %v4861 = vpop.f32.mrf.mxu0
    %v4862 = vadd.f32 %v4776, %v4861
    %v4863 = vpop.f32.mrf.mxu0
    %4864 = vmatprep.mubr.f32.mxu0 0.0
    %v4865 = vand.u32 %v4701, 4294901760
    %4866 = vmatmul.mubr.f32.gmra.mxu0 %v4865
    %v4867 = vpop.f32.mrf.mxu0
    %v4868 = vadd.f32 %v4786, %v4867
    %v4869 = vpop.f32.mrf.mxu0
    %4870 = vdwg.mxu0
    %4871 = vmatprep.subr.mxu0 0.0
    %4872 = vmatpush1.msra.mxu0 0.0
    %4873 = vmatprep.subr.mxu0 0.0
    %4874 = vmatpush1.msra.mxu0 0.0
    %4875 = vmatprep.subr.mxu0 0.0
    %4876 = vmatpush1.msra.mxu0 0.0
    %4877 = vmatprep.subr.mxu0 0.0
    %4878 = vmatpush1.msra.mxu0 0.0
    %4879 = vmatprep.subr.mxu0 0.0
    %4880 = vmatpush1.msra.mxu0 0.0
    %4881 = vmatprep.subr.mxu0 0.0
    %4882 = vmatpush1.msra.mxu0 0.0
    %4883 = vmatprep.subr.mxu0 0.0
    %4884 = vmatpush1.msra.mxu0 0.0
    %4885 = vmatprep.subr.mxu0 0.0
    %4886 = vmatpush1.msra.mxu0 0.0
    %4887 = vmatprep.subr.mxu0 0.0
    %4888 = vmatpush1.msra.mxu0 0.0
    %4889 = vmatprep.subr.mxu0 0.0
    %4890 = vmatpush1.msra.mxu0 0.0
    %4891 = vmatprep.subr.mxu0 0.0
    %4892 = vmatpush1.msra.mxu0 0.0
    %4893 = vmatprep.subr.mxu0 0.0
    %4894 = vmatpush1.msra.mxu0 0.0
    %4895 = vmatprep.subr.mxu0 0.0
    %4896 = vmatpush1.msra.mxu0 0.0
    %4897 = vmatprep.subr.mxu0 0.0
    %4898 = vmatpush1.msra.mxu0 0.0
    %4899 = vmatprep.subr.mxu0 0.0
    %4900 = vmatpush1.msra.mxu0 0.0
    %4901 = vmatprep.subr.mxu0 0.0
    %v4902 = vand.u32 %v4685, 4294901760
    %v4903 = vsub.f32 %v4685, %v4902
    %4904 = vmatpush1.msra.mxu0 %v4903
    %4905 = vmatprep.subr.mxu0 0.0
    %4906 = vmatpush2.msra.mxu0 0.0
    %4907 = vmatprep.subr.mxu0 0.0
    %4908 = vmatpush2.msra.mxu0 0.0
    %4909 = vmatprep.subr.mxu0 0.0
    %4910 = vmatpush2.msra.mxu0 0.0
    %4911 = vmatprep.subr.mxu0 0.0
    %4912 = vmatpush2.msra.mxu0 0.0
    %4913 = vmatprep.subr.mxu0 0.0
    %4914 = vmatpush2.msra.mxu0 0.0
    %4915 = vmatprep.subr.mxu0 0.0
    %4916 = vmatpush2.msra.mxu0 0.0
    %4917 = vmatprep.subr.mxu0 0.0
    %4918 = vmatpush2.msra.mxu0 0.0
    %4919 = vmatprep.subr.mxu0 0.0
    %4920 = vmatpush2.msra.mxu0 0.0
    %4921 = vmatprep.subr.mxu0 0.0
    %4922 = vmatpush2.msra.mxu0 0.0
    %4923 = vmatprep.subr.mxu0 0.0
    %4924 = vmatpush2.msra.mxu0 0.0
    %4925 = vmatprep.subr.mxu0 0.0
    %4926 = vmatpush2.msra.mxu0 0.0
    %4927 = vmatprep.subr.mxu0 0.0
    %4928 = vmatpush2.msra.mxu0 0.0
    %4929 = vmatprep.subr.mxu0 0.0
    %4930 = vmatpush2.msra.mxu0 0.0
    %4931 = vmatprep.subr.mxu0 0.0
    %4932 = vmatpush2.msra.mxu0 0.0
    %4933 = vmatprep.subr.mxu0 0.0
    %4934 = vmatpush2.msra.mxu0 0.0
    %4935 = vmatprep.subr.mxu0 0.0
    %4936 = vmatpush2.msra.mxu0 0.0
    %4937 = vmatprep.mubr.f32.mxu0 0.0
    %v4938 = vand.u32 %v4699, 4294901760
    %v4939 = vsub.f32 %v4699, %v4938
    %4940 = vmatmul.mubr.f32.gmra.mxu0 %v4939
    %v4941 = vpop.f32.mrf.mxu0
    %v4942 = vadd.f32 %v4862, %v4941
    %v4943 = vpop.f32.mrf.mxu0
    %4944 = vmatprep.mubr.f32.mxu0 0.0
    %v4945 = vand.u32 %v4701, 4294901760
    %v4946 = vsub.f32 %v4701, %v4945
    %4947 = vmatmul.mubr.f32.gmra.mxu0 %v4946
    %v4948 = vpop.f32.mrf.mxu0
    %v4949 = vadd.f32 %v4868, %v4948
    %v4950 = vpop.f32.mrf.mxu0
    %4951 = vdwg.mxu0
    %4952 = vmatprep.subr.mxu0 0.0
    %4953 = vmatpush1.msra.mxu0 0.0
    %4954 = vmatprep.subr.mxu0 0.0
    %4955 = vmatpush1.msra.mxu0 0.0
    %4956 = vmatprep.subr.mxu0 0.0
    %4957 = vmatpush1.msra.mxu0 0.0
    %4958 = vmatprep.subr.mxu0 0.0
    %4959 = vmatpush1.msra.mxu0 0.0
    %4960 = vmatprep.subr.mxu0 0.0
    %4961 = vmatpush1.msra.mxu0 0.0
    %4962 = vmatprep.subr.mxu0 0.0
    %4963 = vmatpush1.msra.mxu0 0.0
    %4964 = vmatprep.subr.mxu0 0.0
    %4965 = vmatpush1.msra.mxu0 0.0
    %4966 = vmatprep.subr.mxu0 0.0
    %4967 = vmatpush1.msra.mxu0 0.0
    %4968 = vmatprep.subr.mxu0 0.0
    %4969 = vmatpush1.msra.mxu0 0.0
    %4970 = vmatprep.subr.mxu0 0.0
    %4971 = vmatpush1.msra.mxu0 0.0
    %4972 = vmatprep.subr.mxu0 0.0
    %4973 = vmatpush1.msra.mxu0 0.0
    %4974 = vmatprep.subr.mxu0 0.0
    %4975 = vmatpush1.msra.mxu0 0.0
    %4976 = vmatprep.subr.mxu0 0.0
    %4977 = vmatpush1.msra.mxu0 0.0
    %4978 = vmatprep.subr.mxu0 0.0
    %4979 = vmatpush1.msra.mxu0 0.0
    %4980 = vmatprep.subr.mxu0 0.0
    %4981 = vmatpush1.msra.mxu0 0.0
    %4982 = vmatprep.subr.mxu0 0.0
    %v4983 = vand.u32 %v4685, 4294901760
    %4984 = vmatpush1.msra.mxu0 %v4983
    %4985 = vmatprep.subr.mxu0 0.0
    %4986 = vmatpush2.msra.mxu0 0.0
    %4987 = vmatprep.subr.mxu0 0.0
    %4988 = vmatpush2.msra.mxu0 0.0
    %4989 = vmatprep.subr.mxu0 0.0
    %4990 = vmatpush2.msra.mxu0 0.0
    %4991 = vmatprep.subr.mxu0 0.0
    %4992 = vmatpush2.msra.mxu0 0.0
    %4993 = vmatprep.subr.mxu0 0.0
    %4994 = vmatpush2.msra.mxu0 0.0
    %4995 = vmatprep.subr.mxu0 0.0
    %4996 = vmatpush2.msra.mxu0 0.0
    %4997 = vmatprep.subr.mxu0 0.0
    %4998 = vmatpush2.msra.mxu0 0.0
    %4999 = vmatprep.subr.mxu0 0.0
    %5000 = vmatpush2.msra.mxu0 0.0
    %5001 = vmatprep.subr.mxu0 0.0
    %5002 = vmatpush2.msra.mxu0 0.0
    %5003 = vmatprep.subr.mxu0 0.0
    %5004 = vmatpush2.msra.mxu0 0.0
    %5005 = vmatprep.subr.mxu0 0.0
    %5006 = vmatpush2.msra.mxu0 0.0
    %5007 = vmatprep.subr.mxu0 0.0
    %5008 = vmatpush2.msra.mxu0 0.0
    %5009 = vmatprep.subr.mxu0 0.0
    %5010 = vmatpush2.msra.mxu0 0.0
    %5011 = vmatprep.subr.mxu0 0.0
    %5012 = vmatpush2.msra.mxu0 0.0
    %5013 = vmatprep.subr.mxu0 0.0
    %5014 = vmatpush2.msra.mxu0 0.0
    %5015 = vmatprep.subr.mxu0 0.0
    %5016 = vmatpush2.msra.mxu0 0.0
    %5017 = vmatprep.mubr.f32.mxu0 0.0
    %v5018 = vand.u32 %v4699, 4294901760
    %v5019 = vsub.f32 %v4699, %v5018
    %v5020 = vand.u32 %v5019, 4294901760
    %5021 = vmatmul.mubr.f32.gmra.mxu0 %v5020
    %v5022 = vpop.f32.mrf.mxu0
    %v5023 = vadd.f32 %v4942, %v5022
    %v5024 = vpop.f32.mrf.mxu0
    %5025 = vmatprep.mubr.f32.mxu0 0.0
    %v5026 = vand.u32 %v4701, 4294901760
    %v5027 = vsub.f32 %v4701, %v5026
    %v5028 = vand.u32 %v5027, 4294901760
    %5029 = vmatmul.mubr.f32.gmra.mxu0 %v5028
    %v5030 = vpop.f32.mrf.mxu0
    %v5031 = vadd.f32 %v4949, %v5030
    %v5032 = vpop.f32.mrf.mxu0
    %5033 = vdwg.mxu0
    %5034 = vmatprep.subr.mxu0 0.0
    %5035 = vmatpush1.msra.mxu0 0.0
    %5036 = vmatprep.subr.mxu0 0.0
    %5037 = vmatpush1.msra.mxu0 0.0
    %5038 = vmatprep.subr.mxu0 0.0
    %5039 = vmatpush1.msra.mxu0 0.0
    %5040 = vmatprep.subr.mxu0 0.0
    %5041 = vmatpush1.msra.mxu0 0.0
    %5042 = vmatprep.subr.mxu0 0.0
    %5043 = vmatpush1.msra.mxu0 0.0
    %5044 = vmatprep.subr.mxu0 0.0
    %5045 = vmatpush1.msra.mxu0 0.0
    %5046 = vmatprep.subr.mxu0 0.0
    %5047 = vmatpush1.msra.mxu0 0.0
    %5048 = vmatprep.subr.mxu0 0.0
    %5049 = vmatpush1.msra.mxu0 0.0
    %5050 = vmatprep.subr.mxu0 0.0
    %5051 = vmatpush1.msra.mxu0 0.0
    %5052 = vmatprep.subr.mxu0 0.0
    %5053 = vmatpush1.msra.mxu0 0.0
    %5054 = vmatprep.subr.mxu0 0.0
    %5055 = vmatpush1.msra.mxu0 0.0
    %5056 = vmatprep.subr.mxu0 0.0
    %5057 = vmatpush1.msra.mxu0 0.0
    %5058 = vmatprep.subr.mxu0 0.0
    %5059 = vmatpush1.msra.mxu0 0.0
    %5060 = vmatprep.subr.mxu0 0.0
    %5061 = vmatpush1.msra.mxu0 0.0
    %5062 = vmatprep.subr.mxu0 0.0
    %5063 = vmatpush1.msra.mxu0 0.0
    %5064 = vmatprep.subr.mxu0 0.0
    %v5065 = vand.u32 %v4685, 4294901760
    %v5066 = vsub.f32 %v4685, %v5065
    %v5067 = vand.u32 %v5066, 4294901760
    %5068 = vmatpush1.msra.mxu0 %v5067
    %5069 = vmatprep.subr.mxu0 0.0
    %5070 = vmatpush2.msra.mxu0 0.0
    %5071 = vmatprep.subr.mxu0 0.0
    %5072 = vmatpush2.msra.mxu0 0.0
    %5073 = vmatprep.subr.mxu0 0.0
    %5074 = vmatpush2.msra.mxu0 0.0
    %5075 = vmatprep.subr.mxu0 0.0
    %5076 = vmatpush2.msra.mxu0 0.0
    %5077 = vmatprep.subr.mxu0 0.0
    %5078 = vmatpush2.msra.mxu0 0.0
    %5079 = vmatprep.subr.mxu0 0.0
    %5080 = vmatpush2.msra.mxu0 0.0
    %5081 = vmatprep.subr.mxu0 0.0
    %5082 = vmatpush2.msra.mxu0 0.0
    %5083 = vmatprep.subr.mxu0 0.0
    %5084 = vmatpush2.msra.mxu0 0.0
    %5085 = vmatprep.subr.mxu0 0.0
    %5086 = vmatpush2.msra.mxu0 0.0
    %5087 = vmatprep.subr.mxu0 0.0
    %5088 = vmatpush2.msra.mxu0 0.0
    %5089 = vmatprep.subr.mxu0 0.0
    %5090 = vmatpush2.msra.mxu0 0.0
    %5091 = vmatprep.subr.mxu0 0.0
    %5092 = vmatpush2.msra.mxu0 0.0
    %5093 = vmatprep.subr.mxu0 0.0
    %5094 = vmatpush2.msra.mxu0 0.0
    %5095 = vmatprep.subr.mxu0 0.0
    %5096 = vmatpush2.msra.mxu0 0.0
    %5097 = vmatprep.subr.mxu0 0.0
    %5098 = vmatpush2.msra.mxu0 0.0
    %5099 = vmatprep.subr.mxu0 0.0
    %5100 = vmatpush2.msra.mxu0 0.0
    %5101 = vmatprep.mubr.f32.mxu0 0.0
    %v5102 = vand.u32 %v4699, 4294901760
    %5103 = vmatmul.mubr.f32.gmra.mxu0 %v5102
    %v5104 = vpop.f32.mrf.mxu0
    %v5105 = vadd.f32 %v5023, %v5104
    %v5106 = vpop.f32.mrf.mxu0
    %5107 = vmatprep.mubr.f32.mxu0 0.0
    %v5108 = vand.u32 %v4701, 4294901760
    %5109 = vmatmul.mubr.f32.gmra.mxu0 %v5108
    %v5110 = vpop.f32.mrf.mxu0
    %v5111 = vadd.f32 %v5031, %v5110
    %v5112 = vpop.f32.mrf.mxu0
    %5113 = vdwg.mxu0
    %5114 = vmatprep.subr.mxu0 0.0
    %5115 = vmatpush1.msra.mxu0 0.0
    %5116 = vmatprep.subr.mxu0 0.0
    %5117 = vmatpush1.msra.mxu0 0.0
    %5118 = vmatprep.subr.mxu0 0.0
    %5119 = vmatpush1.msra.mxu0 0.0
    %5120 = vmatprep.subr.mxu0 0.0
    %5121 = vmatpush1.msra.mxu0 0.0
    %5122 = vmatprep.subr.mxu0 0.0
    %5123 = vmatpush1.msra.mxu0 0.0
    %5124 = vmatprep.subr.mxu0 0.0
    %5125 = vmatpush1.msra.mxu0 0.0
    %5126 = vmatprep.subr.mxu0 0.0
    %5127 = vmatpush1.msra.mxu0 0.0
    %5128 = vmatprep.subr.mxu0 0.0
    %5129 = vmatpush1.msra.mxu0 0.0
    %5130 = vmatprep.subr.mxu0 0.0
    %5131 = vmatpush1.msra.mxu0 0.0
    %5132 = vmatprep.subr.mxu0 0.0
    %5133 = vmatpush1.msra.mxu0 0.0
    %5134 = vmatprep.subr.mxu0 0.0
    %5135 = vmatpush1.msra.mxu0 0.0
    %5136 = vmatprep.subr.mxu0 0.0
    %5137 = vmatpush1.msra.mxu0 0.0
    %5138 = vmatprep.subr.mxu0 0.0
    %5139 = vmatpush1.msra.mxu0 0.0
    %5140 = vmatprep.subr.mxu0 0.0
    %5141 = vmatpush1.msra.mxu0 0.0
    %5142 = vmatprep.subr.mxu0 0.0
    %5143 = vmatpush1.msra.mxu0 0.0
    %5144 = vmatprep.subr.mxu0 0.0
    %v5145 = vand.u32 %v4685, 4294901760
    %5146 = vmatpush1.msra.mxu0 %v5145
    %5147 = vmatprep.subr.mxu0 0.0
    %5148 = vmatpush2.msra.mxu0 0.0
    %5149 = vmatprep.subr.mxu0 0.0
    %5150 = vmatpush2.msra.mxu0 0.0
    %5151 = vmatprep.subr.mxu0 0.0
    %5152 = vmatpush2.msra.mxu0 0.0
    %5153 = vmatprep.subr.mxu0 0.0
    %5154 = vmatpush2.msra.mxu0 0.0
    %5155 = vmatprep.subr.mxu0 0.0
    %5156 = vmatpush2.msra.mxu0 0.0
    %5157 = vmatprep.subr.mxu0 0.0
    %5158 = vmatpush2.msra.mxu0 0.0
    %5159 = vmatprep.subr.mxu0 0.0
    %5160 = vmatpush2.msra.mxu0 0.0
    %5161 = vmatprep.subr.mxu0 0.0
    %5162 = vmatpush2.msra.mxu0 0.0
    %5163 = vmatprep.subr.mxu0 0.0
    %5164 = vmatpush2.msra.mxu0 0.0
    %5165 = vmatprep.subr.mxu0 0.0
    %5166 = vmatpush2.msra.mxu0 0.0
    %5167 = vmatprep.subr.mxu0 0.0
    %5168 = vmatpush2.msra.mxu0 0.0
    %5169 = vmatprep.subr.mxu0 0.0
    %5170 = vmatpush2.msra.mxu0 0.0
    %5171 = vmatprep.subr.mxu0 0.0
    %5172 = vmatpush2.msra.mxu0 0.0
    %5173 = vmatprep.subr.mxu0 0.0
    %5174 = vmatpush2.msra.mxu0 0.0
    %5175 = vmatprep.subr.mxu0 0.0
    %5176 = vmatpush2.msra.mxu0 0.0
    %5177 = vmatprep.subr.mxu0 0.0
    %5178 = vmatpush2.msra.mxu0 0.0
    %5179 = vmatprep.mubr.f32.mxu0 0.0
    %v5180 = vand.u32 %v4699, 4294901760
    %5181 = vmatmul.mubr.f32.gmra.mxu0 %v5180
    %v5182 = vpop.f32.mrf.mxu0
    %v5183 = vadd.f32 %v5105, %v5182
    %v5184 = vpop.f32.mrf.mxu0
    %5185 = vmatprep.mubr.f32.mxu0 0.0
    %v5186 = vand.u32 %v4701, 4294901760
    %5187 = vmatmul.mubr.f32.gmra.mxu0 %v5186
    %v5188 = vpop.f32.mrf.mxu0
    %v5189 = vadd.f32 %v5111, %v5188
    %v5190 = vpop.f32.mrf.mxu0
    %5191 = vdwg.mxu0
    %v5192 = vld [vmem:[%s9] sm:$0xff]
    %v5193 = vld [vmem:[%s11] sm:$0x1]
    %v5195 = vlaneseq
    %v5196 = vshrl.u32 %v5195, 7
    %v5197 = vsub.s32 0, %v5196
    %v5198 = vrot.slane %v5193, %v5197
    %5200 = vmatprep.subr.mxu0 0.0
    %5201 = vmatpush1.msra.mxu0 0.0
    %5202 = vmatprep.subr.mxu0 0.0
    %5203 = vmatpush1.msra.mxu0 0.0
    %5204 = vmatprep.subr.mxu0 0.0
    %5205 = vmatpush1.msra.mxu0 0.0
    %5206 = vmatprep.subr.mxu0 0.0
    %5207 = vmatpush1.msra.mxu0 0.0
    %5208 = vmatprep.subr.mxu0 0.0
    %5209 = vmatpush1.msra.mxu0 0.0
    %5210 = vmatprep.subr.mxu0 0.0
    %5211 = vmatpush1.msra.mxu0 0.0
    %5212 = vmatprep.subr.mxu0 0.0
    %5213 = vmatpush1.msra.mxu0 0.0
    %5214 = vmatprep.subr.mxu0 0.0
    %5215 = vmatpush1.msra.mxu0 0.0
    %5216 = vmatprep.subr.mxu0 0.0
    %5217 = vmatpush1.msra.mxu0 0.0
    %5218 = vmatprep.subr.mxu0 0.0
    %5219 = vmatpush1.msra.mxu0 0.0
    %5220 = vmatprep.subr.mxu0 0.0
    %5221 = vmatpush1.msra.mxu0 0.0
    %5222 = vmatprep.subr.mxu0 0.0
    %5223 = vmatpush1.msra.mxu0 0.0
    %5224 = vmatprep.subr.mxu0 0.0
    %5225 = vmatpush1.msra.mxu0 0.0
    %5226 = vmatprep.subr.mxu0 0.0
    %5227 = vmatpush1.msra.mxu0 0.0
    %5228 = vmatprep.subr.mxu0 0.0
    %5229 = vmatpush1.msra.mxu0 0.0
    %5230 = vmatprep.subr.mxu0 0.0
    %v5231 = vand.u32 %v5192, 4294901760
    %5232 = vmatpush1.msra.mxu0 %v5231
    %5233 = vmatprep.subr.mxu0 0.0
    %5234 = vmatpush2.msra.mxu0 0.0
    %5235 = vmatprep.subr.mxu0 0.0
    %5236 = vmatpush2.msra.mxu0 0.0
    %5237 = vmatprep.subr.mxu0 0.0
    %5238 = vmatpush2.msra.mxu0 0.0
    %5239 = vmatprep.subr.mxu0 0.0
    %5240 = vmatpush2.msra.mxu0 0.0
    %5241 = vmatprep.subr.mxu0 0.0
    %5242 = vmatpush2.msra.mxu0 0.0
    %5243 = vmatprep.subr.mxu0 0.0
    %5244 = vmatpush2.msra.mxu0 0.0
    %5245 = vmatprep.subr.mxu0 0.0
    %5246 = vmatpush2.msra.mxu0 0.0
    %5247 = vmatprep.subr.mxu0 0.0
    %5248 = vmatpush2.msra.mxu0 0.0
    %5249 = vmatprep.subr.mxu0 0.0
    %5250 = vmatpush2.msra.mxu0 0.0
    %5251 = vmatprep.subr.mxu0 0.0
    %5252 = vmatpush2.msra.mxu0 0.0
    %5253 = vmatprep.subr.mxu0 0.0
    %5254 = vmatpush2.msra.mxu0 0.0
    %5255 = vmatprep.subr.mxu0 0.0
    %5256 = vmatpush2.msra.mxu0 0.0
    %5257 = vmatprep.subr.mxu0 0.0
    %5258 = vmatpush2.msra.mxu0 0.0
    %5259 = vmatprep.subr.mxu0 0.0
    %5260 = vmatpush2.msra.mxu0 0.0
    %5261 = vmatprep.subr.mxu0 0.0
    %5262 = vmatpush2.msra.mxu0 0.0
    %5263 = vmatprep.subr.mxu0 0.0
    %5264 = vmatpush2.msra.mxu0 0.0
    %5265 = vmatprep.mubr.f32.mxu0 0.0
    %v5266 = vand.u32 %v4699, 4294901760
    %v5267 = vsub.f32 %v4699, %v5266
    %v5268 = vand.u32 %v5267, 4294901760
    %v5269 = vsub.f32 %v5267, %v5268
    %v5270 = vand.u32 %v5269, 4294901760
    %5271 = vmatmul.mubr.f32.gmra.mxu0 %v5270
    %v5272 = vpop.f32.mrf.mxu0
    %v5273 = vadd.f32 %v5198, %v5272
    %v5274 = vpop.f32.mrf.mxu0
    %5275 = vmatprep.mubr.f32.mxu0 0.0
    %v5276 = vand.u32 %v4701, 4294901760
    %v5277 = vsub.f32 %v4701, %v5276
    %v5278 = vand.u32 %v5277, 4294901760
    %v5279 = vsub.f32 %v5277, %v5278
    %v5280 = vand.u32 %v5279, 4294901760
    %5281 = vmatmul.mubr.f32.gmra.mxu0 %v5280
    %v5282 = vpop.f32.mrf.mxu0
    %v5283 = vadd.f32 %v5198, %v5282
    %v5284 = vpop.f32.mrf.mxu0
    %5285 = vdwg.mxu0
    %5286 = vmatprep.subr.mxu0 0.0
    %5287 = vmatpush1.msra.mxu0 0.0
    %5288 = vmatprep.subr.mxu0 0.0
    %5289 = vmatpush1.msra.mxu0 0.0
    %5290 = vmatprep.subr.mxu0 0.0
    %5291 = vmatpush1.msra.mxu0 0.0
    %5292 = vmatprep.subr.mxu0 0.0
    %5293 = vmatpush1.msra.mxu0 0.0
    %5294 = vmatprep.subr.mxu0 0.0
    %5295 = vmatpush1.msra.mxu0 0.0
    %5296 = vmatprep.subr.mxu0 0.0
    %5297 = vmatpush1.msra.mxu0 0.0
    %5298 = vmatprep.subr.mxu0 0.0
    %5299 = vmatpush1.msra.mxu0 0.0
    %5300 = vmatprep.subr.mxu0 0.0
    %5301 = vmatpush1.msra.mxu0 0.0
    %5302 = vmatprep.subr.mxu0 0.0
    %5303 = vmatpush1.msra.mxu0 0.0
    %5304 = vmatprep.subr.mxu0 0.0
    %5305 = vmatpush1.msra.mxu0 0.0
    %5306 = vmatprep.subr.mxu0 0.0
    %5307 = vmatpush1.msra.mxu0 0.0
    %5308 = vmatprep.subr.mxu0 0.0
    %5309 = vmatpush1.msra.mxu0 0.0
    %5310 = vmatprep.subr.mxu0 0.0
    %5311 = vmatpush1.msra.mxu0 0.0
    %5312 = vmatprep.subr.mxu0 0.0
    %5313 = vmatpush1.msra.mxu0 0.0
    %5314 = vmatprep.subr.mxu0 0.0
    %5315 = vmatpush1.msra.mxu0 0.0
    %5316 = vmatprep.subr.mxu0 0.0
    %v5317 = vand.u32 %v5192, 4294901760
    %v5318 = vsub.f32 %v5192, %v5317
    %v5319 = vand.u32 %v5318, 4294901760
    %v5320 = vsub.f32 %v5318, %v5319
    %v5321 = vand.u32 %v5320, 4294901760
    %5322 = vmatpush1.msra.mxu0 %v5321
    %5323 = vmatprep.subr.mxu0 0.0
    %5324 = vmatpush2.msra.mxu0 0.0
    %5325 = vmatprep.subr.mxu0 0.0
    %5326 = vmatpush2.msra.mxu0 0.0
    %5327 = vmatprep.subr.mxu0 0.0
    %5328 = vmatpush2.msra.mxu0 0.0
    %5329 = vmatprep.subr.mxu0 0.0
    %5330 = vmatpush2.msra.mxu0 0.0
    %5331 = vmatprep.subr.mxu0 0.0
    %5332 = vmatpush2.msra.mxu0 0.0
    %5333 = vmatprep.subr.mxu0 0.0
    %5334 = vmatpush2.msra.mxu0 0.0
    %5335 = vmatprep.subr.mxu0 0.0
    %5336 = vmatpush2.msra.mxu0 0.0
    %5337 = vmatprep.subr.mxu0 0.0
    %5338 = vmatpush2.msra.mxu0 0.0
    %5339 = vmatprep.subr.mxu0 0.0
    %5340 = vmatpush2.msra.mxu0 0.0
    %5341 = vmatprep.subr.mxu0 0.0
    %5342 = vmatpush2.msra.mxu0 0.0
    %5343 = vmatprep.subr.mxu0 0.0
    %5344 = vmatpush2.msra.mxu0 0.0
    %5345 = vmatprep.subr.mxu0 0.0
    %5346 = vmatpush2.msra.mxu0 0.0
    %5347 = vmatprep.subr.mxu0 0.0
    %5348 = vmatpush2.msra.mxu0 0.0
    %5349 = vmatprep.subr.mxu0 0.0
    %5350 = vmatpush2.msra.mxu0 0.0
    %5351 = vmatprep.subr.mxu0 0.0
    %5352 = vmatpush2.msra.mxu0 0.0
    %5353 = vmatprep.subr.mxu0 0.0
    %5354 = vmatpush2.msra.mxu0 0.0
    %5355 = vmatprep.mubr.f32.mxu0 0.0
    %v5356 = vand.u32 %v4699, 4294901760
    %5357 = vmatmul.mubr.f32.gmra.mxu0 %v5356
    %v5358 = vpop.f32.mrf.mxu0
    %v5359 = vadd.f32 %v5273, %v5358
    %v5360 = vpop.f32.mrf.mxu0
    %5361 = vmatprep.mubr.f32.mxu0 0.0
    %v5362 = vand.u32 %v4701, 4294901760
    %5363 = vmatmul.mubr.f32.gmra.mxu0 %v5362
    %v5364 = vpop.f32.mrf.mxu0
    %v5365 = vadd.f32 %v5283, %v5364
    %v5366 = vpop.f32.mrf.mxu0
    %5367 = vdwg.mxu0
    %5368 = vmatprep.subr.mxu0 0.0
    %5369 = vmatpush1.msra.mxu0 0.0
    %5370 = vmatprep.subr.mxu0 0.0
    %5371 = vmatpush1.msra.mxu0 0.0
    %5372 = vmatprep.subr.mxu0 0.0
    %5373 = vmatpush1.msra.mxu0 0.0
    %5374 = vmatprep.subr.mxu0 0.0
    %5375 = vmatpush1.msra.mxu0 0.0
    %5376 = vmatprep.subr.mxu0 0.0
    %5377 = vmatpush1.msra.mxu0 0.0
    %5378 = vmatprep.subr.mxu0 0.0
    %5379 = vmatpush1.msra.mxu0 0.0
    %5380 = vmatprep.subr.mxu0 0.0
    %5381 = vmatpush1.msra.mxu0 0.0
    %5382 = vmatprep.subr.mxu0 0.0
    %5383 = vmatpush1.msra.mxu0 0.0
    %5384 = vmatprep.subr.mxu0 0.0
    %5385 = vmatpush1.msra.mxu0 0.0
    %5386 = vmatprep.subr.mxu0 0.0
    %5387 = vmatpush1.msra.mxu0 0.0
    %5388 = vmatprep.subr.mxu0 0.0
    %5389 = vmatpush1.msra.mxu0 0.0
    %5390 = vmatprep.subr.mxu0 0.0
    %5391 = vmatpush1.msra.mxu0 0.0
    %5392 = vmatprep.subr.mxu0 0.0
    %5393 = vmatpush1.msra.mxu0 0.0
    %5394 = vmatprep.subr.mxu0 0.0
    %5395 = vmatpush1.msra.mxu0 0.0
    %5396 = vmatprep.subr.mxu0 0.0
    %5397 = vmatpush1.msra.mxu0 0.0
    %5398 = vmatprep.subr.mxu0 0.0
    %v5399 = vand.u32 %v5192, 4294901760
    %v5400 = vsub.f32 %v5192, %v5399
    %5401 = vmatpush1.msra.mxu0 %v5400
    %5402 = vmatprep.subr.mxu0 0.0
    %5403 = vmatpush2.msra.mxu0 0.0
    %5404 = vmatprep.subr.mxu0 0.0
    %5405 = vmatpush2.msra.mxu0 0.0
    %5406 = vmatprep.subr.mxu0 0.0
    %5407 = vmatpush2.msra.mxu0 0.0
    %5408 = vmatprep.subr.mxu0 0.0
    %5409 = vmatpush2.msra.mxu0 0.0
    %5410 = vmatprep.subr.mxu0 0.0
    %5411 = vmatpush2.msra.mxu0 0.0
    %5412 = vmatprep.subr.mxu0 0.0
    %5413 = vmatpush2.msra.mxu0 0.0
    %5414 = vmatprep.subr.mxu0 0.0
    %5415 = vmatpush2.msra.mxu0 0.0
    %5416 = vmatprep.subr.mxu0 0.0
    %5417 = vmatpush2.msra.mxu0 0.0
    %5418 = vmatprep.subr.mxu0 0.0
    %5419 = vmatpush2.msra.mxu0 0.0
    %5420 = vmatprep.subr.mxu0 0.0
    %5421 = vmatpush2.msra.mxu0 0.0
    %5422 = vmatprep.subr.mxu0 0.0
    %5423 = vmatpush2.msra.mxu0 0.0
    %5424 = vmatprep.subr.mxu0 0.0
    %5425 = vmatpush2.msra.mxu0 0.0
    %5426 = vmatprep.subr.mxu0 0.0
    %5427 = vmatpush2.msra.mxu0 0.0
    %5428 = vmatprep.subr.mxu0 0.0
    %5429 = vmatpush2.msra.mxu0 0.0
    %5430 = vmatprep.subr.mxu0 0.0
    %5431 = vmatpush2.msra.mxu0 0.0
    %5432 = vmatprep.subr.mxu0 0.0
    %5433 = vmatpush2.msra.mxu0 0.0
    %5434 = vmatprep.mubr.f32.mxu0 0.0
    %v5435 = vand.u32 %v4699, 4294901760
    %v5436 = vsub.f32 %v4699, %v5435
    %5437 = vmatmul.mubr.f32.gmra.mxu0 %v5436
    %v5438 = vpop.f32.mrf.mxu0
    %v5439 = vadd.f32 %v5359, %v5438
    %v5440 = vpop.f32.mrf.mxu0
    %5441 = vmatprep.mubr.f32.mxu0 0.0
    %v5442 = vand.u32 %v4701, 4294901760
    %v5443 = vsub.f32 %v4701, %v5442
    %5444 = vmatmul.mubr.f32.gmra.mxu0 %v5443
    %v5445 = vpop.f32.mrf.mxu0
    %v5446 = vadd.f32 %v5365, %v5445
    %v5447 = vpop.f32.mrf.mxu0
    %5448 = vdwg.mxu0
    %5449 = vmatprep.subr.mxu0 0.0
    %5450 = vmatpush1.msra.mxu0 0.0
    %5451 = vmatprep.subr.mxu0 0.0
    %5452 = vmatpush1.msra.mxu0 0.0
    %5453 = vmatprep.subr.mxu0 0.0
    %5454 = vmatpush1.msra.mxu0 0.0
    %5455 = vmatprep.subr.mxu0 0.0
    %5456 = vmatpush1.msra.mxu0 0.0
    %5457 = vmatprep.subr.mxu0 0.0
    %5458 = vmatpush1.msra.mxu0 0.0
    %5459 = vmatprep.subr.mxu0 0.0
    %5460 = vmatpush1.msra.mxu0 0.0
    %5461 = vmatprep.subr.mxu0 0.0
    %5462 = vmatpush1.msra.mxu0 0.0
    %5463 = vmatprep.subr.mxu0 0.0
    %5464 = vmatpush1.msra.mxu0 0.0
    %5465 = vmatprep.subr.mxu0 0.0
    %5466 = vmatpush1.msra.mxu0 0.0
    %5467 = vmatprep.subr.mxu0 0.0
    %5468 = vmatpush1.msra.mxu0 0.0
    %5469 = vmatprep.subr.mxu0 0.0
    %5470 = vmatpush1.msra.mxu0 0.0
    %5471 = vmatprep.subr.mxu0 0.0
    %5472 = vmatpush1.msra.mxu0 0.0
    %5473 = vmatprep.subr.mxu0 0.0
    %5474 = vmatpush1.msra.mxu0 0.0
    %5475 = vmatprep.subr.mxu0 0.0
    %5476 = vmatpush1.msra.mxu0 0.0
    %5477 = vmatprep.subr.mxu0 0.0
    %5478 = vmatpush1.msra.mxu0 0.0
    %5479 = vmatprep.subr.mxu0 0.0
    %v5480 = vand.u32 %v5192, 4294901760
    %5481 = vmatpush1.msra.mxu0 %v5480
    %5482 = vmatprep.subr.mxu0 0.0
    %5483 = vmatpush2.msra.mxu0 0.0
    %5484 = vmatprep.subr.mxu0 0.0
    %5485 = vmatpush2.msra.mxu0 0.0
    %5486 = vmatprep.subr.mxu0 0.0
    %5487 = vmatpush2.msra.mxu0 0.0
    %5488 = vmatprep.subr.mxu0 0.0
    %5489 = vmatpush2.msra.mxu0 0.0
    %5490 = vmatprep.subr.mxu0 0.0
    %5491 = vmatpush2.msra.mxu0 0.0
    %5492 = vmatprep.subr.mxu0 0.0
    %5493 = vmatpush2.msra.mxu0 0.0
    %5494 = vmatprep.subr.mxu0 0.0
    %5495 = vmatpush2.msra.mxu0 0.0
    %5496 = vmatprep.subr.mxu0 0.0
    %5497 = vmatpush2.msra.mxu0 0.0
    %5498 = vmatprep.subr.mxu0 0.0
    %5499 = vmatpush2.msra.mxu0 0.0
    %5500 = vmatprep.subr.mxu0 0.0
    %5501 = vmatpush2.msra.mxu0 0.0
    %5502 = vmatprep.subr.mxu0 0.0
    %5503 = vmatpush2.msra.mxu0 0.0
    %5504 = vmatprep.subr.mxu0 0.0
    %5505 = vmatpush2.msra.mxu0 0.0
    %5506 = vmatprep.subr.mxu0 0.0
    %5507 = vmatpush2.msra.mxu0 0.0
    %5508 = vmatprep.subr.mxu0 0.0
    %5509 = vmatpush2.msra.mxu0 0.0
    %5510 = vmatprep.subr.mxu0 0.0
    %5511 = vmatpush2.msra.mxu0 0.0
    %5512 = vmatprep.subr.mxu0 0.0
    %5513 = vmatpush2.msra.mxu0 0.0
    %5514 = vmatprep.mubr.f32.mxu0 0.0
    %v5515 = vand.u32 %v4699, 4294901760
    %v5516 = vsub.f32 %v4699, %v5515
    %v5517 = vand.u32 %v5516, 4294901760
    %5518 = vmatmul.mubr.f32.gmra.mxu0 %v5517
    %v5519 = vpop.f32.mrf.mxu0
    %v5520 = vadd.f32 %v5439, %v5519
    %v5521 = vpop.f32.mrf.mxu0
    %5522 = vmatprep.mubr.f32.mxu0 0.0
    %v5523 = vand.u32 %v4701, 4294901760
    %v5524 = vsub.f32 %v4701, %v5523
    %v5525 = vand.u32 %v5524, 4294901760
    %5526 = vmatmul.mubr.f32.gmra.mxu0 %v5525
    %v5527 = vpop.f32.mrf.mxu0
    %v5528 = vadd.f32 %v5446, %v5527
    %v5529 = vpop.f32.mrf.mxu0
    %5530 = vdwg.mxu0
    %5531 = vmatprep.subr.mxu0 0.0
    %5532 = vmatpush1.msra.mxu0 0.0
    %5533 = vmatprep.subr.mxu0 0.0
    %5534 = vmatpush1.msra.mxu0 0.0
    %5535 = vmatprep.subr.mxu0 0.0
    %5536 = vmatpush1.msra.mxu0 0.0
    %5537 = vmatprep.subr.mxu0 0.0
    %5538 = vmatpush1.msra.mxu0 0.0
    %5539 = vmatprep.subr.mxu0 0.0
    %5540 = vmatpush1.msra.mxu0 0.0
    %5541 = vmatprep.subr.mxu0 0.0
    %5542 = vmatpush1.msra.mxu0 0.0
    %5543 = vmatprep.subr.mxu0 0.0
    %5544 = vmatpush1.msra.mxu0 0.0
    %5545 = vmatprep.subr.mxu0 0.0
    %5546 = vmatpush1.msra.mxu0 0.0
    %5547 = vmatprep.subr.mxu0 0.0
    %5548 = vmatpush1.msra.mxu0 0.0
    %5549 = vmatprep.subr.mxu0 0.0
    %5550 = vmatpush1.msra.mxu0 0.0
    %5551 = vmatprep.subr.mxu0 0.0
    %5552 = vmatpush1.msra.mxu0 0.0
    %5553 = vmatprep.subr.mxu0 0.0
    %5554 = vmatpush1.msra.mxu0 0.0
    %5555 = vmatprep.subr.mxu0 0.0
    %5556 = vmatpush1.msra.mxu0 0.0
    %5557 = vmatprep.subr.mxu0 0.0
    %5558 = vmatpush1.msra.mxu0 0.0
    %5559 = vmatprep.subr.mxu0 0.0
    %5560 = vmatpush1.msra.mxu0 0.0
    %5561 = vmatprep.subr.mxu0 0.0
    %v5562 = vand.u32 %v5192, 4294901760
    %v5563 = vsub.f32 %v5192, %v5562
    %v5564 = vand.u32 %v5563, 4294901760
    %5565 = vmatpush1.msra.mxu0 %v5564
    %5566 = vmatprep.subr.mxu0 0.0
    %5567 = vmatpush2.msra.mxu0 0.0
    %5568 = vmatprep.subr.mxu0 0.0
    %5569 = vmatpush2.msra.mxu0 0.0
    %5570 = vmatprep.subr.mxu0 0.0
    %5571 = vmatpush2.msra.mxu0 0.0
    %5572 = vmatprep.subr.mxu0 0.0
    %5573 = vmatpush2.msra.mxu0 0.0
    %5574 = vmatprep.subr.mxu0 0.0
    %5575 = vmatpush2.msra.mxu0 0.0
    %5576 = vmatprep.subr.mxu0 0.0
    %5577 = vmatpush2.msra.mxu0 0.0
    %5578 = vmatprep.subr.mxu0 0.0
    %5579 = vmatpush2.msra.mxu0 0.0
    %5580 = vmatprep.subr.mxu0 0.0
    %5581 = vmatpush2.msra.mxu0 0.0
    %5582 = vmatprep.subr.mxu0 0.0
    %5583 = vmatpush2.msra.mxu0 0.0
    %5584 = vmatprep.subr.mxu0 0.0
    %5585 = vmatpush2.msra.mxu0 0.0
    %5586 = vmatprep.subr.mxu0 0.0
    %5587 = vmatpush2.msra.mxu0 0.0
    %5588 = vmatprep.subr.mxu0 0.0
    %5589 = vmatpush2.msra.mxu0 0.0
    %5590 = vmatprep.subr.mxu0 0.0
    %5591 = vmatpush2.msra.mxu0 0.0
    %5592 = vmatprep.subr.mxu0 0.0
    %5593 = vmatpush2.msra.mxu0 0.0
    %5594 = vmatprep.subr.mxu0 0.0
    %5595 = vmatpush2.msra.mxu0 0.0
    %5596 = vmatprep.subr.mxu0 0.0
    %5597 = vmatpush2.msra.mxu0 0.0
    %5598 = vmatprep.mubr.f32.mxu0 0.0
    %v5599 = vand.u32 %v4699, 4294901760
    %5600 = vmatmul.mubr.f32.gmra.mxu0 %v5599
    %v5601 = vpop.f32.mrf.mxu0
    %v5602 = vadd.f32 %v5520, %v5601
    %v5603 = vpop.f32.mrf.mxu0
    %5604 = vmatprep.mubr.f32.mxu0 0.0
    %v5605 = vand.u32 %v4701, 4294901760
    %5606 = vmatmul.mubr.f32.gmra.mxu0 %v5605
    %v5607 = vpop.f32.mrf.mxu0
    %v5608 = vadd.f32 %v5528, %v5607
    %v5609 = vpop.f32.mrf.mxu0
    %5610 = vdwg.mxu0
    %5611 = vmatprep.subr.mxu0 0.0
    %5612 = vmatpush1.msra.mxu0 0.0
    %5613 = vmatprep.subr.mxu0 0.0
    %5614 = vmatpush1.msra.mxu0 0.0
    %5615 = vmatprep.subr.mxu0 0.0
    %5616 = vmatpush1.msra.mxu0 0.0
    %5617 = vmatprep.subr.mxu0 0.0
    %5618 = vmatpush1.msra.mxu0 0.0
    %5619 = vmatprep.subr.mxu0 0.0
    %5620 = vmatpush1.msra.mxu0 0.0
    %5621 = vmatprep.subr.mxu0 0.0
    %5622 = vmatpush1.msra.mxu0 0.0
    %5623 = vmatprep.subr.mxu0 0.0
    %5624 = vmatpush1.msra.mxu0 0.0
    %5625 = vmatprep.subr.mxu0 0.0
    %5626 = vmatpush1.msra.mxu0 0.0
    %5627 = vmatprep.subr.mxu0 0.0
    %5628 = vmatpush1.msra.mxu0 0.0
    %5629 = vmatprep.subr.mxu0 0.0
    %5630 = vmatpush1.msra.mxu0 0.0
    %5631 = vmatprep.subr.mxu0 0.0
    %5632 = vmatpush1.msra.mxu0 0.0
    %5633 = vmatprep.subr.mxu0 0.0
    %5634 = vmatpush1.msra.mxu0 0.0
    %5635 = vmatprep.subr.mxu0 0.0
    %5636 = vmatpush1.msra.mxu0 0.0
    %5637 = vmatprep.subr.mxu0 0.0
    %5638 = vmatpush1.msra.mxu0 0.0
    %5639 = vmatprep.subr.mxu0 0.0
    %5640 = vmatpush1.msra.mxu0 0.0
    %5641 = vmatprep.subr.mxu0 0.0
    %v5642 = vand.u32 %v5192, 4294901760
    %5643 = vmatpush1.msra.mxu0 %v5642
    %5644 = vmatprep.subr.mxu0 0.0
    %5645 = vmatpush2.msra.mxu0 0.0
    %5646 = vmatprep.subr.mxu0 0.0
    %5647 = vmatpush2.msra.mxu0 0.0
    %5648 = vmatprep.subr.mxu0 0.0
    %5649 = vmatpush2.msra.mxu0 0.0
    %5650 = vmatprep.subr.mxu0 0.0
    %5651 = vmatpush2.msra.mxu0 0.0
    %5652 = vmatprep.subr.mxu0 0.0
    %5653 = vmatpush2.msra.mxu0 0.0
    %5654 = vmatprep.subr.mxu0 0.0
    %5655 = vmatpush2.msra.mxu0 0.0
    %5656 = vmatprep.subr.mxu0 0.0
    %5657 = vmatpush2.msra.mxu0 0.0
    %5658 = vmatprep.subr.mxu0 0.0
    %5659 = vmatpush2.msra.mxu0 0.0
    %5660 = vmatprep.subr.mxu0 0.0
    %5661 = vmatpush2.msra.mxu0 0.0
    %5662 = vmatprep.subr.mxu0 0.0
    %5663 = vmatpush2.msra.mxu0 0.0
    %5664 = vmatprep.subr.mxu0 0.0
    %5665 = vmatpush2.msra.mxu0 0.0
    %5666 = vmatprep.subr.mxu0 0.0
    %5667 = vmatpush2.msra.mxu0 0.0
    %5668 = vmatprep.subr.mxu0 0.0
    %5669 = vmatpush2.msra.mxu0 0.0
    %5670 = vmatprep.subr.mxu0 0.0
    %5671 = vmatpush2.msra.mxu0 0.0
    %5672 = vmatprep.subr.mxu0 0.0
    %5673 = vmatpush2.msra.mxu0 0.0
    %5674 = vmatprep.subr.mxu0 0.0
    %5675 = vmatpush2.msra.mxu0 0.0
    %5676 = vmatprep.mubr.f32.mxu0 0.0
    %v5677 = vand.u32 %v4699, 4294901760
    %5678 = vmatmul.mubr.f32.gmra.mxu0 %v5677
    %v5679 = vpop.f32.mrf.mxu0
    %v5680 = vadd.f32 %v5602, %v5679
    %v5681 = vpop.f32.mrf.mxu0
    %5682 = vmatprep.mubr.f32.mxu0 0.0
    %v5683 = vand.u32 %v4701, 4294901760
    %5684 = vmatmul.mubr.f32.gmra.mxu0 %v5683
    %v5685 = vpop.f32.mrf.mxu0
    %v5686 = vadd.f32 %v5608, %v5685
    %v5687 = vpop.f32.mrf.mxu0
    %5688 = vdwg.mxu0
    %v5689 = vld [vmem:[%s7] sm:$0x1]
    %v5690 = vld [vmem:[%s10] sm:$0x1]
    %v5692 = vlaneseq
    %v5693 = vshrl.u32 %v5692, 7
    %v5694 = vsub.s32 0, %v5693
    %v5695 = vrot.slane %v5689, %v5694
    %v5697 = vmul.f32 %v5695, 0.0
    %v5698 = vadd.f32 %v5183, %v5697
    %v5699 = vxor.u32 %v5698, 2147483648
    %v5700 = vmul.f32 %v5699, 1.442695
    %v5701 = vpow.pop %v5700
    %v5702 = vadd.f32 %v5701, 1.0
    %v5703 = vrcp.pop %v5702
    %v5704 = vmul.f32 1.0, %v5703
    %v5705 = vtanh.pop %v5698
    %v5706 = vmul.f32 %v5704, 0.0
    %5708 = vrot.lane.b32.xlu0 %v5705, 125
    %v5709 = vpop.permute.xlu0 %5708
    %v5711 = vmul.f32 %v5704, %v5709
    %5713 = vrot.lane.b32.xlu0 %v5711, 1
    %v5714 = vpop.permute.xlu0 %5713
    %v5716 = vadd.f32 %v5706, %v5714
    %v5717 = vtanh.pop %v5716
    %5719 = vrot.lane.b32.xlu0 %v5717, 1
    %v5720 = vpop.permute.xlu0 %5719
    %v5722 = vmul.f32 %v5704, %v5720
    %5724 = vset.pattern.permute.xlu0 2
    %5725 = vperm.xlu0 %5724, %v5722
    %v5726 = vpop.permute.xlu0 %5725
    %v5728 = vmul.f32 %v5726, %v5695
    %v5730 = vrot.slane %v5728, 6
    %v5732 = vadd.f32 %v5183, %v5730
    %v5733 = vxor.u32 %v5732, 2147483648
    %v5734 = vmul.f32 %v5733, 1.442695
    %v5735 = vpow.pop %v5734
    %v5736 = vadd.f32 %v5735, 1.0
    %v5737 = vrcp.pop %v5736
    %v5738 = vmul.f32 1.0, %v5737
    %v5739 = vtanh.pop %v5732
    %v5741 = vrot.slane %v5716, 6
    %v5743 = vmul.f32 %v5738, %v5741
    %5745 = vrot.lane.b32.xlu0 %v5739, 125
    %v5746 = vpop.permute.xlu0 %5745
    %v5748 = vmul.f32 %v5738, %v5746
    %5750 = vrot.lane.b32.xlu0 %v5748, 1
    %v5751 = vpop.permute.xlu0 %5750
    %v5753 = vadd.f32 %v5743, %v5751
    %v5754 = vtanh.pop %v5753
    %5756 = vrot.lane.b32.xlu0 %v5754, 1
    %v5757 = vpop.permute.xlu0 %5756
    %v5759 = vmul.f32 %v5738, %v5757
    %5761 = vset.pattern.permute.xlu0 2
    %5762 = vperm.xlu0 %5761, %v5759
    %v5763 = vpop.permute.xlu0 %5762
    %v5765 = vmul.f32 %v5763, %v5695
    %v5767 = vrot.slane %v5765, 6
    %v5769 = vadd.f32 %v5183, %v5767
    %v5770 = vxor.u32 %v5769, 2147483648
    %v5771 = vmul.f32 %v5770, 1.442695
    %v5772 = vpow.pop %v5771
    %v5773 = vadd.f32 %v5772, 1.0
    %v5774 = vrcp.pop %v5773
    %v5775 = vmul.f32 1.0, %v5774
    %v5776 = vtanh.pop %v5769
    %v5778 = vrot.slane %v5753, 6
    %v5780 = vmul.f32 %v5775, %v5778
    %5782 = vrot.lane.b32.xlu0 %v5776, 125
    %v5783 = vpop.permute.xlu0 %5782
    %v5785 = vmul.f32 %v5775, %v5783
    %5787 = vrot.lane.b32.xlu0 %v5785, 1
    %v5788 = vpop.permute.xlu0 %5787
    %v5790 = vadd.f32 %v5780, %v5788
    %v5791 = vtanh.pop %v5790
    %5793 = vrot.lane.b32.xlu0 %v5791, 1
    %v5794 = vpop.permute.xlu0 %5793
    %v5796 = vmul.f32 %v5775, %v5794
    %5798 = vset.pattern.permute.xlu0 2
    %5799 = vperm.xlu0 %5798, %v5796
    %v5800 = vpop.permute.xlu0 %5799
    %v5802 = vmul.f32 %v5800, %v5695
    %v5804 = vrot.slane %v5802, 6
    %v5806 = vadd.f32 %v5183, %v5804
    %v5807 = vxor.u32 %v5806, 2147483648
    %v5808 = vmul.f32 %v5807, 1.442695
    %v5809 = vpow.pop %v5808
    %v5810 = vadd.f32 %v5809, 1.0
    %v5811 = vrcp.pop %v5810
    %v5812 = vmul.f32 1.0, %v5811
    %v5813 = vtanh.pop %v5806
    %v5815 = vrot.slane %v5790, 6
    %v5817 = vmul.f32 %v5812, %v5815
    %5819 = vrot.lane.b32.xlu0 %v5813, 125
    %v5820 = vpop.permute.xlu0 %5819
    %v5822 = vmul.f32 %v5812, %v5820
    %5824 = vrot.lane.b32.xlu0 %v5822, 1
    %v5825 = vpop.permute.xlu0 %5824
    %v5827 = vadd.f32 %v5817, %v5825
    %v5828 = vtanh.pop %v5827
    %5830 = vrot.lane.b32.xlu0 %v5828, 1
    %v5831 = vpop.permute.xlu0 %5830
    %v5833 = vmul.f32 %v5812, %v5831
    %5835 = vset.pattern.permute.xlu0 2
    %5836 = vperm.xlu0 %5835, %v5833
    %v5837 = vpop.permute.xlu0 %5836
    %v5839 = vmul.f32 %v5837, %v5695
    %v5841 = vrot.slane %v5839, 6
    %v5843 = vadd.f32 %v5189, %v5841
    %v5844 = vxor.u32 %v5843, 2147483648
    %v5845 = vmul.f32 %v5844, 1.442695
    %v5846 = vpow.pop %v5845
    %v5847 = vadd.f32 %v5846, 1.0
    %v5848 = vrcp.pop %v5847
    %v5849 = vmul.f32 1.0, %v5848
    %v5850 = vtanh.pop %v5843
    %v5852 = vrot.slane %v5827, 6
    %v5854 = vmul.f32 %v5849, %v5852
    %5856 = vrot.lane.b32.xlu0 %v5850, 125
    %v5857 = vpop.permute.xlu0 %5856
    %v5859 = vmul.f32 %v5849, %v5857
    %5861 = vrot.lane.b32.xlu0 %v5859, 1
    %v5862 = vpop.permute.xlu0 %5861
    %v5864 = vadd.f32 %v5854, %v5862
    %v5865 = vtanh.pop %v5864
    %5867 = vrot.lane.b32.xlu0 %v5865, 1
    %v5868 = vpop.permute.xlu0 %5867
    %v5870 = vmul.f32 %v5849, %v5868
    %5872 = vset.pattern.permute.xlu0 2
    %5873 = vperm.xlu0 %5872, %v5870
    %v5874 = vpop.permute.xlu0 %5873
    %v5876 = vmul.f32 %v5874, %v5695
    %v5878 = vrot.slane %v5876, 6
    %v5880 = vadd.f32 %v5189, %v5878
    %v5881 = vxor.u32 %v5880, 2147483648
    %v5882 = vmul.f32 %v5881, 1.442695
    %v5883 = vpow.pop %v5882
    %v5884 = vadd.f32 %v5883, 1.0
    %v5885 = vrcp.pop %v5884
    %v5886 = vmul.f32 1.0, %v5885
    %v5887 = vtanh.pop %v5880
    %v5889 = vrot.slane %v5864, 6
    %v5891 = vmul.f32 %v5886, %v5889
    %5893 = vrot.lane.b32.xlu0 %v5887, 125
    %v5894 = vpop.permute.xlu0 %5893
    %v5896 = vmul.f32 %v5886, %v5894
    %5898 = vrot.lane.b32.xlu0 %v5896, 1
    %v5899 = vpop.permute.xlu0 %5898
    %v5901 = vadd.f32 %v5891, %v5899
    %v5902 = vtanh.pop %v5901
    %5904 = vrot.lane.b32.xlu0 %v5902, 1
    %v5905 = vpop.permute.xlu0 %5904
    %v5907 = vmul.f32 %v5886, %v5905
    %5909 = vset.pattern.permute.xlu0 2
    %5910 = vperm.xlu0 %5909, %v5907
    %v5911 = vpop.permute.xlu0 %5910
    %v5913 = vmul.f32 %v5911, %v5695
    %v5915 = vrot.slane %v5913, 6
    %v5917 = vadd.f32 %v5189, %v5915
    %v5918 = vxor.u32 %v5917, 2147483648
    %v5919 = vmul.f32 %v5918, 1.442695
    %v5920 = vpow.pop %v5919
    %v5921 = vadd.f32 %v5920, 1.0
    %v5922 = vrcp.pop %v5921
    %v5923 = vmul.f32 1.0, %v5922
    %v5924 = vtanh.pop %v5917
    %v5926 = vrot.slane %v5901, 6
    %v5928 = vmul.f32 %v5923, %v5926
    %5930 = vrot.lane.b32.xlu0 %v5924, 125
    %v5931 = vpop.permute.xlu0 %5930
    %v5933 = vmul.f32 %v5923, %v5931
    %5935 = vrot.lane.b32.xlu0 %v5933, 1
    %v5936 = vpop.permute.xlu0 %5935
    %v5938 = vadd.f32 %v5928, %v5936
    %v5939 = vtanh.pop %v5938
    %5941 = vrot.lane.b32.xlu0 %v5939, 1
    %v5942 = vpop.permute.xlu0 %5941
    %v5944 = vmul.f32 %v5923, %v5942
    %v5946 = vlaneseq
    %v5947 = vshrl.u32 %v5946, 7
    %v5948 = vsub.s32 0, %v5947
    %v5949 = vrot.slane %v5690, %v5948
    %v5951 = vmul.f32 %v5949, 0.0
    %v5952 = vadd.f32 %v5686, %v5951
    %v5953 = vxor.u32 %v5952, 2147483648
    %v5954 = vmul.f32 %v5953, 1.442695
    %v5955 = vpow.pop %v5954
    %v5956 = vadd.f32 %v5955, 1.0
    %v5957 = vrcp.pop %v5956
    %v5958 = vmul.f32 1.0, %v5957
    %v5959 = vtanh.pop %v5952
    %v5960 = vmul.f32 %v5958, 0.0
    %5962 = vrot.lane.b32.xlu0 %v5959, 125
    %v5963 = vpop.permute.xlu0 %5962
    %v5965 = vmul.f32 %v5958, %v5963
    %5967 = vrot.lane.b32.xlu0 %v5965, 1
    %v5968 = vpop.permute.xlu0 %5967
    %v5970 = vadd.f32 %v5960, %v5968
    %v5971 = vtanh.pop %v5970
    %5973 = vrot.lane.b32.xlu0 %v5971, 1
    %v5974 = vpop.permute.xlu0 %5973
    %v5976 = vmul.f32 %v5958, %v5974
    %5978 = vset.pattern.permute.xlu0 2
    %5979 = vperm.xlu0 %5978, %v5976
    %v5980 = vpop.permute.xlu0 %5979
    %v5982 = vmul.f32 %v5980, %v5949
    %v5984 = vrot.slane %v5982, 2
    %v5986 = vadd.f32 %v5686, %v5984
    %v5987 = vxor.u32 %v5986, 2147483648
    %v5988 = vmul.f32 %v5987, 1.442695
    %v5989 = vpow.pop %v5988
    %v5990 = vadd.f32 %v5989, 1.0
    %v5991 = vrcp.pop %v5990
    %v5992 = vmul.f32 1.0, %v5991
    %v5993 = vtanh.pop %v5986
    %v5995 = vrot.slane %v5970, 2
    %v5997 = vmul.f32 %v5992, %v5995
    %5999 = vrot.lane.b32.xlu0 %v5993, 125
    %v6000 = vpop.permute.xlu0 %5999
    %v6002 = vmul.f32 %v5992, %v6000
    %6004 = vrot.lane.b32.xlu0 %v6002, 1
    %v6005 = vpop.permute.xlu0 %6004
    %v6007 = vadd.f32 %v5997, %v6005
    %v6008 = vtanh.pop %v6007
    %6010 = vrot.lane.b32.xlu0 %v6008, 1
    %v6011 = vpop.permute.xlu0 %6010
    %v6013 = vmul.f32 %v5992, %v6011
    %6015 = vset.pattern.permute.xlu0 2
    %6016 = vperm.xlu0 %6015, %v6013
    %v6017 = vpop.permute.xlu0 %6016
    %v6019 = vmul.f32 %v6017, %v5949
    %v6021 = vrot.slane %v6019, 2
    %v6023 = vadd.f32 %v5686, %v6021
    %v6024 = vxor.u32 %v6023, 2147483648
    %v6025 = vmul.f32 %v6024, 1.442695
    %v6026 = vpow.pop %v6025
    %v6027 = vadd.f32 %v6026, 1.0
    %v6028 = vrcp.pop %v6027
    %v6029 = vmul.f32 1.0, %v6028
    %v6030 = vtanh.pop %v6023
    %v6032 = vrot.slane %v6007, 2
    %v6034 = vmul.f32 %v6029, %v6032
    %6036 = vrot.lane.b32.xlu0 %v6030, 125
    %v6037 = vpop.permute.xlu0 %6036
    %v6039 = vmul.f32 %v6029, %v6037
    %6041 = vrot.lane.b32.xlu0 %v6039, 1
    %v6042 = vpop.permute.xlu0 %6041
    %v6044 = vadd.f32 %v6034, %v6042
    %v6045 = vtanh.pop %v6044
    %6047 = vrot.lane.b32.xlu0 %v6045, 1
    %v6048 = vpop.permute.xlu0 %6047
    %v6050 = vmul.f32 %v6029, %v6048
    %6052 = vset.pattern.permute.xlu0 2
    %6053 = vperm.xlu0 %6052, %v6050
    %v6054 = vpop.permute.xlu0 %6053
    %v6056 = vmul.f32 %v6054, %v5949
    %v6058 = vrot.slane %v6056, 2
    %v6060 = vadd.f32 %v5680, %v6058
    %v6061 = vxor.u32 %v6060, 2147483648
    %v6062 = vmul.f32 %v6061, 1.442695
    %v6063 = vpow.pop %v6062
    %v6064 = vadd.f32 %v6063, 1.0
    %v6065 = vrcp.pop %v6064
    %v6066 = vmul.f32 1.0, %v6065
    %v6067 = vtanh.pop %v6060
    %v6069 = vrot.slane %v6044, 2
    %v6071 = vmul.f32 %v6066, %v6069
    %6073 = vrot.lane.b32.xlu0 %v6067, 125
    %v6074 = vpop.permute.xlu0 %6073
    %v6076 = vmul.f32 %v6066, %v6074
    %6078 = vrot.lane.b32.xlu0 %v6076, 1
    %v6079 = vpop.permute.xlu0 %6078
    %v6081 = vadd.f32 %v6071, %v6079
    %v6082 = vtanh.pop %v6081
    %6084 = vrot.lane.b32.xlu0 %v6082, 1
    %v6085 = vpop.permute.xlu0 %6084
    %v6087 = vmul.f32 %v6066, %v6085
    %6089 = vset.pattern.permute.xlu0 2
    %6090 = vperm.xlu0 %6089, %v6087
    %v6091 = vpop.permute.xlu0 %6090
    %v6093 = vmul.f32 %v6091, %v5949
    %v6095 = vrot.slane %v6093, 2
    %v6097 = vadd.f32 %v5680, %v6095
    %v6098 = vxor.u32 %v6097, 2147483648
    %v6099 = vmul.f32 %v6098, 1.442695
    %v6100 = vpow.pop %v6099
    %v6101 = vadd.f32 %v6100, 1.0
    %v6102 = vrcp.pop %v6101
    %v6103 = vmul.f32 1.0, %v6102
    %v6104 = vtanh.pop %v6097
    %v6106 = vrot.slane %v6081, 2
    %v6108 = vmul.f32 %v6103, %v6106
    %6110 = vrot.lane.b32.xlu0 %v6104, 125
    %v6111 = vpop.permute.xlu0 %6110
    %v6113 = vmul.f32 %v6103, %v6111
    %6115 = vrot.lane.b32.xlu0 %v6113, 1
    %v6116 = vpop.permute.xlu0 %6115
    %v6118 = vadd.f32 %v6108, %v6116
    %v6119 = vtanh.pop %v6118
    %6121 = vrot.lane.b32.xlu0 %v6119, 1
    %v6122 = vpop.permute.xlu0 %6121
    %v6124 = vmul.f32 %v6103, %v6122
    %6126 = vset.pattern.permute.xlu0 2
    %6127 = vperm.xlu0 %6126, %v6124
    %v6128 = vpop.permute.xlu0 %6127
    %v6130 = vmul.f32 %v6128, %v5949
    %v6132 = vrot.slane %v6130, 2
    %v6134 = vadd.f32 %v5680, %v6132
    %v6135 = vxor.u32 %v6134, 2147483648
    %v6136 = vmul.f32 %v6135, 1.442695
    %v6137 = vpow.pop %v6136
    %v6138 = vadd.f32 %v6137, 1.0
    %v6139 = vrcp.pop %v6138
    %v6140 = vmul.f32 1.0, %v6139
    %v6141 = vtanh.pop %v6134
    %v6143 = vrot.slane %v6118, 2
    %v6145 = vmul.f32 %v6140, %v6143
    %6147 = vrot.lane.b32.xlu0 %v6141, 125
    %v6148 = vpop.permute.xlu0 %6147
    %v6150 = vmul.f32 %v6140, %v6148
    %6152 = vrot.lane.b32.xlu0 %v6150, 1
    %v6153 = vpop.permute.xlu0 %6152
    %v6155 = vadd.f32 %v6145, %v6153
    %v6156 = vtanh.pop %v6155
    %6158 = vrot.lane.b32.xlu0 %v6156, 1
    %v6159 = vpop.permute.xlu0 %6158
    %v6161 = vmul.f32 %v6140, %v6159
    %6163 = vset.pattern.permute.xlu0 2
    %6164 = vperm.xlu0 %6163, %v6161
    %v6165 = vpop.permute.xlu0 %6164
    %v6167 = vmul.f32 %v6165, %v5949
    %v6169 = vrot.slane %v6167, 2
    %v6171 = vadd.f32 %v5680, %v6169
    %v6172 = vxor.u32 %v6171, 2147483648
    %v6173 = vmul.f32 %v6172, 1.442695
    %v6174 = vpow.pop %v6173
    %v6175 = vadd.f32 %v6174, 1.0
    %v6176 = vrcp.pop %v6175
    %v6177 = vmul.f32 1.0, %v6176
    %v6178 = vtanh.pop %v6171
    %v6180 = vrot.slane %v6155, 2
    %v6182 = vmul.f32 %v6177, %v6180
    %6184 = vrot.lane.b32.xlu0 %v6178, 125
    %v6185 = vpop.permute.xlu0 %6184
    %v6187 = vmul.f32 %v6177, %v6185
    %6189 = vrot.lane.b32.xlu0 %v6187, 1
    %v6190 = vpop.permute.xlu0 %6189
    %v6192 = vadd.f32 %v6182, %v6190
    %v6193 = vtanh.pop %v6192
    %6195 = vrot.lane.b32.xlu0 %v6193, 1
    %v6196 = vpop.permute.xlu0 %6195
    %v6198 = vmul.f32 %v6177, %v6196
    %v6199 = vadd.f32 %v5722, %v6198
    %v6200 = vadd.f32 %v5759, %v6161
    %v6201 = vadd.f32 %v5796, %v6124
    %v6202 = vadd.f32 %v5833, %v6087
    %v6203 = vadd.f32 %v5870, %v6050
    %v6204 = vadd.f32 %v5907, %v6013
    %v6205 = vadd.f32 %v5944, %v5976
    %6207 = vrot.lane.b32.xlu0 %v6199, 126
    %v6208 = vpop.permute.xlu0 %6207
    %v6211 = vrot.slane %v6200, 2
    %6212 = vrot.lane.b32.xlu0 %v6211, 127
    %v6213 = vpop.permute.xlu0 %6212
    %v6216 = vrot.slane %v6201, 4
    %v6219 = vrot.slane %v6202, 6
    %6220 = vrot.lane.b32.xlu0 %v6219, 1
    %v6221 = vpop.permute.xlu0 %6220
    %6224 = vrot.lane.b32.xlu0 %v6203, 2
    %v6225 = vpop.permute.xlu0 %6224
    %v6228 = vrot.slane %v6204, 2
    %6229 = vrot.lane.b32.xlu0 %v6228, 3
    %v6230 = vpop.permute.xlu0 %6229
    %v6233 = vrot.slane %v6205, 4
    %6234 = vrot.lane.b32.xlu0 %v6233, 4
    %v6235 = vpop.permute.xlu0 %6234
    %vm6237 = vcmask 7168
    %v6238 = vsel %vm6237, %v6208, %v6213
    %vm6239 = vcmask 15360
    %v6240 = vsel %vm6239, %v6238, %v6216
    %vm6241 = vcmask 23552
    %v6242 = vsel %vm6241, %v6240, %v6221
    %v6243 = vsel %vm68, %v6242, %v6225
    %vm6244 = vcmask 39936
    %v6245 = vsel %vm6244, %v6243, %v6230
    %vm6246 = vcmask 48128
    %v6247 = vsel %vm6246, %v6245, %v6235
    %vm6248 = vcmask 50176
    %6249 = vst.msk [vmem:[#allocation2] sm:$0x3] %vm6248, %v6247
    // Predicated region
    $region50: #{encoder_forward.1} parent=1 // pred_check
      _
    $region51: #{encoder_forward.1} parent=1 // pred_check_branch
      %6251 = sbr.rel (0) target = $region53
    $region52: #{encoder_forward.1} parent=1 // pred_region
      %s6253 = ssub.s32 32, 32
      %6254 = vsyncadd [#allocation3], %s6253
      %s6256 = sshll.u32 [#allocation2], 4
      %s6257 = int_to_ptr.vmem [resolvable:$true] %s6256
      %6259 = dma.vmem_to_hbm [thread:$0]  %s6257, 32, %s12, [#allocation3]
    $region53: #{encoder_forward.1} parent=1 // pred_fallthru
      _
    // Predicated region
    $region54: #{encoder_forward.1} parent=1 // pred_check
      _
    $region55: #{encoder_forward.1} parent=1 // pred_check_branch
      %6261 = sbr.rel (0) target = $region57
    $region56: #{encoder_forward.1} parent=1 // pred_region
      %6262 = dma.done [#allocation3], 32
    $region57: #{encoder_forward.1} parent=1 // pred_fallthru
      _
    %6263 = vsyncpa [#allocation3], 1

</llo_original>
